<compile_context>
chip_gen: v7x
topology: tpu7x:2x2x1
jax: 0.10.0
libtpu: 0.0.40
codegen_flags: <defaults>
</compile_context>

<pallas_src>
import functools
import math

import jax
import jax.numpy as jnp
from jax.experimental import pallas as pl
from jax.experimental.pallas import tpu as pltpu


NEG_INF = -1e9
LN_EPS = 1e-5
FC_BLOCK_N = 512
VMEM_LIMIT = 64 * 1024 * 1024


def _layer_compiler_params():
    return pltpu.CompilerParams(dimension_semantics=("parallel",),
                                vmem_limit_bytes=VMEM_LIMIT)


# ----------------------------------------------------------------------------
# In-kernel building blocks
# ----------------------------------------------------------------------------

def _layer_norm(x, g, b):
    mu = jnp.mean(x, axis=-1, keepdims=True)
    xc = x - mu
    var = jnp.mean(xc * xc, axis=-1, keepdims=True)
    return xc * jax.lax.rsqrt(var + LN_EPS) * g + b


def _mha_block(q, k, v, bias, wo, bo, ctx_ref, *, num_heads, scale):
    """Multi-head attention + single fused output projection.

    q: (Lq, D) f32, k/v: (Lk, D) f32, bias: f32 additive, broadcastable to
    (Lq, Lk) (precomputed key-padding [+ causal]); wo: (D, D) bf16;
    bo: (1, D) f32; ctx_ref: (Lq, D) f32 VMEM scratch.
    """
    Lq, D = q.shape
    Dh = D // num_heads
    for h in range(num_heads):
        sl = slice(h * Dh, (h + 1) * Dh)
        qh = (q[:, sl] * scale).astype(jnp.bfloat16)      # (Lq, Dh)
        kh = k[:, sl].astype(jnp.bfloat16)                # (Lk, Dh)
        vh = v[:, sl].astype(jnp.bfloat16)                # (Lk, Dh)

        s = jax.lax.dot_general(qh, kh, (((1,), (1,)), ((), ())),
                                preferred_element_type=jnp.float32)  # (Lq, Lk)
        s = s + bias                                       # one add per head

        m = jnp.max(s, axis=-1, keepdims=True)
        p = jnp.exp(s - m)
        p = p * pl.reciprocal(jnp.sum(p, axis=-1, keepdims=True), approx=True)

        # Per-head context goes into the (Lq, D) scratch at its lane slice.
        ctx_ref[:, sl] = jnp.dot(p.astype(jnp.bfloat16), vh,
                                 preferred_element_type=jnp.float32)

    # ONE full-depth (Lq, D) @ (D, D) output projection (K = D on the MXU).
    return jnp.dot(ctx_ref[...].astype(jnp.bfloat16), wo,
                   preferred_element_type=jnp.float32) + bo


# ----------------------------------------------------------------------------
# Fused per-layer kernels
# ----------------------------------------------------------------------------

def _encoder_layer_kernel(x_ref, kbias_ref,
                          wqkv_ref, bqkv_ref, wo_ref, bo_ref,
                          g1_ref, b1_ref,
                          w1_ref, c1_ref, w2_ref, c2_ref,
                          g2_ref, b2_ref,
                          o_ref, ctx_ref, *, num_heads, scale):
    x_bf = x_ref[0]                             # (L, D) bf16
    x = x_bf.astype(jnp.float32)
    kb = kbias_ref[0]                           # (1, L) additive key bias
    D = x.shape[-1]

    # self-attention (packed QKV) + single output projection
    qkv = jnp.dot(x_bf, wqkv_ref[...],
                  preferred_element_type=jnp.float32) + bqkv_ref[...]  # (L, 3D)
    attn = _mha_block(qkv[:, :D], qkv[:, D:2 * D], qkv[:, 2 * D:], kb,
                      wo_ref[...], bo_ref[...], ctx_ref,
                      num_heads=num_heads, scale=scale)
    h = _layer_norm(x + attn, g1_ref[...], b1_ref[...])

    # FFN
    f = jnp.maximum(jnp.dot(h.astype(jnp.bfloat16), w1_ref[...],
                            preferred_element_type=jnp.float32) + c1_ref[...],
                    0.0)
    f = jnp.dot(f.astype(jnp.bfloat16), w2_ref[...],
                preferred_element_type=jnp.float32) + c2_ref[...]
    y = _layer_norm(h + f, g2_ref[...], b2_ref[...])
    o_ref[0] = y.astype(o_ref.dtype)


def _decoder_layer_kernel(x_ref, enc_ref, tkb_ref, skb_ref,
                          wqkv_ref, bqkv_ref, wo1_ref, bo1_ref, g1_ref, b1_ref,
                          wq_ref, bq_ref, wkv_ref, bkv_ref, wo2_ref, bo2_ref,
                          g2_ref, b2_ref,
                          w1_ref, c1_ref, w2_ref, c2_ref, g3_ref, b3_ref,
                          o_ref, ctx_ref, *, num_heads, scale):
    x_bf = x_ref[0]                         # (Lt, D) bf16
    e_bf = enc_ref[0]                       # (Ls, D) bf16
    x = x_bf.astype(jnp.float32)
    tkb = tkb_ref[0]                        # (1, Lt)
    skb = skb_ref[0]                        # (1, Ls)
    Lt, D = x.shape

    # combined causal + key-padding bias, computed ONCE
    row = jax.lax.broadcasted_iota(jnp.int32, (Lt, Lt), 0)
    col = jax.lax.broadcasted_iota(jnp.int32, (Lt, Lt), 1)
    self_bias = jnp.where(col <= row, jnp.float32(0.0),
                          jnp.float32(NEG_INF)) + tkb        # (Lt, Lt)

    # 1) causal self-attention + residual + LN
    qkv = jnp.dot(x_bf, wqkv_ref[...],
                  preferred_element_type=jnp.float32) + bqkv_ref[...]
    a = _mha_block(qkv[:, :D], qkv[:, D:2 * D], qkv[:, 2 * D:], self_bias,
                   wo1_ref[...], bo1_ref[...], ctx_ref,
                   num_heads=num_heads, scale=scale)
    h1 = _layer_norm(x + a, g1_ref[...], b1_ref[...])

    # 2) cross-attention over encoder output + residual + LN
    q = jnp.dot(h1.astype(jnp.bfloat16), wq_ref[...],
                preferred_element_type=jnp.float32) + bq_ref[...]
    kv = jnp.dot(e_bf, wkv_ref[...],
                 preferred_element_type=jnp.float32) + bkv_ref[...]    # (Ls, 2D)
    c = _mha_block(q, kv[:, :D], kv[:, D:], skb,
                   wo2_ref[...], bo2_ref[...], ctx_ref,
                   num_heads=num_heads, scale=scale)
    h2 = _layer_norm(h1 + c, g2_ref[...], b2_ref[...])

    # 3) FFN + residual + LN
    f = jnp.maximum(jnp.dot(h2.astype(jnp.bfloat16), w1_ref[...],
                            preferred_element_type=jnp.float32) + c1_ref[...],
                    0.0)
    f = jnp.dot(f.astype(jnp.bfloat16), w2_ref[...],
                preferred_element_type=jnp.float32) + c2_ref[...]
    y = _layer_norm(h2 + f, g3_ref[...], b3_ref[...])
    o_ref[0] = y.astype(o_ref.dtype)


def _linear_kernel(x_ref, w_ref, b_ref, o_ref):
    y = jnp.dot(x_ref[...], w_ref[...],
                preferred_element_type=jnp.float32) + b_ref[...]
    o_ref[...] = y.astype(o_ref.dtype)


# ----------------------------------------------------------------------------
# Wrappers around pallas_call
# ----------------------------------------------------------------------------

def _const_spec(shape):
    n = len(shape)
    return pl.BlockSpec(shape, lambda b, _n=n: (0,) * _n)


def encoder_layer(p, x, key_bias, num_heads):
    B, L, D = x.shape
    F = p["ff1_w"].shape[1]
    scale = 1.0 / math.sqrt(D // num_heads)
    kernel = functools.partial(_encoder_layer_kernel,
                               num_heads=num_heads, scale=scale)
    in_specs = [
        pl.BlockSpec((1, L, D), lambda b: (b, 0, 0)),       # x (bf16)
        pl.BlockSpec((1, 1, L), lambda b: (b, 0, 0)),       # key-padding bias
        _const_spec((D, 3 * D)), _const_spec((1, 3 * D)),   # wqkv, bqkv
        _const_spec((D, D)), _const_spec((1, D)),           # wo, bo
        _const_spec((1, D)), _const_spec((1, D)),           # ln1 g/b
        _const_spec((D, F)), _const_spec((1, F)),           # ff1 w/b
        _const_spec((F, D)), _const_spec((1, D)),           # ff2 w/b
        _const_spec((1, D)), _const_spec((1, D)),           # ln2 g/b
    ]
    return pl.pallas_call(
        kernel,
        out_shape=jax.ShapeDtypeStruct((B, L, D), jnp.bfloat16),
        grid=(B,),
        in_specs=in_specs,
        out_specs=pl.BlockSpec((1, L, D), lambda b: (b, 0, 0)),
        scratch_shapes=[pltpu.VMEM((L, D), jnp.float32)],
        compiler_params=_layer_compiler_params(),
    )(x, key_bias,
      p["wqkv"], p["bqkv"], p["wo"], p["bo"],
      p["ln1_g"], p["ln1_b"],
      p["ff1_w"], p["ff1_b"], p["ff2_w"], p["ff2_b"],
      p["ln2_g"], p["ln2_b"])


def decoder_layer(p, x, enc_out, tgt_key_bias, src_key_bias, num_heads):
    B, Lt, D = x.shape
    _, Ls, _ = enc_out.shape
    F = p["ff1_w"].shape[1]
    scale = 1.0 / math.sqrt(D // num_heads)
    kernel = functools.partial(_decoder_layer_kernel,
                               num_heads=num_heads, scale=scale)
    in_specs = [
        pl.BlockSpec((1, Lt, D), lambda b: (b, 0, 0)),      # x (bf16)
        pl.BlockSpec((1, Ls, D), lambda b: (b, 0, 0)),      # enc_out (bf16)
        pl.BlockSpec((1, 1, Lt), lambda b: (b, 0, 0)),      # tgt key bias
        pl.BlockSpec((1, 1, Ls), lambda b: (b, 0, 0)),      # src key bias
        _const_spec((D, 3 * D)), _const_spec((1, 3 * D)),   # self wqkv/bqkv
        _const_spec((D, D)), _const_spec((1, D)),           # self wo/bo
        _const_spec((1, D)), _const_spec((1, D)),           # ln1
        _const_spec((D, D)), _const_spec((1, D)),           # cross wq/bq
        _const_spec((D, 2 * D)), _const_spec((1, 2 * D)),   # cross wkv/bkv
        _const_spec((D, D)), _const_spec((1, D)),           # cross wo/bo
        _const_spec((1, D)), _const_spec((1, D)),           # ln2
        _const_spec((D, F)), _const_spec((1, F)),           # ff1
        _const_spec((F, D)), _const_spec((1, D)),           # ff2
        _const_spec((1, D)), _const_spec((1, D)),           # ln3
    ]
    return pl.pallas_call(
        kernel,
        out_shape=jax.ShapeDtypeStruct((B, Lt, D), jnp.bfloat16),
        grid=(B,),
        in_specs=in_specs,
        out_specs=pl.BlockSpec((1, Lt, D), lambda b: (b, 0, 0)),
        scratch_shapes=[pltpu.VMEM((Lt, D), jnp.float32)],
        compiler_params=_layer_compiler_params(),
    )(x, enc_out, tgt_key_bias, src_key_bias,
      p["self_wqkv"], p["self_bqkv"], p["self_wo"], p["self_bo"],
      p["ln1_g"], p["ln1_b"],
      p["cross_wq"], p["cross_bq"], p["cross_wkv"], p["cross_bkv"],
      p["cross_wo"], p["cross_bo"],
      p["ln2_g"], p["ln2_b"],
      p["ff1_w"], p["ff1_b"], p["ff2_w"], p["ff2_b"],
      p["ln3_g"], p["ln3_b"])


def fc_out(x2d, w_padded, b_padded, n_true, *, block_n=FC_BLOCK_N):
    """Final vocab projection; weights pre-padded (at init) to a multiple of
    block_n lanes, tiled over N with 512-wide lane-dense output blocks."""
    M, K = x2d.shape
    Np = w_padded.shape[1]
    out = pl.pallas_call(
        _linear_kernel,
        out_shape=jax.ShapeDtypeStruct((M, Np), jnp.float32),
        grid=(Np // block_n,),
        in_specs=[
            pl.BlockSpec((M, K), lambda j: (0, 0)),
            pl.BlockSpec((K, block_n), lambda j: (0, j)),
            pl.BlockSpec((1, block_n), lambda j: (0, j)),
        ],
        out_specs=pl.BlockSpec((M, block_n), lambda j: (0, j)),
        compiler_params=pltpu.CompilerParams(
            dimension_semantics=("parallel",), vmem_limit_bytes=VMEM_LIMIT),
    )(x2d, w_padded, b_padded)
    return out[:, :n_true]


# ----------------------------------------------------------------------------
# Model glue (plain JAX around the fused Pallas kernels)
# ----------------------------------------------------------------------------

def key_padding_bias(mask, B, Lk):
    """PyTorch-style padding mask (B,1,1,Lk), 0 = masked -> additive (B,1,Lk)."""
    if mask is None:
        return jnp.zeros((B, 1, Lk), jnp.float32)
    m = mask.reshape(B, 1, Lk)
    return jnp.where(m == 0, jnp.float32(NEG_INF), jnp.float32(0.0))


def positional_encoding(max_len, d_model):
    pos = jnp.arange(max_len, dtype=jnp.float32)[:, None]
    i = jnp.arange(d_model, dtype=jnp.float32)[None, :]
    angle = pos / jnp.power(10000.0, (2.0 * jnp.floor(i / 2.0)) / d_model)
    pe = jnp.where(jnp.mod(jnp.arange(d_model), 2) == 0,
                   jnp.sin(angle), jnp.cos(angle))
    return pe  # (max_len, d_model)


def encoder_forward(params, pe, src, src_key_bias, num_heads):
    D = params["src_emb"].shape[1]
    L = src.shape[1]
    # TODO(synk): embedding gather stays in plain JAX (dynamic row gather, tiny).
    x = jnp.take(params["src_emb"], src, axis=0) * jnp.sqrt(jnp.float32(D))
    x = (x + pe[:L][None, :, :]).astype(jnp.bfloat16)
    # TODO(synk): dropout is identity (inference / eval mode).
    for layer in params["enc"]:
        x = encoder_layer(layer, x, src_key_bias, num_heads)
    return x


def decoder_forward(params, pe, tgt, enc_out, src_key_bias, tgt_key_bias,
                    num_heads):
    D = params["tgt_emb"].shape[1]
    L = tgt.shape[1]
    x = jnp.take(params["tgt_emb"], tgt, axis=0) * jnp.sqrt(jnp.float32(D))
    x = (x + pe[:L][None, :, :]).astype(jnp.bfloat16)
    for layer in params["dec"]:
        x = decoder_layer(layer, x, enc_out, tgt_key_bias, src_key_bias,
                          num_heads)
    return x


def transformer_forward(params, pe, src, tgt, src_mask, tgt_key_mask, *,
                        num_heads, tgt_vocab_size):
    B, Ls = src.shape
    _, Lt = tgt.shape
    src_key_bias = key_padding_bias(src_mask, B, Ls)
    tgt_key_bias = key_padding_bias(tgt_key_mask, B, Lt)
    # TODO(synk): decoder self-attn applies the causal mask structurally
    # in-kernel (plus key-padding); arbitrary dense tgt_mask matrices are not
    # supported.
    enc_out = encoder_forward(params, pe, src, src_key_bias, num_heads)
    dec_out = decoder_forward(params, pe, tgt, enc_out, src_key_bias,
                              tgt_key_bias, num_heads)
    B2, Lt2, D = dec_out.shape
    logits = fc_out(dec_out.reshape(B2 * Lt2, D), params["fc_w"],
                    params["fc_b"], tgt_vocab_size)
    return logits.reshape(B2, Lt2, tgt_vocab_size)


# ----------------------------------------------------------------------------
# Deterministic parameter init (bf16 weights, (1,N) f32 biases/LN, padded fc)
# ----------------------------------------------------------------------------

def init_params(key, num_layers, d_model, num_heads, d_ff,
                src_vocab_size, tgt_vocab_size):
    keys = iter(jax.random.split(key, 4096))

    def w_bf16(shape):
        return (0.02 * jax.random.normal(next(keys), shape,
                                         jnp.float32)).astype(jnp.bfloat16)

    def w_f32(shape):
        return 0.02 * jax.random.normal(next(keys), shape, jnp.float32)

    def zeros_row(n):
        return jnp.zeros((1, n), jnp.float32)

    def ones_row(n):
        return jnp.ones((1, n), jnp.float32)

    def enc_layer():
        return {
            "wqkv": w_bf16((d_model, 3 * d_model)), "bqkv": zeros_row(3 * d_model),
            "wo": w_bf16((d_model, d_model)), "bo": zeros_row(d_model),
            "ln1_g": ones_row(d_model), "ln1_b": zeros_row(d_model),
            "ff1_w": w_bf16((d_model, d_ff)), "ff1_b": zeros_row(d_ff),
            "ff2_w": w_bf16((d_ff, d_model)), "ff2_b": zeros_row(d_model),
            "ln2_g": ones_row(d_model), "ln2_b": zeros_row(d_model),
        }

    def dec_layer():
        return {
            "self_wqkv": w_bf16((d_model, 3 * d_model)),
            "self_bqkv": zeros_row(3 * d_model),
            "self_wo": w_bf16((d_model, d_model)), "self_bo": zeros_row(d_model),
            "ln1_g": ones_row(d_model), "ln1_b": zeros_row(d_model),
            "cross_wq": w_bf16((d_model, d_model)), "cross_bq": zeros_row(d_model),
            "cross_wkv": w_bf16((d_model, 2 * d_model)),
            "cross_bkv": zeros_row(2 * d_model),
            "cross_wo": w_bf16((d_model, d_model)), "cross_bo": zeros_row(d_model),
            "ln2_g": ones_row(d_model), "ln2_b": zeros_row(d_model),
            "ff1_w": w_bf16((d_model, d_ff)), "ff1_b": zeros_row(d_ff),
            "ff2_w": w_bf16((d_ff, d_model)), "ff2_b": zeros_row(d_model),
            "ln3_g": ones_row(d_model), "ln3_b": zeros_row(d_model),
        }

    # fc_out: pre-pad vocab dim once to a multiple of FC_BLOCK_N.
    fc_w = w_f32((d_model, tgt_vocab_size))
    fc_b = jnp.zeros((tgt_vocab_size,), jnp.float32)
    n_pad = (-tgt_vocab_size) % FC_BLOCK_N
    fc_w_p = jnp.pad(fc_w, ((0, 0), (0, n_pad))).astype(jnp.bfloat16)
    fc_b_p = jnp.pad(fc_b, ((0, n_pad),)).reshape(1, -1).astype(jnp.float32)

    return {
        "src_emb": w_f32((src_vocab_size, d_model)),
        "tgt_emb": w_f32((tgt_vocab_size, d_model)),
        "enc": [enc_layer() for _ in range(num_layers)],
        "dec": [dec_layer() for _ in range(num_layers)],
        "fc_w": fc_w_p,
        "fc_b": fc_b_p,
    }


# ----------------------------------------------------------------------------
# Main
# ----------------------------------------------------------------------------

if __name__ == "__main__":
    num_layers = 2
    d_model = 128          # lane-aligned (multiple of 128)
    num_heads = 4
    d_ff = 256
    src_vocab_size = 50
    tgt_vocab_size = 60
    max_len = 16

    B, Ls, Lt = 2, 8, 8

    key = jax.random.PRNGKey(0)
    k_param, k_src, k_tgt = jax.random.split(key, 3)

    params = init_params(k_param, num_layers, d_model, num_heads, d_ff,
                         src_vocab_size, tgt_vocab_size)
    pe = positional_encoding(max_len, d_model)

    src = jax.random.randint(k_src, (B, Ls), 0, src_vocab_size, dtype=jnp.int32)
    tgt = jax.random.randint(k_tgt, (B, Lt), 0, tgt_vocab_size, dtype=jnp.int32)

    # Padding mask for src (all ones -> nothing masked); the decoder's causal
    # mask is generated inside the kernel (equivalent to the PyTorch tril mask).
    src_mask = jnp.ones((B, 1, 1, Ls), jnp.int32)
    tgt_key_mask = None

    fwd = jax.jit(functools.partial(transformer_forward,
                                    num_heads=num_heads,
                                    tgt_vocab_size=tgt_vocab_size))
    out = fwd(params, pe, src, tgt, src_mask, tgt_key_mask)
    out = jax.block_until_ready(out)

    assert out.shape == (B, Lt, tgt_vocab_size), out.shape
    assert out.dtype == jnp.float32
    assert bool(jnp.all(jnp.isfinite(out)))
    print("KERNEL_OK")
</pallas_src>

<mosaic_0001>
module attributes {stable_mosaic.version = 11 : i64} {
  func.func @_encoder_layer_kernel(%arg0: i32, %arg1: memref<1x8x128xbf16, #tpu.memory_space<vmem>>, %arg2: memref<1x1x8xf32, #tpu.memory_space<vmem>>, %arg3: memref<128x384xbf16, #tpu.memory_space<vmem>>, %arg4: memref<1x384xf32, #tpu.memory_space<vmem>>, %arg5: memref<128x128xbf16, #tpu.memory_space<vmem>>, %arg6: memref<1x128xf32, #tpu.memory_space<vmem>>, %arg7: memref<1x128xf32, #tpu.memory_space<vmem>>, %arg8: memref<1x128xf32, #tpu.memory_space<vmem>>, %arg9: memref<128x256xbf16, #tpu.memory_space<vmem>>, %arg10: memref<1x256xf32, #tpu.memory_space<vmem>>, %arg11: memref<256x128xbf16, #tpu.memory_space<vmem>>, %arg12: memref<1x128xf32, #tpu.memory_space<vmem>>, %arg13: memref<1x128xf32, #tpu.memory_space<vmem>>, %arg14: memref<1x128xf32, #tpu.memory_space<vmem>>, %arg15: memref<1x8x128xbf16, #tpu.memory_space<vmem>>, %arg16: memref<8x128xf32, #tpu.memory_space<vmem>>) attributes {dimension_semantics = [#tpu.dimension_semantics<parallel>], iteration_bounds = array<i64: 2>, scalar_prefetch = 0 : i64, scratch_operands = 1 : i64, tpu.core_type = #tpu.core_type<tc>, window_params = [{transform_indices = @transform_0, window_bounds = array<i64: 1, 8, 128>}, {transform_indices = @transform_1, window_bounds = array<i64: 1, 1, 8>}, {pipeline_mode = #tpu.pipeline_mode<synchronous>, transform_indices = @transform_2, window_bounds = array<i64: 128, 384>}, {pipeline_mode = #tpu.pipeline_mode<synchronous>, transform_indices = @transform_3, window_bounds = array<i64: 1, 384>}, {pipeline_mode = #tpu.pipeline_mode<synchronous>, transform_indices = @transform_4, window_bounds = array<i64: 128, 128>}, {pipeline_mode = #tpu.pipeline_mode<synchronous>, transform_indices = @transform_5, window_bounds = array<i64: 1, 128>}, {pipeline_mode = #tpu.pipeline_mode<synchronous>, transform_indices = @transform_6, window_bounds = array<i64: 1, 128>}, {pipeline_mode = #tpu.pipeline_mode<synchronous>, transform_indices = @transform_7, window_bounds = array<i64: 1, 128>}, {pipeline_mode = #tpu.pipeline_mode<synchronous>, transform_indices = @transform_8, window_bounds = array<i64: 128, 256>}, {pipeline_mode = #tpu.pipeline_mode<synchronous>, transform_indices = @transform_9, window_bounds = array<i64: 1, 256>}, {pipeline_mode = #tpu.pipeline_mode<synchronous>, transform_indices = @transform_10, window_bounds = array<i64: 256, 128>}, {pipeline_mode = #tpu.pipeline_mode<synchronous>, transform_indices = @transform_11, window_bounds = array<i64: 1, 128>}, {pipeline_mode = #tpu.pipeline_mode<synchronous>, transform_indices = @transform_12, window_bounds = array<i64: 1, 128>}, {pipeline_mode = #tpu.pipeline_mode<synchronous>, transform_indices = @transform_13, window_bounds = array<i64: 1, 128>}, {transform_indices = @transform_14, window_bounds = array<i64: 1, 8, 128>}]} {
    %c0 = arith.constant 0 : index
    %c0_0 = arith.constant 0 : index
    %c0_1 = arith.constant 0 : index
    %0 = vector.load %arg1[%c0, %c0_0, %c0_1] : memref<1x8x128xbf16, #tpu.memory_space<vmem>>, vector<1x8x128xbf16>
    %1 = vector.shape_cast %0 : vector<1x8x128xbf16> to vector<8x128xbf16>
    %2 = arith.extf %1 : vector<8x128xbf16> to vector<8x128xf32>
    %c0_2 = arith.constant 0 : index
    %c0_3 = arith.constant 0 : index
    %c0_4 = arith.constant 0 : index
    %3 = vector.load %arg2[%c0_2, %c0_3, %c0_4] : memref<1x1x8xf32, #tpu.memory_space<vmem>>, vector<1x1x8xf32>
    %4 = vector.shape_cast %3 : vector<1x1x8xf32> to vector<1x8xf32>
    %c0_5 = arith.constant 0 : index
    %c0_6 = arith.constant 0 : index
    %5 = vector.load %arg3[%c0_5, %c0_6] : memref<128x384xbf16, #tpu.memory_space<vmem>>, vector<128x384xbf16>
    %cst = arith.constant dense<0.000000e+00> : vector<8x384xf32>
    %6 = tpu.matmul %1, %5, %cst {dimension_numbers = #tpu.dot_dimension_numbers<[1], [0], [0], [1], [0, 0, 1, 1], [], []>} : vector<8x128xbf16>, vector<128x384xbf16>, vector<8x384xf32> -> vector<8x384xf32>
    %c0_7 = arith.constant 0 : index
    %c0_8 = arith.constant 0 : index
    %7 = vector.load %arg4[%c0_7, %c0_8] : memref<1x384xf32, #tpu.memory_space<vmem>>, vector<1x384xf32>
    %8 = vector.broadcast %7 : vector<1x384xf32> to vector<8x384xf32>
    %9 = arith.addf %6, %8 : vector<8x384xf32>
    %10 = vector.extract_strided_slice %9 {offsets = [0, 0], sizes = [8, 128], strides = [1, 1]} : vector<8x384xf32> to vector<8x128xf32>
    %11 = vector.extract_strided_slice %9 {offsets = [0, 128], sizes = [8, 128], strides = [1, 1]} : vector<8x384xf32> to vector<8x128xf32>
    %12 = vector.extract_strided_slice %9 {offsets = [0, 256], sizes = [8, 128], strides = [1, 1]} : vector<8x384xf32> to vector<8x128xf32>
    %c0_9 = arith.constant 0 : index
    %c0_10 = arith.constant 0 : index
    %13 = vector.load %arg5[%c0_9, %c0_10] : memref<128x128xbf16, #tpu.memory_space<vmem>>, vector<128x128xbf16>
    %c0_11 = arith.constant 0 : index
    %c0_12 = arith.constant 0 : index
    %14 = vector.load %arg6[%c0_11, %c0_12] : memref<1x128xf32, #tpu.memory_space<vmem>>, vector<1x128xf32>
    %15 = vector.extract_strided_slice %10 {offsets = [0, 0], sizes = [8, 32], strides = [1, 1]} : vector<8x128xf32> to vector<8x32xf32>
    %cst_13 = arith.constant 0.176776692 : f32
    %16 = vector.broadcast %cst_13 : f32 to vector<8x32xf32>
    %17 = arith.mulf %15, %16 : vector<8x32xf32>
    %18 = arith.truncf %17 : vector<8x32xf32> to vector<8x32xbf16>
    %19 = vector.extract_strided_slice %11 {offsets = [0, 0], sizes = [8, 32], strides = [1, 1]} : vector<8x128xf32> to vector<8x32xf32>
    %20 = arith.truncf %19 : vector<8x32xf32> to vector<8x32xbf16>
    %21 = vector.extract_strided_slice %12 {offsets = [0, 0], sizes = [8, 32], strides = [1, 1]} : vector<8x128xf32> to vector<8x32xf32>
    %22 = arith.truncf %21 : vector<8x32xf32> to vector<8x32xbf16>
    %cst_14 = arith.constant dense<0.000000e+00> : vector<8x8xf32>
    %23 = tpu.matmul %18, %20, %cst_14 {dimension_numbers = #tpu.dot_dimension_numbers<[1], [1], [0], [0], [0, 0, 1, 0], [], []>} : vector<8x32xbf16>, vector<8x32xbf16>, vector<8x8xf32> -> vector<8x8xf32>
    %24 = vector.broadcast %4 : vector<1x8xf32> to vector<8x8xf32>
    %25 = arith.addf %23, %24 : vector<8x8xf32>
    %cst_15 = arith.constant dense<0xFF800000> : vector<8xf32>
    %26 = vector.multi_reduction <maximumf>, %25, %cst_15 [1] : vector<8x8xf32> to vector<8xf32>
    %27 = vector.shape_cast %26 : vector<8xf32> to vector<8x1xf32>
    %28 = vector.broadcast %27 : vector<8x1xf32> to vector<8x8xf32>
    %29 = arith.subf %25, %28 : vector<8x8xf32>
    %30 = math.exp %29 : vector<8x8xf32>
    %cst_16 = arith.constant dense<0.000000e+00> : vector<8xf32>
    %31 = vector.multi_reduction <add>, %30, %cst_16 [1] : vector<8x8xf32> to vector<8xf32>
    %32 = vector.shape_cast %31 : vector<8xf32> to vector<8x1xf32>
    %33 = tpu.reciprocal %32 {approx = true} : vector<8x1xf32> -> vector<8x1xf32>
    %34 = vector.broadcast %33 : vector<8x1xf32> to vector<8x8xf32>
    %35 = arith.mulf %30, %34 : vector<8x8xf32>
    %36 = arith.truncf %35 : vector<8x8xf32> to vector<8x8xbf16>
    %cst_17 = arith.constant dense<0.000000e+00> : vector<8x32xf32>
    %37 = tpu.matmul %36, %22, %cst_17 {dimension_numbers = #tpu.dot_dimension_numbers<[1], [0], [0], [1], [0, 0, 1, 1], [], []>} : vector<8x8xbf16>, vector<8x32xbf16>, vector<8x32xf32> -> vector<8x32xf32>
    %c0_18 = arith.constant 0 : index
    %c0_19 = arith.constant 0 : index
    %38 = vector.load %arg16[%c0_18, %c0_19] : memref<8x128xf32, #tpu.memory_space<vmem>>, vector<8x32xf32>
    tpu.vector_store %arg16[%c0_18, %c0_19], %37 {strides = array<i32>} : memref<8x128xf32, #tpu.memory_space<vmem>>, vector<8x32xf32>,
    %39 = vector.extract_strided_slice %10 {offsets = [0, 32], sizes = [8, 32], strides = [1, 1]} : vector<8x128xf32> to vector<8x32xf32>
    %cst_20 = arith.constant 0.176776692 : f32
    %40 = vector.broadcast %cst_20 : f32 to vector<8x32xf32>
    %41 = arith.mulf %39, %40 : vector<8x32xf32>
    %42 = arith.truncf %41 : vector<8x32xf32> to vector<8x32xbf16>
    %43 = vector.extract_strided_slice %11 {offsets = [0, 32], sizes = [8, 32], strides = [1, 1]} : vector<8x128xf32> to vector<8x32xf32>
    %44 = arith.truncf %43 : vector<8x32xf32> to vector<8x32xbf16>
    %45 = vector.extract_strided_slice %12 {offsets = [0, 32], sizes = [8, 32], strides = [1, 1]} : vector<8x128xf32> to vector<8x32xf32>
    %46 = arith.truncf %45 : vector<8x32xf32> to vector<8x32xbf16>
    %cst_21 = arith.constant dense<0.000000e+00> : vector<8x8xf32>
    %47 = tpu.matmul %42, %44, %cst_21 {dimension_numbers = #tpu.dot_dimension_numbers<[1], [1], [0], [0], [0, 0, 1, 0], [], []>} : vector<8x32xbf16>, vector<8x32xbf16>, vector<8x8xf32> -> vector<8x8xf32>
    %48 = vector.broadcast %4 : vector<1x8xf32> to vector<8x8xf32>
    %49 = arith.addf %47, %48 : vector<8x8xf32>
    %cst_22 = arith.constant dense<0xFF800000> : vector<8xf32>
    %50 = vector.multi_reduction <maximumf>, %49, %cst_22 [1] : vector<8x8xf32> to vector<8xf32>
    %51 = vector.shape_cast %50 : vector<8xf32> to vector<8x1xf32>
    %52 = vector.broadcast %51 : vector<8x1xf32> to vector<8x8xf32>
    %53 = arith.subf %49, %52 : vector<8x8xf32>
    %54 = math.exp %53 : vector<8x8xf32>
    %cst_23 = arith.constant dense<0.000000e+00> : vector<8xf32>
    %55 = vector.multi_reduction <add>, %54, %cst_23 [1] : vector<8x8xf32> to vector<8xf32>
    %56 = vector.shape_cast %55 : vector<8xf32> to vector<8x1xf32>
    %57 = tpu.reciprocal %56 {approx = true} : vector<8x1xf32> -> vector<8x1xf32>
    %58 = vector.broadcast %57 : vector<8x1xf32> to vector<8x8xf32>
    %59 = arith.mulf %54, %58 : vector<8x8xf32>
    %60 = arith.truncf %59 : vector<8x8xf32> to vector<8x8xbf16>
    %cst_24 = arith.constant dense<0.000000e+00> : vector<8x32xf32>
    %61 = tpu.matmul %60, %46, %cst_24 {dimension_numbers = #tpu.dot_dimension_numbers<[1], [0], [0], [1], [0, 0, 1, 1], [], []>} : vector<8x8xbf16>, vector<8x32xbf16>, vector<8x32xf32> -> vector<8x32xf32>
    %c0_25 = arith.constant 0 : index
    %c32 = arith.constant 32 : index
    %62 = vector.load %arg16[%c0_25, %c32] : memref<8x128xf32, #tpu.memory_space<vmem>>, vector<8x32xf32>
    tpu.vector_store %arg16[%c0_25, %c32], %61 {strides = array<i32>} : memref<8x128xf32, #tpu.memory_space<vmem>>, vector<8x32xf32>,
    %63 = vector.extract_strided_slice %10 {offsets = [0, 64], sizes = [8, 32], strides = [1, 1]} : vector<8x128xf32> to vector<8x32xf32>
    %cst_26 = arith.constant 0.176776692 : f32
    %64 = vector.broadcast %cst_26 : f32 to vector<8x32xf32>
    %65 = arith.mulf %63, %64 : vector<8x32xf32>
    %66 = arith.truncf %65 : vector<8x32xf32> to vector<8x32xbf16>
    %67 = vector.extract_strided_slice %11 {offsets = [0, 64], sizes = [8, 32], strides = [1, 1]} : vector<8x128xf32> to vector<8x32xf32>
    %68 = arith.truncf %67 : vector<8x32xf32> to vector<8x32xbf16>
    %69 = vector.extract_strided_slice %12 {offsets = [0, 64], sizes = [8, 32], strides = [1, 1]} : vector<8x128xf32> to vector<8x32xf32>
    %70 = arith.truncf %69 : vector<8x32xf32> to vector<8x32xbf16>
    %cst_27 = arith.constant dense<0.000000e+00> : vector<8x8xf32>
    %71 = tpu.matmul %66, %68, %cst_27 {dimension_numbers = #tpu.dot_dimension_numbers<[1], [1], [0], [0], [0, 0, 1, 0], [], []>} : vector<8x32xbf16>, vector<8x32xbf16>, vector<8x8xf32> -> vector<8x8xf32>
    %72 = vector.broadcast %4 : vector<1x8xf32> to vector<8x8xf32>
    %73 = arith.addf %71, %72 : vector<8x8xf32>
    %cst_28 = arith.constant dense<0xFF800000> : vector<8xf32>
    %74 = vector.multi_reduction <maximumf>, %73, %cst_28 [1] : vector<8x8xf32> to vector<8xf32>
    %75 = vector.shape_cast %74 : vector<8xf32> to vector<8x1xf32>
    %76 = vector.broadcast %75 : vector<8x1xf32> to vector<8x8xf32>
    %77 = arith.subf %73, %76 : vector<8x8xf32>
    %78 = math.exp %77 : vector<8x8xf32>
    %cst_29 = arith.constant dense<0.000000e+00> : vector<8xf32>
    %79 = vector.multi_reduction <add>, %78, %cst_29 [1] : vector<8x8xf32> to vector<8xf32>
    %80 = vector.shape_cast %79 : vector<8xf32> to vector<8x1xf32>
    %81 = tpu.reciprocal %80 {approx = true} : vector<8x1xf32> -> vector<8x1xf32>
    %82 = vector.broadcast %81 : vector<8x1xf32> to vector<8x8xf32>
    %83 = arith.mulf %78, %82 : vector<8x8xf32>
    %84 = arith.truncf %83 : vector<8x8xf32> to vector<8x8xbf16>
    %cst_30 = arith.constant dense<0.000000e+00> : vector<8x32xf32>
    %85 = tpu.matmul %84, %70, %cst_30 {dimension_numbers = #tpu.dot_dimension_numbers<[1], [0], [0], [1], [0, 0, 1, 1], [], []>} : vector<8x8xbf16>, vector<8x32xbf16>, vector<8x32xf32> -> vector<8x32xf32>
    %c0_31 = arith.constant 0 : index
    %c64 = arith.constant 64 : index
    %86 = vector.load %arg16[%c0_31, %c64] : memref<8x128xf32, #tpu.memory_space<vmem>>, vector<8x32xf32>
    tpu.vector_store %arg16[%c0_31, %c64], %85 {strides = array<i32>} : memref<8x128xf32, #tpu.memory_space<vmem>>, vector<8x32xf32>,
    %87 = vector.extract_strided_slice %10 {offsets = [0, 96], sizes = [8, 32], strides = [1, 1]} : vector<8x128xf32> to vector<8x32xf32>
    %cst_32 = arith.constant 0.176776692 : f32
    %88 = vector.broadcast %cst_32 : f32 to vector<8x32xf32>
    %89 = arith.mulf %87, %88 : vector<8x32xf32>
    %90 = arith.truncf %89 : vector<8x32xf32> to vector<8x32xbf16>
    %91 = vector.extract_strided_slice %11 {offsets = [0, 96], sizes = [8, 32], strides = [1, 1]} : vector<8x128xf32> to vector<8x32xf32>
    %92 = arith.truncf %91 : vector<8x32xf32> to vector<8x32xbf16>
    %93 = vector.extract_strided_slice %12 {offsets = [0, 96], sizes = [8, 32], strides = [1, 1]} : vector<8x128xf32> to vector<8x32xf32>
    %94 = arith.truncf %93 : vector<8x32xf32> to vector<8x32xbf16>
    %cst_33 = arith.constant dense<0.000000e+00> : vector<8x8xf32>
    %95 = tpu.matmul %90, %92, %cst_33 {dimension_numbers = #tpu.dot_dimension_numbers<[1], [1], [0], [0], [0, 0, 1, 0], [], []>} : vector<8x32xbf16>, vector<8x32xbf16>, vector<8x8xf32> -> vector<8x8xf32>
    %96 = vector.broadcast %4 : vector<1x8xf32> to vector<8x8xf32>
    %97 = arith.addf %95, %96 : vector<8x8xf32>
    %cst_34 = arith.constant dense<0xFF800000> : vector<8xf32>
    %98 = vector.multi_reduction <maximumf>, %97, %cst_34 [1] : vector<8x8xf32> to vector<8xf32>
    %99 = vector.shape_cast %98 : vector<8xf32> to vector<8x1xf32>
    %100 = vector.broadcast %99 : vector<8x1xf32> to vector<8x8xf32>
    %101 = arith.subf %97, %100 : vector<8x8xf32>
    %102 = math.exp %101 : vector<8x8xf32>
    %cst_35 = arith.constant dense<0.000000e+00> : vector<8xf32>
    %103 = vector.multi_reduction <add>, %102, %cst_35 [1] : vector<8x8xf32> to vector<8xf32>
    %104 = vector.shape_cast %103 : vector<8xf32> to vector<8x1xf32>
    %105 = tpu.reciprocal %104 {approx = true} : vector<8x1xf32> -> vector<8x1xf32>
    %106 = vector.broadcast %105 : vector<8x1xf32> to vector<8x8xf32>
    %107 = arith.mulf %102, %106 : vector<8x8xf32>
    %108 = arith.truncf %107 : vector<8x8xf32> to vector<8x8xbf16>
    %cst_36 = arith.constant dense<0.000000e+00> : vector<8x32xf32>
    %109 = tpu.matmul %108, %94, %cst_36 {dimension_numbers = #tpu.dot_dimension_numbers<[1], [0], [0], [1], [0, 0, 1, 1], [], []>} : vector<8x8xbf16>, vector<8x32xbf16>, vector<8x32xf32> -> vector<8x32xf32>
    %c0_37 = arith.constant 0 : index
    %c96 = arith.constant 96 : index
    %110 = vector.load %arg16[%c0_37, %c96] : memref<8x128xf32, #tpu.memory_space<vmem>>, vector<8x32xf32>
    tpu.vector_store %arg16[%c0_37, %c96], %109 {strides = array<i32>} : memref<8x128xf32, #tpu.memory_space<vmem>>, vector<8x32xf32>,
    %c0_38 = arith.constant 0 : index
    %c0_39 = arith.constant 0 : index
    %111 = vector.load %arg16[%c0_38, %c0_39] : memref<8x128xf32, #tpu.memory_space<vmem>>, vector<8x128xf32>
    %112 = arith.truncf %111 : vector<8x128xf32> to vector<8x128xbf16>
    %cst_40 = arith.constant dense<0.000000e+00> : vector<8x128xf32>
    %113 = tpu.matmul %112, %13, %cst_40 {dimension_numbers = #tpu.dot_dimension_numbers<[1], [0], [0], [1], [0, 0, 1, 1], [], []>} : vector<8x128xbf16>, vector<128x128xbf16>, vector<8x128xf32> -> vector<8x128xf32>
    %114 = vector.broadcast %14 : vector<1x128xf32> to vector<8x128xf32>
    %115 = arith.addf %113, %114 : vector<8x128xf32>
    %116 = arith.addf %2, %115 : vector<8x128xf32>
    %c0_41 = arith.constant 0 : index
    %c0_42 = arith.constant 0 : index
    %117 = vector.load %arg7[%c0_41, %c0_42] : memref<1x128xf32, #tpu.memory_space<vmem>>, vector<1x128xf32>
    %c0_43 = arith.constant 0 : index
    %c0_44 = arith.constant 0 : index
    %118 = vector.load %arg8[%c0_43, %c0_44] : memref<1x128xf32, #tpu.memory_space<vmem>>, vector<1x128xf32>
    %cst_45 = arith.constant dense<0.000000e+00> : vector<8xf32>
    %119 = vector.multi_reduction <add>, %116, %cst_45 [1] : vector<8x128xf32> to vector<8xf32>
    %120 = vector.shape_cast %119 : vector<8xf32> to vector<8x1xf32>
    %cst_46 = arith.constant 1.280000e+02 : f32
    %121 = vector.broadcast %cst_46 : f32 to vector<8x1xf32>
    %122 = arith.divf %120, %121 : vector<8x1xf32>
    %123 = vector.broadcast %122 : vector<8x1xf32> to vector<8x128xf32>
    %124 = arith.subf %116, %123 : vector<8x128xf32>
    %125 = arith.mulf %124, %124 : vector<8x128xf32>
    %cst_47 = arith.constant dense<0.000000e+00> : vector<8xf32>
    %126 = vector.multi_reduction <add>, %125, %cst_47 [1] : vector<8x128xf32> to vector<8xf32>
    %127 = vector.shape_cast %126 : vector<8xf32> to vector<8x1xf32>
    %cst_48 = arith.constant 1.280000e+02 : f32
    %128 = vector.broadcast %cst_48 : f32 to vector<8x1xf32>
    %129 = arith.divf %127, %128 : vector<8x1xf32>
    %cst_49 = arith.constant 9.99999974E-6 : f32
    %130 = vector.broadcast %cst_49 : f32 to vector<8x1xf32>
    %131 = arith.addf %129, %130 : vector<8x1xf32>
    %132 = math.rsqrt %131 : vector<8x1xf32>
    %133 = vector.broadcast %132 : vector<8x1xf32> to vector<8x128xf32>
    %134 = arith.mulf %124, %133 : vector<8x128xf32>
    %135 = vector.broadcast %117 : vector<1x128xf32> to vector<8x128xf32>
    %136 = arith.mulf %134, %135 : vector<8x128xf32>
    %137 = vector.broadcast %118 : vector<1x128xf32> to vector<8x128xf32>
    %138 = arith.addf %136, %137 : vector<8x128xf32>
    %139 = arith.truncf %138 : vector<8x128xf32> to vector<8x128xbf16>
    %c0_50 = arith.constant 0 : index
    %c0_51 = arith.constant 0 : index
    %140 = vector.load %arg9[%c0_50, %c0_51] : memref<128x256xbf16, #tpu.memory_space<vmem>>, vector<128x256xbf16>
    %cst_52 = arith.constant dense<0.000000e+00> : vector<8x256xf32>
    %141 = tpu.matmul %139, %140, %cst_52 {dimension_numbers = #tpu.dot_dimension_numbers<[1], [0], [0], [1], [0, 0, 1, 1], [], []>} : vector<8x128xbf16>, vector<128x256xbf16>, vector<8x256xf32> -> vector<8x256xf32>
    %c0_53 = arith.constant 0 : index
    %c0_54 = arith.constant 0 : index
    %142 = vector.load %arg10[%c0_53, %c0_54] : memref<1x256xf32, #tpu.memory_space<vmem>>, vector<1x256xf32>
    %143 = vector.broadcast %142 : vector<1x256xf32> to vector<8x256xf32>
    %144 = arith.addf %141, %143 : vector<8x256xf32>
    %cst_55 = arith.constant 0.000000e+00 : f32
    %145 = vector.broadcast %cst_55 : f32 to vector<8x256xf32>
    %146 = arith.maximumf %144, %145 : vector<8x256xf32>
    %147 = arith.truncf %146 : vector<8x256xf32> to vector<8x256xbf16>
    %c0_56 = arith.constant 0 : index
    %c0_57 = arith.constant 0 : index
    %148 = vector.load %arg11[%c0_56, %c0_57] : memref<256x128xbf16, #tpu.memory_space<vmem>>, vector<256x128xbf16>
    %cst_58 = arith.constant dense<0.000000e+00> : vector<8x128xf32>
    %149 = tpu.matmul %147, %148, %cst_58 {dimension_numbers = #tpu.dot_dimension_numbers<[1], [0], [0], [1], [0, 0, 1, 1], [], []>} : vector<8x256xbf16>, vector<256x128xbf16>, vector<8x128xf32> -> vector<8x128xf32>
    %c0_59 = arith.constant 0 : index
    %c0_60 = arith.constant 0 : index
    %150 = vector.load %arg12[%c0_59, %c0_60] : memref<1x128xf32, #tpu.memory_space<vmem>>, vector<1x128xf32>
    %151 = vector.broadcast %150 : vector<1x128xf32> to vector<8x128xf32>
    %152 = arith.addf %149, %151 : vector<8x128xf32>
    %153 = arith.addf %138, %152 : vector<8x128xf32>
    %c0_61 = arith.constant 0 : index
    %c0_62 = arith.constant 0 : index
    %154 = vector.load %arg13[%c0_61, %c0_62] : memref<1x128xf32, #tpu.memory_space<vmem>>, vector<1x128xf32>
    %c0_63 = arith.constant 0 : index
    %c0_64 = arith.constant 0 : index
    %155 = vector.load %arg14[%c0_63, %c0_64] : memref<1x128xf32, #tpu.memory_space<vmem>>, vector<1x128xf32>
    %cst_65 = arith.constant dense<0.000000e+00> : vector<8xf32>
    %156 = vector.multi_reduction <add>, %153, %cst_65 [1] : vector<8x128xf32> to vector<8xf32>
    %157 = vector.shape_cast %156 : vector<8xf32> to vector<8x1xf32>
    %cst_66 = arith.constant 1.280000e+02 : f32
    %158 = vector.broadcast %cst_66 : f32 to vector<8x1xf32>
    %159 = arith.divf %157, %158 : vector<8x1xf32>
    %160 = vector.broadcast %159 : vector<8x1xf32> to vector<8x128xf32>
    %161 = arith.subf %153, %160 : vector<8x128xf32>
    %162 = arith.mulf %161, %161 : vector<8x128xf32>
    %cst_67 = arith.constant dense<0.000000e+00> : vector<8xf32>
    %163 = vector.multi_reduction <add>, %162, %cst_67 [1] : vector<8x128xf32> to vector<8xf32>
    %164 = vector.shape_cast %163 : vector<8xf32> to vector<8x1xf32>
    %cst_68 = arith.constant 1.280000e+02 : f32
    %165 = vector.broadcast %cst_68 : f32 to vector<8x1xf32>
    %166 = arith.divf %164, %165 : vector<8x1xf32>
    %cst_69 = arith.constant 9.99999974E-6 : f32
    %167 = vector.broadcast %cst_69 : f32 to vector<8x1xf32>
    %168 = arith.addf %166, %167 : vector<8x1xf32>
    %169 = math.rsqrt %168 : vector<8x1xf32>
    %170 = vector.broadcast %169 : vector<8x1xf32> to vector<8x128xf32>
    %171 = arith.mulf %161, %170 : vector<8x128xf32>
    %172 = vector.broadcast %154 : vector<1x128xf32> to vector<8x128xf32>
    %173 = arith.mulf %171, %172 : vector<8x128xf32>
    %174 = vector.broadcast %155 : vector<1x128xf32> to vector<8x128xf32>
    %175 = arith.addf %173, %174 : vector<8x128xf32>
    %176 = arith.truncf %175 : vector<8x128xf32> to vector<8x128xbf16>
    %c0_70 = arith.constant 0 : index
    %c0_71 = arith.constant 0 : index
    %c0_72 = arith.constant 0 : index
    %177 = vector.load %arg15[%c0_70, %c0_71, %c0_72] : memref<1x8x128xbf16, #tpu.memory_space<vmem>>, vector<1x8x128xbf16>
    %178 = vector.shape_cast %177 : vector<1x8x128xbf16> to vector<8x128xbf16>
    %179 = vector.shape_cast %176 : vector<8x128xbf16> to vector<1x8x128xbf16>
    tpu.vector_store %arg15[%c0_70, %c0_71, %c0_72], %179 {strides = array<i32>} : memref<1x8x128xbf16, #tpu.memory_space<vmem>>, vector<1x8x128xbf16>,
    return
  }
  func.func @transform_0(%arg0: i32) -> (i32, i32, i32) {
    %c0_i32 = arith.constant 0 : i32
    %c0_i32_0 = arith.constant 0 : i32
    %c0_i32_1 = arith.constant 0 : i32
    return %arg0, %c0_i32, %c0_i32_0 : i32, i32, i32
  }
  func.func @transform_1(%arg0: i32) -> (i32, i32, i32) {
    %c0_i32 = arith.constant 0 : i32
    %c0_i32_0 = arith.constant 0 : i32
    %c0_i32_1 = arith.constant 0 : i32
    return %arg0, %c0_i32, %c0_i32_0 : i32, i32, i32
  }
  func.func @transform_2(%arg0: i32) -> (i32, i32) {
    %c0_i32 = arith.constant 0 : i32
    %c0_i32_0 = arith.constant 0 : i32
    %c0_i32_1 = arith.constant 0 : i32
    return %c0_i32, %c0_i32_0 : i32, i32
  }
  func.func @transform_3(%arg0: i32) -> (i32, i32) {
    %c0_i32 = arith.constant 0 : i32
    %c0_i32_0 = arith.constant 0 : i32
    %c0_i32_1 = arith.constant 0 : i32
    return %c0_i32, %c0_i32_0 : i32, i32
  }
  func.func @transform_4(%arg0: i32) -> (i32, i32) {
    %c0_i32 = arith.constant 0 : i32
    %c0_i32_0 = arith.constant 0 : i32
    %c0_i32_1 = arith.constant 0 : i32
    return %c0_i32, %c0_i32_0 : i32, i32
  }
  func.func @transform_5(%arg0: i32) -> (i32, i32) {
    %c0_i32 = arith.constant 0 : i32
    %c0_i32_0 = arith.constant 0 : i32
    %c0_i32_1 = arith.constant 0 : i32
    return %c0_i32, %c0_i32_0 : i32, i32
  }
  func.func @transform_6(%arg0: i32) -> (i32, i32) {
    %c0_i32 = arith.constant 0 : i32
    %c0_i32_0 = arith.constant 0 : i32
    %c0_i32_1 = arith.constant 0 : i32
    return %c0_i32, %c0_i32_0 : i32, i32
  }
  func.func @transform_7(%arg0: i32) -> (i32, i32) {
    %c0_i32 = arith.constant 0 : i32
    %c0_i32_0 = arith.constant 0 : i32
    %c0_i32_1 = arith.constant 0 : i32
    return %c0_i32, %c0_i32_0 : i32, i32
  }
  func.func @transform_8(%arg0: i32) -> (i32, i32) {
    %c0_i32 = arith.constant 0 : i32
    %c0_i32_0 = arith.constant 0 : i32
    %c0_i32_1 = arith.constant 0 : i32
    return %c0_i32, %c0_i32_0 : i32, i32
  }
  func.func @transform_9(%arg0: i32) -> (i32, i32) {
    %c0_i32 = arith.constant 0 : i32
    %c0_i32_0 = arith.constant 0 : i32
    %c0_i32_1 = arith.constant 0 : i32
    return %c0_i32, %c0_i32_0 : i32, i32
  }
  func.func @transform_10(%arg0: i32) -> (i32, i32) {
    %c0_i32 = arith.constant 0 : i32
    %c0_i32_0 = arith.constant 0 : i32
    %c0_i32_1 = arith.constant 0 : i32
    return %c0_i32, %c0_i32_0 : i32, i32
  }
  func.func @transform_11(%arg0: i32) -> (i32, i32) {
    %c0_i32 = arith.constant 0 : i32
    %c0_i32_0 = arith.constant 0 : i32
    %c0_i32_1 = arith.constant 0 : i32
    return %c0_i32, %c0_i32_0 : i32, i32
  }
  func.func @transform_12(%arg0: i32) -> (i32, i32) {
    %c0_i32 = arith.constant 0 : i32
    %c0_i32_0 = arith.constant 0 : i32
    %c0_i32_1 = arith.constant 0 : i32
    return %c0_i32, %c0_i32_0 : i32, i32
  }
  func.func @transform_13(%arg0: i32) -> (i32, i32) {
    %c0_i32 = arith.constant 0 : i32
    %c0_i32_0 = arith.constant 0 : i32
    %c0_i32_1 = arith.constant 0 : i32
    return %c0_i32, %c0_i32_0 : i32, i32
  }
  func.func @transform_14(%arg0: i32) -> (i32, i32, i32) {
    %c0_i32 = arith.constant 0 : i32
    %c0_i32_0 = arith.constant 0 : i32
    %c0_i32_1 = arith.constant 0 : i32
    return %arg0, %c0_i32, %c0_i32_0 : i32, i32, i32
  }
}

module attributes {stable_mosaic.version = 11 : i64} {
  func.func @_decoder_layer_kernel(%arg0: i32, %arg1: memref<1x8x128xbf16, #tpu.memory_space<vmem>>, %arg2: memref<1x8x128xbf16, #tpu.memory_space<vmem>>, %arg3: memref<1x1x8xf32, #tpu.memory_space<vmem>>, %arg4: memref<1x1x8xf32, #tpu.memory_space<vmem>>, %arg5: memref<128x384xbf16, #tpu.memory_space<vmem>>, %arg6: memref<1x384xf32, #tpu.memory_space<vmem>>, %arg7: memref<128x128xbf16, #tpu.memory_space<vmem>>, %arg8: memref<1x128xf32, #tpu.memory_space<vmem>>, %arg9: memref<1x128xf32, #tpu.memory_space<vmem>>, %arg10: memref<1x128xf32, #tpu.memory_space<vmem>>, %arg11: memref<128x128xbf16, #tpu.memory_space<vmem>>, %arg12: memref<1x128xf32, #tpu.memory_space<vmem>>, %arg13: memref<128x256xbf16, #tpu.memory_space<vmem>>, %arg14: memref<1x256xf32, #tpu.memory_space<vmem>>, %arg15: memref<128x128xbf16, #tpu.memory_space<vmem>>, %arg16: memref<1x128xf32, #tpu.memory_space<vmem>>, %arg17: memref<1x128xf32, #tpu.memory_space<vmem>>, %arg18: memref<1x128xf32, #tpu.memory_space<vmem>>, %arg19: memref<128x256xbf16, #tpu.memory_space<vmem>>, %arg20: memref<1x256xf32, #tpu.memory_space<vmem>>, %arg21: memref<256x128xbf16, #tpu.memory_space<vmem>>, %arg22: memref<1x128xf32, #tpu.memory_space<vmem>>, %arg23: memref<1x128xf32, #tpu.memory_space<vmem>>, %arg24: memref<1x128xf32, #tpu.memory_space<vmem>>, %arg25: memref<1x8x128xbf16, #tpu.memory_space<vmem>>, %arg26: memref<8x128xf32, #tpu.memory_space<vmem>>) attributes {dimension_semantics = [#tpu.dimension_semantics<parallel>], iteration_bounds = array<i64: 2>, scalar_prefetch = 0 : i64, scratch_operands = 1 : i64, tpu.core_type = #tpu.core_type<tc>, window_params = [{transform_indices = @transform_0, window_bounds = array<i64: 1, 8, 128>}, {transform_indices = @transform_1, window_bounds = array<i64: 1, 8, 128>}, {transform_indices = @transform_2, window_bounds = array<i64: 1, 1, 8>}, {transform_indices = @transform_3, window_bounds = array<i64: 1, 1, 8>}, {pipeline_mode = #tpu.pipeline_mode<synchronous>, transform_indices = @transform_4, window_bounds = array<i64: 128, 384>}, {pipeline_mode = #tpu.pipeline_mode<synchronous>, transform_indices = @transform_5, window_bounds = array<i64: 1, 384>}, {pipeline_mode = #tpu.pipeline_mode<synchronous>, transform_indices = @transform_6, window_bounds = array<i64: 128, 128>}, {pipeline_mode = #tpu.pipeline_mode<synchronous>, transform_indices = @transform_7, window_bounds = array<i64: 1, 128>}, {pipeline_mode = #tpu.pipeline_mode<synchronous>, transform_indices = @transform_8, window_bounds = array<i64: 1, 128>}, {pipeline_mode = #tpu.pipeline_mode<synchronous>, transform_indices = @transform_9, window_bounds = array<i64: 1, 128>}, {pipeline_mode = #tpu.pipeline_mode<synchronous>, transform_indices = @transform_10, window_bounds = array<i64: 128, 128>}, {pipeline_mode = #tpu.pipeline_mode<synchronous>, transform_indices = @transform_11, window_bounds = array<i64: 1, 128>}, {pipeline_mode = #tpu.pipeline_mode<synchronous>, transform_indices = @transform_12, window_bounds = array<i64: 128, 256>}, {pipeline_mode = #tpu.pipeline_mode<synchronous>, transform_indices = @transform_13, window_bounds = array<i64: 1, 256>}, {pipeline_mode = #tpu.pipeline_mode<synchronous>, transform_indices = @transform_14, window_bounds = array<i64: 128, 128>}, {pipeline_mode = #tpu.pipeline_mode<synchronous>, transform_indices = @transform_15, window_bounds = array<i64: 1, 128>}, {pipeline_mode = #tpu.pipeline_mode<synchronous>, transform_indices = @transform_16, window_bounds = array<i64: 1, 128>}, {pipeline_mode = #tpu.pipeline_mode<synchronous>, transform_indices = @transform_17, window_bounds = array<i64: 1, 128>}, {pipeline_mode = #tpu.pipeline_mode<synchronous>, transform_indices = @transform_18, window_bounds = array<i64: 128, 256>}, {pipeline_mode = #tpu.pipeline_mode<synchronous>, transform_indices = @transform_19, window_bounds = array<i64: 1, 256>}, {pipeline_mode = #tpu.pipeline_mode<synchronous>, transform_indices = @transform_20, window_bounds = array<i64: 256, 128>}, {pipeline_mode = #tpu.pipeline_mode<synchronous>, transform_indices = @transform_21, window_bounds = array<i64: 1, 128>}, {pipeline_mode = #tpu.pipeline_mode<synchronous>, transform_indices = @transform_22, window_bounds = array<i64: 1, 128>}, {pipeline_mode = #tpu.pipeline_mode<synchronous>, transform_indices = @transform_23, window_bounds = array<i64: 1, 128>}, {transform_indices = @transform_24, window_bounds = array<i64: 1, 8, 128>}]} {
    %c0 = arith.constant 0 : index
    %c0_0 = arith.constant 0 : index
    %c0_1 = arith.constant 0 : index
    %0 = vector.load %arg1[%c0, %c0_0, %c0_1] : memref<1x8x128xbf16, #tpu.memory_space<vmem>>, vector<1x8x128xbf16>
    %1 = vector.shape_cast %0 : vector<1x8x128xbf16> to vector<8x128xbf16>
    %c0_2 = arith.constant 0 : index
    %c0_3 = arith.constant 0 : index
    %c0_4 = arith.constant 0 : index
    %2 = vector.load %arg2[%c0_2, %c0_3, %c0_4] : memref<1x8x128xbf16, #tpu.memory_space<vmem>>, vector<1x8x128xbf16>
    %3 = vector.shape_cast %2 : vector<1x8x128xbf16> to vector<8x128xbf16>
    %4 = arith.extf %1 : vector<8x128xbf16> to vector<8x128xf32>
    %c0_5 = arith.constant 0 : index
    %c0_6 = arith.constant 0 : index
    %c0_7 = arith.constant 0 : index
    %5 = vector.load %arg3[%c0_5, %c0_6, %c0_7] : memref<1x1x8xf32, #tpu.memory_space<vmem>>, vector<1x1x8xf32>
    %6 = vector.shape_cast %5 : vector<1x1x8xf32> to vector<1x8xf32>
    %c0_8 = arith.constant 0 : index
    %c0_9 = arith.constant 0 : index
    %c0_10 = arith.constant 0 : index
    %7 = vector.load %arg4[%c0_8, %c0_9, %c0_10] : memref<1x1x8xf32, #tpu.memory_space<vmem>>, vector<1x1x8xf32>
    %8 = vector.shape_cast %7 : vector<1x1x8xf32> to vector<1x8xf32>
    %9 = tpu.iota {dimensions = array<i32: 0>} : vector<8x8xi32>
    %10 = tpu.iota {dimensions = array<i32: 1>} : vector<8x8xi32>
    %11 = arith.cmpi sle, %10, %9 : vector<8x8xi32>
    %cst = arith.constant 0.000000e+00 : f32
    %cst_11 = arith.constant -1.000000e+09 : f32
    %12 = vector.broadcast %cst : f32 to vector<8x8xf32>
    %13 = vector.broadcast %cst_11 : f32 to vector<8x8xf32>
    %14 = arith.select %11, %12, %13 : vector<8x8xi1>, vector<8x8xf32>
    %15 = vector.broadcast %6 : vector<1x8xf32> to vector<8x8xf32>
    %16 = arith.addf %14, %15 : vector<8x8xf32>
    %c0_12 = arith.constant 0 : index
    %c0_13 = arith.constant 0 : index
    %17 = vector.load %arg5[%c0_12, %c0_13] : memref<128x384xbf16, #tpu.memory_space<vmem>>, vector<128x384xbf16>
    %cst_14 = arith.constant dense<0.000000e+00> : vector<8x384xf32>
    %18 = tpu.matmul %1, %17, %cst_14 {dimension_numbers = #tpu.dot_dimension_numbers<[1], [0], [0], [1], [0, 0, 1, 1], [], []>} : vector<8x128xbf16>, vector<128x384xbf16>, vector<8x384xf32> -> vector<8x384xf32>
    %c0_15 = arith.constant 0 : index
    %c0_16 = arith.constant 0 : index
    %19 = vector.load %arg6[%c0_15, %c0_16] : memref<1x384xf32, #tpu.memory_space<vmem>>, vector<1x384xf32>
    %20 = vector.broadcast %19 : vector<1x384xf32> to vector<8x384xf32>
    %21 = arith.addf %18, %20 : vector<8x384xf32>
    %22 = vector.extract_strided_slice %21 {offsets = [0, 0], sizes = [8, 128], strides = [1, 1]} : vector<8x384xf32> to vector<8x128xf32>
    %23 = vector.extract_strided_slice %21 {offsets = [0, 128], sizes = [8, 128], strides = [1, 1]} : vector<8x384xf32> to vector<8x128xf32>
    %24 = vector.extract_strided_slice %21 {offsets = [0, 256], sizes = [8, 128], strides = [1, 1]} : vector<8x384xf32> to vector<8x128xf32>
    %c0_17 = arith.constant 0 : index
    %c0_18 = arith.constant 0 : index
    %25 = vector.load %arg7[%c0_17, %c0_18] : memref<128x128xbf16, #tpu.memory_space<vmem>>, vector<128x128xbf16>
    %c0_19 = arith.constant 0 : index
    %c0_20 = arith.constant 0 : index
    %26 = vector.load %arg8[%c0_19, %c0_20] : memref<1x128xf32, #tpu.memory_space<vmem>>, vector<1x128xf32>
    %27 = vector.extract_strided_slice %22 {offsets = [0, 0], sizes = [8, 32], strides = [1, 1]} : vector<8x128xf32> to vector<8x32xf32>
    %cst_21 = arith.constant 0.176776692 : f32
    %28 = vector.broadcast %cst_21 : f32 to vector<8x32xf32>
    %29 = arith.mulf %27, %28 : vector<8x32xf32>
    %30 = arith.truncf %29 : vector<8x32xf32> to vector<8x32xbf16>
    %31 = vector.extract_strided_slice %23 {offsets = [0, 0], sizes = [8, 32], strides = [1, 1]} : vector<8x128xf32> to vector<8x32xf32>
    %32 = arith.truncf %31 : vector<8x32xf32> to vector<8x32xbf16>
    %33 = vector.extract_strided_slice %24 {offsets = [0, 0], sizes = [8, 32], strides = [1, 1]} : vector<8x128xf32> to vector<8x32xf32>
    %34 = arith.truncf %33 : vector<8x32xf32> to vector<8x32xbf16>
    %cst_22 = arith.constant dense<0.000000e+00> : vector<8x8xf32>
    %35 = tpu.matmul %30, %32, %cst_22 {dimension_numbers = #tpu.dot_dimension_numbers<[1], [1], [0], [0], [0, 0, 1, 0], [], []>} : vector<8x32xbf16>, vector<8x32xbf16>, vector<8x8xf32> -> vector<8x8xf32>
    %36 = arith.addf %35, %16 : vector<8x8xf32>
    %cst_23 = arith.constant dense<0xFF800000> : vector<8xf32>
    %37 = vector.multi_reduction <maximumf>, %36, %cst_23 [1] : vector<8x8xf32> to vector<8xf32>
    %38 = vector.shape_cast %37 : vector<8xf32> to vector<8x1xf32>
    %39 = vector.broadcast %38 : vector<8x1xf32> to vector<8x8xf32>
    %40 = arith.subf %36, %39 : vector<8x8xf32>
    %41 = math.exp %40 : vector<8x8xf32>
    %cst_24 = arith.constant dense<0.000000e+00> : vector<8xf32>
    %42 = vector.multi_reduction <add>, %41, %cst_24 [1] : vector<8x8xf32> to vector<8xf32>
    %43 = vector.shape_cast %42 : vector<8xf32> to vector<8x1xf32>
    %44 = tpu.reciprocal %43 {approx = true} : vector<8x1xf32> -> vector<8x1xf32>
    %45 = vector.broadcast %44 : vector<8x1xf32> to vector<8x8xf32>
    %46 = arith.mulf %41, %45 : vector<8x8xf32>
    %47 = arith.truncf %46 : vector<8x8xf32> to vector<8x8xbf16>
    %cst_25 = arith.constant dense<0.000000e+00> : vector<8x32xf32>
    %48 = tpu.matmul %47, %34, %cst_25 {dimension_numbers = #tpu.dot_dimension_numbers<[1], [0], [0], [1], [0, 0, 1, 1], [], []>} : vector<8x8xbf16>, vector<8x32xbf16>, vector<8x32xf32> -> vector<8x32xf32>
    %c0_26 = arith.constant 0 : index
    %c0_27 = arith.constant 0 : index
    %49 = vector.load %arg26[%c0_26, %c0_27] : memref<8x128xf32, #tpu.memory_space<vmem>>, vector<8x32xf32>
    tpu.vector_store %arg26[%c0_26, %c0_27], %48 {strides = array<i32>} : memref<8x128xf32, #tpu.memory_space<vmem>>, vector<8x32xf32>,
    %50 = vector.extract_strided_slice %22 {offsets = [0, 32], sizes = [8, 32], strides = [1, 1]} : vector<8x128xf32> to vector<8x32xf32>
    %cst_28 = arith.constant 0.176776692 : f32
    %51 = vector.broadcast %cst_28 : f32 to vector<8x32xf32>
    %52 = arith.mulf %50, %51 : vector<8x32xf32>
    %53 = arith.truncf %52 : vector<8x32xf32> to vector<8x32xbf16>
    %54 = vector.extract_strided_slice %23 {offsets = [0, 32], sizes = [8, 32], strides = [1, 1]} : vector<8x128xf32> to vector<8x32xf32>
    %55 = arith.truncf %54 : vector<8x32xf32> to vector<8x32xbf16>
    %56 = vector.extract_strided_slice %24 {offsets = [0, 32], sizes = [8, 32], strides = [1, 1]} : vector<8x128xf32> to vector<8x32xf32>
    %57 = arith.truncf %56 : vector<8x32xf32> to vector<8x32xbf16>
    %cst_29 = arith.constant dense<0.000000e+00> : vector<8x8xf32>
    %58 = tpu.matmul %53, %55, %cst_29 {dimension_numbers = #tpu.dot_dimension_numbers<[1], [1], [0], [0], [0, 0, 1, 0], [], []>} : vector<8x32xbf16>, vector<8x32xbf16>, vector<8x8xf32> -> vector<8x8xf32>
    %59 = arith.addf %58, %16 : vector<8x8xf32>
    %cst_30 = arith.constant dense<0xFF800000> : vector<8xf32>
    %60 = vector.multi_reduction <maximumf>, %59, %cst_30 [1] : vector<8x8xf32> to vector<8xf32>
    %61 = vector.shape_cast %60 : vector<8xf32> to vector<8x1xf32>
    %62 = vector.broadcast %61 : vector<8x1xf32> to vector<8x8xf32>
    %63 = arith.subf %59, %62 : vector<8x8xf32>
    %64 = math.exp %63 : vector<8x8xf32>
    %cst_31 = arith.constant dense<0.000000e+00> : vector<8xf32>
    %65 = vector.multi_reduction <add>, %64, %cst_31 [1] : vector<8x8xf32> to vector<8xf32>
    %66 = vector.shape_cast %65 : vector<8xf32> to vector<8x1xf32>
    %67 = tpu.reciprocal %66 {approx = true} : vector<8x1xf32> -> vector<8x1xf32>
    %68 = vector.broadcast %67 : vector<8x1xf32> to vector<8x8xf32>
    %69 = arith.mulf %64, %68 : vector<8x8xf32>
    %70 = arith.truncf %69 : vector<8x8xf32> to vector<8x8xbf16>
    %cst_32 = arith.constant dense<0.000000e+00> : vector<8x32xf32>
    %71 = tpu.matmul %70, %57, %cst_32 {dimension_numbers = #tpu.dot_dimension_numbers<[1], [0], [0], [1], [0, 0, 1, 1], [], []>} : vector<8x8xbf16>, vector<8x32xbf16>, vector<8x32xf32> -> vector<8x32xf32>
    %c0_33 = arith.constant 0 : index
    %c32 = arith.constant 32 : index
    %72 = vector.load %arg26[%c0_33, %c32] : memref<8x128xf32, #tpu.memory_space<vmem>>, vector<8x32xf32>
    tpu.vector_store %arg26[%c0_33, %c32], %71 {strides = array<i32>} : memref<8x128xf32, #tpu.memory_space<vmem>>, vector<8x32xf32>,
    %73 = vector.extract_strided_slice %22 {offsets = [0, 64], sizes = [8, 32], strides = [1, 1]} : vector<8x128xf32> to vector<8x32xf32>
    %cst_34 = arith.constant 0.176776692 : f32
    %74 = vector.broadcast %cst_34 : f32 to vector<8x32xf32>
    %75 = arith.mulf %73, %74 : vector<8x32xf32>
    %76 = arith.truncf %75 : vector<8x32xf32> to vector<8x32xbf16>
    %77 = vector.extract_strided_slice %23 {offsets = [0, 64], sizes = [8, 32], strides = [1, 1]} : vector<8x128xf32> to vector<8x32xf32>
    %78 = arith.truncf %77 : vector<8x32xf32> to vector<8x32xbf16>
    %79 = vector.extract_strided_slice %24 {offsets = [0, 64], sizes = [8, 32], strides = [1, 1]} : vector<8x128xf32> to vector<8x32xf32>
    %80 = arith.truncf %79 : vector<8x32xf32> to vector<8x32xbf16>
    %cst_35 = arith.constant dense<0.000000e+00> : vector<8x8xf32>
    %81 = tpu.matmul %76, %78, %cst_35 {dimension_numbers = #tpu.dot_dimension_numbers<[1], [1], [0], [0], [0, 0, 1, 0], [], []>} : vector<8x32xbf16>, vector<8x32xbf16>, vector<8x8xf32> -> vector<8x8xf32>
    %82 = arith.addf %81, %16 : vector<8x8xf32>
    %cst_36 = arith.constant dense<0xFF800000> : vector<8xf32>
    %83 = vector.multi_reduction <maximumf>, %82, %cst_36 [1] : vector<8x8xf32> to vector<8xf32>
    %84 = vector.shape_cast %83 : vector<8xf32> to vector<8x1xf32>
    %85 = vector.broadcast %84 : vector<8x1xf32> to vector<8x8xf32>
    %86 = arith.subf %82, %85 : vector<8x8xf32>
    %87 = math.exp %86 : vector<8x8xf32>
    %cst_37 = arith.constant dense<0.000000e+00> : vector<8xf32>
    %88 = vector.multi_reduction <add>, %87, %cst_37 [1] : vector<8x8xf32> to vector<8xf32>
    %89 = vector.shape_cast %88 : vector<8xf32> to vector<8x1xf32>
    %90 = tpu.reciprocal %89 {approx = true} : vector<8x1xf32> -> vector<8x1xf32>
    %91 = vector.broadcast %90 : vector<8x1xf32> to vector<8x8xf32>
    %92 = arith.mulf %87, %91 : vector<8x8xf32>
    %93 = arith.truncf %92 : vector<8x8xf32> to vector<8x8xbf16>
    %cst_38 = arith.constant dense<0.000000e+00> : vector<8x32xf32>
    %94 = tpu.matmul %93, %80, %cst_38 {dimension_numbers = #tpu.dot_dimension_numbers<[1], [0], [0], [1], [0, 0, 1, 1], [], []>} : vector<8x8xbf16>, vector<8x32xbf16>, vector<8x32xf32> -> vector<8x32xf32>
    %c0_39 = arith.constant 0 : index
    %c64 = arith.constant 64 : index
    %95 = vector.load %arg26[%c0_39, %c64] : memref<8x128xf32, #tpu.memory_space<vmem>>, vector<8x32xf32>
    tpu.vector_store %arg26[%c0_39, %c64], %94 {strides = array<i32>} : memref<8x128xf32, #tpu.memory_space<vmem>>, vector<8x32xf32>,
    %96 = vector.extract_strided_slice %22 {offsets = [0, 96], sizes = [8, 32], strides = [1, 1]} : vector<8x128xf32> to vector<8x32xf32>
    %cst_40 = arith.constant 0.176776692 : f32
    %97 = vector.broadcast %cst_40 : f32 to vector<8x32xf32>
    %98 = arith.mulf %96, %97 : vector<8x32xf32>
    %99 = arith.truncf %98 : vector<8x32xf32> to vector<8x32xbf16>
    %100 = vector.extract_strided_slice %23 {offsets = [0, 96], sizes = [8, 32], strides = [1, 1]} : vector<8x128xf32> to vector<8x32xf32>
    %101 = arith.truncf %100 : vector<8x32xf32> to vector<8x32xbf16>
    %102 = vector.extract_strided_slice %24 {offsets = [0, 96], sizes = [8, 32], strides = [1, 1]} : vector<8x128xf32> to vector<8x32xf32>
    %103 = arith.truncf %102 : vector<8x32xf32> to vector<8x32xbf16>
    %cst_41 = arith.constant dense<0.000000e+00> : vector<8x8xf32>
    %104 = tpu.matmul %99, %101, %cst_41 {dimension_numbers = #tpu.dot_dimension_numbers<[1], [1], [0], [0], [0, 0, 1, 0], [], []>} : vector<8x32xbf16>, vector<8x32xbf16>, vector<8x8xf32> -> vector<8x8xf32>
    %105 = arith.addf %104, %16 : vector<8x8xf32>
    %cst_42 = arith.constant dense<0xFF800000> : vector<8xf32>
    %106 = vector.multi_reduction <maximumf>, %105, %cst_42 [1] : vector<8x8xf32> to vector<8xf32>
    %107 = vector.shape_cast %106 : vector<8xf32> to vector<8x1xf32>
    %108 = vector.broadcast %107 : vector<8x1xf32> to vector<8x8xf32>
    %109 = arith.subf %105, %108 : vector<8x8xf32>
    %110 = math.exp %109 : vector<8x8xf32>
    %cst_43 = arith.constant dense<0.000000e+00> : vector<8xf32>
    %111 = vector.multi_reduction <add>, %110, %cst_43 [1] : vector<8x8xf32> to vector<8xf32>
    %112 = vector.shape_cast %111 : vector<8xf32> to vector<8x1xf32>
    %113 = tpu.reciprocal %112 {approx = true} : vector<8x1xf32> -> vector<8x1xf32>
    %114 = vector.broadcast %113 : vector<8x1xf32> to vector<8x8xf32>
    %115 = arith.mulf %110, %114 : vector<8x8xf32>
    %116 = arith.truncf %115 : vector<8x8xf32> to vector<8x8xbf16>
    %cst_44 = arith.constant dense<0.000000e+00> : vector<8x32xf32>
    %117 = tpu.matmul %116, %103, %cst_44 {dimension_numbers = #tpu.dot_dimension_numbers<[1], [0], [0], [1], [0, 0, 1, 1], [], []>} : vector<8x8xbf16>, vector<8x32xbf16>, vector<8x32xf32> -> vector<8x32xf32>
    %c0_45 = arith.constant 0 : index
    %c96 = arith.constant 96 : index
    %118 = vector.load %arg26[%c0_45, %c96] : memref<8x128xf32, #tpu.memory_space<vmem>>, vector<8x32xf32>
    tpu.vector_store %arg26[%c0_45, %c96], %117 {strides = array<i32>} : memref<8x128xf32, #tpu.memory_space<vmem>>, vector<8x32xf32>,
    %c0_46 = arith.constant 0 : index
    %c0_47 = arith.constant 0 : index
    %119 = vector.load %arg26[%c0_46, %c0_47] : memref<8x128xf32, #tpu.memory_space<vmem>>, vector<8x128xf32>
    %120 = arith.truncf %119 : vector<8x128xf32> to vector<8x128xbf16>
    %cst_48 = arith.constant dense<0.000000e+00> : vector<8x128xf32>
    %121 = tpu.matmul %120, %25, %cst_48 {dimension_numbers = #tpu.dot_dimension_numbers<[1], [0], [0], [1], [0, 0, 1, 1], [], []>} : vector<8x128xbf16>, vector<128x128xbf16>, vector<8x128xf32> -> vector<8x128xf32>
    %122 = vector.broadcast %26 : vector<1x128xf32> to vector<8x128xf32>
    %123 = arith.addf %121, %122 : vector<8x128xf32>
    %124 = arith.addf %4, %123 : vector<8x128xf32>
    %c0_49 = arith.constant 0 : index
    %c0_50 = arith.constant 0 : index
    %125 = vector.load %arg9[%c0_49, %c0_50] : memref<1x128xf32, #tpu.memory_space<vmem>>, vector<1x128xf32>
    %c0_51 = arith.constant 0 : index
    %c0_52 = arith.constant 0 : index
    %126 = vector.load %arg10[%c0_51, %c0_52] : memref<1x128xf32, #tpu.memory_space<vmem>>, vector<1x128xf32>
    %cst_53 = arith.constant dense<0.000000e+00> : vector<8xf32>
    %127 = vector.multi_reduction <add>, %124, %cst_53 [1] : vector<8x128xf32> to vector<8xf32>
    %128 = vector.shape_cast %127 : vector<8xf32> to vector<8x1xf32>
    %cst_54 = arith.constant 1.280000e+02 : f32
    %129 = vector.broadcast %cst_54 : f32 to vector<8x1xf32>
    %130 = arith.divf %128, %129 : vector<8x1xf32>
    %131 = vector.broadcast %130 : vector<8x1xf32> to vector<8x128xf32>
    %132 = arith.subf %124, %131 : vector<8x128xf32>
    %133 = arith.mulf %132, %132 : vector<8x128xf32>
    %cst_55 = arith.constant dense<0.000000e+00> : vector<8xf32>
    %134 = vector.multi_reduction <add>, %133, %cst_55 [1] : vector<8x128xf32> to vector<8xf32>
    %135 = vector.shape_cast %134 : vector<8xf32> to vector<8x1xf32>
    %cst_56 = arith.constant 1.280000e+02 : f32
    %136 = vector.broadcast %cst_56 : f32 to vector<8x1xf32>
    %137 = arith.divf %135, %136 : vector<8x1xf32>
    %cst_57 = arith.constant 9.99999974E-6 : f32
    %138 = vector.broadcast %cst_57 : f32 to vector<8x1xf32>
    %139 = arith.addf %137, %138 : vector<8x1xf32>
    %140 = math.rsqrt %139 : vector<8x1xf32>
    %141 = vector.broadcast %140 : vector<8x1xf32> to vector<8x128xf32>
    %142 = arith.mulf %132, %141 : vector<8x128xf32>
    %143 = vector.broadcast %125 : vector<1x128xf32> to vector<8x128xf32>
    %144 = arith.mulf %142, %143 : vector<8x128xf32>
    %145 = vector.broadcast %126 : vector<1x128xf32> to vector<8x128xf32>
    %146 = arith.addf %144, %145 : vector<8x128xf32>
    %147 = arith.truncf %146 : vector<8x128xf32> to vector<8x128xbf16>
    %c0_58 = arith.constant 0 : index
    %c0_59 = arith.constant 0 : index
    %148 = vector.load %arg11[%c0_58, %c0_59] : memref<128x128xbf16, #tpu.memory_space<vmem>>, vector<128x128xbf16>
    %cst_60 = arith.constant dense<0.000000e+00> : vector<8x128xf32>
    %149 = tpu.matmul %147, %148, %cst_60 {dimension_numbers = #tpu.dot_dimension_numbers<[1], [0], [0], [1], [0, 0, 1, 1], [], []>} : vector<8x128xbf16>, vector<128x128xbf16>, vector<8x128xf32> -> vector<8x128xf32>
    %c0_61 = arith.constant 0 : index
    %c0_62 = arith.constant 0 : index
    %150 = vector.load %arg12[%c0_61, %c0_62] : memref<1x128xf32, #tpu.memory_space<vmem>>, vector<1x128xf32>
    %151 = vector.broadcast %150 : vector<1x128xf32> to vector<8x128xf32>
    %152 = arith.addf %149, %151 : vector<8x128xf32>
    %c0_63 = arith.constant 0 : index
    %c0_64 = arith.constant 0 : index
    %153 = vector.load %arg13[%c0_63, %c0_64] : memref<128x256xbf16, #tpu.memory_space<vmem>>, vector<128x256xbf16>
    %cst_65 = arith.constant dense<0.000000e+00> : vector<8x256xf32>
    %154 = tpu.matmul %3, %153, %cst_65 {dimension_numbers = #tpu.dot_dimension_numbers<[1], [0], [0], [1], [0, 0, 1, 1], [], []>} : vector<8x128xbf16>, vector<128x256xbf16>, vector<8x256xf32> -> vector<8x256xf32>
    %c0_66 = arith.constant 0 : index
    %c0_67 = arith.constant 0 : index
    %155 = vector.load %arg14[%c0_66, %c0_67] : memref<1x256xf32, #tpu.memory_space<vmem>>, vector<1x256xf32>
    %156 = vector.broadcast %155 : vector<1x256xf32> to vector<8x256xf32>
    %157 = arith.addf %154, %156 : vector<8x256xf32>
    %158 = vector.extract_strided_slice %157 {offsets = [0, 0], sizes = [8, 128], strides = [1, 1]} : vector<8x256xf32> to vector<8x128xf32>
    %159 = vector.extract_strided_slice %157 {offsets = [0, 128], sizes = [8, 128], strides = [1, 1]} : vector<8x256xf32> to vector<8x128xf32>
    %c0_68 = arith.constant 0 : index
    %c0_69 = arith.constant 0 : index
    %160 = vector.load %arg15[%c0_68, %c0_69] : memref<128x128xbf16, #tpu.memory_space<vmem>>, vector<128x128xbf16>
    %c0_70 = arith.constant 0 : index
    %c0_71 = arith.constant 0 : index
    %161 = vector.load %arg16[%c0_70, %c0_71] : memref<1x128xf32, #tpu.memory_space<vmem>>, vector<1x128xf32>
    %162 = vector.extract_strided_slice %152 {offsets = [0, 0], sizes = [8, 32], strides = [1, 1]} : vector<8x128xf32> to vector<8x32xf32>
    %cst_72 = arith.constant 0.176776692 : f32
    %163 = vector.broadcast %cst_72 : f32 to vector<8x32xf32>
    %164 = arith.mulf %162, %163 : vector<8x32xf32>
    %165 = arith.truncf %164 : vector<8x32xf32> to vector<8x32xbf16>
    %166 = vector.extract_strided_slice %158 {offsets = [0, 0], sizes = [8, 32], strides = [1, 1]} : vector<8x128xf32> to vector<8x32xf32>
    %167 = arith.truncf %166 : vector<8x32xf32> to vector<8x32xbf16>
    %168 = vector.extract_strided_slice %159 {offsets = [0, 0], sizes = [8, 32], strides = [1, 1]} : vector<8x128xf32> to vector<8x32xf32>
    %169 = arith.truncf %168 : vector<8x32xf32> to vector<8x32xbf16>
    %cst_73 = arith.constant dense<0.000000e+00> : vector<8x8xf32>
    %170 = tpu.matmul %165, %167, %cst_73 {dimension_numbers = #tpu.dot_dimension_numbers<[1], [1], [0], [0], [0, 0, 1, 0], [], []>} : vector<8x32xbf16>, vector<8x32xbf16>, vector<8x8xf32> -> vector<8x8xf32>
    %171 = vector.broadcast %8 : vector<1x8xf32> to vector<8x8xf32>
    %172 = arith.addf %170, %171 : vector<8x8xf32>
    %cst_74 = arith.constant dense<0xFF800000> : vector<8xf32>
    %173 = vector.multi_reduction <maximumf>, %172, %cst_74 [1] : vector<8x8xf32> to vector<8xf32>
    %174 = vector.shape_cast %173 : vector<8xf32> to vector<8x1xf32>
    %175 = vector.broadcast %174 : vector<8x1xf32> to vector<8x8xf32>
    %176 = arith.subf %172, %175 : vector<8x8xf32>
    %177 = math.exp %176 : vector<8x8xf32>
    %cst_75 = arith.constant dense<0.000000e+00> : vector<8xf32>
    %178 = vector.multi_reduction <add>, %177, %cst_75 [1] : vector<8x8xf32> to vector<8xf32>
    %179 = vector.shape_cast %178 : vector<8xf32> to vector<8x1xf32>
    %180 = tpu.reciprocal %179 {approx = true} : vector<8x1xf32> -> vector<8x1xf32>
    %181 = vector.broadcast %180 : vector<8x1xf32> to vector<8x8xf32>
    %182 = arith.mulf %177, %181 : vector<8x8xf32>
    %183 = arith.truncf %182 : vector<8x8xf32> to vector<8x8xbf16>
    %cst_76 = arith.constant dense<0.000000e+00> : vector<8x32xf32>
    %184 = tpu.matmul %183, %169, %cst_76 {dimension_numbers = #tpu.dot_dimension_numbers<[1], [0], [0], [1], [0, 0, 1, 1], [], []>} : vector<8x8xbf16>, vector<8x32xbf16>, vector<8x32xf32> -> vector<8x32xf32>
    %c0_77 = arith.constant 0 : index
    %c0_78 = arith.constant 0 : index
    %185 = vector.load %arg26[%c0_77, %c0_78] : memref<8x128xf32, #tpu.memory_space<vmem>>, vector<8x32xf32>
    tpu.vector_store %arg26[%c0_77, %c0_78], %184 {strides = array<i32>} : memref<8x128xf32, #tpu.memory_space<vmem>>, vector<8x32xf32>,
    %186 = vector.extract_strided_slice %152 {offsets = [0, 32], sizes = [8, 32], strides = [1, 1]} : vector<8x128xf32> to vector<8x32xf32>
    %cst_79 = arith.constant 0.176776692 : f32
    %187 = vector.broadcast %cst_79 : f32 to vector<8x32xf32>
    %188 = arith.mulf %186, %187 : vector<8x32xf32>
    %189 = arith.truncf %188 : vector<8x32xf32> to vector<8x32xbf16>
    %190 = vector.extract_strided_slice %158 {offsets = [0, 32], sizes = [8, 32], strides = [1, 1]} : vector<8x128xf32> to vector<8x32xf32>
    %191 = arith.truncf %190 : vector<8x32xf32> to vector<8x32xbf16>
    %192 = vector.extract_strided_slice %159 {offsets = [0, 32], sizes = [8, 32], strides = [1, 1]} : vector<8x128xf32> to vector<8x32xf32>
    %193 = arith.truncf %192 : vector<8x32xf32> to vector<8x32xbf16>
    %cst_80 = arith.constant dense<0.000000e+00> : vector<8x8xf32>
    %194 = tpu.matmul %189, %191, %cst_80 {dimension_numbers = #tpu.dot_dimension_numbers<[1], [1], [0], [0], [0, 0, 1, 0], [], []>} : vector<8x32xbf16>, vector<8x32xbf16>, vector<8x8xf32> -> vector<8x8xf32>
    %195 = vector.broadcast %8 : vector<1x8xf32> to vector<8x8xf32>
    %196 = arith.addf %194, %195 : vector<8x8xf32>
    %cst_81 = arith.constant dense<0xFF800000> : vector<8xf32>
    %197 = vector.multi_reduction <maximumf>, %196, %cst_81 [1] : vector<8x8xf32> to vector<8xf32>
    %198 = vector.shape_cast %197 : vector<8xf32> to vector<8x1xf32>
    %199 = vector.broadcast %198 : vector<8x1xf32> to vector<8x8xf32>
    %200 = arith.subf %196, %199 : vector<8x8xf32>
    %201 = math.exp %200 : vector<8x8xf32>
    %cst_82 = arith.constant dense<0.000000e+00> : vector<8xf32>
    %202 = vector.multi_reduction <add>, %201, %cst_82 [1] : vector<8x8xf32> to vector<8xf32>
    %203 = vector.shape_cast %202 : vector<8xf32> to vector<8x1xf32>
    %204 = tpu.reciprocal %203 {approx = true} : vector<8x1xf32> -> vector<8x1xf32>
    %205 = vector.broadcast %204 : vector<8x1xf32> to vector<8x8xf32>
    %206 = arith.mulf %201, %205 : vector<8x8xf32>
    %207 = arith.truncf %206 : vector<8x8xf32> to vector<8x8xbf16>
    %cst_83 = arith.constant dense<0.000000e+00> : vector<8x32xf32>
    %208 = tpu.matmul %207, %193, %cst_83 {dimension_numbers = #tpu.dot_dimension_numbers<[1], [0], [0], [1], [0, 0, 1, 1], [], []>} : vector<8x8xbf16>, vector<8x32xbf16>, vector<8x32xf32> -> vector<8x32xf32>
    %c0_84 = arith.constant 0 : index
    %c32_85 = arith.constant 32 : index
    %209 = vector.load %arg26[%c0_84, %c32_85] : memref<8x128xf32, #tpu.memory_space<vmem>>, vector<8x32xf32>
    tpu.vector_store %arg26[%c0_84, %c32_85], %208 {strides = array<i32>} : memref<8x128xf32, #tpu.memory_space<vmem>>, vector<8x32xf32>,
    %210 = vector.extract_strided_slice %152 {offsets = [0, 64], sizes = [8, 32], strides = [1, 1]} : vector<8x128xf32> to vector<8x32xf32>
    %cst_86 = arith.constant 0.176776692 : f32
    %211 = vector.broadcast %cst_86 : f32 to vector<8x32xf32>
    %212 = arith.mulf %210, %211 : vector<8x32xf32>
    %213 = arith.truncf %212 : vector<8x32xf32> to vector<8x32xbf16>
    %214 = vector.extract_strided_slice %158 {offsets = [0, 64], sizes = [8, 32], strides = [1, 1]} : vector<8x128xf32> to vector<8x32xf32>
    %215 = arith.truncf %214 : vector<8x32xf32> to vector<8x32xbf16>
    %216 = vector.extract_strided_slice %159 {offsets = [0, 64], sizes = [8, 32], strides = [1, 1]} : vector<8x128xf32> to vector<8x32xf32>
    %217 = arith.truncf %216 : vector<8x32xf32> to vector<8x32xbf16>
    %cst_87 = arith.constant dense<0.000000e+00> : vector<8x8xf32>
    %218 = tpu.matmul %213, %215, %cst_87 {dimension_numbers = #tpu.dot_dimension_numbers<[1], [1], [0], [0], [0, 0, 1, 0], [], []>} : vector<8x32xbf16>, vector<8x32xbf16>, vector<8x8xf32> -> vector<8x8xf32>
    %219 = vector.broadcast %8 : vector<1x8xf32> to vector<8x8xf32>
    %220 = arith.addf %218, %219 : vector<8x8xf32>
    %cst_88 = arith.constant dense<0xFF800000> : vector<8xf32>
    %221 = vector.multi_reduction <maximumf>, %220, %cst_88 [1] : vector<8x8xf32> to vector<8xf32>
    %222 = vector.shape_cast %221 : vector<8xf32> to vector<8x1xf32>
    %223 = vector.broadcast %222 : vector<8x1xf32> to vector<8x8xf32>
    %224 = arith.subf %220, %223 : vector<8x8xf32>
    %225 = math.exp %224 : vector<8x8xf32>
    %cst_89 = arith.constant dense<0.000000e+00> : vector<8xf32>
    %226 = vector.multi_reduction <add>, %225, %cst_89 [1] : vector<8x8xf32> to vector<8xf32>
    %227 = vector.shape_cast %226 : vector<8xf32> to vector<8x1xf32>
    %228 = tpu.reciprocal %227 {approx = true} : vector<8x1xf32> -> vector<8x1xf32>
    %229 = vector.broadcast %228 : vector<8x1xf32> to vector<8x8xf32>
    %230 = arith.mulf %225, %229 : vector<8x8xf32>
    %231 = arith.truncf %230 : vector<8x8xf32> to vector<8x8xbf16>
    %cst_90 = arith.constant dense<0.000000e+00> : vector<8x32xf32>
    %232 = tpu.matmul %231, %217, %cst_90 {dimension_numbers = #tpu.dot_dimension_numbers<[1], [0], [0], [1], [0, 0, 1, 1], [], []>} : vector<8x8xbf16>, vector<8x32xbf16>, vector<8x32xf32> -> vector<8x32xf32>
    %c0_91 = arith.constant 0 : index
    %c64_92 = arith.constant 64 : index
    %233 = vector.load %arg26[%c0_91, %c64_92] : memref<8x128xf32, #tpu.memory_space<vmem>>, vector<8x32xf32>
    tpu.vector_store %arg26[%c0_91, %c64_92], %232 {strides = array<i32>} : memref<8x128xf32, #tpu.memory_space<vmem>>, vector<8x32xf32>,
    %234 = vector.extract_strided_slice %152 {offsets = [0, 96], sizes = [8, 32], strides = [1, 1]} : vector<8x128xf32> to vector<8x32xf32>
    %cst_93 = arith.constant 0.176776692 : f32
    %235 = vector.broadcast %cst_93 : f32 to vector<8x32xf32>
    %236 = arith.mulf %234, %235 : vector<8x32xf32>
    %237 = arith.truncf %236 : vector<8x32xf32> to vector<8x32xbf16>
    %238 = vector.extract_strided_slice %158 {offsets = [0, 96], sizes = [8, 32], strides = [1, 1]} : vector<8x128xf32> to vector<8x32xf32>
    %239 = arith.truncf %238 : vector<8x32xf32> to vector<8x32xbf16>
    %240 = vector.extract_strided_slice %159 {offsets = [0, 96], sizes = [8, 32], strides = [1, 1]} : vector<8x128xf32> to vector<8x32xf32>
    %241 = arith.truncf %240 : vector<8x32xf32> to vector<8x32xbf16>
    %cst_94 = arith.constant dense<0.000000e+00> : vector<8x8xf32>
    %242 = tpu.matmul %237, %239, %cst_94 {dimension_numbers = #tpu.dot_dimension_numbers<[1], [1], [0], [0], [0, 0, 1, 0], [], []>} : vector<8x32xbf16>, vector<8x32xbf16>, vector<8x8xf32> -> vector<8x8xf32>
    %243 = vector.broadcast %8 : vector<1x8xf32> to vector<8x8xf32>
    %244 = arith.addf %242, %243 : vector<8x8xf32>
    %cst_95 = arith.constant dense<0xFF800000> : vector<8xf32>
    %245 = vector.multi_reduction <maximumf>, %244, %cst_95 [1] : vector<8x8xf32> to vector<8xf32>
    %246 = vector.shape_cast %245 : vector<8xf32> to vector<8x1xf32>
    %247 = vector.broadcast %246 : vector<8x1xf32> to vector<8x8xf32>
    %248 = arith.subf %244, %247 : vector<8x8xf32>
    %249 = math.exp %248 : vector<8x8xf32>
    %cst_96 = arith.constant dense<0.000000e+00> : vector<8xf32>
    %250 = vector.multi_reduction <add>, %249, %cst_96 [1] : vector<8x8xf32> to vector<8xf32>
    %251 = vector.shape_cast %250 : vector<8xf32> to vector<8x1xf32>
    %252 = tpu.reciprocal %251 {approx = true} : vector<8x1xf32> -> vector<8x1xf32>
    %253 = vector.broadcast %252 : vector<8x1xf32> to vector<8x8xf32>
    %254 = arith.mulf %249, %253 : vector<8x8xf32>
    %255 = arith.truncf %254 : vector<8x8xf32> to vector<8x8xbf16>
    %cst_97 = arith.constant dense<0.000000e+00> : vector<8x32xf32>
    %256 = tpu.matmul %255, %241, %cst_97 {dimension_numbers = #tpu.dot_dimension_numbers<[1], [0], [0], [1], [0, 0, 1, 1], [], []>} : vector<8x8xbf16>, vector<8x32xbf16>, vector<8x32xf32> -> vector<8x32xf32>
    %c0_98 = arith.constant 0 : index
    %c96_99 = arith.constant 96 : index
    %257 = vector.load %arg26[%c0_98, %c96_99] : memref<8x128xf32, #tpu.memory_space<vmem>>, vector<8x32xf32>
    tpu.vector_store %arg26[%c0_98, %c96_99], %256 {strides = array<i32>} : memref<8x128xf32, #tpu.memory_space<vmem>>, vector<8x32xf32>,
    %c0_100 = arith.constant 0 : index
    %c0_101 = arith.constant 0 : index
    %258 = vector.load %arg26[%c0_100, %c0_101] : memref<8x128xf32, #tpu.memory_space<vmem>>, vector<8x128xf32>
    %259 = arith.truncf %258 : vector<8x128xf32> to vector<8x128xbf16>
    %cst_102 = arith.constant dense<0.000000e+00> : vector<8x128xf32>
    %260 = tpu.matmul %259, %160, %cst_102 {dimension_numbers = #tpu.dot_dimension_numbers<[1], [0], [0], [1], [0, 0, 1, 1], [], []>} : vector<8x128xbf16>, vector<128x128xbf16>, vector<8x128xf32> -> vector<8x128xf32>
    %261 = vector.broadcast %161 : vector<1x128xf32> to vector<8x128xf32>
    %262 = arith.addf %260, %261 : vector<8x128xf32>
    %263 = arith.addf %146, %262 : vector<8x128xf32>
    %c0_103 = arith.constant 0 : index
    %c0_104 = arith.constant 0 : index
    %264 = vector.load %arg17[%c0_103, %c0_104] : memref<1x128xf32, #tpu.memory_space<vmem>>, vector<1x128xf32>
    %c0_105 = arith.constant 0 : index
    %c0_106 = arith.constant 0 : index
    %265 = vector.load %arg18[%c0_105, %c0_106] : memref<1x128xf32, #tpu.memory_space<vmem>>, vector<1x128xf32>
    %cst_107 = arith.constant dense<0.000000e+00> : vector<8xf32>
    %266 = vector.multi_reduction <add>, %263, %cst_107 [1] : vector<8x128xf32> to vector<8xf32>
    %267 = vector.shape_cast %266 : vector<8xf32> to vector<8x1xf32>
    %cst_108 = arith.constant 1.280000e+02 : f32
    %268 = vector.broadcast %cst_108 : f32 to vector<8x1xf32>
    %269 = arith.divf %267, %268 : vector<8x1xf32>
    %270 = vector.broadcast %269 : vector<8x1xf32> to vector<8x128xf32>
    %271 = arith.subf %263, %270 : vector<8x128xf32>
    %272 = arith.mulf %271, %271 : vector<8x128xf32>
    %cst_109 = arith.constant dense<0.000000e+00> : vector<8xf32>
    %273 = vector.multi_reduction <add>, %272, %cst_109 [1] : vector<8x128xf32> to vector<8xf32>
    %274 = vector.shape_cast %273 : vector<8xf32> to vector<8x1xf32>
    %cst_110 = arith.constant 1.280000e+02 : f32
    %275 = vector.broadcast %cst_110 : f32 to vector<8x1xf32>
    %276 = arith.divf %274, %275 : vector<8x1xf32>
    %cst_111 = arith.constant 9.99999974E-6 : f32
    %277 = vector.broadcast %cst_111 : f32 to vector<8x1xf32>
    %278 = arith.addf %276, %277 : vector<8x1xf32>
    %279 = math.rsqrt %278 : vector<8x1xf32>
    %280 = vector.broadcast %279 : vector<8x1xf32> to vector<8x128xf32>
    %281 = arith.mulf %271, %280 : vector<8x128xf32>
    %282 = vector.broadcast %264 : vector<1x128xf32> to vector<8x128xf32>
    %283 = arith.mulf %281, %282 : vector<8x128xf32>
    %284 = vector.broadcast %265 : vector<1x128xf32> to vector<8x128xf32>
    %285 = arith.addf %283, %284 : vector<8x128xf32>
    %286 = arith.truncf %285 : vector<8x128xf32> to vector<8x128xbf16>
    %c0_112 = arith.constant 0 : index
    %c0_113 = arith.constant 0 : index
    %287 = vector.load %arg19[%c0_112, %c0_113] : memref<128x256xbf16, #tpu.memory_space<vmem>>, vector<128x256xbf16>
    %cst_114 = arith.constant dense<0.000000e+00> : vector<8x256xf32>
    %288 = tpu.matmul %286, %287, %cst_114 {dimension_numbers = #tpu.dot_dimension_numbers<[1], [0], [0], [1], [0, 0, 1, 1], [], []>} : vector<8x128xbf16>, vector<128x256xbf16>, vector<8x256xf32> -> vector<8x256xf32>
    %c0_115 = arith.constant 0 : index
    %c0_116 = arith.constant 0 : index
    %289 = vector.load %arg20[%c0_115, %c0_116] : memref<1x256xf32, #tpu.memory_space<vmem>>, vector<1x256xf32>
    %290 = vector.broadcast %289 : vector<1x256xf32> to vector<8x256xf32>
    %291 = arith.addf %288, %290 : vector<8x256xf32>
    %cst_117 = arith.constant 0.000000e+00 : f32
    %292 = vector.broadcast %cst_117 : f32 to vector<8x256xf32>
    %293 = arith.maximumf %291, %292 : vector<8x256xf32>
    %294 = arith.truncf %293 : vector<8x256xf32> to vector<8x256xbf16>
    %c0_118 = arith.constant 0 : index
    %c0_119 = arith.constant 0 : index
    %295 = vector.load %arg21[%c0_118, %c0_119] : memref<256x128xbf16, #tpu.memory_space<vmem>>, vector<256x128xbf16>
    %cst_120 = arith.constant dense<0.000000e+00> : vector<8x128xf32>
    %296 = tpu.matmul %294, %295, %cst_120 {dimension_numbers = #tpu.dot_dimension_numbers<[1], [0], [0], [1], [0, 0, 1, 1], [], []>} : vector<8x256xbf16>, vector<256x128xbf16>, vector<8x128xf32> -> vector<8x128xf32>
    %c0_121 = arith.constant 0 : index
    %c0_122 = arith.constant 0 : index
    %297 = vector.load %arg22[%c0_121, %c0_122] : memref<1x128xf32, #tpu.memory_space<vmem>>, vector<1x128xf32>
    %298 = vector.broadcast %297 : vector<1x128xf32> to vector<8x128xf32>
    %299 = arith.addf %296, %298 : vector<8x128xf32>
    %300 = arith.addf %285, %299 : vector<8x128xf32>
    %c0_123 = arith.constant 0 : index
    %c0_124 = arith.constant 0 : index
    %301 = vector.load %arg23[%c0_123, %c0_124] : memref<1x128xf32, #tpu.memory_space<vmem>>, vector<1x128xf32>
    %c0_125 = arith.constant 0 : index
    %c0_126 = arith.constant 0 : index
    %302 = vector.load %arg24[%c0_125, %c0_126] : memref<1x128xf32, #tpu.memory_space<vmem>>, vector<1x128xf32>
    %cst_127 = arith.constant dense<0.000000e+00> : vector<8xf32>
    %303 = vector.multi_reduction <add>, %300, %cst_127 [1] : vector<8x128xf32> to vector<8xf32>
    %304 = vector.shape_cast %303 : vector<8xf32> to vector<8x1xf32>
    %cst_128 = arith.constant 1.280000e+02 : f32
    %305 = vector.broadcast %cst_128 : f32 to vector<8x1xf32>
    %306 = arith.divf %304, %305 : vector<8x1xf32>
    %307 = vector.broadcast %306 : vector<8x1xf32> to vector<8x128xf32>
    %308 = arith.subf %300, %307 : vector<8x128xf32>
    %309 = arith.mulf %308, %308 : vector<8x128xf32>
    %cst_129 = arith.constant dense<0.000000e+00> : vector<8xf32>
    %310 = vector.multi_reduction <add>, %309, %cst_129 [1] : vector<8x128xf32> to vector<8xf32>
    %311 = vector.shape_cast %310 : vector<8xf32> to vector<8x1xf32>
    %cst_130 = arith.constant 1.280000e+02 : f32
    %312 = vector.broadcast %cst_130 : f32 to vector<8x1xf32>
    %313 = arith.divf %311, %312 : vector<8x1xf32>
    %cst_131 = arith.constant 9.99999974E-6 : f32
    %314 = vector.broadcast %cst_131 : f32 to vector<8x1xf32>
    %315 = arith.addf %313, %314 : vector<8x1xf32>
    %316 = math.rsqrt %315 : vector<8x1xf32>
    %317 = vector.broadcast %316 : vector<8x1xf32> to vector<8x128xf32>
    %318 = arith.mulf %308, %317 : vector<8x128xf32>
    %319 = vector.broadcast %301 : vector<1x128xf32> to vector<8x128xf32>
    %320 = arith.mulf %318, %319 : vector<8x128xf32>
    %321 = vector.broadcast %302 : vector<1x128xf32> to vector<8x128xf32>
    %322 = arith.addf %320, %321 : vector<8x128xf32>
    %323 = arith.truncf %322 : vector<8x128xf32> to vector<8x128xbf16>
    %c0_132 = arith.constant 0 : index
    %c0_133 = arith.constant 0 : index
    %c0_134 = arith.constant 0 : index
    %324 = vector.load %arg25[%c0_132, %c0_133, %c0_134] : memref<1x8x128xbf16, #tpu.memory_space<vmem>>, vector<1x8x128xbf16>
    %325 = vector.shape_cast %324 : vector<1x8x128xbf16> to vector<8x128xbf16>
    %326 = vector.shape_cast %323 : vector<8x128xbf16> to vector<1x8x128xbf16>
    tpu.vector_store %arg25[%c0_132, %c0_133, %c0_134], %326 {strides = array<i32>} : memref<1x8x128xbf16, #tpu.memory_space<vmem>>, vector<1x8x128xbf16>,
    return
  }
  func.func @transform_0(%arg0: i32) -> (i32, i32, i32) {
    %c0_i32 = arith.constant 0 : i32
    %c0_i32_0 = arith.constant 0 : i32
    %c0_i32_1 = arith.constant 0 : i32
    return %arg0, %c0_i32, %c0_i32_0 : i32, i32, i32
  }
  func.func @transform_1(%arg0: i32) -> (i32, i32, i32) {
    %c0_i32 = arith.constant 0 : i32
    %c0_i32_0 = arith.constant 0 : i32
    %c0_i32_1 = arith.constant 0 : i32
    return %arg0, %c0_i32, %c0_i32_0 : i32, i32, i32
  }
  func.func @transform_2(%arg0: i32) -> (i32, i32, i32) {
    %c0_i32 = arith.constant 0 : i32
    %c0_i32_0 = arith.constant 0 : i32
    %c0_i32_1 = arith.constant 0 : i32
    return %arg0, %c0_i32, %c0_i32_0 : i32, i32, i32
  }
  func.func @transform_3(%arg0: i32) -> (i32, i32, i32) {
    %c0_i32 = arith.constant 0 : i32
    %c0_i32_0 = arith.constant 0 : i32
    %c0_i32_1 = arith.constant 0 : i32
    return %arg0, %c0_i32, %c0_i32_0 : i32, i32, i32
  }
  func.func @transform_4(%arg0: i32) -> (i32, i32) {
    %c0_i32 = arith.constant 0 : i32
    %c0_i32_0 = arith.constant 0 : i32
    %c0_i32_1 = arith.constant 0 : i32
    return %c0_i32, %c0_i32_0 : i32, i32
  }
  func.func @transform_5(%arg0: i32) -> (i32, i32) {
    %c0_i32 = arith.constant 0 : i32
    %c0_i32_0 = arith.constant 0 : i32
    %c0_i32_1 = arith.constant 0 : i32
    return %c0_i32, %c0_i32_0 : i32, i32
  }
  func.func @transform_6(%arg0: i32) -> (i32, i32) {
    %c0_i32 = arith.constant 0 : i32
    %c0_i32_0 = arith.constant 0 : i32
    %c0_i32_1 = arith.constant 0 : i32
    return %c0_i32, %c0_i32_0 : i32, i32
  }
  func.func @transform_7(%arg0: i32) -> (i32, i32) {
    %c0_i32 = arith.constant 0 : i32
    %c0_i32_0 = arith.constant 0 : i32
    %c0_i32_1 = arith.constant 0 : i32
    return %c0_i32, %c0_i32_0 : i32, i32
  }
  func.func @transform_8(%arg0: i32) -> (i32, i32) {
    %c0_i32 = arith.constant 0 : i32
    %c0_i32_0 = arith.constant 0 : i32
    %c0_i32_1 = arith.constant 0 : i32
    return %c0_i32, %c0_i32_0 : i32, i32
  }
  func.func @transform_9(%arg0: i32) -> (i32, i32) {
    %c0_i32 = arith.constant 0 : i32
    %c0_i32_0 = arith.constant 0 : i32
    %c0_i32_1 = arith.constant 0 : i32
    return %c0_i32, %c0_i32_0 : i32, i32
  }
  func.func @transform_10(%arg0: i32) -> (i32, i32) {
    %c0_i32 = arith.constant 0 : i32
    %c0_i32_0 = arith.constant 0 : i32
    %c0_i32_1 = arith.constant 0 : i32
    return %c0_i32, %c0_i32_0 : i32, i32
  }
  func.func @transform_11(%arg0: i32) -> (i32, i32) {
    %c0_i32 = arith.constant 0 : i32
    %c0_i32_0 = arith.constant 0 : i32
    %c0_i32_1 = arith.constant 0 : i32
    return %c0_i32, %c0_i32_0 : i32, i32
  }
  func.func @transform_12(%arg0: i32) -> (i32, i32) {
    %c0_i32 = arith.constant 0 : i32
    %c0_i32_0 = arith.constant 0 : i32
    %c0_i32_1 = arith.constant 0 : i32
    return %c0_i32, %c0_i32_0 : i32, i32
  }
  func.func @transform_13(%arg0: i32) -> (i32, i32) {
    %c0_i32 = arith.constant 0 : i32
    %c0_i32_0 = arith.constant 0 : i32
    %c0_i32_1 = arith.constant 0 : i32
    return %c0_i32, %c0_i32_0 : i32, i32
  }
  func.func @transform_14(%arg0: i32) -> (i32, i32) {
    %c0_i32 = arith.constant 0 : i32
    %c0_i32_0 = arith.constant 0 : i32
    %c0_i32_1 = arith.constant 0 : i32
    return %c0_i32, %c0_i32_0 : i32, i32
  }
  func.func @transform_15(%arg0: i32) -> (i32, i32) {
    %c0_i32 = arith.constant 0 : i32
    %c0_i32_0 = arith.constant 0 : i32
    %c0_i32_1 = arith.constant 0 : i32
    return %c0_i32, %c0_i32_0 : i32, i32
  }
  func.func @transform_16(%arg0: i32) -> (i32, i32) {
    %c0_i32 = arith.constant 0 : i32
    %c0_i32_0 = arith.constant 0 : i32
    %c0_i32_1 = arith.constant 0 : i32
    return %c0_i32, %c0_i32_0 : i32, i32
  }
  func.func @transform_17(%arg0: i32) -> (i32, i32) {
    %c0_i32 = arith.constant 0 : i32
    %c0_i32_0 = arith.constant 0 : i32
    %c0_i32_1 = arith.constant 0 : i32
    return %c0_i32, %c0_i32_0 : i32, i32
  }
  func.func @transform_18(%arg0: i32) -> (i32, i32) {
    %c0_i32 = arith.constant 0 : i32
    %c0_i32_0 = arith.constant 0 : i32
    %c0_i32_1 = arith.constant 0 : i32
    return %c0_i32, %c0_i32_0 : i32, i32
  }
  func.func @transform_19(%arg0: i32) -> (i32, i32) {
    %c0_i32 = arith.constant 0 : i32
    %c0_i32_0 = arith.constant 0 : i32
    %c0_i32_1 = arith.constant 0 : i32
    return %c0_i32, %c0_i32_0 : i32, i32
  }
  func.func @transform_20(%arg0: i32) -> (i32, i32) {
    %c0_i32 = arith.constant 0 : i32
    %c0_i32_0 = arith.constant 0 : i32
    %c0_i32_1 = arith.constant 0 : i32
    return %c0_i32, %c0_i32_0 : i32, i32
  }
  func.func @transform_21(%arg0: i32) -> (i32, i32) {
    %c0_i32 = arith.constant 0 : i32
    %c0_i32_0 = arith.constant 0 : i32
    %c0_i32_1 = arith.constant 0 : i32
    return %c0_i32, %c0_i32_0 : i32, i32
  }
  func.func @transform_22(%arg0: i32) -> (i32, i32) {
    %c0_i32 = arith.constant 0 : i32
    %c0_i32_0 = arith.constant 0 : i32
    %c0_i32_1 = arith.constant 0 : i32
    return %c0_i32, %c0_i32_0 : i32, i32
  }
  func.func @transform_23(%arg0: i32) -> (i32, i32) {
    %c0_i32 = arith.constant 0 : i32
    %c0_i32_0 = arith.constant 0 : i32
    %c0_i32_1 = arith.constant 0 : i32
    return %c0_i32, %c0_i32_0 : i32, i32
  }
  func.func @transform_24(%arg0: i32) -> (i32, i32, i32) {
    %c0_i32 = arith.constant 0 : i32
    %c0_i32_0 = arith.constant 0 : i32
    %c0_i32_1 = arith.constant 0 : i32
    return %arg0, %c0_i32, %c0_i32_0 : i32, i32, i32
  }
}

module attributes {stable_mosaic.version = 11 : i64} {
  func.func @_linear_kernel(%arg0: i32, %arg1: memref<16x128xbf16, #tpu.memory_space<vmem>>, %arg2: memref<128x512xbf16, #tpu.memory_space<vmem>>, %arg3: memref<1x512xf32, #tpu.memory_space<vmem>>, %arg4: memref<16x512xf32, #tpu.memory_space<vmem>>) attributes {dimension_semantics = [#tpu.dimension_semantics<parallel>], iteration_bounds = array<i64: 1>, scalar_prefetch = 0 : i64, scratch_operands = 0 : i64, tpu.core_type = #tpu.core_type<tc>, window_params = [{pipeline_mode = #tpu.pipeline_mode<synchronous>, transform_indices = @transform_0, window_bounds = array<i64: 16, 128>}, {transform_indices = @transform_1, window_bounds = array<i64: 128, 512>}, {transform_indices = @transform_2, window_bounds = array<i64: 1, 512>}, {transform_indices = @transform_3, window_bounds = array<i64: 16, 512>}]} {
    %c0 = arith.constant 0 : index
    %c0_0 = arith.constant 0 : index
    %0 = vector.load %arg1[%c0, %c0_0] : memref<16x128xbf16, #tpu.memory_space<vmem>>, vector<16x128xbf16>
    %c0_1 = arith.constant 0 : index
    %c0_2 = arith.constant 0 : index
    %1 = vector.load %arg2[%c0_1, %c0_2] : memref<128x512xbf16, #tpu.memory_space<vmem>>, vector<128x512xbf16>
    %cst = arith.constant dense<0.000000e+00> : vector<16x512xf32>
    %2 = tpu.matmul %0, %1, %cst {dimension_numbers = #tpu.dot_dimension_numbers<[1], [0], [0], [1], [0, 0, 1, 1], [], []>} : vector<16x128xbf16>, vector<128x512xbf16>, vector<16x512xf32> -> vector<16x512xf32>
    %c0_3 = arith.constant 0 : index
    %c0_4 = arith.constant 0 : index
    %3 = vector.load %arg3[%c0_3, %c0_4] : memref<1x512xf32, #tpu.memory_space<vmem>>, vector<1x512xf32>
    %4 = vector.broadcast %3 : vector<1x512xf32> to vector<16x512xf32>
    %5 = arith.addf %2, %4 : vector<16x512xf32>
    %c0_5 = arith.constant 0 : index
    %c0_6 = arith.constant 0 : index
    %6 = vector.load %arg4[%c0_5, %c0_6] : memref<16x512xf32, #tpu.memory_space<vmem>>, vector<16x512xf32>
    tpu.vector_store %arg4[%c0_5, %c0_6], %5 {strides = array<i32>} : memref<16x512xf32, #tpu.memory_space<vmem>>, vector<16x512xf32>,
    return
  }
  func.func @transform_0(%arg0: i32) -> (i32, i32) {
    %c0_i32 = arith.constant 0 : i32
    %c0_i32_0 = arith.constant 0 : i32
    %c0_i32_1 = arith.constant 0 : i32
    return %c0_i32, %c0_i32_0 : i32, i32
  }
  func.func @transform_1(%arg0: i32) -> (i32, i32) {
    %c0_i32 = arith.constant 0 : i32
    %c0_i32_0 = arith.constant 0 : i32
    return %c0_i32, %arg0 : i32, i32
  }
  func.func @transform_2(%arg0: i32) -> (i32, i32) {
    %c0_i32 = arith.constant 0 : i32
    %c0_i32_0 = arith.constant 0 : i32
    return %c0_i32, %arg0 : i32, i32
  }
  func.func @transform_3(%arg0: i32) -> (i32, i32) {
    %c0_i32 = arith.constant 0 : i32
    %c0_i32_0 = arith.constant 0 : i32
    return %c0_i32, %arg0 : i32, i32
  }
}

</mosaic_0001>

<llo_original>
// kernel: transformer_forward.9
$region0: #{transformer_forward.9}
  #allocation0 [shape = 'u32[]', space=smem, size = 0x4, offset = 0x4, fixed_abs, tag = 'smem constant byte address 0x4 - core index']
  #allocation1 [shape = 'u32[144,128]{1,0:T(1,128)}', space=vmem, size = 0x12000, scoped, tag = 'internal scratch']
  %s0 = inlined_call_operand.hbm [shape: bf16[16,128], index: 0, kind: input, shape index: {}]
  %s1 = inlined_call_operand.hbm [shape: bf16[128,512], index: 1, kind: input, shape index: {}]
  %s2 = inlined_call_operand.hbm [shape: f32[1,512], index: 2, kind: input, shape index: {}]
  %s3 = inlined_call_operand.hbm [shape: f32[16,512], index: 3, kind: output, shape index: {}]
  %s4 = sld [smem:[#allocation0]]
  $region34: #{transformer_forward.9} parent=0
    _
  %s6 = ssub.s32 1, %s4
  %s7 = scalar_select 0, %s6, %s4
  $region1: #{transformer_forward.9} parent=0
    #allocation2 [shape = 'u8[4096]{0}', space=vmem, size = 0x1000, scoped, tag = 'input window, operand 0, single buffered']
    #allocation3 [shape = 's32[1]{0}', space=sflag, size = 0x4, scoped, tag = 'scoped memory for transformer_forward.9']
    #allocation4 [shape = 's32[1]{0}', space=sflag, size = 0x4, scoped, tag = 'scoped memory for transformer_forward.9']
    #allocation5 [shape = 'u8[131072]{0}', space=vmem, size = 0x20000, scoped, tag = 'input window, operand 1, single buffered']
    #allocation6 [shape = 's32[1]{0}', space=sflag, size = 0x4, scoped, tag = 'scoped memory for transformer_forward.9']
    #allocation7 [shape = 'u8[2048]{0}', space=vmem, size = 0x800, scoped, tag = 'input window, operand 2, single buffered']
    #allocation8 [shape = 'u8[32768]{0}', space=vmem, size = 0x8000, scoped, tag = 'output window, operand 0, single buffered']
    %8 = vsyncpa [#allocation3], 0
    %9 = vsyncpa [#allocation6], 0
    %10 = vsyncpa [#allocation4], 0
    // Predicated region
    $region2: #{transformer_forward.9} parent=1 // pred_check
      _
    $region3: #{transformer_forward.9} parent=1 // pred_check_branch
      %12 = sbr.rel (0) target = $region5
    $region4: #{transformer_forward.9} parent=1 // pred_region
      %s14 = ssub.s32 128, 128
      %15 = vsyncadd [#allocation3], %s14
      %s16 = sshll.u32 [#allocation2], 4
      %s17 = int_to_ptr.vmem [resolvable:$true] %s16
      %22 = dma.hbm_to_vmem [thread:$0]  %s0, 128, %s17, [#allocation3], 64, 64, 4
    $region5: #{transformer_forward.9} parent=1 // pred_fallthru
      _
    // Predicated region
    $region6: #{transformer_forward.9} parent=1 // pred_check
      _
    $region7: #{transformer_forward.9} parent=1 // pred_check_branch
      %24 = sbr.rel (0) target = $region9
    $region8: #{transformer_forward.9} parent=1 // pred_region
      %s26 = ssub.s32 4096, 4096
      %27 = vsyncadd [#allocation6], %s26
      %s28 = sshll.u32 [#allocation5], 4
      %s29 = int_to_ptr.vmem [resolvable:$true] %s28
      %34 = dma.hbm_to_vmem [thread:$0]  %s1, 4096, %s29, [#allocation6], 256, 256, 16
    $region9: #{transformer_forward.9} parent=1 // pred_fallthru
      _
    // Predicated region
    $region10: #{transformer_forward.9} parent=1 // pred_check
      _
    $region11: #{transformer_forward.9} parent=1 // pred_check_branch
      %36 = sbr.rel (0) target = $region13
    $region12: #{transformer_forward.9} parent=1 // pred_region
      %s38 = ssub.s32 64, 64
      %39 = vsyncadd [#allocation6], %s38
      %s41 = sshll.u32 [#allocation7], 4
      %s42 = int_to_ptr.vmem [resolvable:$true] %s41
      %44 = dma.hbm_to_vmem [thread:$0]  %s2, 64, %s42, [#allocation6]
    $region13: #{transformer_forward.9} parent=1 // pred_fallthru
      _
    // Predicated region
    $region14: #{transformer_forward.9} parent=1 // pred_check
      _
    $region15: #{transformer_forward.9} parent=1 // pred_check_branch
      %46 = sbr.rel (0) target = $region17
    $region16: #{transformer_forward.9} parent=1 // pred_region
      %47 = dma.done [#allocation3], 128
    $region17: #{transformer_forward.9} parent=1 // pred_fallthru
      _
    // Predicated region
    $region18: #{transformer_forward.9} parent=1 // pred_check
      _
    $region19: #{transformer_forward.9} parent=1 // pred_check_branch
      %49 = sbr.rel (0) target = $region21
    $region20: #{transformer_forward.9} parent=1 // pred_region
      %50 = dma.done [#allocation6], 4096
    $region21: #{transformer_forward.9} parent=1 // pred_fallthru
      _
    // Predicated region
    $region22: #{transformer_forward.9} parent=1 // pred_check
      _
    $region23: #{transformer_forward.9} parent=1 // pred_check_branch
      %52 = sbr.rel (0) target = $region25
    $region24: #{transformer_forward.9} parent=1 // pred_region
      %53 = dma.done [#allocation6], 64
    $region25: #{transformer_forward.9} parent=1 // pred_fallthru
      _
    %v55 = vld [vmem:[#allocation2] sm:$0xf]
    %v56 = vld [vmem:[#allocation2 + $0x4] sm:$0xf]
    %v57 = vld [vmem:[#allocation5] sm:$0xff]
    %v58 = vld [vmem:[#allocation5 + $0x8] sm:$0xff]
    %v59 = vld [vmem:[#allocation5 + $0x10] sm:$0xff]
    %v60 = vld [vmem:[#allocation5 + $0x18] sm:$0xff]
    %v61 = vld [vmem:[#allocation5 + $0x20] sm:$0xff]
    %v62 = vld [vmem:[#allocation5 + $0x28] sm:$0xff]
    %v63 = vld [vmem:[#allocation5 + $0x30] sm:$0xff]
    %v64 = vld [vmem:[#allocation5 + $0x38] sm:$0xff]
    %v65 = vld [vmem:[#allocation5 + $0x40] sm:$0xff]
    %v66 = vld [vmem:[#allocation5 + $0x48] sm:$0xff]
    %v67 = vld [vmem:[#allocation5 + $0x50] sm:$0xff]
    %v68 = vld [vmem:[#allocation5 + $0x58] sm:$0xff]
    %v69 = vld [vmem:[#allocation5 + $0x60] sm:$0xff]
    %v70 = vld [vmem:[#allocation5 + $0x68] sm:$0xff]
    %v71 = vld [vmem:[#allocation5 + $0x70] sm:$0xff]
    %v72 = vld [vmem:[#allocation5 + $0x78] sm:$0xff]
    %v73 = vld [vmem:[#allocation5 + $0x80] sm:$0xff]
    %v74 = vld [vmem:[#allocation5 + $0x88] sm:$0xff]
    %v75 = vld [vmem:[#allocation5 + $0x90] sm:$0xff]
    %v76 = vld [vmem:[#allocation5 + $0x98] sm:$0xff]
    %v77 = vld [vmem:[#allocation5 + $0xa0] sm:$0xff]
    %v78 = vld [vmem:[#allocation5 + $0xa8] sm:$0xff]
    %v79 = vld [vmem:[#allocation5 + $0xb0] sm:$0xff]
    %v80 = vld [vmem:[#allocation5 + $0xb8] sm:$0xff]
    %v81 = vld [vmem:[#allocation5 + $0xc0] sm:$0xff]
    %v82 = vld [vmem:[#allocation5 + $0xc8] sm:$0xff]
    %v83 = vld [vmem:[#allocation5 + $0xd0] sm:$0xff]
    %v84 = vld [vmem:[#allocation5 + $0xd8] sm:$0xff]
    %v85 = vld [vmem:[#allocation5 + $0xe0] sm:$0xff]
    %v86 = vld [vmem:[#allocation5 + $0xe8] sm:$0xff]
    %v87 = vld [vmem:[#allocation5 + $0xf0] sm:$0xff]
    %v88 = vld [vmem:[#allocation5 + $0xf8] sm:$0xff]
    %v89 = vld [vmem:[#allocation7] sm:$0xf]
    %v91 = vlaneseq
    %v92 = vshrl.u32 %v91, 7
    %v93 = vsub.s32 0, %v92
    %v94 = vrot.slane %v89, %v93
    %v95 = vlaneseq
    %v96 = vshrl.u32 %v95, 7
    %v97 = vsub.s32 1, %v96
    %v98 = vrot.slane %v89, %v97
    %v99 = vlaneseq
    %v100 = vshrl.u32 %v99, 7
    %v101 = vsub.s32 2, %v100
    %v102 = vrot.slane %v89, %v101
    %v103 = vlaneseq
    %v104 = vshrl.u32 %v103, 7
    %v105 = vsub.s32 3, %v104
    %v106 = vrot.slane %v89, %v105
    %v113 = vunpack.c.l.b16 %v55
    %v114 = vunpack.c.l.b16 %v56
    %v115 = vpack.c.b16 %v114, %v113
    %v149 = vunpack.c.l.b16 %v57
    %v150 = vunpack.c.h.b16 %v57
    %v151 = vunpack.c.l.b16 %v58
    %v152 = vunpack.c.h.b16 %v58
    %v153 = vunpack.c.l.b16 %v59
    %v154 = vunpack.c.h.b16 %v59
    %v155 = vunpack.c.l.b16 %v60
    %v156 = vunpack.c.h.b16 %v60
    %v157 = vunpack.c.l.b16 %v61
    %v158 = vunpack.c.h.b16 %v61
    %v159 = vunpack.c.l.b16 %v62
    %v160 = vunpack.c.h.b16 %v62
    %v161 = vunpack.c.l.b16 %v63
    %v162 = vunpack.c.h.b16 %v63
    %v163 = vunpack.c.l.b16 %v64
    %v164 = vunpack.c.h.b16 %v64
    %v165 = vunpack.c.l.b16 %v65
    %v166 = vunpack.c.h.b16 %v65
    %v167 = vunpack.c.l.b16 %v66
    %v168 = vunpack.c.h.b16 %v66
    %v169 = vunpack.c.l.b16 %v67
    %v170 = vunpack.c.h.b16 %v67
    %v171 = vunpack.c.l.b16 %v68
    %v172 = vunpack.c.h.b16 %v68
    %v173 = vunpack.c.l.b16 %v69
    %v174 = vunpack.c.h.b16 %v69
    %v175 = vunpack.c.l.b16 %v70
    %v176 = vunpack.c.h.b16 %v70
    %v177 = vunpack.c.l.b16 %v71
    %v178 = vunpack.c.h.b16 %v71
    %v179 = vunpack.c.l.b16 %v72
    %v180 = vunpack.c.h.b16 %v72
    %v181 = vunpack.c.l.b16 %v73
    %v182 = vunpack.c.h.b16 %v73
    %v183 = vunpack.c.l.b16 %v74
    %v184 = vunpack.c.h.b16 %v74
    %v185 = vunpack.c.l.b16 %v75
    %v186 = vunpack.c.h.b16 %v75
    %v187 = vunpack.c.l.b16 %v76
    %v188 = vunpack.c.h.b16 %v76
    %v189 = vunpack.c.l.b16 %v77
    %v190 = vunpack.c.h.b16 %v77
    %v191 = vunpack.c.l.b16 %v78
    %v192 = vunpack.c.h.b16 %v78
    %v193 = vunpack.c.l.b16 %v79
    %v194 = vunpack.c.h.b16 %v79
    %v195 = vunpack.c.l.b16 %v80
    %v196 = vunpack.c.h.b16 %v80
    %v197 = vunpack.c.l.b16 %v81
    %v198 = vunpack.c.h.b16 %v81
    %v199 = vunpack.c.l.b16 %v82
    %v200 = vunpack.c.h.b16 %v82
    %v201 = vunpack.c.l.b16 %v83
    %v202 = vunpack.c.h.b16 %v83
    %v203 = vunpack.c.l.b16 %v84
    %v204 = vunpack.c.h.b16 %v84
    %v205 = vunpack.c.l.b16 %v85
    %v206 = vunpack.c.h.b16 %v85
    %v207 = vunpack.c.l.b16 %v86
    %v208 = vunpack.c.h.b16 %v86
    %v209 = vunpack.c.l.b16 %v87
    %v210 = vunpack.c.h.b16 %v87
    %v211 = vunpack.c.l.b16 %v88
    %v212 = vunpack.c.h.b16 %v88
    %v213 = vpack.c.b16 %v153, %v149
    %v214 = vpack.c.b16 %v154, %v150
    %v215 = vpack.c.b16 %v155, %v151
    %v216 = vpack.c.b16 %v156, %v152
    %v217 = vpack.c.b16 %v161, %v157
    %v218 = vpack.c.b16 %v162, %v158
    %v219 = vpack.c.b16 %v163, %v159
    %v220 = vpack.c.b16 %v164, %v160
    %v221 = vpack.c.b16 %v169, %v165
    %v222 = vpack.c.b16 %v170, %v166
    %v223 = vpack.c.b16 %v171, %v167
    %v224 = vpack.c.b16 %v172, %v168
    %v225 = vpack.c.b16 %v177, %v173
    %v226 = vpack.c.b16 %v178, %v174
    %v227 = vpack.c.b16 %v179, %v175
    %v228 = vpack.c.b16 %v180, %v176
    %v229 = vpack.c.b16 %v185, %v181
    %v230 = vpack.c.b16 %v186, %v182
    %v231 = vpack.c.b16 %v187, %v183
    %v232 = vpack.c.b16 %v188, %v184
    %v233 = vpack.c.b16 %v193, %v189
    %v234 = vpack.c.b16 %v194, %v190
    %v235 = vpack.c.b16 %v195, %v191
    %v236 = vpack.c.b16 %v196, %v192
    %v237 = vpack.c.b16 %v201, %v197
    %v238 = vpack.c.b16 %v202, %v198
    %v239 = vpack.c.b16 %v203, %v199
    %v240 = vpack.c.b16 %v204, %v200
    %v241 = vpack.c.b16 %v209, %v205
    %v242 = vpack.c.b16 %v210, %v206
    %v243 = vpack.c.b16 %v211, %v207
    %v244 = vpack.c.b16 %v212, %v208
    %277 = vmatprep.subr.bf16.mxu0 %v214
    %278 = vmatpush1.bf16.msra.mxu0 %v213
    %279 = vmatprep.subr.bf16.mxu0 %v218
    %280 = vmatpush1.bf16.msra.mxu0 %v217
    %281 = vmatprep.subr.bf16.mxu0 %v222
    %282 = vmatpush1.bf16.msra.mxu0 %v221
    %283 = vmatprep.subr.bf16.mxu0 %v226
    %284 = vmatpush1.bf16.msra.mxu0 %v225
    %285 = vmatprep.subr.bf16.mxu0 %v230
    %286 = vmatpush1.bf16.msra.mxu0 %v229
    %287 = vmatprep.subr.bf16.mxu0 %v234
    %288 = vmatpush1.bf16.msra.mxu0 %v233
    %289 = vmatprep.subr.bf16.mxu0 %v238
    %290 = vmatpush1.bf16.msra.mxu0 %v237
    %291 = vmatprep.subr.bf16.mxu0 %v242
    %292 = vmatpush1.bf16.msra.mxu0 %v241
    %293 = vmatprep.subr.bf16.mxu0 0
    %294 = vmatpush1.bf16.msra.mxu0 0
    %295 = vmatprep.subr.bf16.mxu0 0
    %296 = vmatpush1.bf16.msra.mxu0 0
    %297 = vmatprep.subr.bf16.mxu0 0
    %298 = vmatpush1.bf16.msra.mxu0 0
    %299 = vmatprep.subr.bf16.mxu0 0
    %300 = vmatpush1.bf16.msra.mxu0 0
    %301 = vmatprep.subr.bf16.mxu0 0
    %302 = vmatpush1.bf16.msra.mxu0 0
    %303 = vmatprep.subr.bf16.mxu0 0
    %304 = vmatpush1.bf16.msra.mxu0 0
    %305 = vmatprep.subr.bf16.mxu0 0
    %306 = vmatpush1.bf16.msra.mxu0 0
    %307 = vmatprep.subr.bf16.mxu0 0
    %308 = vmatpush1.bf16.msra.mxu0 0
    %309 = vmatprep.mubr.bf16.mxu0 0
    %310 = vmatmul.mubr.bf16.gmra.mrb[0].mxu0 %v115
    %v311 = vpop.f32.mrb[0].mxu0
    %v312 = vadd.f32 %v94, %v311
    %v313 = vpop.f32.mrb[0].mxu0
    %v314 = vadd.f32 %v98, %v313
    %v315 = vpop.f32.mrb[0].mxu0
    %v316 = vadd.f32 %v94, %v315
    %v317 = vpop.f32.mrb[0].mxu0
    %v318 = vadd.f32 %v98, %v317
    %319 = vdwg.mxu0
    %320 = vmatprep.subr.bf16.mxu0 %v216
    %321 = vmatpush1.bf16.msra.mxu0 %v215
    %322 = vmatprep.subr.bf16.mxu0 %v220
    %323 = vmatpush1.bf16.msra.mxu0 %v219
    %324 = vmatprep.subr.bf16.mxu0 %v224
    %325 = vmatpush1.bf16.msra.mxu0 %v223
    %326 = vmatprep.subr.bf16.mxu0 %v228
    %327 = vmatpush1.bf16.msra.mxu0 %v227
    %328 = vmatprep.subr.bf16.mxu0 %v232
    %329 = vmatpush1.bf16.msra.mxu0 %v231
    %330 = vmatprep.subr.bf16.mxu0 %v236
    %331 = vmatpush1.bf16.msra.mxu0 %v235
    %332 = vmatprep.subr.bf16.mxu0 %v240
    %333 = vmatpush1.bf16.msra.mxu0 %v239
    %334 = vmatprep.subr.bf16.mxu0 %v244
    %335 = vmatpush1.bf16.msra.mxu0 %v243
    %336 = vmatprep.subr.bf16.mxu0 0
    %337 = vmatpush1.bf16.msra.mxu0 0
    %338 = vmatprep.subr.bf16.mxu0 0
    %339 = vmatpush1.bf16.msra.mxu0 0
    %340 = vmatprep.subr.bf16.mxu0 0
    %341 = vmatpush1.bf16.msra.mxu0 0
    %342 = vmatprep.subr.bf16.mxu0 0
    %343 = vmatpush1.bf16.msra.mxu0 0
    %344 = vmatprep.subr.bf16.mxu0 0
    %345 = vmatpush1.bf16.msra.mxu0 0
    %346 = vmatprep.subr.bf16.mxu0 0
    %347 = vmatpush1.bf16.msra.mxu0 0
    %348 = vmatprep.subr.bf16.mxu0 0
    %349 = vmatpush1.bf16.msra.mxu0 0
    %350 = vmatprep.subr.bf16.mxu0 0
    %351 = vmatpush1.bf16.msra.mxu0 0
    %352 = vmatprep.mubr.bf16.mxu0 0
    %353 = vmatmul.mubr.bf16.gmra.mrb[0].mxu0 %v115
    %v354 = vpop.f32.mrb[0].mxu0
    %v355 = vadd.f32 %v102, %v354
    %v356 = vpop.f32.mrb[0].mxu0
    %v357 = vadd.f32 %v106, %v356
    %v358 = vpop.f32.mrb[0].mxu0
    %v359 = vadd.f32 %v102, %v358
    %v360 = vpop.f32.mrb[0].mxu0
    %v361 = vadd.f32 %v106, %v360
    %362 = vdwg.mxu0
    %363 = vst [vmem:[#allocation8] sm:$0xff] %v312
    %364 = vst [vmem:[#allocation8 + $0x8] sm:$0xff] %v314
    %365 = vst [vmem:[#allocation8 + $0x10] sm:$0xff] %v355
    %366 = vst [vmem:[#allocation8 + $0x18] sm:$0xff] %v357
    %367 = vst [vmem:[#allocation8 + $0x20] sm:$0xff] %v316
    %368 = vst [vmem:[#allocation8 + $0x28] sm:$0xff] %v318
    %369 = vst [vmem:[#allocation8 + $0x30] sm:$0xff] %v359
    %370 = vst [vmem:[#allocation8 + $0x38] sm:$0xff] %v361
    // Predicated region
    $region26: #{transformer_forward.9} parent=1 // pred_check
      _
    $region27: #{transformer_forward.9} parent=1 // pred_check_branch
      %372 = sbr.rel (0) target = $region29
    $region28: #{transformer_forward.9} parent=1 // pred_region
      %s374 = ssub.s32 1024, 1024
      %375 = vsyncadd [#allocation4], %s374
      %s376 = sshll.u32 [#allocation8], 4
      %s377 = int_to_ptr.vmem [resolvable:$true] %s376
      %382 = dma.vmem_to_hbm [thread:$0]  %s377, 1024, %s3, [#allocation4], 512, 512, 32
    $region29: #{transformer_forward.9} parent=1 // pred_fallthru
      _
    // Predicated region
    $region30: #{transformer_forward.9} parent=1 // pred_check
      _
    $region31: #{transformer_forward.9} parent=1 // pred_check_branch
      %384 = sbr.rel (0) target = $region33
    $region32: #{transformer_forward.9} parent=1 // pred_region
      %385 = dma.done [#allocation4], 1024
    $region33: #{transformer_forward.9} parent=1 // pred_fallthru
      _
    %386 = vsyncpa [#allocation3], 1
    %387 = vsyncpa [#allocation6], 1
    %388 = vsyncpa [#allocation4], 1

// kernel: transformer_forward.5
$region0: #{transformer_forward.5}
  #allocation0 [shape = 'u32[]', space=smem, size = 0x4, offset = 0x4, fixed_abs, tag = 'smem constant byte address 0x4 - core index']
  #allocation1 [shape = 'u32[144,128]{1,0:T(1,128)}', space=vmem, size = 0x12000, scoped, tag = 'internal scratch']
  #allocation2 [shape = 'f32[8,128]{1,0:T(8,128)}', space=vmem, size = 0x1000, scoped, tag = 'scratch operand']
  %s0 = inlined_call_operand.hbm [shape: bf16[2,8,128], index: 0, kind: input, shape index: {}]
  %s1 = inlined_call_operand.hbm [shape: f32[2,1,8], index: 1, kind: input, shape index: {}]
  %s2 = inlined_call_operand.hbm [shape: bf16[128,384], index: 2, kind: input, shape index: {}]
  %s3 = inlined_call_operand.hbm [shape: f32[1,384], index: 3, kind: input, shape index: {}]
  %s4 = inlined_call_operand.hbm [shape: bf16[128,128], index: 4, kind: input, shape index: {}]
  %s5 = inlined_call_operand.hbm [shape: f32[1,128], index: 5, kind: input, shape index: {}]
  %s6 = inlined_call_operand.hbm [shape: f32[1,128], index: 6, kind: input, shape index: {}]
  %s7 = inlined_call_operand.hbm [shape: f32[1,128], index: 7, kind: input, shape index: {}]
  %s8 = inlined_call_operand.hbm [shape: bf16[128,256], index: 8, kind: input, shape index: {}]
  %s9 = inlined_call_operand.hbm [shape: f32[1,256], index: 9, kind: input, shape index: {}]
  %s10 = inlined_call_operand.hbm [shape: bf16[256,128], index: 10, kind: input, shape index: {}]
  %s11 = inlined_call_operand.hbm [shape: f32[1,128], index: 11, kind: input, shape index: {}]
  %s12 = inlined_call_operand.hbm [shape: f32[1,128], index: 12, kind: input, shape index: {}]
  %s13 = inlined_call_operand.hbm [shape: f32[1,128], index: 13, kind: input, shape index: {}]
  %s14 = inlined_call_operand.hbm [shape: bf16[2,8,128], index: 14, kind: output, shape index: {}]
  %s15 = sld [smem:[#allocation0]]
  $region145: #{transformer_forward.5} parent=0
    _
  %s17 = ssub.s32 1, %s15
  %s18 = scalar_select 0, %s17, %s15
  $region1: #{transformer_forward.5} parent=0
    #allocation3 [shape = 'u8[4096]{0}', space=vmem, size = 0x1000, scoped, tag = 'input window, operand 0']
    #allocation4 [shape = 's32[2]{0}', space=sflag, size = 0x8, scoped, tag = 'scoped memory for transformer_forward.5']
    #allocation5 [shape = 's32[2]{0}', space=sflag, size = 0x8, scoped, tag = 'scoped memory for transformer_forward.5']
    #allocation6 [shape = 'u8[1024]{0}', space=vmem, size = 0x400, scoped, tag = 'input window, operand 1']
    #allocation7 [shape = 's32[2]{0}', space=sflag, size = 0x8, scoped, tag = 'scoped memory for transformer_forward.5']
    #allocation8 [shape = 'u8[98304]{0}', space=vmem, size = 0x18000, scoped, tag = 'input window, operand 2, single buffered']
    #allocation9 [shape = 'u8[1536]{0}', space=vmem, size = 0x800, scoped, tag = 'input window, operand 3, single buffered']
    #allocation10 [shape = 's32[1]{0}', space=sflag, size = 0x4, scoped, tag = 'scoped memory for transformer_forward.5']
    #allocation11 [shape = 'u8[32768]{0}', space=vmem, size = 0x8000, scoped, tag = 'input window, operand 4, single buffered']
    #allocation12 [shape = 'u8[512]{0}', space=vmem, size = 0x400, scoped, tag = 'input window, operand 5, single buffered']
    #allocation13 [shape = 's32[1]{0}', space=sflag, size = 0x4, scoped, tag = 'scoped memory for transformer_forward.5']
    #allocation14 [shape = 'u8[512]{0}', space=vmem, size = 0x400, scoped, tag = 'input window, operand 6, single buffered']
    #allocation15 [shape = 'u8[512]{0}', space=vmem, size = 0x400, scoped, tag = 'input window, operand 7, single buffered']
    #allocation16 [shape = 's32[1]{0}', space=sflag, size = 0x4, scoped, tag = 'scoped memory for transformer_forward.5']
    #allocation17 [shape = 'u8[65536]{0}', space=vmem, size = 0x10000, scoped, tag = 'input window, operand 8, single buffered']
    #allocation18 [shape = 'u8[1024]{0}', space=vmem, size = 0x400, scoped, tag = 'input window, operand 9, single buffered']
    #allocation19 [shape = 's32[1]{0}', space=sflag, size = 0x4, scoped, tag = 'scoped memory for transformer_forward.5']
    #allocation20 [shape = 'u8[65536]{0}', space=vmem, size = 0x10000, scoped, tag = 'input window, operand 10, single buffered']
    #allocation21 [shape = 'u8[512]{0}', space=vmem, size = 0x400, scoped, tag = 'input window, operand 11, single buffered']
    #allocation22 [shape = 's32[1]{0}', space=sflag, size = 0x4, scoped, tag = 'scoped memory for transformer_forward.5']
    #allocation23 [shape = 'u8[512]{0}', space=vmem, size = 0x400, scoped, tag = 'input window, operand 12, single buffered']
    #allocation24 [shape = 'u8[512]{0}', space=vmem, size = 0x400, scoped, tag = 'input window, operand 13, single buffered']
    #allocation25 [shape = 's32[1]{0}', space=sflag, size = 0x4, scoped, tag = 'scoped memory for transformer_forward.5']
    #allocation26 [shape = 'u8[4096]{0}', space=vmem, size = 0x1000, scoped, tag = 'output window, operand 0']
    %19 = vsyncpa [#allocation4], 0
    %s20 = scalar_lea.sflag [#allocation4], 1
    %21 = vsyncpa %s20, 0
    %22 = vsyncpa [#allocation7], 0
    %s23 = scalar_lea.sflag [#allocation7], 1
    %24 = vsyncpa %s23, 0
    %25 = vsyncpa [#allocation10], 0
    %26 = vsyncpa [#allocation13], 0
    %27 = vsyncpa [#allocation16], 0
    %28 = vsyncpa [#allocation19], 0
    %29 = vsyncpa [#allocation22], 0
    %30 = vsyncpa [#allocation25], 0
    %31 = vsyncpa [#allocation5], 0
    %s32 = scalar_lea.sflag [#allocation5], 1
    %33 = vsyncpa %s32, 0
    loop: start=0, step=1, limit=4
    $region2: #{transformer_forward.5} parent=1 // loop_pre_header
      _
    $region3: #{transformer_forward.5} parent=1 // loop_header
      %s35 = sphi 0, %s39
      %p36 = scmp.ge.s32.totalorder %s35, 4
      %s45 = sphi 0, %s47
      %s48 = sphi 0, %s45
      %s49 = sphi 0, %s48
      %s65 = sphi 0, %s49
      %s71 = sphi 0, %s73
      %s74 = sphi 0, %s71
      %s75 = sphi 0, %s74
      %s91 = sphi 0, %s75
      %s95 = sphi 0, %s95
      %s97 = sphi 0, %s95
      %s98 = sphi 0, %s97
      %s112 = sphi 0, %s98
      %s116 = sphi 0, %s116
      %s118 = sphi 0, %s116
      %s119 = sphi 0, %s118
      %s133 = sphi 0, %s119
      %s137 = sphi 0, %s137
      %s139 = sphi 0, %s137
      %s140 = sphi 0, %s139
      %s154 = sphi 0, %s140
      %s158 = sphi 0, %s158
      %s160 = sphi 0, %s158
      %s161 = sphi 0, %s160
      %s175 = sphi 0, %s161
      %s179 = sphi 0, %s179
      %s181 = sphi 0, %s179
      %s182 = sphi 0, %s181
      %s196 = sphi 0, %s182
      %s200 = sphi 0, %s200
      %s202 = sphi 0, %s200
      %s203 = sphi 0, %s202
      %s217 = sphi 0, %s203
      %s221 = sphi 0, %s221
      %s223 = sphi 0, %s221
      %s224 = sphi 0, %s223
      %s238 = sphi 0, %s224
      %s242 = sphi 0, %s242
      %s244 = sphi 0, %s242
      %s245 = sphi 0, %s244
      %s259 = sphi 0, %s245
      %s263 = sphi 0, %s263
      %s265 = sphi 0, %s263
      %s266 = sphi 0, %s265
      %s280 = sphi 0, %s266
      %s284 = sphi 0, %s284
      %s286 = sphi 0, %s284
      %s287 = sphi 0, %s286
      %s301 = sphi 0, %s287
      %s305 = sphi 0, %s305
      %s307 = sphi 0, %s305
      %s308 = sphi 0, %s307
      %s322 = sphi 0, %s308
      %s326 = sphi 0, %s326
      %s328 = sphi 0, %s326
      %s329 = sphi 0, %s328
      %s343 = sphi 0, %s329
      %s349 = sphi 0, %s351
      %s352 = sphi 0, %s349
      %s353 = sphi 0, %s352
      %s369 = sphi 0, %s353
    $region4: #{transformer_forward.5} parent=1 // loop_header_branch
      %38 = sbr.rel (%p36) target = $region8
    $region5: #{transformer_forward.5} parent=1 // loop_body
      %s40 = ssub.s32 %s35, 1
      %s41 = ssub.s32 %s35, 2
      %s42 = sadd.s32 %s35, 1
      %s43 = ssub.s32 %s35, %s42
      %p44 = scmp.eq.s32.totalorder %s43, 0
      %s46 = sadd.s32 %s45, 1
      %s47 = scalar_select %p44, %s45, %s46
      %p50 = pneg %p44
      %p51 = scmp.eq.s32.totalorder %s35, 1
      %p52 = por %p50, %p51
      %p53 = scmp.ne.s32.totalorder %s45, %s48
      %p54 = scmp.eq.s32.totalorder %s35, 0
      %p55 = por %p53, %p54
      %p56 = scmp.ne.s32.totalorder %s45, %s48
      %p57 = scmp.eq.s32.totalorder %s40, 1
      %p58 = por %p56, %p57
      %p59 = scmp.ne.s32.totalorder %s48, %s49
      %p60 = scmp.eq.s32.totalorder %s40, 0
      %p61 = por %p59, %p60
      %p62 = scmp.ne.s32.totalorder %s48, %s49
      %p63 = scmp.eq.s32.totalorder %s41, 1
      %p64 = por %p62, %p63
      %p66 = scmp.ne.s32.totalorder %s49, %s65
      %p67 = scmp.eq.s32.totalorder %s41, 0
      %p68 = por %p66, %p67
      %s69 = ssub.s32 %s35, %s42
      %p70 = scmp.eq.s32.totalorder %s69, 0
      %s72 = sadd.s32 %s71, 1
      %s73 = scalar_select %p70, %s71, %s72
      %p76 = pneg %p70
      %p77 = scmp.eq.s32.totalorder %s35, 1
      %p78 = por %p76, %p77
      %p79 = scmp.ne.s32.totalorder %s71, %s74
      %p80 = scmp.eq.s32.totalorder %s35, 0
      %p81 = por %p79, %p80
      %p82 = scmp.ne.s32.totalorder %s71, %s74
      %p83 = scmp.eq.s32.totalorder %s40, 1
      %p84 = por %p82, %p83
      %p85 = scmp.ne.s32.totalorder %s74, %s75
      %p86 = scmp.eq.s32.totalorder %s40, 0
      %p87 = por %p85, %p86
      %p88 = scmp.ne.s32.totalorder %s74, %s75
      %p89 = scmp.eq.s32.totalorder %s41, 1
      %p90 = por %p88, %p89
      %p92 = scmp.ne.s32.totalorder %s75, %s91
      %p93 = scmp.eq.s32.totalorder %s41, 0
      %p94 = por %p92, %p93
      %s96 = sadd.s32 %s95, 1
      %p99 = scmp.eq.s32.totalorder %s35, 1
      %p100 = scmp.ne.s32.totalorder %s95, %s97
      %p101 = scmp.eq.s32.totalorder %s35, 0
      %p102 = por %p100, %p101
      %p103 = scmp.ne.s32.totalorder %s95, %s97
      %p104 = scmp.eq.s32.totalorder %s40, 1
      %p105 = por %p103, %p104
      %p106 = scmp.ne.s32.totalorder %s97, %s98
      %p107 = scmp.eq.s32.totalorder %s40, 0
      %p108 = por %p106, %p107
      %p109 = scmp.ne.s32.totalorder %s97, %s98
      %p110 = scmp.eq.s32.totalorder %s41, 1
      %p111 = por %p109, %p110
      %p113 = scmp.ne.s32.totalorder %s98, %s112
      %p114 = scmp.eq.s32.totalorder %s41, 0
      %p115 = por %p113, %p114
      %s117 = sadd.s32 %s116, 1
      %p120 = scmp.eq.s32.totalorder %s35, 1
      %p121 = scmp.ne.s32.totalorder %s116, %s118
      %p122 = scmp.eq.s32.totalorder %s35, 0
      %p123 = por %p121, %p122
      %p124 = scmp.ne.s32.totalorder %s116, %s118
      %p125 = scmp.eq.s32.totalorder %s40, 1
      %p126 = por %p124, %p125
      %p127 = scmp.ne.s32.totalorder %s118, %s119
      %p128 = scmp.eq.s32.totalorder %s40, 0
      %p129 = por %p127, %p128
      %p130 = scmp.ne.s32.totalorder %s118, %s119
      %p131 = scmp.eq.s32.totalorder %s41, 1
      %p132 = por %p130, %p131
      %p134 = scmp.ne.s32.totalorder %s119, %s133
      %p135 = scmp.eq.s32.totalorder %s41, 0
      %p136 = por %p134, %p135
      %s138 = sadd.s32 %s137, 1
      %p141 = scmp.eq.s32.totalorder %s35, 1
      %p142 = scmp.ne.s32.totalorder %s137, %s139
      %p143 = scmp.eq.s32.totalorder %s35, 0
      %p144 = por %p142, %p143
      %p145 = scmp.ne.s32.totalorder %s137, %s139
      %p146 = scmp.eq.s32.totalorder %s40, 1
      %p147 = por %p145, %p146
      %p148 = scmp.ne.s32.totalorder %s139, %s140
      %p149 = scmp.eq.s32.totalorder %s40, 0
      %p150 = por %p148, %p149
      %p151 = scmp.ne.s32.totalorder %s139, %s140
      %p152 = scmp.eq.s32.totalorder %s41, 1
      %p153 = por %p151, %p152
      %p155 = scmp.ne.s32.totalorder %s140, %s154
      %p156 = scmp.eq.s32.totalorder %s41, 0
      %p157 = por %p155, %p156
      %s159 = sadd.s32 %s158, 1
      %p162 = scmp.eq.s32.totalorder %s35, 1
      %p163 = scmp.ne.s32.totalorder %s158, %s160
      %p164 = scmp.eq.s32.totalorder %s35, 0
      %p165 = por %p163, %p164
      %p166 = scmp.ne.s32.totalorder %s158, %s160
      %p167 = scmp.eq.s32.totalorder %s40, 1
      %p168 = por %p166, %p167
      %p169 = scmp.ne.s32.totalorder %s160, %s161
      %p170 = scmp.eq.s32.totalorder %s40, 0
      %p171 = por %p169, %p170
      %p172 = scmp.ne.s32.totalorder %s160, %s161
      %p173 = scmp.eq.s32.totalorder %s41, 1
      %p174 = por %p172, %p173
      %p176 = scmp.ne.s32.totalorder %s161, %s175
      %p177 = scmp.eq.s32.totalorder %s41, 0
      %p178 = por %p176, %p177
      %s180 = sadd.s32 %s179, 1
      %p183 = scmp.eq.s32.totalorder %s35, 1
      %p184 = scmp.ne.s32.totalorder %s179, %s181
      %p185 = scmp.eq.s32.totalorder %s35, 0
      %p186 = por %p184, %p185
      %p187 = scmp.ne.s32.totalorder %s179, %s181
      %p188 = scmp.eq.s32.totalorder %s40, 1
      %p189 = por %p187, %p188
      %p190 = scmp.ne.s32.totalorder %s181, %s182
      %p191 = scmp.eq.s32.totalorder %s40, 0
      %p192 = por %p190, %p191
      %p193 = scmp.ne.s32.totalorder %s181, %s182
      %p194 = scmp.eq.s32.totalorder %s41, 1
      %p195 = por %p193, %p194
      %p197 = scmp.ne.s32.totalorder %s182, %s196
      %p198 = scmp.eq.s32.totalorder %s41, 0
      %p199 = por %p197, %p198
      %s201 = sadd.s32 %s200, 1
      %p204 = scmp.eq.s32.totalorder %s35, 1
      %p205 = scmp.ne.s32.totalorder %s200, %s202
      %p206 = scmp.eq.s32.totalorder %s35, 0
      %p207 = por %p205, %p206
      %p208 = scmp.ne.s32.totalorder %s200, %s202
      %p209 = scmp.eq.s32.totalorder %s40, 1
      %p210 = por %p208, %p209
      %p211 = scmp.ne.s32.totalorder %s202, %s203
      %p212 = scmp.eq.s32.totalorder %s40, 0
      %p213 = por %p211, %p212
      %p214 = scmp.ne.s32.totalorder %s202, %s203
      %p215 = scmp.eq.s32.totalorder %s41, 1
      %p216 = por %p214, %p215
      %p218 = scmp.ne.s32.totalorder %s203, %s217
      %p219 = scmp.eq.s32.totalorder %s41, 0
      %p220 = por %p218, %p219
      %s222 = sadd.s32 %s221, 1
      %p225 = scmp.eq.s32.totalorder %s35, 1
      %p226 = scmp.ne.s32.totalorder %s221, %s223
      %p227 = scmp.eq.s32.totalorder %s35, 0
      %p228 = por %p226, %p227
      %p229 = scmp.ne.s32.totalorder %s221, %s223
      %p230 = scmp.eq.s32.totalorder %s40, 1
      %p231 = por %p229, %p230
      %p232 = scmp.ne.s32.totalorder %s223, %s224
      %p233 = scmp.eq.s32.totalorder %s40, 0
      %p234 = por %p232, %p233
      %p235 = scmp.ne.s32.totalorder %s223, %s224
      %p236 = scmp.eq.s32.totalorder %s41, 1
      %p237 = por %p235, %p236
      %p239 = scmp.ne.s32.totalorder %s224, %s238
      %p240 = scmp.eq.s32.totalorder %s41, 0
      %p241 = por %p239, %p240
      %s243 = sadd.s32 %s242, 1
      %p246 = scmp.eq.s32.totalorder %s35, 1
      %p247 = scmp.ne.s32.totalorder %s242, %s244
      %p248 = scmp.eq.s32.totalorder %s35, 0
      %p249 = por %p247, %p248
      %p250 = scmp.ne.s32.totalorder %s242, %s244
      %p251 = scmp.eq.s32.totalorder %s40, 1
      %p252 = por %p250, %p251
      %p253 = scmp.ne.s32.totalorder %s244, %s245
      %p254 = scmp.eq.s32.totalorder %s40, 0
      %p255 = por %p253, %p254
      %p256 = scmp.ne.s32.totalorder %s244, %s245
      %p257 = scmp.eq.s32.totalorder %s41, 1
      %p258 = por %p256, %p257
      %p260 = scmp.ne.s32.totalorder %s245, %s259
      %p261 = scmp.eq.s32.totalorder %s41, 0
      %p262 = por %p260, %p261
      %s264 = sadd.s32 %s263, 1
      %p267 = scmp.eq.s32.totalorder %s35, 1
      %p268 = scmp.ne.s32.totalorder %s263, %s265
      %p269 = scmp.eq.s32.totalorder %s35, 0
      %p270 = por %p268, %p269
      %p271 = scmp.ne.s32.totalorder %s263, %s265
      %p272 = scmp.eq.s32.totalorder %s40, 1
      %p273 = por %p271, %p272
      %p274 = scmp.ne.s32.totalorder %s265, %s266
      %p275 = scmp.eq.s32.totalorder %s40, 0
      %p276 = por %p274, %p275
      %p277 = scmp.ne.s32.totalorder %s265, %s266
      %p278 = scmp.eq.s32.totalorder %s41, 1
      %p279 = por %p277, %p278
      %p281 = scmp.ne.s32.totalorder %s266, %s280
      %p282 = scmp.eq.s32.totalorder %s41, 0
      %p283 = por %p281, %p282
      %s285 = sadd.s32 %s284, 1
      %p288 = scmp.eq.s32.totalorder %s35, 1
      %p289 = scmp.ne.s32.totalorder %s284, %s286
      %p290 = scmp.eq.s32.totalorder %s35, 0
      %p291 = por %p289, %p290
      %p292 = scmp.ne.s32.totalorder %s284, %s286
      %p293 = scmp.eq.s32.totalorder %s40, 1
      %p294 = por %p292, %p293
      %p295 = scmp.ne.s32.totalorder %s286, %s287
      %p296 = scmp.eq.s32.totalorder %s40, 0
      %p297 = por %p295, %p296
      %p298 = scmp.ne.s32.totalorder %s286, %s287
      %p299 = scmp.eq.s32.totalorder %s41, 1
      %p300 = por %p298, %p299
      %p302 = scmp.ne.s32.totalorder %s287, %s301
      %p303 = scmp.eq.s32.totalorder %s41, 0
      %p304 = por %p302, %p303
      %s306 = sadd.s32 %s305, 1
      %p309 = scmp.eq.s32.totalorder %s35, 1
      %p310 = scmp.ne.s32.totalorder %s305, %s307
      %p311 = scmp.eq.s32.totalorder %s35, 0
      %p312 = por %p310, %p311
      %p313 = scmp.ne.s32.totalorder %s305, %s307
      %p314 = scmp.eq.s32.totalorder %s40, 1
      %p315 = por %p313, %p314
      %p316 = scmp.ne.s32.totalorder %s307, %s308
      %p317 = scmp.eq.s32.totalorder %s40, 0
      %p318 = por %p316, %p317
      %p319 = scmp.ne.s32.totalorder %s307, %s308
      %p320 = scmp.eq.s32.totalorder %s41, 1
      %p321 = por %p319, %p320
      %p323 = scmp.ne.s32.totalorder %s308, %s322
      %p324 = scmp.eq.s32.totalorder %s41, 0
      %p325 = por %p323, %p324
      %s327 = sadd.s32 %s326, 1
      %p330 = scmp.eq.s32.totalorder %s35, 1
      %p331 = scmp.ne.s32.totalorder %s326, %s328
      %p332 = scmp.eq.s32.totalorder %s35, 0
      %p333 = por %p331, %p332
      %p334 = scmp.ne.s32.totalorder %s326, %s328
      %p335 = scmp.eq.s32.totalorder %s40, 1
      %p336 = por %p334, %p335
      %p337 = scmp.ne.s32.totalorder %s328, %s329
      %p338 = scmp.eq.s32.totalorder %s40, 0
      %p339 = por %p337, %p338
      %p340 = scmp.ne.s32.totalorder %s328, %s329
      %p341 = scmp.eq.s32.totalorder %s41, 1
      %p342 = por %p340, %p341
      %p344 = scmp.ne.s32.totalorder %s329, %s343
      %p345 = scmp.eq.s32.totalorder %s41, 0
      %p346 = por %p344, %p345
      %s347 = ssub.s32 %s35, %s42
      %p348 = scmp.eq.s32.totalorder %s347, 0
      %s350 = sadd.s32 %s349, 1
      %s351 = scalar_select %p348, %s349, %s350
      %p354 = pneg %p348
      %p355 = scmp.eq.s32.totalorder %s35, 1
      %p356 = por %p354, %p355
      %p357 = scmp.ne.s32.totalorder %s349, %s352
      %p358 = scmp.eq.s32.totalorder %s35, 0
      %p359 = por %p357, %p358
      %p360 = scmp.ne.s32.totalorder %s349, %s352
      %p361 = scmp.eq.s32.totalorder %s40, 1
      %p362 = por %p360, %p361
      %p363 = scmp.ne.s32.totalorder %s352, %s353
      %p364 = scmp.eq.s32.totalorder %s40, 0
      %p365 = por %p363, %p364
      %p366 = scmp.ne.s32.totalorder %s352, %s353
      %p367 = scmp.eq.s32.totalorder %s41, 1
      %p368 = por %p366, %p367
      %p370 = scmp.ne.s32.totalorder %s353, %s369
      %p371 = scmp.eq.s32.totalorder %s41, 0
      %p372 = por %p370, %p371
      %p373 = scmp.le.s32.totalorder 1, %s35
      %p374 = scmp.lt.s32.totalorder %s35, 3
      %p375 = pnand %p373, %p374
      %p376 = pneg %p375
      // Predicated region
      $region9: #{transformer_forward.5} parent=5 // pred_check
        _
      $region10: #{transformer_forward.5} parent=5 // pred_check_branch
        %378 = sbr.rel (%p375) target = $region12
      $region11: #{transformer_forward.5} parent=5 // pred_region
        %s379 = ssub.s32 %s35, 1
        // Predicated region
        $region13: #{transformer_forward.5} parent=11 // pred_check
          %p380 = pneg %p108
        $region14: #{transformer_forward.5} parent=11 // pred_check_branch
          %382 = sbr.rel (%p380) target = $region16
        $region15: #{transformer_forward.5} parent=11 // pred_region
          %s384 = ssub.s32 3072, 3072
          %385 = vsyncadd [#allocation7], %s384
          %s386 = sshll.u32 [#allocation8], 4
          %s387 = int_to_ptr.vmem [resolvable:$true] %s386
          %392 = dma.hbm_to_vmem [thread:$0]  %s2, 3072, %s387, [#allocation7], 192, 192, 12
        $region16: #{transformer_forward.5} parent=11 // pred_fallthru
          _
        // Predicated region
        $region17: #{transformer_forward.5} parent=11 // pred_check
          %p393 = pneg %p129
        $region18: #{transformer_forward.5} parent=11 // pred_check_branch
          %395 = sbr.rel (%p393) target = $region20
        $region19: #{transformer_forward.5} parent=11 // pred_region
          %s397 = ssub.s32 48, 48
          %398 = vsyncadd [#allocation10], %s397
          %s400 = sshll.u32 [#allocation9], 4
          %s401 = int_to_ptr.vmem [resolvable:$true] %s400
          %403 = dma.hbm_to_vmem [thread:$0]  %s3, 48, %s401, [#allocation10]
        $region20: #{transformer_forward.5} parent=11 // pred_fallthru
          _
        // Predicated region
        $region21: #{transformer_forward.5} parent=11 // pred_check
          %p404 = pneg %p150
        $region22: #{transformer_forward.5} parent=11 // pred_check_branch
          %406 = sbr.rel (%p404) target = $region24
        $region23: #{transformer_forward.5} parent=11 // pred_region
          %s408 = ssub.s32 1024, 1024
          %409 = vsyncadd [#allocation10], %s408
          %s410 = sshll.u32 [#allocation11], 4
          %s411 = int_to_ptr.vmem [resolvable:$true] %s410
          %416 = dma.hbm_to_vmem [thread:$0]  %s4, 1024, %s411, [#allocation10], 64, 64, 4
        $region24: #{transformer_forward.5} parent=11 // pred_fallthru
          _
        // Predicated region
        $region25: #{transformer_forward.5} parent=11 // pred_check
          %p417 = pneg %p171
        $region26: #{transformer_forward.5} parent=11 // pred_check_branch
          %419 = sbr.rel (%p417) target = $region28
        $region27: #{transformer_forward.5} parent=11 // pred_region
          %s421 = ssub.s32 16, 16
          %422 = vsyncadd [#allocation13], %s421
          %s424 = sshll.u32 [#allocation12], 4
          %s425 = int_to_ptr.vmem [resolvable:$true] %s424
          %427 = dma.hbm_to_vmem [thread:$0]  %s5, 16, %s425, [#allocation13]
        $region28: #{transformer_forward.5} parent=11 // pred_fallthru
          _
        // Predicated region
        $region29: #{transformer_forward.5} parent=11 // pred_check
          %p428 = pneg %p192
        $region30: #{transformer_forward.5} parent=11 // pred_check_branch
          %430 = sbr.rel (%p428) target = $region32
        $region31: #{transformer_forward.5} parent=11 // pred_region
          %s432 = ssub.s32 16, 16
          %433 = vsyncadd [#allocation13], %s432
          %s435 = sshll.u32 [#allocation14], 4
          %s436 = int_to_ptr.vmem [resolvable:$true] %s435
          %438 = dma.hbm_to_vmem [thread:$0]  %s6, 16, %s436, [#allocation13]
        $region32: #{transformer_forward.5} parent=11 // pred_fallthru
          _
        // Predicated region
        $region33: #{transformer_forward.5} parent=11 // pred_check
          %p439 = pneg %p213
        $region34: #{transformer_forward.5} parent=11 // pred_check_branch
          %441 = sbr.rel (%p439) target = $region36
        $region35: #{transformer_forward.5} parent=11 // pred_region
          %s443 = ssub.s32 16, 16
          %444 = vsyncadd [#allocation16], %s443
          %s446 = sshll.u32 [#allocation15], 4
          %s447 = int_to_ptr.vmem [resolvable:$true] %s446
          %449 = dma.hbm_to_vmem [thread:$0]  %s7, 16, %s447, [#allocation16]
        $region36: #{transformer_forward.5} parent=11 // pred_fallthru
          _
        // Predicated region
        $region37: #{transformer_forward.5} parent=11 // pred_check
          %p450 = pneg %p234
        $region38: #{transformer_forward.5} parent=11 // pred_check_branch
          %452 = sbr.rel (%p450) target = $region40
        $region39: #{transformer_forward.5} parent=11 // pred_region
          %s454 = ssub.s32 2048, 2048
          %455 = vsyncadd [#allocation16], %s454
          %s456 = sshll.u32 [#allocation17], 4
          %s457 = int_to_ptr.vmem [resolvable:$true] %s456
          %462 = dma.hbm_to_vmem [thread:$0]  %s8, 2048, %s457, [#allocation16], 128, 128, 8
        $region40: #{transformer_forward.5} parent=11 // pred_fallthru
          _
        // Predicated region
        $region41: #{transformer_forward.5} parent=11 // pred_check
          %p463 = pneg %p255
        $region42: #{transformer_forward.5} parent=11 // pred_check_branch
          %465 = sbr.rel (%p463) target = $region44
        $region43: #{transformer_forward.5} parent=11 // pred_region
          %s467 = ssub.s32 32, 32
          %468 = vsyncadd [#allocation19], %s467
          %s470 = sshll.u32 [#allocation18], 4
          %s471 = int_to_ptr.vmem [resolvable:$true] %s470
          %473 = dma.hbm_to_vmem [thread:$0]  %s9, 32, %s471, [#allocation19]
        $region44: #{transformer_forward.5} parent=11 // pred_fallthru
          _
        // Predicated region
        $region45: #{transformer_forward.5} parent=11 // pred_check
          %p474 = pneg %p276
        $region46: #{transformer_forward.5} parent=11 // pred_check_branch
          %476 = sbr.rel (%p474) target = $region48
        $region47: #{transformer_forward.5} parent=11 // pred_region
          %s478 = ssub.s32 2048, 2048
          %479 = vsyncadd [#allocation19], %s478
          %s480 = sshll.u32 [#allocation20], 4
          %s481 = int_to_ptr.vmem [resolvable:$true] %s480
          %486 = dma.hbm_to_vmem [thread:$0]  %s10, 2048, %s481, [#allocation19], 64, 64, 4
        $region48: #{transformer_forward.5} parent=11 // pred_fallthru
          _
        // Predicated region
        $region49: #{transformer_forward.5} parent=11 // pred_check
          %p487 = pneg %p297
        $region50: #{transformer_forward.5} parent=11 // pred_check_branch
          %489 = sbr.rel (%p487) target = $region52
        $region51: #{transformer_forward.5} parent=11 // pred_region
          %s491 = ssub.s32 16, 16
          %492 = vsyncadd [#allocation22], %s491
          %s494 = sshll.u32 [#allocation21], 4
          %s495 = int_to_ptr.vmem [resolvable:$true] %s494
          %497 = dma.hbm_to_vmem [thread:$0]  %s11, 16, %s495, [#allocation22]
        $region52: #{transformer_forward.5} parent=11 // pred_fallthru
          _
        // Predicated region
        $region53: #{transformer_forward.5} parent=11 // pred_check
          %p498 = pneg %p318
        $region54: #{transformer_forward.5} parent=11 // pred_check_branch
          %500 = sbr.rel (%p498) target = $region56
        $region55: #{transformer_forward.5} parent=11 // pred_region
          %s502 = ssub.s32 16, 16
          %503 = vsyncadd [#allocation22], %s502
          %s505 = sshll.u32 [#allocation23], 4
          %s506 = int_to_ptr.vmem [resolvable:$true] %s505
          %508 = dma.hbm_to_vmem [thread:$0]  %s12, 16, %s506, [#allocation22]
        $region56: #{transformer_forward.5} parent=11 // pred_fallthru
          _
        // Predicated region
        $region57: #{transformer_forward.5} parent=11 // pred_check
          %p509 = pneg %p339
        $region58: #{transformer_forward.5} parent=11 // pred_check_branch
          %511 = sbr.rel (%p509) target = $region60
        $region59: #{transformer_forward.5} parent=11 // pred_region
          %s513 = ssub.s32 16, 16
          %514 = vsyncadd [#allocation25], %s513
          %s516 = sshll.u32 [#allocation24], 4
          %s517 = int_to_ptr.vmem [resolvable:$true] %s516
          %519 = dma.hbm_to_vmem [thread:$0]  %s13, 16, %s517, [#allocation25]
        $region60: #{transformer_forward.5} parent=11 // pred_fallthru
          _
      $region12: #{transformer_forward.5} parent=5 // pred_fallthru
        _
      %p520 = scmp.lt.s32.totalorder %s35, 2
      // Predicated region
      $region61: #{transformer_forward.5} parent=5 // pred_check
        %p521 = pneg %p520
      $region62: #{transformer_forward.5} parent=5 // pred_check_branch
        %523 = sbr.rel (%p521) target = $region64
      $region63: #{transformer_forward.5} parent=5 // pred_region
        // Predicated region
        $region65: #{transformer_forward.5} parent=63 // pred_check
          %p524 = pneg %p55
        $region66: #{transformer_forward.5} parent=63 // pred_check_branch
          %526 = sbr.rel (%p524) target = $region68
        $region67: #{transformer_forward.5} parent=63 // pred_region
          %s527 = sand.u32 %s45, 1
          %s528 = scalar_lea.sflag [#allocation4], %s527
          %s529 = sand.u32 %s45, 1
          %s530 = smul.addr %s529, 4
          %s531 = scalar_lea.vmem [#allocation3], %s530
          %s533 = ssub.s32 64, 64
          %534 = vsyncadd %s528, %s533
          %s535 = smul.addr %s35, 64
          %s536 = scalar_lea.hbm %s0, %s535
          %s538 = sshll.u32 %s531, 4
          %s539 = int_to_ptr.vmem [resolvable:$true] %s538
          %541 = dma.hbm_to_vmem [thread:$0]  %s536, 64, %s539, %s528
        $region68: #{transformer_forward.5} parent=63 // pred_fallthru
          _
        // Predicated region
        $region69: #{transformer_forward.5} parent=63 // pred_check
          %p542 = pneg %p81
        $region70: #{transformer_forward.5} parent=63 // pred_check_branch
          %544 = sbr.rel (%p542) target = $region72
        $region71: #{transformer_forward.5} parent=63 // pred_region
          %s545 = sand.u32 %s35, 1
          %s546 = scalar_lea.sflag [#allocation7], %s545
          %s547 = sand.u32 %s71, 1
          %s548 = scalar_lea.vmem [#allocation6], %s547
          %s550 = ssub.s32 16, 16
          %551 = vsyncadd %s546, %s550
          %s552 = smul.addr %s35, 16
          %s553 = scalar_lea.hbm %s1, %s552
          %s555 = sshll.u32 %s548, 4
          %s556 = int_to_ptr.vmem [resolvable:$true] %s555
          %558 = dma.hbm_to_vmem [thread:$0]  %s553, 16, %s556, %s546
        $region72: #{transformer_forward.5} parent=63 // pred_fallthru
          _
      $region64: #{transformer_forward.5} parent=5 // pred_fallthru
        _
      %p559 = scmp.le.s32.totalorder 1, %s35
      %p560 = scmp.lt.s32.totalorder %s35, 3
      %p561 = pnand %p559, %p560
      %p562 = pneg %p561
      // Predicated region
      $region73: #{transformer_forward.5} parent=5 // pred_check
        _
      $region74: #{transformer_forward.5} parent=5 // pred_check_branch
        %564 = sbr.rel (%p561) target = $region76
      $region75: #{transformer_forward.5} parent=5 // pred_region
        %s565 = ssub.s32 %s35, 1
        %s566 = sand.u32 %s48, 1
        %s567 = scalar_lea.sflag [#allocation4], %s566
        %s568 = sand.u32 %s48, 1
        %s569 = smul.addr %s568, 4
        %s570 = scalar_lea.vmem [#allocation3], %s569
        // Predicated region
        $region77: #{transformer_forward.5} parent=75 // pred_check
          %p571 = pneg %p61
        $region78: #{transformer_forward.5} parent=75 // pred_check_branch
          %573 = sbr.rel (%p571) target = $region80
        $region79: #{transformer_forward.5} parent=75 // pred_region
          %574 = dma.done %s567, 64
        $region80: #{transformer_forward.5} parent=75 // pred_fallthru
          _
        %s575 = sand.u32 %s40, 1
        %s576 = scalar_lea.sflag [#allocation7], %s575
        %s577 = sand.u32 %s74, 1
        %s578 = scalar_lea.vmem [#allocation6], %s577
        // Predicated region
        $region81: #{transformer_forward.5} parent=75 // pred_check
          %p579 = pneg %p87
        $region82: #{transformer_forward.5} parent=75 // pred_check_branch
          %581 = sbr.rel (%p579) target = $region84
        $region83: #{transformer_forward.5} parent=75 // pred_region
          %582 = dma.done %s576, 16
        $region84: #{transformer_forward.5} parent=75 // pred_fallthru
          _
        // Predicated region
        $region85: #{transformer_forward.5} parent=75 // pred_check
          %p583 = pneg %p108
        $region86: #{transformer_forward.5} parent=75 // pred_check_branch
          %585 = sbr.rel (%p583) target = $region88
        $region87: #{transformer_forward.5} parent=75 // pred_region
          %586 = dma.done [#allocation7], 3072
        $region88: #{transformer_forward.5} parent=75 // pred_fallthru
          _
        // Predicated region
        $region89: #{transformer_forward.5} parent=75 // pred_check
          %p587 = pneg %p129
        $region90: #{transformer_forward.5} parent=75 // pred_check_branch
          %589 = sbr.rel (%p587) target = $region92
        $region91: #{transformer_forward.5} parent=75 // pred_region
          %590 = dma.done [#allocation10], 48
        $region92: #{transformer_forward.5} parent=75 // pred_fallthru
          _
        // Predicated region
        $region93: #{transformer_forward.5} parent=75 // pred_check
          %p591 = pneg %p150
        $region94: #{transformer_forward.5} parent=75 // pred_check_branch
          %593 = sbr.rel (%p591) target = $region96
        $region95: #{transformer_forward.5} parent=75 // pred_region
          %594 = dma.done [#allocation10], 1024
        $region96: #{transformer_forward.5} parent=75 // pred_fallthru
          _
        // Predicated region
        $region97: #{transformer_forward.5} parent=75 // pred_check
          %p595 = pneg %p171
        $region98: #{transformer_forward.5} parent=75 // pred_check_branch
          %597 = sbr.rel (%p595) target = $region100
        $region99: #{transformer_forward.5} parent=75 // pred_region
          %598 = dma.done [#allocation13], 16
        $region100: #{transformer_forward.5} parent=75 // pred_fallthru
          _
        // Predicated region
        $region101: #{transformer_forward.5} parent=75 // pred_check
          %p599 = pneg %p192
        $region102: #{transformer_forward.5} parent=75 // pred_check_branch
          %601 = sbr.rel (%p599) target = $region104
        $region103: #{transformer_forward.5} parent=75 // pred_region
          %602 = dma.done [#allocation13], 16
        $region104: #{transformer_forward.5} parent=75 // pred_fallthru
          _
        // Predicated region
        $region105: #{transformer_forward.5} parent=75 // pred_check
          %p603 = pneg %p213
        $region106: #{transformer_forward.5} parent=75 // pred_check_branch
          %605 = sbr.rel (%p603) target = $region108
        $region107: #{transformer_forward.5} parent=75 // pred_region
          %606 = dma.done [#allocation16], 16
        $region108: #{transformer_forward.5} parent=75 // pred_fallthru
          _
        // Predicated region
        $region109: #{transformer_forward.5} parent=75 // pred_check
          %p607 = pneg %p234
        $region110: #{transformer_forward.5} parent=75 // pred_check_branch
          %609 = sbr.rel (%p607) target = $region112
        $region111: #{transformer_forward.5} parent=75 // pred_region
          %610 = dma.done [#allocation16], 2048
        $region112: #{transformer_forward.5} parent=75 // pred_fallthru
          _
        // Predicated region
        $region113: #{transformer_forward.5} parent=75 // pred_check
          %p611 = pneg %p255
        $region114: #{transformer_forward.5} parent=75 // pred_check_branch
          %613 = sbr.rel (%p611) target = $region116
        $region115: #{transformer_forward.5} parent=75 // pred_region
          %614 = dma.done [#allocation19], 32
        $region116: #{transformer_forward.5} parent=75 // pred_fallthru
          _
        // Predicated region
        $region117: #{transformer_forward.5} parent=75 // pred_check
          %p615 = pneg %p276
        $region118: #{transformer_forward.5} parent=75 // pred_check_branch
          %617 = sbr.rel (%p615) target = $region120
        $region119: #{transformer_forward.5} parent=75 // pred_region
          %618 = dma.done [#allocation19], 2048
        $region120: #{transformer_forward.5} parent=75 // pred_fallthru
          _
        // Predicated region
        $region121: #{transformer_forward.5} parent=75 // pred_check
          %p619 = pneg %p297
        $region122: #{transformer_forward.5} parent=75 // pred_check_branch
          %621 = sbr.rel (%p619) target = $region124
        $region123: #{transformer_forward.5} parent=75 // pred_region
          %622 = dma.done [#allocation22], 16
        $region124: #{transformer_forward.5} parent=75 // pred_fallthru
          _
        // Predicated region
        $region125: #{transformer_forward.5} parent=75 // pred_check
          %p623 = pneg %p318
        $region126: #{transformer_forward.5} parent=75 // pred_check_branch
          %625 = sbr.rel (%p623) target = $region128
        $region127: #{transformer_forward.5} parent=75 // pred_region
          %626 = dma.done [#allocation22], 16
        $region128: #{transformer_forward.5} parent=75 // pred_fallthru
          _
        // Predicated region
        $region129: #{transformer_forward.5} parent=75 // pred_check
          %p627 = pneg %p339
        $region130: #{transformer_forward.5} parent=75 // pred_check_branch
          %629 = sbr.rel (%p627) target = $region132
        $region131: #{transformer_forward.5} parent=75 // pred_region
          %630 = dma.done [#allocation25], 16
        $region132: #{transformer_forward.5} parent=75 // pred_fallthru
          _
        %s631 = sand.u32 %s48, 1
        %s632 = scalar_lea.sflag [#allocation4], %s631
        %s633 = sand.u32 %s48, 1
        %s634 = smul.addr %s633, 4
        %s635 = scalar_lea.vmem [#allocation3], %s634
        %p636 = pneg %p61
        %p637 = pneg %p58
        %s638 = sand.u32 %s40, 1
        %s639 = scalar_lea.sflag [#allocation7], %s638
        %s640 = sand.u32 %s74, 1
        %s641 = scalar_lea.vmem [#allocation6], %s640
        %p642 = pneg %p87
        %p643 = pneg %p84
        %p644 = pneg %p108
        %p645 = pneg %p105
        %p646 = pneg %p129
        %p647 = pneg %p126
        %p648 = pneg %p150
        %p649 = pneg %p147
        %p650 = pneg %p171
        %p651 = pneg %p168
        %p652 = pneg %p192
        %p653 = pneg %p189
        %p654 = pneg %p213
        %p655 = pneg %p210
        %p656 = pneg %p234
        %p657 = pneg %p231
        %p658 = pneg %p255
        %p659 = pneg %p252
        %p660 = pneg %p276
        %p661 = pneg %p273
        %p662 = pneg %p297
        %p663 = pneg %p294
        %p664 = pneg %p318
        %p665 = pneg %p315
        %p666 = pneg %p339
        %p667 = pneg %p336
        %p668 = pneg %p365
        %p669 = pneg %p362
        %s670 = sand.u32 %s352, 1
        %s671 = scalar_lea.sflag [#allocation5], %s670
        %s672 = sand.u32 %s352, 1
        %s673 = smul.addr %s672, 4
        %s674 = scalar_lea.vmem [#allocation26], %s673
        %v676 = vld [vmem:[%s570] sm:$0xf]
        %v677 = vunpack.c.l.bf16 %v676
        %v678 = vld [vmem:[%s578] sm:$0x1]
        %v679 = vld [vmem:[#allocation8] sm:$0xff]
        %v680 = vld [vmem:[#allocation8 + $0x8] sm:$0xf]
        %v681 = vld [vmem:[#allocation8 + $0xc] sm:$0xff]
        %v682 = vld [vmem:[#allocation8 + $0x14] sm:$0xf]
        %v683 = vld [vmem:[#allocation8 + $0x18] sm:$0xff]
        %v684 = vld [vmem:[#allocation8 + $0x20] sm:$0xf]
        %v685 = vld [vmem:[#allocation8 + $0x24] sm:$0xff]
        %v686 = vld [vmem:[#allocation8 + $0x2c] sm:$0xf]
        %v687 = vld [vmem:[#allocation8 + $0x30] sm:$0xff]
        %v688 = vld [vmem:[#allocation8 + $0x38] sm:$0xf]
        %v689 = vld [vmem:[#allocation8 + $0x3c] sm:$0xff]
        %v690 = vld [vmem:[#allocation8 + $0x44] sm:$0xf]
        %v691 = vld [vmem:[#allocation8 + $0x48] sm:$0xff]
        %v692 = vld [vmem:[#allocation8 + $0x50] sm:$0xf]
        %v693 = vld [vmem:[#allocation8 + $0x54] sm:$0xff]
        %v694 = vld [vmem:[#allocation8 + $0x5c] sm:$0xf]
        %v695 = vld [vmem:[#allocation8 + $0x60] sm:$0xff]
        %v696 = vld [vmem:[#allocation8 + $0x68] sm:$0xf]
        %v697 = vld [vmem:[#allocation8 + $0x6c] sm:$0xff]
        %v698 = vld [vmem:[#allocation8 + $0x74] sm:$0xf]
        %v699 = vld [vmem:[#allocation8 + $0x78] sm:$0xff]
        %v700 = vld [vmem:[#allocation8 + $0x80] sm:$0xf]
        %v701 = vld [vmem:[#allocation8 + $0x84] sm:$0xff]
        %v702 = vld [vmem:[#allocation8 + $0x8c] sm:$0xf]
        %v703 = vld [vmem:[#allocation8 + $0x90] sm:$0xff]
        %v704 = vld [vmem:[#allocation8 + $0x98] sm:$0xf]
        %v705 = vld [vmem:[#allocation8 + $0x9c] sm:$0xff]
        %v706 = vld [vmem:[#allocation8 + $0xa4] sm:$0xf]
        %v707 = vld [vmem:[#allocation8 + $0xa8] sm:$0xff]
        %v708 = vld [vmem:[#allocation8 + $0xb0] sm:$0xf]
        %v709 = vld [vmem:[#allocation8 + $0xb4] sm:$0xff]
        %v710 = vld [vmem:[#allocation8 + $0xbc] sm:$0xf]
        %v711 = vld [vmem:[#allocation9] sm:$0x7]
        %v713 = vlaneseq
        %v714 = vshrl.u32 %v713, 7
        %v715 = vsub.s32 0, %v714
        %v716 = vrot.slane %v711, %v715
        %v717 = vlaneseq
        %v718 = vshrl.u32 %v717, 7
        %v719 = vsub.s32 1, %v718
        %v720 = vrot.slane %v711, %v719
        %v721 = vlaneseq
        %v722 = vshrl.u32 %v721, 7
        %v723 = vsub.s32 2, %v722
        %v724 = vrot.slane %v711, %v723
        %v760 = vunpack.c.l.b16 %v679
        %v761 = vunpack.c.h.b16 %v679
        %v762 = vunpack.c.l.b16 %v680
        %v763 = vunpack.c.l.b16 %v681
        %v764 = vunpack.c.h.b16 %v681
        %v765 = vunpack.c.l.b16 %v682
        %v766 = vunpack.c.l.b16 %v683
        %v767 = vunpack.c.h.b16 %v683
        %v768 = vunpack.c.l.b16 %v684
        %v769 = vunpack.c.l.b16 %v685
        %v770 = vunpack.c.h.b16 %v685
        %v771 = vunpack.c.l.b16 %v686
        %v772 = vunpack.c.l.b16 %v687
        %v773 = vunpack.c.h.b16 %v687
        %v774 = vunpack.c.l.b16 %v688
        %v775 = vunpack.c.l.b16 %v689
        %v776 = vunpack.c.h.b16 %v689
        %v777 = vunpack.c.l.b16 %v690
        %v778 = vunpack.c.l.b16 %v691
        %v779 = vunpack.c.h.b16 %v691
        %v780 = vunpack.c.l.b16 %v692
        %v781 = vunpack.c.l.b16 %v693
        %v782 = vunpack.c.h.b16 %v693
        %v783 = vunpack.c.l.b16 %v694
        %v784 = vunpack.c.l.b16 %v695
        %v785 = vunpack.c.h.b16 %v695
        %v786 = vunpack.c.l.b16 %v696
        %v787 = vunpack.c.l.b16 %v697
        %v788 = vunpack.c.h.b16 %v697
        %v789 = vunpack.c.l.b16 %v698
        %v790 = vunpack.c.l.b16 %v699
        %v791 = vunpack.c.h.b16 %v699
        %v792 = vunpack.c.l.b16 %v700
        %v793 = vunpack.c.l.b16 %v701
        %v794 = vunpack.c.h.b16 %v701
        %v795 = vunpack.c.l.b16 %v702
        %v796 = vunpack.c.l.b16 %v703
        %v797 = vunpack.c.h.b16 %v703
        %v798 = vunpack.c.l.b16 %v704
        %v799 = vunpack.c.l.b16 %v705
        %v800 = vunpack.c.h.b16 %v705
        %v801 = vunpack.c.l.b16 %v706
        %v802 = vunpack.c.l.b16 %v707
        %v803 = vunpack.c.h.b16 %v707
        %v804 = vunpack.c.l.b16 %v708
        %v805 = vunpack.c.l.b16 %v709
        %v806 = vunpack.c.h.b16 %v709
        %v807 = vunpack.c.l.b16 %v710
        %v808 = vpack.c.b16 %v763, %v760
        %v809 = vpack.c.b16 %v764, %v761
        %v810 = vpack.c.b16 %v765, %v762
        %v811 = vpack.c.b16 %v769, %v766
        %v812 = vpack.c.b16 %v770, %v767
        %v813 = vpack.c.b16 %v771, %v768
        %v814 = vpack.c.b16 %v775, %v772
        %v815 = vpack.c.b16 %v776, %v773
        %v816 = vpack.c.b16 %v777, %v774
        %v817 = vpack.c.b16 %v781, %v778
        %v818 = vpack.c.b16 %v782, %v779
        %v819 = vpack.c.b16 %v783, %v780
        %v820 = vpack.c.b16 %v787, %v784
        %v821 = vpack.c.b16 %v788, %v785
        %v822 = vpack.c.b16 %v789, %v786
        %v823 = vpack.c.b16 %v793, %v790
        %v824 = vpack.c.b16 %v794, %v791
        %v825 = vpack.c.b16 %v795, %v792
        %v826 = vpack.c.b16 %v799, %v796
        %v827 = vpack.c.b16 %v800, %v797
        %v828 = vpack.c.b16 %v801, %v798
        %v829 = vpack.c.b16 %v805, %v802
        %v830 = vpack.c.b16 %v806, %v803
        %v831 = vpack.c.b16 %v807, %v804
        %856 = vmatprep.subr.bf16.mxu0 %v809
        %857 = vmatpush1.bf16.msra.mxu0 %v808
        %858 = vmatprep.subr.bf16.mxu0 %v812
        %859 = vmatpush1.bf16.msra.mxu0 %v811
        %860 = vmatprep.subr.bf16.mxu0 %v815
        %861 = vmatpush1.bf16.msra.mxu0 %v814
        %862 = vmatprep.subr.bf16.mxu0 %v818
        %863 = vmatpush1.bf16.msra.mxu0 %v817
        %864 = vmatprep.subr.bf16.mxu0 %v821
        %865 = vmatpush1.bf16.msra.mxu0 %v820
        %866 = vmatprep.subr.bf16.mxu0 %v824
        %867 = vmatpush1.bf16.msra.mxu0 %v823
        %868 = vmatprep.subr.bf16.mxu0 %v827
        %869 = vmatpush1.bf16.msra.mxu0 %v826
        %870 = vmatprep.subr.bf16.mxu0 %v830
        %871 = vmatpush1.bf16.msra.mxu0 %v829
        %872 = vmatprep.subr.bf16.mxu0 0
        %873 = vmatpush1.bf16.msra.mxu0 0
        %874 = vmatprep.subr.bf16.mxu0 0
        %875 = vmatpush1.bf16.msra.mxu0 0
        %876 = vmatprep.subr.bf16.mxu0 0
        %877 = vmatpush1.bf16.msra.mxu0 0
        %878 = vmatprep.subr.bf16.mxu0 0
        %879 = vmatpush1.bf16.msra.mxu0 0
        %880 = vmatprep.subr.bf16.mxu0 0
        %881 = vmatpush1.bf16.msra.mxu0 0
        %882 = vmatprep.subr.bf16.mxu0 0
        %883 = vmatpush1.bf16.msra.mxu0 0
        %884 = vmatprep.subr.bf16.mxu0 0
        %885 = vmatpush1.bf16.msra.mxu0 0
        %886 = vmatprep.subr.bf16.mxu0 0
        %887 = vmatpush1.bf16.msra.mxu0 0
        %888 = vmatprep.mubr.bf16.mxu0 0
        %889 = vmatmul.mubr.bf16.gmra.mrb[0].mxu0 %v676
        %v890 = vpop.f32.mrb[0].mxu0
        %v891 = vadd.f32 %v716, %v890
        %v892 = vpop.f32.mrb[0].mxu0
        %v893 = vadd.f32 %v720, %v892
        %v894 = vpop.f32.mrb[0].mxu0
        %v895 = vpop.f32.mrb[0].mxu0
        %896 = vdwg.mxu0
        %897 = vmatprep.subr.bf16.mxu0 0
        %898 = vmatpush1.bf16.msra.mxu0 %v810
        %899 = vmatprep.subr.bf16.mxu0 0
        %900 = vmatpush1.bf16.msra.mxu0 %v813
        %901 = vmatprep.subr.bf16.mxu0 0
        %902 = vmatpush1.bf16.msra.mxu0 %v816
        %903 = vmatprep.subr.bf16.mxu0 0
        %904 = vmatpush1.bf16.msra.mxu0 %v819
        %905 = vmatprep.subr.bf16.mxu0 0
        %906 = vmatpush1.bf16.msra.mxu0 %v822
        %907 = vmatprep.subr.bf16.mxu0 0
        %908 = vmatpush1.bf16.msra.mxu0 %v825
        %909 = vmatprep.subr.bf16.mxu0 0
        %910 = vmatpush1.bf16.msra.mxu0 %v828
        %911 = vmatprep.subr.bf16.mxu0 0
        %912 = vmatpush1.bf16.msra.mxu0 %v831
        %913 = vmatprep.subr.bf16.mxu0 0
        %914 = vmatpush1.bf16.msra.mxu0 0
        %915 = vmatprep.subr.bf16.mxu0 0
        %916 = vmatpush1.bf16.msra.mxu0 0
        %917 = vmatprep.subr.bf16.mxu0 0
        %918 = vmatpush1.bf16.msra.mxu0 0
        %919 = vmatprep.subr.bf16.mxu0 0
        %920 = vmatpush1.bf16.msra.mxu0 0
        %921 = vmatprep.subr.bf16.mxu0 0
        %922 = vmatpush1.bf16.msra.mxu0 0
        %923 = vmatprep.subr.bf16.mxu0 0
        %924 = vmatpush1.bf16.msra.mxu0 0
        %925 = vmatprep.subr.bf16.mxu0 0
        %926 = vmatpush1.bf16.msra.mxu0 0
        %927 = vmatprep.subr.bf16.mxu0 0
        %928 = vmatpush1.bf16.msra.mxu0 0
        %929 = vmatprep.mubr.bf16.mxu0 0
        %930 = vmatmul.mubr.bf16.gmra.mrb[0].mxu0 %v676
        %v931 = vpop.f32.mrb[0].mxu0
        %v932 = vadd.f32 %v724, %v931
        %v933 = vpop.f32.mrb[0].mxu0
        %v934 = vpop.f32.mrb[0].mxu0
        %v935 = vpop.f32.mrb[0].mxu0
        %936 = vdwg.mxu0
        %v937 = vld [vmem:[#allocation11] sm:$0xf]
        %v938 = vld [vmem:[#allocation11 + $0x4] sm:$0xf]
        %v939 = vld [vmem:[#allocation11 + $0x8] sm:$0xf]
        %v940 = vld [vmem:[#allocation11 + $0xc] sm:$0xf]
        %v941 = vld [vmem:[#allocation11 + $0x10] sm:$0xf]
        %v942 = vld [vmem:[#allocation11 + $0x14] sm:$0xf]
        %v943 = vld [vmem:[#allocation11 + $0x18] sm:$0xf]
        %v944 = vld [vmem:[#allocation11 + $0x1c] sm:$0xf]
        %v945 = vld [vmem:[#allocation11 + $0x20] sm:$0xf]
        %v946 = vld [vmem:[#allocation11 + $0x24] sm:$0xf]
        %v947 = vld [vmem:[#allocation11 + $0x28] sm:$0xf]
        %v948 = vld [vmem:[#allocation11 + $0x2c] sm:$0xf]
        %v949 = vld [vmem:[#allocation11 + $0x30] sm:$0xf]
        %v950 = vld [vmem:[#allocation11 + $0x34] sm:$0xf]
        %v951 = vld [vmem:[#allocation11 + $0x38] sm:$0xf]
        %v952 = vld [vmem:[#allocation11 + $0x3c] sm:$0xf]
        %v953 = vld [vmem:[#allocation12] sm:$0x1]
        %v954 = vmul.f32 %v891, 0.17677669
        %v955 = vpack.c.bf16 %v954, %v954
        %v956 = vpack.c.bf16 %v893, %v893
        %v957 = vpack.c.bf16 %v932, %v932
        %v959 = vlaneseq
        %v960 = vshrl.u32 %v959, 7
        %v961 = vsub.s32 0, %v960
        %v962 = vrot.slane %v678, %v961
        %vm964 = vcmask 261120
        %v966 = vsel %vm964, %v955, 0
        %v969 = vsel %vm964, %v956, 0
        %971 = vmatprep.subr.bf16.mxu0 0
        %972 = vmatpush1.bf16.xpose.msra.mxu0 %v969
        %973 = vmatprep.subr.bf16.mxu0 0
        %974 = vmatpush1.bf16.xpose.msra.mxu0 0
        %975 = vmatprep.subr.bf16.mxu0 0
        %976 = vmatpush1.bf16.xpose.msra.mxu0 0
        %977 = vmatprep.subr.bf16.mxu0 0
        %978 = vmatpush1.bf16.xpose.msra.mxu0 0
        %979 = vmatprep.subr.bf16.mxu0 0
        %980 = vmatpush1.bf16.xpose.msra.mxu0 0
        %981 = vmatprep.subr.bf16.mxu0 0
        %982 = vmatpush1.bf16.xpose.msra.mxu0 0
        %983 = vmatprep.subr.bf16.mxu0 0
        %984 = vmatpush1.bf16.xpose.msra.mxu0 0
        %985 = vmatprep.subr.bf16.mxu0 0
        %986 = vmatpush1.bf16.xpose.msra.mxu0 0
        %987 = vmatprep.subr.bf16.mxu0 0
        %988 = vmatpush1.bf16.xpose.msra.mxu0 0
        %989 = vmatprep.subr.bf16.mxu0 0
        %990 = vmatpush1.bf16.xpose.msra.mxu0 0
        %991 = vmatprep.subr.bf16.mxu0 0
        %992 = vmatpush1.bf16.xpose.msra.mxu0 0
        %993 = vmatprep.subr.bf16.mxu0 0
        %994 = vmatpush1.bf16.xpose.msra.mxu0 0
        %995 = vmatprep.subr.bf16.mxu0 0
        %996 = vmatpush1.bf16.xpose.msra.mxu0 0
        %997 = vmatprep.subr.bf16.mxu0 0
        %998 = vmatpush1.bf16.xpose.msra.mxu0 0
        %999 = vmatprep.subr.bf16.mxu0 0
        %1000 = vmatpush1.bf16.xpose.msra.mxu0 0
        %1001 = vmatprep.subr.bf16.mxu0 0
        %1002 = vmatpush1.bf16.xpose.msra.mxu0 0
        %1003 = vmatprep.mubr.bf16.mxu0 0
        %1004 = vmatmul.mubr.bf16.gmra.mrb[0].mxu0 %v966
        %v1005 = vpop.f32.mrb[0].mxu0
        %v1006 = vadd.f32 %v962, %v1005
        %v1007 = vpop.f32.mrb[0].mxu0
        %v1008 = vpop.f32.mrb[0].mxu0
        %v1009 = vpop.f32.mrb[0].mxu0
        %1010 = vdwg.mxu0
        %vm1011 = vcmask 64512
        %v1012 = vsel %vm1011, %v1006, -inf
        %1013 = vmax.xlane.f32.xlu0 %v1012
        %v1014 = vpop.xlane.xlu0 %1013
        %v1015 = vsub.f32 %v1006, %v1014
        %v1016 = vmul.f32 %v1015, 1.442695
        %v1017 = vpow.pop %v1016
        %v1018 = vsel %vm1011, %v1017, 0.0
        %1019 = vadd.xlane.f32.xlu0 %v1018
        %v1020 = vpop.xlane.xlu0 %1019
        %v1021 = vrcp.pop %v1020
        %v1022 = vmul.f32 %v1017, %v1021
        %v1023 = vpack.c.bf16 %v1022, %v1022
        %v1025 = vsel %vm1011, %v1023, 0
        %vm1027 = vcmask 1043456
        %v1029 = vsel %vm1027, %v957, 0
        %1031 = vmatprep.subr.bf16.mxu0 0
        %1032 = vmatpush1.bf16.msra.mxu0 %v1029
        %1033 = vmatprep.subr.bf16.mxu0 0
        %1034 = vmatpush1.bf16.msra.mxu0 0
        %1035 = vmatprep.subr.bf16.mxu0 0
        %1036 = vmatpush1.bf16.msra.mxu0 0
        %1037 = vmatprep.subr.bf16.mxu0 0
        %1038 = vmatpush1.bf16.msra.mxu0 0
        %1039 = vmatprep.subr.bf16.mxu0 0
        %1040 = vmatpush1.bf16.msra.mxu0 0
        %1041 = vmatprep.subr.bf16.mxu0 0
        %1042 = vmatpush1.bf16.msra.mxu0 0
        %1043 = vmatprep.subr.bf16.mxu0 0
        %1044 = vmatpush1.bf16.msra.mxu0 0
        %1045 = vmatprep.subr.bf16.mxu0 0
        %1046 = vmatpush1.bf16.msra.mxu0 0
        %1047 = vmatprep.subr.bf16.mxu0 0
        %1048 = vmatpush1.bf16.msra.mxu0 0
        %1049 = vmatprep.subr.bf16.mxu0 0
        %1050 = vmatpush1.bf16.msra.mxu0 0
        %1051 = vmatprep.subr.bf16.mxu0 0
        %1052 = vmatpush1.bf16.msra.mxu0 0
        %1053 = vmatprep.subr.bf16.mxu0 0
        %1054 = vmatpush1.bf16.msra.mxu0 0
        %1055 = vmatprep.subr.bf16.mxu0 0
        %1056 = vmatpush1.bf16.msra.mxu0 0
        %1057 = vmatprep.subr.bf16.mxu0 0
        %1058 = vmatpush1.bf16.msra.mxu0 0
        %1059 = vmatprep.subr.bf16.mxu0 0
        %1060 = vmatpush1.bf16.msra.mxu0 0
        %1061 = vmatprep.subr.bf16.mxu0 0
        %1062 = vmatpush1.bf16.msra.mxu0 0
        %1063 = vmatprep.mubr.bf16.mxu0 0
        %1064 = vmatmul.mubr.bf16.gmra.mrb[0].mxu0 %v1025
        %v1065 = vpop.f32.mrb[0].mxu0
        %v1066 = vadd.f32 0.0, %v1065
        %v1067 = vpop.f32.mrb[0].mxu0
        %v1068 = vpop.f32.mrb[0].mxu0
        %v1069 = vpop.f32.mrb[0].mxu0
        %1070 = vdwg.mxu0
        %1071 = vst.msk [vmem:[#allocation2] sm:$0xff] %vm964, %v1066
        %1073 = vrot.lane.b32.xlu0 %v955, 96
        %v1074 = vpop.permute.xlu0 %1073
        %1076 = vrot.lane.b32.xlu0 %v956, 96
        %v1077 = vpop.permute.xlu0 %1076
        %v1079 = vsel %vm964, %v1074, 0
        %v1082 = vsel %vm964, %v1077, 0
        %1084 = vmatprep.subr.bf16.mxu0 0
        %1085 = vmatpush1.bf16.xpose.msra.mxu0 %v1082
        %1086 = vmatprep.subr.bf16.mxu0 0
        %1087 = vmatpush1.bf16.xpose.msra.mxu0 0
        %1088 = vmatprep.subr.bf16.mxu0 0
        %1089 = vmatpush1.bf16.xpose.msra.mxu0 0
        %1090 = vmatprep.subr.bf16.mxu0 0
        %1091 = vmatpush1.bf16.xpose.msra.mxu0 0
        %1092 = vmatprep.subr.bf16.mxu0 0
        %1093 = vmatpush1.bf16.xpose.msra.mxu0 0
        %1094 = vmatprep.subr.bf16.mxu0 0
        %1095 = vmatpush1.bf16.xpose.msra.mxu0 0
        %1096 = vmatprep.subr.bf16.mxu0 0
        %1097 = vmatpush1.bf16.xpose.msra.mxu0 0
        %1098 = vmatprep.subr.bf16.mxu0 0
        %1099 = vmatpush1.bf16.xpose.msra.mxu0 0
        %1100 = vmatprep.subr.bf16.mxu0 0
        %1101 = vmatpush1.bf16.xpose.msra.mxu0 0
        %1102 = vmatprep.subr.bf16.mxu0 0
        %1103 = vmatpush1.bf16.xpose.msra.mxu0 0
        %1104 = vmatprep.subr.bf16.mxu0 0
        %1105 = vmatpush1.bf16.xpose.msra.mxu0 0
        %1106 = vmatprep.subr.bf16.mxu0 0
        %1107 = vmatpush1.bf16.xpose.msra.mxu0 0
        %1108 = vmatprep.subr.bf16.mxu0 0
        %1109 = vmatpush1.bf16.xpose.msra.mxu0 0
        %1110 = vmatprep.subr.bf16.mxu0 0
        %1111 = vmatpush1.bf16.xpose.msra.mxu0 0
        %1112 = vmatprep.subr.bf16.mxu0 0
        %1113 = vmatpush1.bf16.xpose.msra.mxu0 0
        %1114 = vmatprep.subr.bf16.mxu0 0
        %1115 = vmatpush1.bf16.xpose.msra.mxu0 0
        %1116 = vmatprep.mubr.bf16.mxu0 0
        %1117 = vmatmul.mubr.bf16.gmra.mrb[0].mxu0 %v1079
        %v1118 = vpop.f32.mrb[0].mxu0
        %v1119 = vadd.f32 %v962, %v1118
        %v1120 = vpop.f32.mrb[0].mxu0
        %v1121 = vpop.f32.mrb[0].mxu0
        %v1122 = vpop.f32.mrb[0].mxu0
        %1123 = vdwg.mxu0
        %v1124 = vsel %vm1011, %v1119, -inf
        %1125 = vmax.xlane.f32.xlu0 %v1124
        %v1126 = vpop.xlane.xlu0 %1125
        %v1127 = vsub.f32 %v1119, %v1126
        %v1128 = vmul.f32 %v1127, 1.442695
        %v1129 = vpow.pop %v1128
        %v1130 = vsel %vm1011, %v1129, 0.0
        %1131 = vadd.xlane.f32.xlu0 %v1130
        %v1132 = vpop.xlane.xlu0 %1131
        %v1133 = vrcp.pop %v1132
        %v1134 = vmul.f32 %v1129, %v1133
        %v1135 = vpack.c.bf16 %v1134, %v1134
        %1137 = vrot.lane.b32.xlu0 %v957, 96
        %v1138 = vpop.permute.xlu0 %1137
        %v1140 = vsel %vm1011, %v1135, 0
        %v1143 = vsel %vm1027, %v1138, 0
        %1145 = vmatprep.subr.bf16.mxu0 0
        %1146 = vmatpush1.bf16.msra.mxu0 %v1143
        %1147 = vmatprep.subr.bf16.mxu0 0
        %1148 = vmatpush1.bf16.msra.mxu0 0
        %1149 = vmatprep.subr.bf16.mxu0 0
        %1150 = vmatpush1.bf16.msra.mxu0 0
        %1151 = vmatprep.subr.bf16.mxu0 0
        %1152 = vmatpush1.bf16.msra.mxu0 0
        %1153 = vmatprep.subr.bf16.mxu0 0
        %1154 = vmatpush1.bf16.msra.mxu0 0
        %1155 = vmatprep.subr.bf16.mxu0 0
        %1156 = vmatpush1.bf16.msra.mxu0 0
        %1157 = vmatprep.subr.bf16.mxu0 0
        %1158 = vmatpush1.bf16.msra.mxu0 0
        %1159 = vmatprep.subr.bf16.mxu0 0
        %1160 = vmatpush1.bf16.msra.mxu0 0
        %1161 = vmatprep.subr.bf16.mxu0 0
        %1162 = vmatpush1.bf16.msra.mxu0 0
        %1163 = vmatprep.subr.bf16.mxu0 0
        %1164 = vmatpush1.bf16.msra.mxu0 0
        %1165 = vmatprep.subr.bf16.mxu0 0
        %1166 = vmatpush1.bf16.msra.mxu0 0
        %1167 = vmatprep.subr.bf16.mxu0 0
        %1168 = vmatpush1.bf16.msra.mxu0 0
        %1169 = vmatprep.subr.bf16.mxu0 0
        %1170 = vmatpush1.bf16.msra.mxu0 0
        %1171 = vmatprep.subr.bf16.mxu0 0
        %1172 = vmatpush1.bf16.msra.mxu0 0
        %1173 = vmatprep.subr.bf16.mxu0 0
        %1174 = vmatpush1.bf16.msra.mxu0 0
        %1175 = vmatprep.subr.bf16.mxu0 0
        %1176 = vmatpush1.bf16.msra.mxu0 0
        %1177 = vmatprep.mubr.bf16.mxu0 0
        %1178 = vmatmul.mubr.bf16.gmra.mrb[0].mxu0 %v1140
        %v1179 = vpop.f32.mrb[0].mxu0
        %v1180 = vadd.f32 0.0, %v1179
        %v1181 = vpop.f32.mrb[0].mxu0
        %v1182 = vpop.f32.mrb[0].mxu0
        %v1183 = vpop.f32.mrb[0].mxu0
        %1184 = vdwg.mxu0
        %1186 = vrot.lane.b32.xlu0 %v1180, 32
        %v1187 = vpop.permute.xlu0 %1186
        %vm1189 = vcmask 523520
        %1190 = vst.msk [vmem:[#allocation2] sm:$0xff] %vm1189, %v1187
        %1191 = vrot.lane.b32.xlu0 %v955, 64
        %v1192 = vpop.permute.xlu0 %1191
        %1193 = vrot.lane.b32.xlu0 %v956, 64
        %v1194 = vpop.permute.xlu0 %1193
        %v1196 = vsel %vm964, %v1192, 0
        %v1199 = vsel %vm964, %v1194, 0
        %1201 = vmatprep.subr.bf16.mxu0 0
        %1202 = vmatpush1.bf16.xpose.msra.mxu0 %v1199
        %1203 = vmatprep.subr.bf16.mxu0 0
        %1204 = vmatpush1.bf16.xpose.msra.mxu0 0
        %1205 = vmatprep.subr.bf16.mxu0 0
        %1206 = vmatpush1.bf16.xpose.msra.mxu0 0
        %1207 = vmatprep.subr.bf16.mxu0 0
        %1208 = vmatpush1.bf16.xpose.msra.mxu0 0
        %1209 = vmatprep.subr.bf16.mxu0 0
        %1210 = vmatpush1.bf16.xpose.msra.mxu0 0
        %1211 = vmatprep.subr.bf16.mxu0 0
        %1212 = vmatpush1.bf16.xpose.msra.mxu0 0
        %1213 = vmatprep.subr.bf16.mxu0 0
        %1214 = vmatpush1.bf16.xpose.msra.mxu0 0
        %1215 = vmatprep.subr.bf16.mxu0 0
        %1216 = vmatpush1.bf16.xpose.msra.mxu0 0
        %1217 = vmatprep.subr.bf16.mxu0 0
        %1218 = vmatpush1.bf16.xpose.msra.mxu0 0
        %1219 = vmatprep.subr.bf16.mxu0 0
        %1220 = vmatpush1.bf16.xpose.msra.mxu0 0
        %1221 = vmatprep.subr.bf16.mxu0 0
        %1222 = vmatpush1.bf16.xpose.msra.mxu0 0
        %1223 = vmatprep.subr.bf16.mxu0 0
        %1224 = vmatpush1.bf16.xpose.msra.mxu0 0
        %1225 = vmatprep.subr.bf16.mxu0 0
        %1226 = vmatpush1.bf16.xpose.msra.mxu0 0
        %1227 = vmatprep.subr.bf16.mxu0 0
        %1228 = vmatpush1.bf16.xpose.msra.mxu0 0
        %1229 = vmatprep.subr.bf16.mxu0 0
        %1230 = vmatpush1.bf16.xpose.msra.mxu0 0
        %1231 = vmatprep.subr.bf16.mxu0 0
        %1232 = vmatpush1.bf16.xpose.msra.mxu0 0
        %1233 = vmatprep.mubr.bf16.mxu0 0
        %1234 = vmatmul.mubr.bf16.gmra.mrb[0].mxu0 %v1196
        %v1235 = vpop.f32.mrb[0].mxu0
        %v1236 = vadd.f32 %v962, %v1235
        %v1237 = vpop.f32.mrb[0].mxu0
        %v1238 = vpop.f32.mrb[0].mxu0
        %v1239 = vpop.f32.mrb[0].mxu0
        %1240 = vdwg.mxu0
        %v1241 = vsel %vm1011, %v1236, -inf
        %1242 = vmax.xlane.f32.xlu0 %v1241
        %v1243 = vpop.xlane.xlu0 %1242
        %v1244 = vsub.f32 %v1236, %v1243
        %v1245 = vmul.f32 %v1244, 1.442695
        %v1246 = vpow.pop %v1245
        %v1247 = vsel %vm1011, %v1246, 0.0
        %1248 = vadd.xlane.f32.xlu0 %v1247
        %v1249 = vpop.xlane.xlu0 %1248
        %v1250 = vrcp.pop %v1249
        %v1251 = vmul.f32 %v1246, %v1250
        %v1252 = vpack.c.bf16 %v1251, %v1251
        %1253 = vrot.lane.b32.xlu0 %v957, 64
        %v1254 = vpop.permute.xlu0 %1253
        %v1256 = vsel %vm1011, %v1252, 0
        %v1259 = vsel %vm1027, %v1254, 0
        %1261 = vmatprep.subr.bf16.mxu0 0
        %1262 = vmatpush1.bf16.msra.mxu0 %v1259
        %1263 = vmatprep.subr.bf16.mxu0 0
        %1264 = vmatpush1.bf16.msra.mxu0 0
        %1265 = vmatprep.subr.bf16.mxu0 0
        %1266 = vmatpush1.bf16.msra.mxu0 0
        %1267 = vmatprep.subr.bf16.mxu0 0
        %1268 = vmatpush1.bf16.msra.mxu0 0
        %1269 = vmatprep.subr.bf16.mxu0 0
        %1270 = vmatpush1.bf16.msra.mxu0 0
        %1271 = vmatprep.subr.bf16.mxu0 0
        %1272 = vmatpush1.bf16.msra.mxu0 0
        %1273 = vmatprep.subr.bf16.mxu0 0
        %1274 = vmatpush1.bf16.msra.mxu0 0
        %1275 = vmatprep.subr.bf16.mxu0 0
        %1276 = vmatpush1.bf16.msra.mxu0 0
        %1277 = vmatprep.subr.bf16.mxu0 0
        %1278 = vmatpush1.bf16.msra.mxu0 0
        %1279 = vmatprep.subr.bf16.mxu0 0
        %1280 = vmatpush1.bf16.msra.mxu0 0
        %1281 = vmatprep.subr.bf16.mxu0 0
        %1282 = vmatpush1.bf16.msra.mxu0 0
        %1283 = vmatprep.subr.bf16.mxu0 0
        %1284 = vmatpush1.bf16.msra.mxu0 0
        %1285 = vmatprep.subr.bf16.mxu0 0
        %1286 = vmatpush1.bf16.msra.mxu0 0
        %1287 = vmatprep.subr.bf16.mxu0 0
        %1288 = vmatpush1.bf16.msra.mxu0 0
        %1289 = vmatprep.subr.bf16.mxu0 0
        %1290 = vmatpush1.bf16.msra.mxu0 0
        %1291 = vmatprep.subr.bf16.mxu0 0
        %1292 = vmatpush1.bf16.msra.mxu0 0
        %1293 = vmatprep.mubr.bf16.mxu0 0
        %1294 = vmatmul.mubr.bf16.gmra.mrb[0].mxu0 %v1256
        %v1295 = vpop.f32.mrb[0].mxu0
        %v1296 = vadd.f32 0.0, %v1295
        %v1297 = vpop.f32.mrb[0].mxu0
        %v1298 = vpop.f32.mrb[0].mxu0
        %v1299 = vpop.f32.mrb[0].mxu0
        %1300 = vdwg.mxu0
        %1302 = vrot.lane.b32.xlu0 %v1296, 64
        %v1303 = vpop.permute.xlu0 %1302
        %vm1305 = vcmask 785920
        %1306 = vst.msk [vmem:[#allocation2] sm:$0xff] %vm1305, %v1303
        %1307 = vrot.lane.b32.xlu0 %v955, 32
        %v1308 = vpop.permute.xlu0 %1307
        %1309 = vrot.lane.b32.xlu0 %v956, 32
        %v1310 = vpop.permute.xlu0 %1309
        %v1312 = vsel %vm964, %v1308, 0
        %v1315 = vsel %vm964, %v1310, 0
        %1317 = vmatprep.subr.bf16.mxu0 0
        %1318 = vmatpush1.bf16.xpose.msra.mxu0 %v1315
        %1319 = vmatprep.subr.bf16.mxu0 0
        %1320 = vmatpush1.bf16.xpose.msra.mxu0 0
        %1321 = vmatprep.subr.bf16.mxu0 0
        %1322 = vmatpush1.bf16.xpose.msra.mxu0 0
        %1323 = vmatprep.subr.bf16.mxu0 0
        %1324 = vmatpush1.bf16.xpose.msra.mxu0 0
        %1325 = vmatprep.subr.bf16.mxu0 0
        %1326 = vmatpush1.bf16.xpose.msra.mxu0 0
        %1327 = vmatprep.subr.bf16.mxu0 0
        %1328 = vmatpush1.bf16.xpose.msra.mxu0 0
        %1329 = vmatprep.subr.bf16.mxu0 0
        %1330 = vmatpush1.bf16.xpose.msra.mxu0 0
        %1331 = vmatprep.subr.bf16.mxu0 0
        %1332 = vmatpush1.bf16.xpose.msra.mxu0 0
        %1333 = vmatprep.subr.bf16.mxu0 0
        %1334 = vmatpush1.bf16.xpose.msra.mxu0 0
        %1335 = vmatprep.subr.bf16.mxu0 0
        %1336 = vmatpush1.bf16.xpose.msra.mxu0 0
        %1337 = vmatprep.subr.bf16.mxu0 0
        %1338 = vmatpush1.bf16.xpose.msra.mxu0 0
        %1339 = vmatprep.subr.bf16.mxu0 0
        %1340 = vmatpush1.bf16.xpose.msra.mxu0 0
        %1341 = vmatprep.subr.bf16.mxu0 0
        %1342 = vmatpush1.bf16.xpose.msra.mxu0 0
        %1343 = vmatprep.subr.bf16.mxu0 0
        %1344 = vmatpush1.bf16.xpose.msra.mxu0 0
        %1345 = vmatprep.subr.bf16.mxu0 0
        %1346 = vmatpush1.bf16.xpose.msra.mxu0 0
        %1347 = vmatprep.subr.bf16.mxu0 0
        %1348 = vmatpush1.bf16.xpose.msra.mxu0 0
        %1349 = vmatprep.mubr.bf16.mxu0 0
        %1350 = vmatmul.mubr.bf16.gmra.mrb[0].mxu0 %v1312
        %v1351 = vpop.f32.mrb[0].mxu0
        %v1352 = vadd.f32 %v962, %v1351
        %v1353 = vpop.f32.mrb[0].mxu0
        %v1354 = vpop.f32.mrb[0].mxu0
        %v1355 = vpop.f32.mrb[0].mxu0
        %1356 = vdwg.mxu0
        %v1357 = vsel %vm1011, %v1352, -inf
        %1358 = vmax.xlane.f32.xlu0 %v1357
        %v1359 = vpop.xlane.xlu0 %1358
        %v1360 = vsub.f32 %v1352, %v1359
        %v1361 = vmul.f32 %v1360, 1.442695
        %v1362 = vpow.pop %v1361
        %v1363 = vsel %vm1011, %v1362, 0.0
        %1364 = vadd.xlane.f32.xlu0 %v1363
        %v1365 = vpop.xlane.xlu0 %1364
        %v1366 = vrcp.pop %v1365
        %v1367 = vmul.f32 %v1362, %v1366
        %v1368 = vpack.c.bf16 %v1367, %v1367
        %1369 = vrot.lane.b32.xlu0 %v957, 32
        %v1370 = vpop.permute.xlu0 %1369
        %v1372 = vsel %vm1011, %v1368, 0
        %v1375 = vsel %vm1027, %v1370, 0
        %1377 = vmatprep.subr.bf16.mxu0 0
        %1378 = vmatpush1.bf16.msra.mxu0 %v1375
        %1379 = vmatprep.subr.bf16.mxu0 0
        %1380 = vmatpush1.bf16.msra.mxu0 0
        %1381 = vmatprep.subr.bf16.mxu0 0
        %1382 = vmatpush1.bf16.msra.mxu0 0
        %1383 = vmatprep.subr.bf16.mxu0 0
        %1384 = vmatpush1.bf16.msra.mxu0 0
        %1385 = vmatprep.subr.bf16.mxu0 0
        %1386 = vmatpush1.bf16.msra.mxu0 0
        %1387 = vmatprep.subr.bf16.mxu0 0
        %1388 = vmatpush1.bf16.msra.mxu0 0
        %1389 = vmatprep.subr.bf16.mxu0 0
        %1390 = vmatpush1.bf16.msra.mxu0 0
        %1391 = vmatprep.subr.bf16.mxu0 0
        %1392 = vmatpush1.bf16.msra.mxu0 0
        %1393 = vmatprep.subr.bf16.mxu0 0
        %1394 = vmatpush1.bf16.msra.mxu0 0
        %1395 = vmatprep.subr.bf16.mxu0 0
        %1396 = vmatpush1.bf16.msra.mxu0 0
        %1397 = vmatprep.subr.bf16.mxu0 0
        %1398 = vmatpush1.bf16.msra.mxu0 0
        %1399 = vmatprep.subr.bf16.mxu0 0
        %1400 = vmatpush1.bf16.msra.mxu0 0
        %1401 = vmatprep.subr.bf16.mxu0 0
        %1402 = vmatpush1.bf16.msra.mxu0 0
        %1403 = vmatprep.subr.bf16.mxu0 0
        %1404 = vmatpush1.bf16.msra.mxu0 0
        %1405 = vmatprep.subr.bf16.mxu0 0
        %1406 = vmatpush1.bf16.msra.mxu0 0
        %1407 = vmatprep.subr.bf16.mxu0 0
        %1408 = vmatpush1.bf16.msra.mxu0 0
        %1409 = vmatprep.mubr.bf16.mxu0 0
        %1410 = vmatmul.mubr.bf16.gmra.mrb[0].mxu0 %v1372
        %v1411 = vpop.f32.mrb[0].mxu0
        %v1412 = vadd.f32 0.0, %v1411
        %v1413 = vpop.f32.mrb[0].mxu0
        %v1414 = vpop.f32.mrb[0].mxu0
        %v1415 = vpop.f32.mrb[0].mxu0
        %1416 = vdwg.mxu0
        %1418 = vrot.lane.b32.xlu0 %v1412, 96
        %v1419 = vpop.permute.xlu0 %1418
        %vm1421 = vcmask 1048320
        %1422 = vst.msk [vmem:[#allocation2] sm:$0xff] %vm1421, %v1419
        %v1423 = vld [vmem:[#allocation2] sm:$0xff]
        %v1424 = vpack.c.bf16 %v1423, %v1423
        %v1426 = vlaneseq
        %v1427 = vshrl.u32 %v1426, 7
        %v1428 = vsub.s32 0, %v1427
        %v1429 = vrot.slane %v953, %v1428
        %v1447 = vunpack.c.l.b16 %v937
        %v1448 = vunpack.c.l.b16 %v938
        %v1449 = vunpack.c.l.b16 %v939
        %v1450 = vunpack.c.l.b16 %v940
        %v1451 = vunpack.c.l.b16 %v941
        %v1452 = vunpack.c.l.b16 %v942
        %v1453 = vunpack.c.l.b16 %v943
        %v1454 = vunpack.c.l.b16 %v944
        %v1455 = vunpack.c.l.b16 %v945
        %v1456 = vunpack.c.l.b16 %v946
        %v1457 = vunpack.c.l.b16 %v947
        %v1458 = vunpack.c.l.b16 %v948
        %v1459 = vunpack.c.l.b16 %v949
        %v1460 = vunpack.c.l.b16 %v950
        %v1461 = vunpack.c.l.b16 %v951
        %v1462 = vunpack.c.l.b16 %v952
        %v1463 = vpack.c.b16 %v1448, %v1447
        %v1464 = vpack.c.b16 %v1450, %v1449
        %v1465 = vpack.c.b16 %v1452, %v1451
        %v1466 = vpack.c.b16 %v1454, %v1453
        %v1467 = vpack.c.b16 %v1456, %v1455
        %v1468 = vpack.c.b16 %v1458, %v1457
        %v1469 = vpack.c.b16 %v1460, %v1459
        %v1470 = vpack.c.b16 %v1462, %v1461
        %1479 = vmatprep.subr.bf16.mxu0 0
        %1480 = vmatpush1.bf16.msra.mxu0 %v1463
        %1481 = vmatprep.subr.bf16.mxu0 0
        %1482 = vmatpush1.bf16.msra.mxu0 %v1464
        %1483 = vmatprep.subr.bf16.mxu0 0
        %1484 = vmatpush1.bf16.msra.mxu0 %v1465
        %1485 = vmatprep.subr.bf16.mxu0 0
        %1486 = vmatpush1.bf16.msra.mxu0 %v1466
        %1487 = vmatprep.subr.bf16.mxu0 0
        %1488 = vmatpush1.bf16.msra.mxu0 %v1467
        %1489 = vmatprep.subr.bf16.mxu0 0
        %1490 = vmatpush1.bf16.msra.mxu0 %v1468
        %1491 = vmatprep.subr.bf16.mxu0 0
        %1492 = vmatpush1.bf16.msra.mxu0 %v1469
        %1493 = vmatprep.subr.bf16.mxu0 0
        %1494 = vmatpush1.bf16.msra.mxu0 %v1470
        %1495 = vmatprep.subr.bf16.mxu0 0
        %1496 = vmatpush1.bf16.msra.mxu0 0
        %1497 = vmatprep.subr.bf16.mxu0 0
        %1498 = vmatpush1.bf16.msra.mxu0 0
        %1499 = vmatprep.subr.bf16.mxu0 0
        %1500 = vmatpush1.bf16.msra.mxu0 0
        %1501 = vmatprep.subr.bf16.mxu0 0
        %1502 = vmatpush1.bf16.msra.mxu0 0
        %1503 = vmatprep.subr.bf16.mxu0 0
        %1504 = vmatpush1.bf16.msra.mxu0 0
        %1505 = vmatprep.subr.bf16.mxu0 0
        %1506 = vmatpush1.bf16.msra.mxu0 0
        %1507 = vmatprep.subr.bf16.mxu0 0
        %1508 = vmatpush1.bf16.msra.mxu0 0
        %1509 = vmatprep.subr.bf16.mxu0 0
        %1510 = vmatpush1.bf16.msra.mxu0 0
        %1511 = vmatprep.mubr.bf16.mxu0 0
        %1512 = vmatmul.mubr.bf16.gmra.mrb[0].mxu0 %v1424
        %v1513 = vpop.f32.mrb[0].mxu0
        %v1514 = vadd.f32 %v1429, %v1513
        %v1515 = vpop.f32.mrb[0].mxu0
        %v1516 = vpop.f32.mrb[0].mxu0
        %v1517 = vpop.f32.mrb[0].mxu0
        %1518 = vdwg.mxu0
        %v1519 = vadd.f32 %v677, %v1514
        %v1520 = vld [vmem:[#allocation14] sm:$0x1]
        %v1521 = vld [vmem:[#allocation15] sm:$0x1]
        %1522 = vadd.xlane.f32.xlu0 %v1519
        %v1523 = vpop.xlane.xlu0 %1522
        %v1524 = vrcp.pop 128.0
        %v1525 = vmul.f32 %v1523, %v1524
        %v1526 = vsub.f32 %v1519, %v1525
        %v1527 = vmul.f32 %v1526, %v1526
        %1528 = vadd.xlane.f32.xlu0 %v1527
        %v1529 = vpop.xlane.xlu0 %1528
        %v1530 = vmul.f32 %v1529, %v1524
        %v1531 = vadd.f32 %v1530, 1e-05
        %v1532 = vrsqrt.pop %v1531
        %v1533 = vmul.f32 %v1526, %v1532
        %v1535 = vlaneseq
        %v1536 = vshrl.u32 %v1535, 7
        %v1537 = vsub.s32 0, %v1536
        %v1538 = vrot.slane %v1520, %v1537
        %v1540 = vmul.f32 %v1533, %v1538
        %v1542 = vlaneseq
        %v1543 = vshrl.u32 %v1542, 7
        %v1544 = vsub.s32 0, %v1543
        %v1545 = vrot.slane %v1521, %v1544
        %v1547 = vadd.f32 %v1540, %v1545
        %v1548 = vpack.c.bf16 %v1547, %v1547
        %v1549 = vld [vmem:[#allocation17] sm:$0xff]
        %v1550 = vld [vmem:[#allocation17 + $0x8] sm:$0xff]
        %v1551 = vld [vmem:[#allocation17 + $0x10] sm:$0xff]
        %v1552 = vld [vmem:[#allocation17 + $0x18] sm:$0xff]
        %v1553 = vld [vmem:[#allocation17 + $0x20] sm:$0xff]
        %v1554 = vld [vmem:[#allocation17 + $0x28] sm:$0xff]
        %v1555 = vld [vmem:[#allocation17 + $0x30] sm:$0xff]
        %v1556 = vld [vmem:[#allocation17 + $0x38] sm:$0xff]
        %v1557 = vld [vmem:[#allocation17 + $0x40] sm:$0xff]
        %v1558 = vld [vmem:[#allocation17 + $0x48] sm:$0xff]
        %v1559 = vld [vmem:[#allocation17 + $0x50] sm:$0xff]
        %v1560 = vld [vmem:[#allocation17 + $0x58] sm:$0xff]
        %v1561 = vld [vmem:[#allocation17 + $0x60] sm:$0xff]
        %v1562 = vld [vmem:[#allocation17 + $0x68] sm:$0xff]
        %v1563 = vld [vmem:[#allocation17 + $0x70] sm:$0xff]
        %v1564 = vld [vmem:[#allocation17 + $0x78] sm:$0xff]
        %v1565 = vld [vmem:[#allocation18] sm:$0x3]
        %v1567 = vlaneseq
        %v1568 = vshrl.u32 %v1567, 7
        %v1569 = vsub.s32 0, %v1568
        %v1570 = vrot.slane %v1565, %v1569
        %v1571 = vlaneseq
        %v1572 = vshrl.u32 %v1571, 7
        %v1573 = vsub.s32 1, %v1572
        %v1574 = vrot.slane %v1565, %v1573
        %v1593 = vunpack.c.l.b16 %v1549
        %v1594 = vunpack.c.h.b16 %v1549
        %v1595 = vunpack.c.l.b16 %v1550
        %v1596 = vunpack.c.h.b16 %v1550
        %v1597 = vunpack.c.l.b16 %v1551
        %v1598 = vunpack.c.h.b16 %v1551
        %v1599 = vunpack.c.l.b16 %v1552
        %v1600 = vunpack.c.h.b16 %v1552
        %v1601 = vunpack.c.l.b16 %v1553
        %v1602 = vunpack.c.h.b16 %v1553
        %v1603 = vunpack.c.l.b16 %v1554
        %v1604 = vunpack.c.h.b16 %v1554
        %v1605 = vunpack.c.l.b16 %v1555
        %v1606 = vunpack.c.h.b16 %v1555
        %v1607 = vunpack.c.l.b16 %v1556
        %v1608 = vunpack.c.h.b16 %v1556
        %v1609 = vunpack.c.l.b16 %v1557
        %v1610 = vunpack.c.h.b16 %v1557
        %v1611 = vunpack.c.l.b16 %v1558
        %v1612 = vunpack.c.h.b16 %v1558
        %v1613 = vunpack.c.l.b16 %v1559
        %v1614 = vunpack.c.h.b16 %v1559
        %v1615 = vunpack.c.l.b16 %v1560
        %v1616 = vunpack.c.h.b16 %v1560
        %v1617 = vunpack.c.l.b16 %v1561
        %v1618 = vunpack.c.h.b16 %v1561
        %v1619 = vunpack.c.l.b16 %v1562
        %v1620 = vunpack.c.h.b16 %v1562
        %v1621 = vunpack.c.l.b16 %v1563
        %v1622 = vunpack.c.h.b16 %v1563
        %v1623 = vunpack.c.l.b16 %v1564
        %v1624 = vunpack.c.h.b16 %v1564
        %v1625 = vpack.c.b16 %v1595, %v1593
        %v1626 = vpack.c.b16 %v1596, %v1594
        %v1627 = vpack.c.b16 %v1599, %v1597
        %v1628 = vpack.c.b16 %v1600, %v1598
        %v1629 = vpack.c.b16 %v1603, %v1601
        %v1630 = vpack.c.b16 %v1604, %v1602
        %v1631 = vpack.c.b16 %v1607, %v1605
        %v1632 = vpack.c.b16 %v1608, %v1606
        %v1633 = vpack.c.b16 %v1611, %v1609
        %v1634 = vpack.c.b16 %v1612, %v1610
        %v1635 = vpack.c.b16 %v1615, %v1613
        %v1636 = vpack.c.b16 %v1616, %v1614
        %v1637 = vpack.c.b16 %v1619, %v1617
        %v1638 = vpack.c.b16 %v1620, %v1618
        %v1639 = vpack.c.b16 %v1623, %v1621
        %v1640 = vpack.c.b16 %v1624, %v1622
        %1657 = vmatprep.subr.bf16.mxu0 %v1626
        %1658 = vmatpush1.bf16.msra.mxu0 %v1625
        %1659 = vmatprep.subr.bf16.mxu0 %v1628
        %1660 = vmatpush1.bf16.msra.mxu0 %v1627
        %1661 = vmatprep.subr.bf16.mxu0 %v1630
        %1662 = vmatpush1.bf16.msra.mxu0 %v1629
        %1663 = vmatprep.subr.bf16.mxu0 %v1632
        %1664 = vmatpush1.bf16.msra.mxu0 %v1631
        %1665 = vmatprep.subr.bf16.mxu0 %v1634
        %1666 = vmatpush1.bf16.msra.mxu0 %v1633
        %1667 = vmatprep.subr.bf16.mxu0 %v1636
        %1668 = vmatpush1.bf16.msra.mxu0 %v1635
        %1669 = vmatprep.subr.bf16.mxu0 %v1638
        %1670 = vmatpush1.bf16.msra.mxu0 %v1637
        %1671 = vmatprep.subr.bf16.mxu0 %v1640
        %1672 = vmatpush1.bf16.msra.mxu0 %v1639
        %1673 = vmatprep.subr.bf16.mxu0 0
        %1674 = vmatpush1.bf16.msra.mxu0 0
        %1675 = vmatprep.subr.bf16.mxu0 0
        %1676 = vmatpush1.bf16.msra.mxu0 0
        %1677 = vmatprep.subr.bf16.mxu0 0
        %1678 = vmatpush1.bf16.msra.mxu0 0
        %1679 = vmatprep.subr.bf16.mxu0 0
        %1680 = vmatpush1.bf16.msra.mxu0 0
        %1681 = vmatprep.subr.bf16.mxu0 0
        %1682 = vmatpush1.bf16.msra.mxu0 0
        %1683 = vmatprep.subr.bf16.mxu0 0
        %1684 = vmatpush1.bf16.msra.mxu0 0
        %1685 = vmatprep.subr.bf16.mxu0 0
        %1686 = vmatpush1.bf16.msra.mxu0 0
        %1687 = vmatprep.subr.bf16.mxu0 0
        %1688 = vmatpush1.bf16.msra.mxu0 0
        %1689 = vmatprep.mubr.bf16.mxu0 0
        %1690 = vmatmul.mubr.bf16.gmra.mrb[0].mxu0 %v1548
        %v1691 = vpop.f32.mrb[0].mxu0
        %v1692 = vadd.f32 %v1570, %v1691
        %v1693 = vpop.f32.mrb[0].mxu0
        %v1694 = vadd.f32 %v1574, %v1693
        %v1695 = vpop.f32.mrb[0].mxu0
        %v1696 = vpop.f32.mrb[0].mxu0
        %1697 = vdwg.mxu0
        %v1698 = vmax.f32 %v1692, 0.0
        %v1699 = vmax.f32 %v1694, 0.0
        %v1700 = vpack.c.bf16 %v1698, %v1698
        %v1701 = vpack.c.bf16 %v1699, %v1699
        %v1702 = vld [vmem:[#allocation20] sm:$0xf]
        %v1703 = vld [vmem:[#allocation20 + $0x4] sm:$0xf]
        %v1704 = vld [vmem:[#allocation20 + $0x8] sm:$0xf]
        %v1705 = vld [vmem:[#allocation20 + $0xc] sm:$0xf]
        %v1706 = vld [vmem:[#allocation20 + $0x10] sm:$0xf]
        %v1707 = vld [vmem:[#allocation20 + $0x14] sm:$0xf]
        %v1708 = vld [vmem:[#allocation20 + $0x18] sm:$0xf]
        %v1709 = vld [vmem:[#allocation20 + $0x1c] sm:$0xf]
        %v1710 = vld [vmem:[#allocation20 + $0x20] sm:$0xf]
        %v1711 = vld [vmem:[#allocation20 + $0x24] sm:$0xf]
        %v1712 = vld [vmem:[#allocation20 + $0x28] sm:$0xf]
        %v1713 = vld [vmem:[#allocation20 + $0x2c] sm:$0xf]
        %v1714 = vld [vmem:[#allocation20 + $0x30] sm:$0xf]
        %v1715 = vld [vmem:[#allocation20 + $0x34] sm:$0xf]
        %v1716 = vld [vmem:[#allocation20 + $0x38] sm:$0xf]
        %v1717 = vld [vmem:[#allocation20 + $0x3c] sm:$0xf]
        %v1718 = vld [vmem:[#allocation20 + $0x40] sm:$0xf]
        %v1719 = vld [vmem:[#allocation20 + $0x44] sm:$0xf]
        %v1720 = vld [vmem:[#allocation20 + $0x48] sm:$0xf]
        %v1721 = vld [vmem:[#allocation20 + $0x4c] sm:$0xf]
        %v1722 = vld [vmem:[#allocation20 + $0x50] sm:$0xf]
        %v1723 = vld [vmem:[#allocation20 + $0x54] sm:$0xf]
        %v1724 = vld [vmem:[#allocation20 + $0x58] sm:$0xf]
        %v1725 = vld [vmem:[#allocation20 + $0x5c] sm:$0xf]
        %v1726 = vld [vmem:[#allocation20 + $0x60] sm:$0xf]
        %v1727 = vld [vmem:[#allocation20 + $0x64] sm:$0xf]
        %v1728 = vld [vmem:[#allocation20 + $0x68] sm:$0xf]
        %v1729 = vld [vmem:[#allocation20 + $0x6c] sm:$0xf]
        %v1730 = vld [vmem:[#allocation20 + $0x70] sm:$0xf]
        %v1731 = vld [vmem:[#allocation20 + $0x74] sm:$0xf]
        %v1732 = vld [vmem:[#allocation20 + $0x78] sm:$0xf]
        %v1733 = vld [vmem:[#allocation20 + $0x7c] sm:$0xf]
        %v1734 = vld [vmem:[#allocation21] sm:$0x1]
        %v1736 = vlaneseq
        %v1737 = vshrl.u32 %v1736, 7
        %v1738 = vsub.s32 0, %v1737
        %v1739 = vrot.slane %v1734, %v1738
        %v1773 = vunpack.c.l.b16 %v1702
        %v1774 = vunpack.c.l.b16 %v1703
        %v1775 = vunpack.c.l.b16 %v1704
        %v1776 = vunpack.c.l.b16 %v1705
        %v1777 = vunpack.c.l.b16 %v1706
        %v1778 = vunpack.c.l.b16 %v1707
        %v1779 = vunpack.c.l.b16 %v1708
        %v1780 = vunpack.c.l.b16 %v1709
        %v1781 = vunpack.c.l.b16 %v1710
        %v1782 = vunpack.c.l.b16 %v1711
        %v1783 = vunpack.c.l.b16 %v1712
        %v1784 = vunpack.c.l.b16 %v1713
        %v1785 = vunpack.c.l.b16 %v1714
        %v1786 = vunpack.c.l.b16 %v1715
        %v1787 = vunpack.c.l.b16 %v1716
        %v1788 = vunpack.c.l.b16 %v1717
        %v1789 = vunpack.c.l.b16 %v1718
        %v1790 = vunpack.c.l.b16 %v1719
        %v1791 = vunpack.c.l.b16 %v1720
        %v1792 = vunpack.c.l.b16 %v1721
        %v1793 = vunpack.c.l.b16 %v1722
        %v1794 = vunpack.c.l.b16 %v1723
        %v1795 = vunpack.c.l.b16 %v1724
        %v1796 = vunpack.c.l.b16 %v1725
        %v1797 = vunpack.c.l.b16 %v1726
        %v1798 = vunpack.c.l.b16 %v1727
        %v1799 = vunpack.c.l.b16 %v1728
        %v1800 = vunpack.c.l.b16 %v1729
        %v1801 = vunpack.c.l.b16 %v1730
        %v1802 = vunpack.c.l.b16 %v1731
        %v1803 = vunpack.c.l.b16 %v1732
        %v1804 = vunpack.c.l.b16 %v1733
        %v1805 = vpack.c.b16 %v1774, %v1773
        %v1806 = vpack.c.b16 %v1776, %v1775
        %v1807 = vpack.c.b16 %v1778, %v1777
        %v1808 = vpack.c.b16 %v1780, %v1779
        %v1809 = vpack.c.b16 %v1782, %v1781
        %v1810 = vpack.c.b16 %v1784, %v1783
        %v1811 = vpack.c.b16 %v1786, %v1785
        %v1812 = vpack.c.b16 %v1788, %v1787
        %v1813 = vpack.c.b16 %v1790, %v1789
        %v1814 = vpack.c.b16 %v1792, %v1791
        %v1815 = vpack.c.b16 %v1794, %v1793
        %v1816 = vpack.c.b16 %v1796, %v1795
        %v1817 = vpack.c.b16 %v1798, %v1797
        %v1818 = vpack.c.b16 %v1800, %v1799
        %v1819 = vpack.c.b16 %v1802, %v1801
        %v1820 = vpack.c.b16 %v1804, %v1803
        %1837 = vmatprep.subr.bf16.mxu0 0
        %1838 = vmatpush1.bf16.msra.mxu0 %v1805
        %1839 = vmatprep.subr.bf16.mxu0 0
        %1840 = vmatpush1.bf16.msra.mxu0 %v1806
        %1841 = vmatprep.subr.bf16.mxu0 0
        %1842 = vmatpush1.bf16.msra.mxu0 %v1807
        %1843 = vmatprep.subr.bf16.mxu0 0
        %1844 = vmatpush1.bf16.msra.mxu0 %v1808
        %1845 = vmatprep.subr.bf16.mxu0 0
        %1846 = vmatpush1.bf16.msra.mxu0 %v1809
        %1847 = vmatprep.subr.bf16.mxu0 0
        %1848 = vmatpush1.bf16.msra.mxu0 %v1810
        %1849 = vmatprep.subr.bf16.mxu0 0
        %1850 = vmatpush1.bf16.msra.mxu0 %v1811
        %1851 = vmatprep.subr.bf16.mxu0 0
        %1852 = vmatpush1.bf16.msra.mxu0 %v1812
        %1853 = vmatprep.subr.bf16.mxu0 0
        %1854 = vmatpush1.bf16.msra.mxu0 %v1813
        %1855 = vmatprep.subr.bf16.mxu0 0
        %1856 = vmatpush1.bf16.msra.mxu0 %v1814
        %1857 = vmatprep.subr.bf16.mxu0 0
        %1858 = vmatpush1.bf16.msra.mxu0 %v1815
        %1859 = vmatprep.subr.bf16.mxu0 0
        %1860 = vmatpush1.bf16.msra.mxu0 %v1816
        %1861 = vmatprep.subr.bf16.mxu0 0
        %1862 = vmatpush1.bf16.msra.mxu0 %v1817
        %1863 = vmatprep.subr.bf16.mxu0 0
        %1864 = vmatpush1.bf16.msra.mxu0 %v1818
        %1865 = vmatprep.subr.bf16.mxu0 0
        %1866 = vmatpush1.bf16.msra.mxu0 %v1819
        %1867 = vmatprep.subr.bf16.mxu0 0
        %1868 = vmatpush1.bf16.msra.mxu0 %v1820
        %1869 = vmatprep.mubr.bf16.mxu0 %v1701
        %1870 = vmatmul.mubr.bf16.gmra.mrb[0].mxu0 %v1700
        %v1871 = vpop.f32.mrb[0].mxu0
        %v1872 = vadd.f32 %v1739, %v1871
        %v1873 = vpop.f32.mrb[0].mxu0
        %v1874 = vpop.f32.mrb[0].mxu0
        %v1875 = vpop.f32.mrb[0].mxu0
        %1876 = vdwg.mxu0
        %v1877 = vadd.f32 %v1547, %v1872
        %v1878 = vld [vmem:[#allocation23] sm:$0x1]
        %v1879 = vld [vmem:[#allocation24] sm:$0x1]
        %1880 = vadd.xlane.f32.xlu0 %v1877
        %v1881 = vpop.xlane.xlu0 %1880
        %v1882 = vmul.f32 %v1881, %v1524
        %v1883 = vsub.f32 %v1877, %v1882
        %v1884 = vmul.f32 %v1883, %v1883
        %1885 = vadd.xlane.f32.xlu0 %v1884
        %v1886 = vpop.xlane.xlu0 %1885
        %v1887 = vmul.f32 %v1886, %v1524
        %v1888 = vadd.f32 %v1887, 1e-05
        %v1889 = vrsqrt.pop %v1888
        %v1890 = vmul.f32 %v1883, %v1889
        %v1892 = vlaneseq
        %v1893 = vshrl.u32 %v1892, 7
        %v1894 = vsub.s32 0, %v1893
        %v1895 = vrot.slane %v1878, %v1894
        %v1897 = vmul.f32 %v1890, %v1895
        %v1899 = vlaneseq
        %v1900 = vshrl.u32 %v1899, 7
        %v1901 = vsub.s32 0, %v1900
        %v1902 = vrot.slane %v1879, %v1901
        %v1904 = vadd.f32 %v1897, %v1902
        %v1905 = vpack.c.bf16 %v1904, %v1904
        %1906 = vst [vmem:[%s674] sm:$0xf] %v1905
        %s1907 = sand.u32 %s352, 1
        %s1908 = scalar_lea.sflag [#allocation5], %s1907
        %s1909 = sand.u32 %s352, 1
        %s1910 = smul.addr %s1909, 4
        %s1911 = scalar_lea.vmem [#allocation26], %s1910
        // Predicated region
        $region133: #{transformer_forward.5} parent=75 // pred_check
          %p1912 = pneg %p362
        $region134: #{transformer_forward.5} parent=75 // pred_check_branch
          %1914 = sbr.rel (%p1912) target = $region136
        $region135: #{transformer_forward.5} parent=75 // pred_region
          %s1916 = ssub.s32 64, 64
          %1917 = vsyncadd %s1908, %s1916
          %s1918 = smul.addr %s40, 64
          %s1919 = scalar_lea.hbm %s14, %s1918
          %s1921 = sshll.u32 %s1911, 4
          %s1922 = int_to_ptr.vmem [resolvable:$true] %s1921
          %1924 = dma.vmem_to_hbm [thread:$0]  %s1922, 64, %s1919, %s1908
        $region136: #{transformer_forward.5} parent=75 // pred_fallthru
          _
      $region76: #{transformer_forward.5} parent=5 // pred_fallthru
        _
      %p1925 = scmp.le.s32.totalorder 2, %s35
      // Predicated region
      $region137: #{transformer_forward.5} parent=5 // pred_check
        %p1926 = pneg %p1925
      $region138: #{transformer_forward.5} parent=5 // pred_check_branch
        %1928 = sbr.rel (%p1926) target = $region140
      $region139: #{transformer_forward.5} parent=5 // pred_region
        %s1929 = ssub.s32 %s35, 2
        // Predicated region
        $region141: #{transformer_forward.5} parent=139 // pred_check
          %p1930 = pneg %p368
        $region142: #{transformer_forward.5} parent=139 // pred_check_branch
          %1932 = sbr.rel (%p1930) target = $region144
        $region143: #{transformer_forward.5} parent=139 // pred_region
          %s1933 = sand.u32 %s353, 1
          %s1934 = scalar_lea.sflag [#allocation5], %s1933
          %s1935 = sand.u32 %s353, 1
          %s1936 = smul.addr %s1935, 4
          %s1937 = scalar_lea.vmem [#allocation26], %s1936
          %1938 = dma.done %s1934, 64
        $region144: #{transformer_forward.5} parent=139 // pred_fallthru
          _
      $region140: #{transformer_forward.5} parent=5 // pred_fallthru
        _
    $region6: #{transformer_forward.5} parent=1 // loop_footer
      %s39 = sadd.s32 1, %s35
    $region7: #{transformer_forward.5} parent=1 // loop_footer_branch
      %34 = sbr.rel target = $region3
    $region8: #{transformer_forward.5} parent=1 // loop_exit
      _
    %1939 = vsyncpa [#allocation4], 1
    %s1940 = scalar_lea.sflag [#allocation4], 1
    %1941 = vsyncpa %s1940, 1
    %1942 = vsyncpa [#allocation7], 1
    %s1943 = scalar_lea.sflag [#allocation7], 1
    %1944 = vsyncpa %s1943, 1
    %1945 = vsyncpa [#allocation10], 1
    %1946 = vsyncpa [#allocation13], 1
    %1947 = vsyncpa [#allocation16], 1
    %1948 = vsyncpa [#allocation19], 1
    %1949 = vsyncpa [#allocation22], 1
    %1950 = vsyncpa [#allocation25], 1
    %1951 = vsyncpa [#allocation5], 1
    %s1952 = scalar_lea.sflag [#allocation5], 1
    %1953 = vsyncpa %s1952, 1

// kernel: transformer_forward.7
$region0: #{transformer_forward.7}
  #allocation0 [shape = 'u32[]', space=smem, size = 0x4, offset = 0x4, fixed_abs, tag = 'smem constant byte address 0x4 - core index']
  #allocation1 [shape = 'u32[144,128]{1,0:T(1,128)}', space=vmem, size = 0x12000, scoped, tag = 'internal scratch']
  #allocation2 [shape = 'f32[8,128]{1,0:T(8,128)}', space=vmem, size = 0x1000, scoped, tag = 'scratch operand']
  %s0 = inlined_call_operand.hbm [shape: bf16[2,8,128], index: 0, kind: input, shape index: {}]
  %s1 = inlined_call_operand.hbm [shape: bf16[2,8,128], index: 1, kind: input, shape index: {}]
  %s2 = inlined_call_operand.hbm [shape: f32[2,1,8], index: 2, kind: input, shape index: {}]
  %s3 = inlined_call_operand.hbm [shape: f32[2,1,8], index: 3, kind: input, shape index: {}]
  %s4 = inlined_call_operand.hbm [shape: bf16[128,384], index: 4, kind: input, shape index: {}]
  %s5 = inlined_call_operand.hbm [shape: f32[1,384], index: 5, kind: input, shape index: {}]
  %s6 = inlined_call_operand.hbm [shape: bf16[128,128], index: 6, kind: input, shape index: {}]
  %s7 = inlined_call_operand.hbm [shape: f32[1,128], index: 7, kind: input, shape index: {}]
  %s8 = inlined_call_operand.hbm [shape: f32[1,128], index: 8, kind: input, shape index: {}]
  %s9 = inlined_call_operand.hbm [shape: f32[1,128], index: 9, kind: input, shape index: {}]
  %s10 = inlined_call_operand.hbm [shape: bf16[128,128], index: 10, kind: input, shape index: {}]
  %s11 = inlined_call_operand.hbm [shape: f32[1,128], index: 11, kind: input, shape index: {}]
  %s12 = inlined_call_operand.hbm [shape: bf16[128,256], index: 12, kind: input, shape index: {}]
  %s13 = inlined_call_operand.hbm [shape: f32[1,256], index: 13, kind: input, shape index: {}]
  %s14 = inlined_call_operand.hbm [shape: bf16[128,128], index: 14, kind: input, shape index: {}]
  %s15 = inlined_call_operand.hbm [shape: f32[1,128], index: 15, kind: input, shape index: {}]
  %s16 = inlined_call_operand.hbm [shape: f32[1,128], index: 16, kind: input, shape index: {}]
  %s17 = inlined_call_operand.hbm [shape: f32[1,128], index: 17, kind: input, shape index: {}]
  %s18 = inlined_call_operand.hbm [shape: bf16[128,256], index: 18, kind: input, shape index: {}]
  %s19 = inlined_call_operand.hbm [shape: f32[1,256], index: 19, kind: input, shape index: {}]
  %s20 = inlined_call_operand.hbm [shape: bf16[256,128], index: 20, kind: input, shape index: {}]
  %s21 = inlined_call_operand.hbm [shape: f32[1,128], index: 21, kind: input, shape index: {}]
  %s22 = inlined_call_operand.hbm [shape: f32[1,128], index: 22, kind: input, shape index: {}]
  %s23 = inlined_call_operand.hbm [shape: f32[1,128], index: 23, kind: input, shape index: {}]
  %s24 = inlined_call_operand.hbm [shape: bf16[2,8,128], index: 24, kind: output, shape index: {}]
  %s25 = sld [smem:[#allocation0]]
  $region225: #{transformer_forward.7} parent=0
    _
  %s27 = ssub.s32 1, %s25
  %s28 = scalar_select 0, %s27, %s25
  $region1: #{transformer_forward.7} parent=0
    #allocation3 [shape = 'u8[4096]{0}', space=vmem, size = 0x1000, scoped, tag = 'input window, operand 0']
    #allocation4 [shape = 's32[2]{0}', space=sflag, size = 0x8, scoped, tag = 'scoped memory for transformer_forward.7']
    #allocation5 [shape = 's32[2]{0}', space=sflag, size = 0x8, scoped, tag = 'scoped memory for transformer_forward.7']
    #allocation6 [shape = 'u8[4096]{0}', space=vmem, size = 0x1000, scoped, tag = 'input window, operand 1']
    #allocation7 [shape = 's32[2]{0}', space=sflag, size = 0x8, scoped, tag = 'scoped memory for transformer_forward.7']
    #allocation8 [shape = 'u8[1024]{0}', space=vmem, size = 0x400, scoped, tag = 'input window, operand 2']
    #allocation9 [shape = 'u8[1024]{0}', space=vmem, size = 0x400, scoped, tag = 'input window, operand 3']
    #allocation10 [shape = 's32[2]{0}', space=sflag, size = 0x8, scoped, tag = 'scoped memory for transformer_forward.7']
    #allocation11 [shape = 'u8[98304]{0}', space=vmem, size = 0x18000, scoped, tag = 'input window, operand 4, single buffered']
    #allocation12 [shape = 'u8[1536]{0}', space=vmem, size = 0x800, scoped, tag = 'input window, operand 5, single buffered']
    #allocation13 [shape = 's32[1]{0}', space=sflag, size = 0x4, scoped, tag = 'scoped memory for transformer_forward.7']
    #allocation14 [shape = 'u8[32768]{0}', space=vmem, size = 0x8000, scoped, tag = 'input window, operand 6, single buffered']
    #allocation15 [shape = 'u8[512]{0}', space=vmem, size = 0x400, scoped, tag = 'input window, operand 7, single buffered']
    #allocation16 [shape = 's32[1]{0}', space=sflag, size = 0x4, scoped, tag = 'scoped memory for transformer_forward.7']
    #allocation17 [shape = 'u8[512]{0}', space=vmem, size = 0x400, scoped, tag = 'input window, operand 8, single buffered']
    #allocation18 [shape = 'u8[512]{0}', space=vmem, size = 0x400, scoped, tag = 'input window, operand 9, single buffered']
    #allocation19 [shape = 's32[1]{0}', space=sflag, size = 0x4, scoped, tag = 'scoped memory for transformer_forward.7']
    #allocation20 [shape = 'u8[32768]{0}', space=vmem, size = 0x8000, scoped, tag = 'input window, operand 10, single buffered']
    #allocation21 [shape = 'u8[512]{0}', space=vmem, size = 0x400, scoped, tag = 'input window, operand 11, single buffered']
    #allocation22 [shape = 's32[1]{0}', space=sflag, size = 0x4, scoped, tag = 'scoped memory for transformer_forward.7']
    #allocation23 [shape = 'u8[65536]{0}', space=vmem, size = 0x10000, scoped, tag = 'input window, operand 12, single buffered']
    #allocation24 [shape = 'u8[1024]{0}', space=vmem, size = 0x400, scoped, tag = 'input window, operand 13, single buffered']
    #allocation25 [shape = 's32[1]{0}', space=sflag, size = 0x4, scoped, tag = 'scoped memory for transformer_forward.7']
    #allocation26 [shape = 'u8[32768]{0}', space=vmem, size = 0x8000, scoped, tag = 'input window, operand 14, single buffered']
    #allocation27 [shape = 'u8[512]{0}', space=vmem, size = 0x400, scoped, tag = 'input window, operand 15, single buffered']
    #allocation28 [shape = 's32[1]{0}', space=sflag, size = 0x4, scoped, tag = 'scoped memory for transformer_forward.7']
    #allocation29 [shape = 'u8[512]{0}', space=vmem, size = 0x400, scoped, tag = 'input window, operand 16, single buffered']
    #allocation30 [shape = 'u8[512]{0}', space=vmem, size = 0x400, scoped, tag = 'input window, operand 17, single buffered']
    #allocation31 [shape = 's32[1]{0}', space=sflag, size = 0x4, scoped, tag = 'scoped memory for transformer_forward.7']
    #allocation32 [shape = 'u8[65536]{0}', space=vmem, size = 0x10000, scoped, tag = 'input window, operand 18, single buffered']
    #allocation33 [shape = 'u8[1024]{0}', space=vmem, size = 0x400, scoped, tag = 'input window, operand 19, single buffered']
    #allocation34 [shape = 's32[1]{0}', space=sflag, size = 0x4, scoped, tag = 'scoped memory for transformer_forward.7']
    #allocation35 [shape = 'u8[65536]{0}', space=vmem, size = 0x10000, scoped, tag = 'input window, operand 20, single buffered']
    #allocation36 [shape = 'u8[512]{0}', space=vmem, size = 0x400, scoped, tag = 'input window, operand 21, single buffered']
    #allocation37 [shape = 's32[1]{0}', space=sflag, size = 0x4, scoped, tag = 'scoped memory for transformer_forward.7']
    #allocation38 [shape = 'u8[512]{0}', space=vmem, size = 0x400, scoped, tag = 'input window, operand 22, single buffered']
    #allocation39 [shape = 'u8[512]{0}', space=vmem, size = 0x400, scoped, tag = 'input window, operand 23, single buffered']
    #allocation40 [shape = 's32[1]{0}', space=sflag, size = 0x4, scoped, tag = 'scoped memory for transformer_forward.7']
    #allocation41 [shape = 'u8[4096]{0}', space=vmem, size = 0x1000, scoped, tag = 'output window, operand 0']
    %29 = vsyncpa [#allocation4], 0
    %s30 = scalar_lea.sflag [#allocation4], 1
    %31 = vsyncpa %s30, 0
    %32 = vsyncpa [#allocation7], 0
    %s33 = scalar_lea.sflag [#allocation7], 1
    %34 = vsyncpa %s33, 0
    %35 = vsyncpa [#allocation10], 0
    %s36 = scalar_lea.sflag [#allocation10], 1
    %37 = vsyncpa %s36, 0
    %38 = vsyncpa [#allocation13], 0
    %39 = vsyncpa [#allocation16], 0
    %40 = vsyncpa [#allocation19], 0
    %41 = vsyncpa [#allocation22], 0
    %42 = vsyncpa [#allocation25], 0
    %43 = vsyncpa [#allocation28], 0
    %44 = vsyncpa [#allocation31], 0
    %45 = vsyncpa [#allocation34], 0
    %46 = vsyncpa [#allocation37], 0
    %47 = vsyncpa [#allocation40], 0
    %48 = vsyncpa [#allocation5], 0
    %s49 = scalar_lea.sflag [#allocation5], 1
    %50 = vsyncpa %s49, 0
    loop: start=0, step=1, limit=4
    $region2: #{transformer_forward.7} parent=1 // loop_pre_header
      _
    $region3: #{transformer_forward.7} parent=1 // loop_header
      %s52 = sphi 0, %s56
      %p53 = scmp.ge.s32.totalorder %s52, 4
      %s62 = sphi 0, %s64
      %s65 = sphi 0, %s62
      %s66 = sphi 0, %s65
      %s82 = sphi 0, %s66
      %s88 = sphi 0, %s90
      %s91 = sphi 0, %s88
      %s92 = sphi 0, %s91
      %s108 = sphi 0, %s92
      %s114 = sphi 0, %s116
      %s117 = sphi 0, %s114
      %s118 = sphi 0, %s117
      %s134 = sphi 0, %s118
      %s140 = sphi 0, %s142
      %s143 = sphi 0, %s140
      %s144 = sphi 0, %s143
      %s160 = sphi 0, %s144
      %s164 = sphi 0, %s164
      %s166 = sphi 0, %s164
      %s167 = sphi 0, %s166
      %s181 = sphi 0, %s167
      %s185 = sphi 0, %s185
      %s187 = sphi 0, %s185
      %s188 = sphi 0, %s187
      %s202 = sphi 0, %s188
      %s206 = sphi 0, %s206
      %s208 = sphi 0, %s206
      %s209 = sphi 0, %s208
      %s223 = sphi 0, %s209
      %s227 = sphi 0, %s227
      %s229 = sphi 0, %s227
      %s230 = sphi 0, %s229
      %s244 = sphi 0, %s230
      %s248 = sphi 0, %s248
      %s250 = sphi 0, %s248
      %s251 = sphi 0, %s250
      %s265 = sphi 0, %s251
      %s269 = sphi 0, %s269
      %s271 = sphi 0, %s269
      %s272 = sphi 0, %s271
      %s286 = sphi 0, %s272
      %s290 = sphi 0, %s290
      %s292 = sphi 0, %s290
      %s293 = sphi 0, %s292
      %s307 = sphi 0, %s293
      %s311 = sphi 0, %s311
      %s313 = sphi 0, %s311
      %s314 = sphi 0, %s313
      %s328 = sphi 0, %s314
      %s332 = sphi 0, %s332
      %s334 = sphi 0, %s332
      %s335 = sphi 0, %s334
      %s349 = sphi 0, %s335
      %s353 = sphi 0, %s353
      %s355 = sphi 0, %s353
      %s356 = sphi 0, %s355
      %s370 = sphi 0, %s356
      %s374 = sphi 0, %s374
      %s376 = sphi 0, %s374
      %s377 = sphi 0, %s376
      %s391 = sphi 0, %s377
      %s395 = sphi 0, %s395
      %s397 = sphi 0, %s395
      %s398 = sphi 0, %s397
      %s412 = sphi 0, %s398
      %s416 = sphi 0, %s416
      %s418 = sphi 0, %s416
      %s419 = sphi 0, %s418
      %s433 = sphi 0, %s419
      %s437 = sphi 0, %s437
      %s439 = sphi 0, %s437
      %s440 = sphi 0, %s439
      %s454 = sphi 0, %s440
      %s458 = sphi 0, %s458
      %s460 = sphi 0, %s458
      %s461 = sphi 0, %s460
      %s475 = sphi 0, %s461
      %s479 = sphi 0, %s479
      %s481 = sphi 0, %s479
      %s482 = sphi 0, %s481
      %s496 = sphi 0, %s482
      %s500 = sphi 0, %s500
      %s502 = sphi 0, %s500
      %s503 = sphi 0, %s502
      %s517 = sphi 0, %s503
      %s521 = sphi 0, %s521
      %s523 = sphi 0, %s521
      %s524 = sphi 0, %s523
      %s538 = sphi 0, %s524
      %s542 = sphi 0, %s542
      %s544 = sphi 0, %s542
      %s545 = sphi 0, %s544
      %s559 = sphi 0, %s545
      %s563 = sphi 0, %s563
      %s565 = sphi 0, %s563
      %s566 = sphi 0, %s565
      %s580 = sphi 0, %s566
      %s586 = sphi 0, %s588
      %s589 = sphi 0, %s586
      %s590 = sphi 0, %s589
      %s606 = sphi 0, %s590
    $region4: #{transformer_forward.7} parent=1 // loop_header_branch
      %55 = sbr.rel (%p53) target = $region8
    $region5: #{transformer_forward.7} parent=1 // loop_body
      %s57 = ssub.s32 %s52, 1
      %s58 = ssub.s32 %s52, 2
      %s59 = sadd.s32 %s52, 1
      %s60 = ssub.s32 %s52, %s59
      %p61 = scmp.eq.s32.totalorder %s60, 0
      %s63 = sadd.s32 %s62, 1
      %s64 = scalar_select %p61, %s62, %s63
      %p67 = pneg %p61
      %p68 = scmp.eq.s32.totalorder %s52, 1
      %p69 = por %p67, %p68
      %p70 = scmp.ne.s32.totalorder %s62, %s65
      %p71 = scmp.eq.s32.totalorder %s52, 0
      %p72 = por %p70, %p71
      %p73 = scmp.ne.s32.totalorder %s62, %s65
      %p74 = scmp.eq.s32.totalorder %s57, 1
      %p75 = por %p73, %p74
      %p76 = scmp.ne.s32.totalorder %s65, %s66
      %p77 = scmp.eq.s32.totalorder %s57, 0
      %p78 = por %p76, %p77
      %p79 = scmp.ne.s32.totalorder %s65, %s66
      %p80 = scmp.eq.s32.totalorder %s58, 1
      %p81 = por %p79, %p80
      %p83 = scmp.ne.s32.totalorder %s66, %s82
      %p84 = scmp.eq.s32.totalorder %s58, 0
      %p85 = por %p83, %p84
      %s86 = ssub.s32 %s52, %s59
      %p87 = scmp.eq.s32.totalorder %s86, 0
      %s89 = sadd.s32 %s88, 1
      %s90 = scalar_select %p87, %s88, %s89
      %p93 = pneg %p87
      %p94 = scmp.eq.s32.totalorder %s52, 1
      %p95 = por %p93, %p94
      %p96 = scmp.ne.s32.totalorder %s88, %s91
      %p97 = scmp.eq.s32.totalorder %s52, 0
      %p98 = por %p96, %p97
      %p99 = scmp.ne.s32.totalorder %s88, %s91
      %p100 = scmp.eq.s32.totalorder %s57, 1
      %p101 = por %p99, %p100
      %p102 = scmp.ne.s32.totalorder %s91, %s92
      %p103 = scmp.eq.s32.totalorder %s57, 0
      %p104 = por %p102, %p103
      %p105 = scmp.ne.s32.totalorder %s91, %s92
      %p106 = scmp.eq.s32.totalorder %s58, 1
      %p107 = por %p105, %p106
      %p109 = scmp.ne.s32.totalorder %s92, %s108
      %p110 = scmp.eq.s32.totalorder %s58, 0
      %p111 = por %p109, %p110
      %s112 = ssub.s32 %s52, %s59
      %p113 = scmp.eq.s32.totalorder %s112, 0
      %s115 = sadd.s32 %s114, 1
      %s116 = scalar_select %p113, %s114, %s115
      %p119 = pneg %p113
      %p120 = scmp.eq.s32.totalorder %s52, 1
      %p121 = por %p119, %p120
      %p122 = scmp.ne.s32.totalorder %s114, %s117
      %p123 = scmp.eq.s32.totalorder %s52, 0
      %p124 = por %p122, %p123
      %p125 = scmp.ne.s32.totalorder %s114, %s117
      %p126 = scmp.eq.s32.totalorder %s57, 1
      %p127 = por %p125, %p126
      %p128 = scmp.ne.s32.totalorder %s117, %s118
      %p129 = scmp.eq.s32.totalorder %s57, 0
      %p130 = por %p128, %p129
      %p131 = scmp.ne.s32.totalorder %s117, %s118
      %p132 = scmp.eq.s32.totalorder %s58, 1
      %p133 = por %p131, %p132
      %p135 = scmp.ne.s32.totalorder %s118, %s134
      %p136 = scmp.eq.s32.totalorder %s58, 0
      %p137 = por %p135, %p136
      %s138 = ssub.s32 %s52, %s59
      %p139 = scmp.eq.s32.totalorder %s138, 0
      %s141 = sadd.s32 %s140, 1
      %s142 = scalar_select %p139, %s140, %s141
      %p145 = pneg %p139
      %p146 = scmp.eq.s32.totalorder %s52, 1
      %p147 = por %p145, %p146
      %p148 = scmp.ne.s32.totalorder %s140, %s143
      %p149 = scmp.eq.s32.totalorder %s52, 0
      %p150 = por %p148, %p149
      %p151 = scmp.ne.s32.totalorder %s140, %s143
      %p152 = scmp.eq.s32.totalorder %s57, 1
      %p153 = por %p151, %p152
      %p154 = scmp.ne.s32.totalorder %s143, %s144
      %p155 = scmp.eq.s32.totalorder %s57, 0
      %p156 = por %p154, %p155
      %p157 = scmp.ne.s32.totalorder %s143, %s144
      %p158 = scmp.eq.s32.totalorder %s58, 1
      %p159 = por %p157, %p158
      %p161 = scmp.ne.s32.totalorder %s144, %s160
      %p162 = scmp.eq.s32.totalorder %s58, 0
      %p163 = por %p161, %p162
      %s165 = sadd.s32 %s164, 1
      %p168 = scmp.eq.s32.totalorder %s52, 1
      %p169 = scmp.ne.s32.totalorder %s164, %s166
      %p170 = scmp.eq.s32.totalorder %s52, 0
      %p171 = por %p169, %p170
      %p172 = scmp.ne.s32.totalorder %s164, %s166
      %p173 = scmp.eq.s32.totalorder %s57, 1
      %p174 = por %p172, %p173
      %p175 = scmp.ne.s32.totalorder %s166, %s167
      %p176 = scmp.eq.s32.totalorder %s57, 0
      %p177 = por %p175, %p176
      %p178 = scmp.ne.s32.totalorder %s166, %s167
      %p179 = scmp.eq.s32.totalorder %s58, 1
      %p180 = por %p178, %p179
      %p182 = scmp.ne.s32.totalorder %s167, %s181
      %p183 = scmp.eq.s32.totalorder %s58, 0
      %p184 = por %p182, %p183
      %s186 = sadd.s32 %s185, 1
      %p189 = scmp.eq.s32.totalorder %s52, 1
      %p190 = scmp.ne.s32.totalorder %s185, %s187
      %p191 = scmp.eq.s32.totalorder %s52, 0
      %p192 = por %p190, %p191
      %p193 = scmp.ne.s32.totalorder %s185, %s187
      %p194 = scmp.eq.s32.totalorder %s57, 1
      %p195 = por %p193, %p194
      %p196 = scmp.ne.s32.totalorder %s187, %s188
      %p197 = scmp.eq.s32.totalorder %s57, 0
      %p198 = por %p196, %p197
      %p199 = scmp.ne.s32.totalorder %s187, %s188
      %p200 = scmp.eq.s32.totalorder %s58, 1
      %p201 = por %p199, %p200
      %p203 = scmp.ne.s32.totalorder %s188, %s202
      %p204 = scmp.eq.s32.totalorder %s58, 0
      %p205 = por %p203, %p204
      %s207 = sadd.s32 %s206, 1
      %p210 = scmp.eq.s32.totalorder %s52, 1
      %p211 = scmp.ne.s32.totalorder %s206, %s208
      %p212 = scmp.eq.s32.totalorder %s52, 0
      %p213 = por %p211, %p212
      %p214 = scmp.ne.s32.totalorder %s206, %s208
      %p215 = scmp.eq.s32.totalorder %s57, 1
      %p216 = por %p214, %p215
      %p217 = scmp.ne.s32.totalorder %s208, %s209
      %p218 = scmp.eq.s32.totalorder %s57, 0
      %p219 = por %p217, %p218
      %p220 = scmp.ne.s32.totalorder %s208, %s209
      %p221 = scmp.eq.s32.totalorder %s58, 1
      %p222 = por %p220, %p221
      %p224 = scmp.ne.s32.totalorder %s209, %s223
      %p225 = scmp.eq.s32.totalorder %s58, 0
      %p226 = por %p224, %p225
      %s228 = sadd.s32 %s227, 1
      %p231 = scmp.eq.s32.totalorder %s52, 1
      %p232 = scmp.ne.s32.totalorder %s227, %s229
      %p233 = scmp.eq.s32.totalorder %s52, 0
      %p234 = por %p232, %p233
      %p235 = scmp.ne.s32.totalorder %s227, %s229
      %p236 = scmp.eq.s32.totalorder %s57, 1
      %p237 = por %p235, %p236
      %p238 = scmp.ne.s32.totalorder %s229, %s230
      %p239 = scmp.eq.s32.totalorder %s57, 0
      %p240 = por %p238, %p239
      %p241 = scmp.ne.s32.totalorder %s229, %s230
      %p242 = scmp.eq.s32.totalorder %s58, 1
      %p243 = por %p241, %p242
      %p245 = scmp.ne.s32.totalorder %s230, %s244
      %p246 = scmp.eq.s32.totalorder %s58, 0
      %p247 = por %p245, %p246
      %s249 = sadd.s32 %s248, 1
      %p252 = scmp.eq.s32.totalorder %s52, 1
      %p253 = scmp.ne.s32.totalorder %s248, %s250
      %p254 = scmp.eq.s32.totalorder %s52, 0
      %p255 = por %p253, %p254
      %p256 = scmp.ne.s32.totalorder %s248, %s250
      %p257 = scmp.eq.s32.totalorder %s57, 1
      %p258 = por %p256, %p257
      %p259 = scmp.ne.s32.totalorder %s250, %s251
      %p260 = scmp.eq.s32.totalorder %s57, 0
      %p261 = por %p259, %p260
      %p262 = scmp.ne.s32.totalorder %s250, %s251
      %p263 = scmp.eq.s32.totalorder %s58, 1
      %p264 = por %p262, %p263
      %p266 = scmp.ne.s32.totalorder %s251, %s265
      %p267 = scmp.eq.s32.totalorder %s58, 0
      %p268 = por %p266, %p267
      %s270 = sadd.s32 %s269, 1
      %p273 = scmp.eq.s32.totalorder %s52, 1
      %p274 = scmp.ne.s32.totalorder %s269, %s271
      %p275 = scmp.eq.s32.totalorder %s52, 0
      %p276 = por %p274, %p275
      %p277 = scmp.ne.s32.totalorder %s269, %s271
      %p278 = scmp.eq.s32.totalorder %s57, 1
      %p279 = por %p277, %p278
      %p280 = scmp.ne.s32.totalorder %s271, %s272
      %p281 = scmp.eq.s32.totalorder %s57, 0
      %p282 = por %p280, %p281
      %p283 = scmp.ne.s32.totalorder %s271, %s272
      %p284 = scmp.eq.s32.totalorder %s58, 1
      %p285 = por %p283, %p284
      %p287 = scmp.ne.s32.totalorder %s272, %s286
      %p288 = scmp.eq.s32.totalorder %s58, 0
      %p289 = por %p287, %p288
      %s291 = sadd.s32 %s290, 1
      %p294 = scmp.eq.s32.totalorder %s52, 1
      %p295 = scmp.ne.s32.totalorder %s290, %s292
      %p296 = scmp.eq.s32.totalorder %s52, 0
      %p297 = por %p295, %p296
      %p298 = scmp.ne.s32.totalorder %s290, %s292
      %p299 = scmp.eq.s32.totalorder %s57, 1
      %p300 = por %p298, %p299
      %p301 = scmp.ne.s32.totalorder %s292, %s293
      %p302 = scmp.eq.s32.totalorder %s57, 0
      %p303 = por %p301, %p302
      %p304 = scmp.ne.s32.totalorder %s292, %s293
      %p305 = scmp.eq.s32.totalorder %s58, 1
      %p306 = por %p304, %p305
      %p308 = scmp.ne.s32.totalorder %s293, %s307
      %p309 = scmp.eq.s32.totalorder %s58, 0
      %p310 = por %p308, %p309
      %s312 = sadd.s32 %s311, 1
      %p315 = scmp.eq.s32.totalorder %s52, 1
      %p316 = scmp.ne.s32.totalorder %s311, %s313
      %p317 = scmp.eq.s32.totalorder %s52, 0
      %p318 = por %p316, %p317
      %p319 = scmp.ne.s32.totalorder %s311, %s313
      %p320 = scmp.eq.s32.totalorder %s57, 1
      %p321 = por %p319, %p320
      %p322 = scmp.ne.s32.totalorder %s313, %s314
      %p323 = scmp.eq.s32.totalorder %s57, 0
      %p324 = por %p322, %p323
      %p325 = scmp.ne.s32.totalorder %s313, %s314
      %p326 = scmp.eq.s32.totalorder %s58, 1
      %p327 = por %p325, %p326
      %p329 = scmp.ne.s32.totalorder %s314, %s328
      %p330 = scmp.eq.s32.totalorder %s58, 0
      %p331 = por %p329, %p330
      %s333 = sadd.s32 %s332, 1
      %p336 = scmp.eq.s32.totalorder %s52, 1
      %p337 = scmp.ne.s32.totalorder %s332, %s334
      %p338 = scmp.eq.s32.totalorder %s52, 0
      %p339 = por %p337, %p338
      %p340 = scmp.ne.s32.totalorder %s332, %s334
      %p341 = scmp.eq.s32.totalorder %s57, 1
      %p342 = por %p340, %p341
      %p343 = scmp.ne.s32.totalorder %s334, %s335
      %p344 = scmp.eq.s32.totalorder %s57, 0
      %p345 = por %p343, %p344
      %p346 = scmp.ne.s32.totalorder %s334, %s335
      %p347 = scmp.eq.s32.totalorder %s58, 1
      %p348 = por %p346, %p347
      %p350 = scmp.ne.s32.totalorder %s335, %s349
      %p351 = scmp.eq.s32.totalorder %s58, 0
      %p352 = por %p350, %p351
      %s354 = sadd.s32 %s353, 1
      %p357 = scmp.eq.s32.totalorder %s52, 1
      %p358 = scmp.ne.s32.totalorder %s353, %s355
      %p359 = scmp.eq.s32.totalorder %s52, 0
      %p360 = por %p358, %p359
      %p361 = scmp.ne.s32.totalorder %s353, %s355
      %p362 = scmp.eq.s32.totalorder %s57, 1
      %p363 = por %p361, %p362
      %p364 = scmp.ne.s32.totalorder %s355, %s356
      %p365 = scmp.eq.s32.totalorder %s57, 0
      %p366 = por %p364, %p365
      %p367 = scmp.ne.s32.totalorder %s355, %s356
      %p368 = scmp.eq.s32.totalorder %s58, 1
      %p369 = por %p367, %p368
      %p371 = scmp.ne.s32.totalorder %s356, %s370
      %p372 = scmp.eq.s32.totalorder %s58, 0
      %p373 = por %p371, %p372
      %s375 = sadd.s32 %s374, 1
      %p378 = scmp.eq.s32.totalorder %s52, 1
      %p379 = scmp.ne.s32.totalorder %s374, %s376
      %p380 = scmp.eq.s32.totalorder %s52, 0
      %p381 = por %p379, %p380
      %p382 = scmp.ne.s32.totalorder %s374, %s376
      %p383 = scmp.eq.s32.totalorder %s57, 1
      %p384 = por %p382, %p383
      %p385 = scmp.ne.s32.totalorder %s376, %s377
      %p386 = scmp.eq.s32.totalorder %s57, 0
      %p387 = por %p385, %p386
      %p388 = scmp.ne.s32.totalorder %s376, %s377
      %p389 = scmp.eq.s32.totalorder %s58, 1
      %p390 = por %p388, %p389
      %p392 = scmp.ne.s32.totalorder %s377, %s391
      %p393 = scmp.eq.s32.totalorder %s58, 0
      %p394 = por %p392, %p393
      %s396 = sadd.s32 %s395, 1
      %p399 = scmp.eq.s32.totalorder %s52, 1
      %p400 = scmp.ne.s32.totalorder %s395, %s397
      %p401 = scmp.eq.s32.totalorder %s52, 0
      %p402 = por %p400, %p401
      %p403 = scmp.ne.s32.totalorder %s395, %s397
      %p404 = scmp.eq.s32.totalorder %s57, 1
      %p405 = por %p403, %p404
      %p406 = scmp.ne.s32.totalorder %s397, %s398
      %p407 = scmp.eq.s32.totalorder %s57, 0
      %p408 = por %p406, %p407
      %p409 = scmp.ne.s32.totalorder %s397, %s398
      %p410 = scmp.eq.s32.totalorder %s58, 1
      %p411 = por %p409, %p410
      %p413 = scmp.ne.s32.totalorder %s398, %s412
      %p414 = scmp.eq.s32.totalorder %s58, 0
      %p415 = por %p413, %p414
      %s417 = sadd.s32 %s416, 1
      %p420 = scmp.eq.s32.totalorder %s52, 1
      %p421 = scmp.ne.s32.totalorder %s416, %s418
      %p422 = scmp.eq.s32.totalorder %s52, 0
      %p423 = por %p421, %p422
      %p424 = scmp.ne.s32.totalorder %s416, %s418
      %p425 = scmp.eq.s32.totalorder %s57, 1
      %p426 = por %p424, %p425
      %p427 = scmp.ne.s32.totalorder %s418, %s419
      %p428 = scmp.eq.s32.totalorder %s57, 0
      %p429 = por %p427, %p428
      %p430 = scmp.ne.s32.totalorder %s418, %s419
      %p431 = scmp.eq.s32.totalorder %s58, 1
      %p432 = por %p430, %p431
      %p434 = scmp.ne.s32.totalorder %s419, %s433
      %p435 = scmp.eq.s32.totalorder %s58, 0
      %p436 = por %p434, %p435
      %s438 = sadd.s32 %s437, 1
      %p441 = scmp.eq.s32.totalorder %s52, 1
      %p442 = scmp.ne.s32.totalorder %s437, %s439
      %p443 = scmp.eq.s32.totalorder %s52, 0
      %p444 = por %p442, %p443
      %p445 = scmp.ne.s32.totalorder %s437, %s439
      %p446 = scmp.eq.s32.totalorder %s57, 1
      %p447 = por %p445, %p446
      %p448 = scmp.ne.s32.totalorder %s439, %s440
      %p449 = scmp.eq.s32.totalorder %s57, 0
      %p450 = por %p448, %p449
      %p451 = scmp.ne.s32.totalorder %s439, %s440
      %p452 = scmp.eq.s32.totalorder %s58, 1
      %p453 = por %p451, %p452
      %p455 = scmp.ne.s32.totalorder %s440, %s454
      %p456 = scmp.eq.s32.totalorder %s58, 0
      %p457 = por %p455, %p456
      %s459 = sadd.s32 %s458, 1
      %p462 = scmp.eq.s32.totalorder %s52, 1
      %p463 = scmp.ne.s32.totalorder %s458, %s460
      %p464 = scmp.eq.s32.totalorder %s52, 0
      %p465 = por %p463, %p464
      %p466 = scmp.ne.s32.totalorder %s458, %s460
      %p467 = scmp.eq.s32.totalorder %s57, 1
      %p468 = por %p466, %p467
      %p469 = scmp.ne.s32.totalorder %s460, %s461
      %p470 = scmp.eq.s32.totalorder %s57, 0
      %p471 = por %p469, %p470
      %p472 = scmp.ne.s32.totalorder %s460, %s461
      %p473 = scmp.eq.s32.totalorder %s58, 1
      %p474 = por %p472, %p473
      %p476 = scmp.ne.s32.totalorder %s461, %s475
      %p477 = scmp.eq.s32.totalorder %s58, 0
      %p478 = por %p476, %p477
      %s480 = sadd.s32 %s479, 1
      %p483 = scmp.eq.s32.totalorder %s52, 1
      %p484 = scmp.ne.s32.totalorder %s479, %s481
      %p485 = scmp.eq.s32.totalorder %s52, 0
      %p486 = por %p484, %p485
      %p487 = scmp.ne.s32.totalorder %s479, %s481
      %p488 = scmp.eq.s32.totalorder %s57, 1
      %p489 = por %p487, %p488
      %p490 = scmp.ne.s32.totalorder %s481, %s482
      %p491 = scmp.eq.s32.totalorder %s57, 0
      %p492 = por %p490, %p491
      %p493 = scmp.ne.s32.totalorder %s481, %s482
      %p494 = scmp.eq.s32.totalorder %s58, 1
      %p495 = por %p493, %p494
      %p497 = scmp.ne.s32.totalorder %s482, %s496
      %p498 = scmp.eq.s32.totalorder %s58, 0
      %p499 = por %p497, %p498
      %s501 = sadd.s32 %s500, 1
      %p504 = scmp.eq.s32.totalorder %s52, 1
      %p505 = scmp.ne.s32.totalorder %s500, %s502
      %p506 = scmp.eq.s32.totalorder %s52, 0
      %p507 = por %p505, %p506
      %p508 = scmp.ne.s32.totalorder %s500, %s502
      %p509 = scmp.eq.s32.totalorder %s57, 1
      %p510 = por %p508, %p509
      %p511 = scmp.ne.s32.totalorder %s502, %s503
      %p512 = scmp.eq.s32.totalorder %s57, 0
      %p513 = por %p511, %p512
      %p514 = scmp.ne.s32.totalorder %s502, %s503
      %p515 = scmp.eq.s32.totalorder %s58, 1
      %p516 = por %p514, %p515
      %p518 = scmp.ne.s32.totalorder %s503, %s517
      %p519 = scmp.eq.s32.totalorder %s58, 0
      %p520 = por %p518, %p519
      %s522 = sadd.s32 %s521, 1
      %p525 = scmp.eq.s32.totalorder %s52, 1
      %p526 = scmp.ne.s32.totalorder %s521, %s523
      %p527 = scmp.eq.s32.totalorder %s52, 0
      %p528 = por %p526, %p527
      %p529 = scmp.ne.s32.totalorder %s521, %s523
      %p530 = scmp.eq.s32.totalorder %s57, 1
      %p531 = por %p529, %p530
      %p532 = scmp.ne.s32.totalorder %s523, %s524
      %p533 = scmp.eq.s32.totalorder %s57, 0
      %p534 = por %p532, %p533
      %p535 = scmp.ne.s32.totalorder %s523, %s524
      %p536 = scmp.eq.s32.totalorder %s58, 1
      %p537 = por %p535, %p536
      %p539 = scmp.ne.s32.totalorder %s524, %s538
      %p540 = scmp.eq.s32.totalorder %s58, 0
      %p541 = por %p539, %p540
      %s543 = sadd.s32 %s542, 1
      %p546 = scmp.eq.s32.totalorder %s52, 1
      %p547 = scmp.ne.s32.totalorder %s542, %s544
      %p548 = scmp.eq.s32.totalorder %s52, 0
      %p549 = por %p547, %p548
      %p550 = scmp.ne.s32.totalorder %s542, %s544
      %p551 = scmp.eq.s32.totalorder %s57, 1
      %p552 = por %p550, %p551
      %p553 = scmp.ne.s32.totalorder %s544, %s545
      %p554 = scmp.eq.s32.totalorder %s57, 0
      %p555 = por %p553, %p554
      %p556 = scmp.ne.s32.totalorder %s544, %s545
      %p557 = scmp.eq.s32.totalorder %s58, 1
      %p558 = por %p556, %p557
      %p560 = scmp.ne.s32.totalorder %s545, %s559
      %p561 = scmp.eq.s32.totalorder %s58, 0
      %p562 = por %p560, %p561
      %s564 = sadd.s32 %s563, 1
      %p567 = scmp.eq.s32.totalorder %s52, 1
      %p568 = scmp.ne.s32.totalorder %s563, %s565
      %p569 = scmp.eq.s32.totalorder %s52, 0
      %p570 = por %p568, %p569
      %p571 = scmp.ne.s32.totalorder %s563, %s565
      %p572 = scmp.eq.s32.totalorder %s57, 1
      %p573 = por %p571, %p572
      %p574 = scmp.ne.s32.totalorder %s565, %s566
      %p575 = scmp.eq.s32.totalorder %s57, 0
      %p576 = por %p574, %p575
      %p577 = scmp.ne.s32.totalorder %s565, %s566
      %p578 = scmp.eq.s32.totalorder %s58, 1
      %p579 = por %p577, %p578
      %p581 = scmp.ne.s32.totalorder %s566, %s580
      %p582 = scmp.eq.s32.totalorder %s58, 0
      %p583 = por %p581, %p582
      %s584 = ssub.s32 %s52, %s59
      %p585 = scmp.eq.s32.totalorder %s584, 0
      %s587 = sadd.s32 %s586, 1
      %s588 = scalar_select %p585, %s586, %s587
      %p591 = pneg %p585
      %p592 = scmp.eq.s32.totalorder %s52, 1
      %p593 = por %p591, %p592
      %p594 = scmp.ne.s32.totalorder %s586, %s589
      %p595 = scmp.eq.s32.totalorder %s52, 0
      %p596 = por %p594, %p595
      %p597 = scmp.ne.s32.totalorder %s586, %s589
      %p598 = scmp.eq.s32.totalorder %s57, 1
      %p599 = por %p597, %p598
      %p600 = scmp.ne.s32.totalorder %s589, %s590
      %p601 = scmp.eq.s32.totalorder %s57, 0
      %p602 = por %p600, %p601
      %p603 = scmp.ne.s32.totalorder %s589, %s590
      %p604 = scmp.eq.s32.totalorder %s58, 1
      %p605 = por %p603, %p604
      %p607 = scmp.ne.s32.totalorder %s590, %s606
      %p608 = scmp.eq.s32.totalorder %s58, 0
      %p609 = por %p607, %p608
      %p610 = scmp.le.s32.totalorder 1, %s52
      %p611 = scmp.lt.s32.totalorder %s52, 3
      %p612 = pnand %p610, %p611
      %p613 = pneg %p612
      // Predicated region
      $region9: #{transformer_forward.7} parent=5 // pred_check
        _
      $region10: #{transformer_forward.7} parent=5 // pred_check_branch
        %615 = sbr.rel (%p612) target = $region12
      $region11: #{transformer_forward.7} parent=5 // pred_region
        %s616 = ssub.s32 %s52, 1
        // Predicated region
        $region13: #{transformer_forward.7} parent=11 // pred_check
          %p617 = pneg %p177
        $region14: #{transformer_forward.7} parent=11 // pred_check_branch
          %619 = sbr.rel (%p617) target = $region16
        $region15: #{transformer_forward.7} parent=11 // pred_region
          %s621 = ssub.s32 3072, 3072
          %622 = vsyncadd [#allocation10], %s621
          %s623 = sshll.u32 [#allocation11], 4
          %s624 = int_to_ptr.vmem [resolvable:$true] %s623
          %629 = dma.hbm_to_vmem [thread:$0]  %s4, 3072, %s624, [#allocation10], 192, 192, 12
        $region16: #{transformer_forward.7} parent=11 // pred_fallthru
          _
        // Predicated region
        $region17: #{transformer_forward.7} parent=11 // pred_check
          %p630 = pneg %p198
        $region18: #{transformer_forward.7} parent=11 // pred_check_branch
          %632 = sbr.rel (%p630) target = $region20
        $region19: #{transformer_forward.7} parent=11 // pred_region
          %s634 = ssub.s32 48, 48
          %635 = vsyncadd [#allocation13], %s634
          %s637 = sshll.u32 [#allocation12], 4
          %s638 = int_to_ptr.vmem [resolvable:$true] %s637
          %640 = dma.hbm_to_vmem [thread:$0]  %s5, 48, %s638, [#allocation13]
        $region20: #{transformer_forward.7} parent=11 // pred_fallthru
          _
        // Predicated region
        $region21: #{transformer_forward.7} parent=11 // pred_check
          %p641 = pneg %p219
        $region22: #{transformer_forward.7} parent=11 // pred_check_branch
          %643 = sbr.rel (%p641) target = $region24
        $region23: #{transformer_forward.7} parent=11 // pred_region
          %s645 = ssub.s32 1024, 1024
          %646 = vsyncadd [#allocation13], %s645
          %s647 = sshll.u32 [#allocation14], 4
          %s648 = int_to_ptr.vmem [resolvable:$true] %s647
          %653 = dma.hbm_to_vmem [thread:$0]  %s6, 1024, %s648, [#allocation13], 64, 64, 4
        $region24: #{transformer_forward.7} parent=11 // pred_fallthru
          _
        // Predicated region
        $region25: #{transformer_forward.7} parent=11 // pred_check
          %p654 = pneg %p240
        $region26: #{transformer_forward.7} parent=11 // pred_check_branch
          %656 = sbr.rel (%p654) target = $region28
        $region27: #{transformer_forward.7} parent=11 // pred_region
          %s658 = ssub.s32 16, 16
          %659 = vsyncadd [#allocation16], %s658
          %s661 = sshll.u32 [#allocation15], 4
          %s662 = int_to_ptr.vmem [resolvable:$true] %s661
          %664 = dma.hbm_to_vmem [thread:$0]  %s7, 16, %s662, [#allocation16]
        $region28: #{transformer_forward.7} parent=11 // pred_fallthru
          _
        // Predicated region
        $region29: #{transformer_forward.7} parent=11 // pred_check
          %p665 = pneg %p261
        $region30: #{transformer_forward.7} parent=11 // pred_check_branch
          %667 = sbr.rel (%p665) target = $region32
        $region31: #{transformer_forward.7} parent=11 // pred_region
          %s669 = ssub.s32 16, 16
          %670 = vsyncadd [#allocation16], %s669
          %s672 = sshll.u32 [#allocation17], 4
          %s673 = int_to_ptr.vmem [resolvable:$true] %s672
          %675 = dma.hbm_to_vmem [thread:$0]  %s8, 16, %s673, [#allocation16]
        $region32: #{transformer_forward.7} parent=11 // pred_fallthru
          _
        // Predicated region
        $region33: #{transformer_forward.7} parent=11 // pred_check
          %p676 = pneg %p282
        $region34: #{transformer_forward.7} parent=11 // pred_check_branch
          %678 = sbr.rel (%p676) target = $region36
        $region35: #{transformer_forward.7} parent=11 // pred_region
          %s680 = ssub.s32 16, 16
          %681 = vsyncadd [#allocation19], %s680
          %s683 = sshll.u32 [#allocation18], 4
          %s684 = int_to_ptr.vmem [resolvable:$true] %s683
          %686 = dma.hbm_to_vmem [thread:$0]  %s9, 16, %s684, [#allocation19]
        $region36: #{transformer_forward.7} parent=11 // pred_fallthru
          _
        // Predicated region
        $region37: #{transformer_forward.7} parent=11 // pred_check
          %p687 = pneg %p303
        $region38: #{transformer_forward.7} parent=11 // pred_check_branch
          %689 = sbr.rel (%p687) target = $region40
        $region39: #{transformer_forward.7} parent=11 // pred_region
          %s691 = ssub.s32 1024, 1024
          %692 = vsyncadd [#allocation19], %s691
          %s693 = sshll.u32 [#allocation20], 4
          %s694 = int_to_ptr.vmem [resolvable:$true] %s693
          %699 = dma.hbm_to_vmem [thread:$0]  %s10, 1024, %s694, [#allocation19], 64, 64, 4
        $region40: #{transformer_forward.7} parent=11 // pred_fallthru
          _
        // Predicated region
        $region41: #{transformer_forward.7} parent=11 // pred_check
          %p700 = pneg %p324
        $region42: #{transformer_forward.7} parent=11 // pred_check_branch
          %702 = sbr.rel (%p700) target = $region44
        $region43: #{transformer_forward.7} parent=11 // pred_region
          %s704 = ssub.s32 16, 16
          %705 = vsyncadd [#allocation22], %s704
          %s707 = sshll.u32 [#allocation21], 4
          %s708 = int_to_ptr.vmem [resolvable:$true] %s707
          %710 = dma.hbm_to_vmem [thread:$0]  %s11, 16, %s708, [#allocation22]
        $region44: #{transformer_forward.7} parent=11 // pred_fallthru
          _
        // Predicated region
        $region45: #{transformer_forward.7} parent=11 // pred_check
          %p711 = pneg %p345
        $region46: #{transformer_forward.7} parent=11 // pred_check_branch
          %713 = sbr.rel (%p711) target = $region48
        $region47: #{transformer_forward.7} parent=11 // pred_region
          %s715 = ssub.s32 2048, 2048
          %716 = vsyncadd [#allocation22], %s715
          %s717 = sshll.u32 [#allocation23], 4
          %s718 = int_to_ptr.vmem [resolvable:$true] %s717
          %723 = dma.hbm_to_vmem [thread:$0]  %s12, 2048, %s718, [#allocation22], 128, 128, 8
        $region48: #{transformer_forward.7} parent=11 // pred_fallthru
          _
        // Predicated region
        $region49: #{transformer_forward.7} parent=11 // pred_check
          %p724 = pneg %p366
        $region50: #{transformer_forward.7} parent=11 // pred_check_branch
          %726 = sbr.rel (%p724) target = $region52
        $region51: #{transformer_forward.7} parent=11 // pred_region
          %s728 = ssub.s32 32, 32
          %729 = vsyncadd [#allocation25], %s728
          %s731 = sshll.u32 [#allocation24], 4
          %s732 = int_to_ptr.vmem [resolvable:$true] %s731
          %734 = dma.hbm_to_vmem [thread:$0]  %s13, 32, %s732, [#allocation25]
        $region52: #{transformer_forward.7} parent=11 // pred_fallthru
          _
        // Predicated region
        $region53: #{transformer_forward.7} parent=11 // pred_check
          %p735 = pneg %p387
        $region54: #{transformer_forward.7} parent=11 // pred_check_branch
          %737 = sbr.rel (%p735) target = $region56
        $region55: #{transformer_forward.7} parent=11 // pred_region
          %s739 = ssub.s32 1024, 1024
          %740 = vsyncadd [#allocation25], %s739
          %s741 = sshll.u32 [#allocation26], 4
          %s742 = int_to_ptr.vmem [resolvable:$true] %s741
          %747 = dma.hbm_to_vmem [thread:$0]  %s14, 1024, %s742, [#allocation25], 64, 64, 4
        $region56: #{transformer_forward.7} parent=11 // pred_fallthru
          _
        // Predicated region
        $region57: #{transformer_forward.7} parent=11 // pred_check
          %p748 = pneg %p408
        $region58: #{transformer_forward.7} parent=11 // pred_check_branch
          %750 = sbr.rel (%p748) target = $region60
        $region59: #{transformer_forward.7} parent=11 // pred_region
          %s752 = ssub.s32 16, 16
          %753 = vsyncadd [#allocation28], %s752
          %s755 = sshll.u32 [#allocation27], 4
          %s756 = int_to_ptr.vmem [resolvable:$true] %s755
          %758 = dma.hbm_to_vmem [thread:$0]  %s15, 16, %s756, [#allocation28]
        $region60: #{transformer_forward.7} parent=11 // pred_fallthru
          _
        // Predicated region
        $region61: #{transformer_forward.7} parent=11 // pred_check
          %p759 = pneg %p429
        $region62: #{transformer_forward.7} parent=11 // pred_check_branch
          %761 = sbr.rel (%p759) target = $region64
        $region63: #{transformer_forward.7} parent=11 // pred_region
          %s763 = ssub.s32 16, 16
          %764 = vsyncadd [#allocation28], %s763
          %s766 = sshll.u32 [#allocation29], 4
          %s767 = int_to_ptr.vmem [resolvable:$true] %s766
          %769 = dma.hbm_to_vmem [thread:$0]  %s16, 16, %s767, [#allocation28]
        $region64: #{transformer_forward.7} parent=11 // pred_fallthru
          _
        // Predicated region
        $region65: #{transformer_forward.7} parent=11 // pred_check
          %p770 = pneg %p450
        $region66: #{transformer_forward.7} parent=11 // pred_check_branch
          %772 = sbr.rel (%p770) target = $region68
        $region67: #{transformer_forward.7} parent=11 // pred_region
          %s774 = ssub.s32 16, 16
          %775 = vsyncadd [#allocation31], %s774
          %s777 = sshll.u32 [#allocation30], 4
          %s778 = int_to_ptr.vmem [resolvable:$true] %s777
          %780 = dma.hbm_to_vmem [thread:$0]  %s17, 16, %s778, [#allocation31]
        $region68: #{transformer_forward.7} parent=11 // pred_fallthru
          _
        // Predicated region
        $region69: #{transformer_forward.7} parent=11 // pred_check
          %p781 = pneg %p471
        $region70: #{transformer_forward.7} parent=11 // pred_check_branch
          %783 = sbr.rel (%p781) target = $region72
        $region71: #{transformer_forward.7} parent=11 // pred_region
          %s785 = ssub.s32 2048, 2048
          %786 = vsyncadd [#allocation31], %s785
          %s787 = sshll.u32 [#allocation32], 4
          %s788 = int_to_ptr.vmem [resolvable:$true] %s787
          %793 = dma.hbm_to_vmem [thread:$0]  %s18, 2048, %s788, [#allocation31], 128, 128, 8
        $region72: #{transformer_forward.7} parent=11 // pred_fallthru
          _
        // Predicated region
        $region73: #{transformer_forward.7} parent=11 // pred_check
          %p794 = pneg %p492
        $region74: #{transformer_forward.7} parent=11 // pred_check_branch
          %796 = sbr.rel (%p794) target = $region76
        $region75: #{transformer_forward.7} parent=11 // pred_region
          %s798 = ssub.s32 32, 32
          %799 = vsyncadd [#allocation34], %s798
          %s801 = sshll.u32 [#allocation33], 4
          %s802 = int_to_ptr.vmem [resolvable:$true] %s801
          %804 = dma.hbm_to_vmem [thread:$0]  %s19, 32, %s802, [#allocation34]
        $region76: #{transformer_forward.7} parent=11 // pred_fallthru
          _
        // Predicated region
        $region77: #{transformer_forward.7} parent=11 // pred_check
          %p805 = pneg %p513
        $region78: #{transformer_forward.7} parent=11 // pred_check_branch
          %807 = sbr.rel (%p805) target = $region80
        $region79: #{transformer_forward.7} parent=11 // pred_region
          %s809 = ssub.s32 2048, 2048
          %810 = vsyncadd [#allocation34], %s809
          %s811 = sshll.u32 [#allocation35], 4
          %s812 = int_to_ptr.vmem [resolvable:$true] %s811
          %817 = dma.hbm_to_vmem [thread:$0]  %s20, 2048, %s812, [#allocation34], 64, 64, 4
        $region80: #{transformer_forward.7} parent=11 // pred_fallthru
          _
        // Predicated region
        $region81: #{transformer_forward.7} parent=11 // pred_check
          %p818 = pneg %p534
        $region82: #{transformer_forward.7} parent=11 // pred_check_branch
          %820 = sbr.rel (%p818) target = $region84
        $region83: #{transformer_forward.7} parent=11 // pred_region
          %s822 = ssub.s32 16, 16
          %823 = vsyncadd [#allocation37], %s822
          %s825 = sshll.u32 [#allocation36], 4
          %s826 = int_to_ptr.vmem [resolvable:$true] %s825
          %828 = dma.hbm_to_vmem [thread:$0]  %s21, 16, %s826, [#allocation37]
        $region84: #{transformer_forward.7} parent=11 // pred_fallthru
          _
        // Predicated region
        $region85: #{transformer_forward.7} parent=11 // pred_check
          %p829 = pneg %p555
        $region86: #{transformer_forward.7} parent=11 // pred_check_branch
          %831 = sbr.rel (%p829) target = $region88
        $region87: #{transformer_forward.7} parent=11 // pred_region
          %s833 = ssub.s32 16, 16
          %834 = vsyncadd [#allocation37], %s833
          %s836 = sshll.u32 [#allocation38], 4
          %s837 = int_to_ptr.vmem [resolvable:$true] %s836
          %839 = dma.hbm_to_vmem [thread:$0]  %s22, 16, %s837, [#allocation37]
        $region88: #{transformer_forward.7} parent=11 // pred_fallthru
          _
        // Predicated region
        $region89: #{transformer_forward.7} parent=11 // pred_check
          %p840 = pneg %p576
        $region90: #{transformer_forward.7} parent=11 // pred_check_branch
          %842 = sbr.rel (%p840) target = $region92
        $region91: #{transformer_forward.7} parent=11 // pred_region
          %s844 = ssub.s32 16, 16
          %845 = vsyncadd [#allocation40], %s844
          %s847 = sshll.u32 [#allocation39], 4
          %s848 = int_to_ptr.vmem [resolvable:$true] %s847
          %850 = dma.hbm_to_vmem [thread:$0]  %s23, 16, %s848, [#allocation40]
        $region92: #{transformer_forward.7} parent=11 // pred_fallthru
          _
      $region12: #{transformer_forward.7} parent=5 // pred_fallthru
        _
      %p851 = scmp.lt.s32.totalorder %s52, 2
      // Predicated region
      $region93: #{transformer_forward.7} parent=5 // pred_check
        %p852 = pneg %p851
      $region94: #{transformer_forward.7} parent=5 // pred_check_branch
        %854 = sbr.rel (%p852) target = $region96
      $region95: #{transformer_forward.7} parent=5 // pred_region
        // Predicated region
        $region97: #{transformer_forward.7} parent=95 // pred_check
          %p855 = pneg %p72
        $region98: #{transformer_forward.7} parent=95 // pred_check_branch
          %857 = sbr.rel (%p855) target = $region100
        $region99: #{transformer_forward.7} parent=95 // pred_region
          %s858 = sand.u32 %s62, 1
          %s859 = scalar_lea.sflag [#allocation4], %s858
          %s860 = sand.u32 %s62, 1
          %s861 = smul.addr %s860, 4
          %s862 = scalar_lea.vmem [#allocation3], %s861
          %s864 = ssub.s32 64, 64
          %865 = vsyncadd %s859, %s864
          %s866 = smul.addr %s52, 64
          %s867 = scalar_lea.hbm %s0, %s866
          %s869 = sshll.u32 %s862, 4
          %s870 = int_to_ptr.vmem [resolvable:$true] %s869
          %872 = dma.hbm_to_vmem [thread:$0]  %s867, 64, %s870, %s859
        $region100: #{transformer_forward.7} parent=95 // pred_fallthru
          _
        // Predicated region
        $region101: #{transformer_forward.7} parent=95 // pred_check
          %p873 = pneg %p98
        $region102: #{transformer_forward.7} parent=95 // pred_check_branch
          %875 = sbr.rel (%p873) target = $region104
        $region103: #{transformer_forward.7} parent=95 // pred_region
          %s876 = sand.u32 %s52, 1
          %s877 = scalar_lea.sflag [#allocation7], %s876
          %s878 = sand.u32 %s88, 1
          %s879 = smul.addr %s878, 4
          %s880 = scalar_lea.vmem [#allocation6], %s879
          %s882 = ssub.s32 64, 64
          %883 = vsyncadd %s877, %s882
          %s884 = smul.addr %s52, 64
          %s885 = scalar_lea.hbm %s1, %s884
          %s887 = sshll.u32 %s880, 4
          %s888 = int_to_ptr.vmem [resolvable:$true] %s887
          %890 = dma.hbm_to_vmem [thread:$0]  %s885, 64, %s888, %s877
        $region104: #{transformer_forward.7} parent=95 // pred_fallthru
          _
        // Predicated region
        $region105: #{transformer_forward.7} parent=95 // pred_check
          %p891 = pneg %p124
        $region106: #{transformer_forward.7} parent=95 // pred_check_branch
          %893 = sbr.rel (%p891) target = $region108
        $region107: #{transformer_forward.7} parent=95 // pred_region
          %s894 = sand.u32 %s52, 1
          %s895 = scalar_lea.sflag [#allocation7], %s894
          %s896 = sand.u32 %s114, 1
          %s897 = scalar_lea.vmem [#allocation8], %s896
          %s899 = ssub.s32 16, 16
          %900 = vsyncadd %s895, %s899
          %s901 = smul.addr %s52, 16
          %s902 = scalar_lea.hbm %s2, %s901
          %s904 = sshll.u32 %s897, 4
          %s905 = int_to_ptr.vmem [resolvable:$true] %s904
          %907 = dma.hbm_to_vmem [thread:$0]  %s902, 16, %s905, %s895
        $region108: #{transformer_forward.7} parent=95 // pred_fallthru
          _
        // Predicated region
        $region109: #{transformer_forward.7} parent=95 // pred_check
          %p908 = pneg %p150
        $region110: #{transformer_forward.7} parent=95 // pred_check_branch
          %910 = sbr.rel (%p908) target = $region112
        $region111: #{transformer_forward.7} parent=95 // pred_region
          %s911 = sand.u32 %s52, 1
          %s912 = scalar_lea.sflag [#allocation10], %s911
          %s913 = sand.u32 %s140, 1
          %s914 = scalar_lea.vmem [#allocation9], %s913
          %s916 = ssub.s32 16, 16
          %917 = vsyncadd %s912, %s916
          %s918 = smul.addr %s52, 16
          %s919 = scalar_lea.hbm %s3, %s918
          %s921 = sshll.u32 %s914, 4
          %s922 = int_to_ptr.vmem [resolvable:$true] %s921
          %924 = dma.hbm_to_vmem [thread:$0]  %s919, 16, %s922, %s912
        $region112: #{transformer_forward.7} parent=95 // pred_fallthru
          _
      $region96: #{transformer_forward.7} parent=5 // pred_fallthru
        _
      %p925 = scmp.le.s32.totalorder 1, %s52
      %p926 = scmp.lt.s32.totalorder %s52, 3
      %p927 = pnand %p925, %p926
      %p928 = pneg %p927
      // Predicated region
      $region113: #{transformer_forward.7} parent=5 // pred_check
        _
      $region114: #{transformer_forward.7} parent=5 // pred_check_branch
        %930 = sbr.rel (%p927) target = $region116
      $region115: #{transformer_forward.7} parent=5 // pred_region
        %s931 = ssub.s32 %s52, 1
        %s932 = sand.u32 %s65, 1
        %s933 = scalar_lea.sflag [#allocation4], %s932
        %s934 = sand.u32 %s65, 1
        %s935 = smul.addr %s934, 4
        %s936 = scalar_lea.vmem [#allocation3], %s935
        // Predicated region
        $region117: #{transformer_forward.7} parent=115 // pred_check
          %p937 = pneg %p78
        $region118: #{transformer_forward.7} parent=115 // pred_check_branch
          %939 = sbr.rel (%p937) target = $region120
        $region119: #{transformer_forward.7} parent=115 // pred_region
          %940 = dma.done %s933, 64
        $region120: #{transformer_forward.7} parent=115 // pred_fallthru
          _
        %s941 = sand.u32 %s57, 1
        %s942 = scalar_lea.sflag [#allocation7], %s941
        %s943 = sand.u32 %s91, 1
        %s944 = smul.addr %s943, 4
        %s945 = scalar_lea.vmem [#allocation6], %s944
        // Predicated region
        $region121: #{transformer_forward.7} parent=115 // pred_check
          %p946 = pneg %p104
        $region122: #{transformer_forward.7} parent=115 // pred_check_branch
          %948 = sbr.rel (%p946) target = $region124
        $region123: #{transformer_forward.7} parent=115 // pred_region
          %949 = dma.done %s942, 64
        $region124: #{transformer_forward.7} parent=115 // pred_fallthru
          _
        %s950 = sand.u32 %s57, 1
        %s951 = scalar_lea.sflag [#allocation7], %s950
        %s952 = sand.u32 %s117, 1
        %s953 = scalar_lea.vmem [#allocation8], %s952
        // Predicated region
        $region125: #{transformer_forward.7} parent=115 // pred_check
          %p954 = pneg %p130
        $region126: #{transformer_forward.7} parent=115 // pred_check_branch
          %956 = sbr.rel (%p954) target = $region128
        $region127: #{transformer_forward.7} parent=115 // pred_region
          %957 = dma.done %s951, 16
        $region128: #{transformer_forward.7} parent=115 // pred_fallthru
          _
        %s958 = sand.u32 %s57, 1
        %s959 = scalar_lea.sflag [#allocation10], %s958
        %s960 = sand.u32 %s143, 1
        %s961 = scalar_lea.vmem [#allocation9], %s960
        // Predicated region
        $region129: #{transformer_forward.7} parent=115 // pred_check
          %p962 = pneg %p156
        $region130: #{transformer_forward.7} parent=115 // pred_check_branch
          %964 = sbr.rel (%p962) target = $region132
        $region131: #{transformer_forward.7} parent=115 // pred_region
          %965 = dma.done %s959, 16
        $region132: #{transformer_forward.7} parent=115 // pred_fallthru
          _
        // Predicated region
        $region133: #{transformer_forward.7} parent=115 // pred_check
          %p966 = pneg %p177
        $region134: #{transformer_forward.7} parent=115 // pred_check_branch
          %968 = sbr.rel (%p966) target = $region136
        $region135: #{transformer_forward.7} parent=115 // pred_region
          %969 = dma.done [#allocation10], 3072
        $region136: #{transformer_forward.7} parent=115 // pred_fallthru
          _
        // Predicated region
        $region137: #{transformer_forward.7} parent=115 // pred_check
          %p970 = pneg %p198
        $region138: #{transformer_forward.7} parent=115 // pred_check_branch
          %972 = sbr.rel (%p970) target = $region140
        $region139: #{transformer_forward.7} parent=115 // pred_region
          %973 = dma.done [#allocation13], 48
        $region140: #{transformer_forward.7} parent=115 // pred_fallthru
          _
        // Predicated region
        $region141: #{transformer_forward.7} parent=115 // pred_check
          %p974 = pneg %p219
        $region142: #{transformer_forward.7} parent=115 // pred_check_branch
          %976 = sbr.rel (%p974) target = $region144
        $region143: #{transformer_forward.7} parent=115 // pred_region
          %977 = dma.done [#allocation13], 1024
        $region144: #{transformer_forward.7} parent=115 // pred_fallthru
          _
        // Predicated region
        $region145: #{transformer_forward.7} parent=115 // pred_check
          %p978 = pneg %p240
        $region146: #{transformer_forward.7} parent=115 // pred_check_branch
          %980 = sbr.rel (%p978) target = $region148
        $region147: #{transformer_forward.7} parent=115 // pred_region
          %981 = dma.done [#allocation16], 16
        $region148: #{transformer_forward.7} parent=115 // pred_fallthru
          _
        // Predicated region
        $region149: #{transformer_forward.7} parent=115 // pred_check
          %p982 = pneg %p261
        $region150: #{transformer_forward.7} parent=115 // pred_check_branch
          %984 = sbr.rel (%p982) target = $region152
        $region151: #{transformer_forward.7} parent=115 // pred_region
          %985 = dma.done [#allocation16], 16
        $region152: #{transformer_forward.7} parent=115 // pred_fallthru
          _
        // Predicated region
        $region153: #{transformer_forward.7} parent=115 // pred_check
          %p986 = pneg %p282
        $region154: #{transformer_forward.7} parent=115 // pred_check_branch
          %988 = sbr.rel (%p986) target = $region156
        $region155: #{transformer_forward.7} parent=115 // pred_region
          %989 = dma.done [#allocation19], 16
        $region156: #{transformer_forward.7} parent=115 // pred_fallthru
          _
        // Predicated region
        $region157: #{transformer_forward.7} parent=115 // pred_check
          %p990 = pneg %p303
        $region158: #{transformer_forward.7} parent=115 // pred_check_branch
          %992 = sbr.rel (%p990) target = $region160
        $region159: #{transformer_forward.7} parent=115 // pred_region
          %993 = dma.done [#allocation19], 1024
        $region160: #{transformer_forward.7} parent=115 // pred_fallthru
          _
        // Predicated region
        $region161: #{transformer_forward.7} parent=115 // pred_check
          %p994 = pneg %p324
        $region162: #{transformer_forward.7} parent=115 // pred_check_branch
          %996 = sbr.rel (%p994) target = $region164
        $region163: #{transformer_forward.7} parent=115 // pred_region
          %997 = dma.done [#allocation22], 16
        $region164: #{transformer_forward.7} parent=115 // pred_fallthru
          _
        // Predicated region
        $region165: #{transformer_forward.7} parent=115 // pred_check
          %p998 = pneg %p345
        $region166: #{transformer_forward.7} parent=115 // pred_check_branch
          %1000 = sbr.rel (%p998) target = $region168
        $region167: #{transformer_forward.7} parent=115 // pred_region
          %1001 = dma.done [#allocation22], 2048
        $region168: #{transformer_forward.7} parent=115 // pred_fallthru
          _
        // Predicated region
        $region169: #{transformer_forward.7} parent=115 // pred_check
          %p1002 = pneg %p366
        $region170: #{transformer_forward.7} parent=115 // pred_check_branch
          %1004 = sbr.rel (%p1002) target = $region172
        $region171: #{transformer_forward.7} parent=115 // pred_region
          %1005 = dma.done [#allocation25], 32
        $region172: #{transformer_forward.7} parent=115 // pred_fallthru
          _
        // Predicated region
        $region173: #{transformer_forward.7} parent=115 // pred_check
          %p1006 = pneg %p387
        $region174: #{transformer_forward.7} parent=115 // pred_check_branch
          %1008 = sbr.rel (%p1006) target = $region176
        $region175: #{transformer_forward.7} parent=115 // pred_region
          %1009 = dma.done [#allocation25], 1024
        $region176: #{transformer_forward.7} parent=115 // pred_fallthru
          _
        // Predicated region
        $region177: #{transformer_forward.7} parent=115 // pred_check
          %p1010 = pneg %p408
        $region178: #{transformer_forward.7} parent=115 // pred_check_branch
          %1012 = sbr.rel (%p1010) target = $region180
        $region179: #{transformer_forward.7} parent=115 // pred_region
          %1013 = dma.done [#allocation28], 16
        $region180: #{transformer_forward.7} parent=115 // pred_fallthru
          _
        // Predicated region
        $region181: #{transformer_forward.7} parent=115 // pred_check
          %p1014 = pneg %p429
        $region182: #{transformer_forward.7} parent=115 // pred_check_branch
          %1016 = sbr.rel (%p1014) target = $region184
        $region183: #{transformer_forward.7} parent=115 // pred_region
          %1017 = dma.done [#allocation28], 16
        $region184: #{transformer_forward.7} parent=115 // pred_fallthru
          _
        // Predicated region
        $region185: #{transformer_forward.7} parent=115 // pred_check
          %p1018 = pneg %p450
        $region186: #{transformer_forward.7} parent=115 // pred_check_branch
          %1020 = sbr.rel (%p1018) target = $region188
        $region187: #{transformer_forward.7} parent=115 // pred_region
          %1021 = dma.done [#allocation31], 16
        $region188: #{transformer_forward.7} parent=115 // pred_fallthru
          _
        // Predicated region
        $region189: #{transformer_forward.7} parent=115 // pred_check
          %p1022 = pneg %p471
        $region190: #{transformer_forward.7} parent=115 // pred_check_branch
          %1024 = sbr.rel (%p1022) target = $region192
        $region191: #{transformer_forward.7} parent=115 // pred_region
          %1025 = dma.done [#allocation31], 2048
        $region192: #{transformer_forward.7} parent=115 // pred_fallthru
          _
        // Predicated region
        $region193: #{transformer_forward.7} parent=115 // pred_check
          %p1026 = pneg %p492
        $region194: #{transformer_forward.7} parent=115 // pred_check_branch
          %1028 = sbr.rel (%p1026) target = $region196
        $region195: #{transformer_forward.7} parent=115 // pred_region
          %1029 = dma.done [#allocation34], 32
        $region196: #{transformer_forward.7} parent=115 // pred_fallthru
          _
        // Predicated region
        $region197: #{transformer_forward.7} parent=115 // pred_check
          %p1030 = pneg %p513
        $region198: #{transformer_forward.7} parent=115 // pred_check_branch
          %1032 = sbr.rel (%p1030) target = $region200
        $region199: #{transformer_forward.7} parent=115 // pred_region
          %1033 = dma.done [#allocation34], 2048
        $region200: #{transformer_forward.7} parent=115 // pred_fallthru
          _
        // Predicated region
        $region201: #{transformer_forward.7} parent=115 // pred_check
          %p1034 = pneg %p534
        $region202: #{transformer_forward.7} parent=115 // pred_check_branch
          %1036 = sbr.rel (%p1034) target = $region204
        $region203: #{transformer_forward.7} parent=115 // pred_region
          %1037 = dma.done [#allocation37], 16
        $region204: #{transformer_forward.7} parent=115 // pred_fallthru
          _
        // Predicated region
        $region205: #{transformer_forward.7} parent=115 // pred_check
          %p1038 = pneg %p555
        $region206: #{transformer_forward.7} parent=115 // pred_check_branch
          %1040 = sbr.rel (%p1038) target = $region208
        $region207: #{transformer_forward.7} parent=115 // pred_region
          %1041 = dma.done [#allocation37], 16
        $region208: #{transformer_forward.7} parent=115 // pred_fallthru
          _
        // Predicated region
        $region209: #{transformer_forward.7} parent=115 // pred_check
          %p1042 = pneg %p576
        $region210: #{transformer_forward.7} parent=115 // pred_check_branch
          %1044 = sbr.rel (%p1042) target = $region212
        $region211: #{transformer_forward.7} parent=115 // pred_region
          %1045 = dma.done [#allocation40], 16
        $region212: #{transformer_forward.7} parent=115 // pred_fallthru
          _
        %s1046 = sand.u32 %s65, 1
        %s1047 = scalar_lea.sflag [#allocation4], %s1046
        %s1048 = sand.u32 %s65, 1
        %s1049 = smul.addr %s1048, 4
        %s1050 = scalar_lea.vmem [#allocation3], %s1049
        %p1051 = pneg %p78
        %p1052 = pneg %p75
        %s1053 = sand.u32 %s57, 1
        %s1054 = scalar_lea.sflag [#allocation7], %s1053
        %s1055 = sand.u32 %s91, 1
        %s1056 = smul.addr %s1055, 4
        %s1057 = scalar_lea.vmem [#allocation6], %s1056
        %p1058 = pneg %p104
        %p1059 = pneg %p101
        %s1060 = sand.u32 %s57, 1
        %s1061 = scalar_lea.sflag [#allocation7], %s1060
        %s1062 = sand.u32 %s117, 1
        %s1063 = scalar_lea.vmem [#allocation8], %s1062
        %p1064 = pneg %p130
        %p1065 = pneg %p127
        %s1066 = sand.u32 %s57, 1
        %s1067 = scalar_lea.sflag [#allocation10], %s1066
        %s1068 = sand.u32 %s143, 1
        %s1069 = scalar_lea.vmem [#allocation9], %s1068
        %p1070 = pneg %p156
        %p1071 = pneg %p153
        %p1072 = pneg %p177
        %p1073 = pneg %p174
        %p1074 = pneg %p198
        %p1075 = pneg %p195
        %p1076 = pneg %p219
        %p1077 = pneg %p216
        %p1078 = pneg %p240
        %p1079 = pneg %p237
        %p1080 = pneg %p261
        %p1081 = pneg %p258
        %p1082 = pneg %p282
        %p1083 = pneg %p279
        %p1084 = pneg %p303
        %p1085 = pneg %p300
        %p1086 = pneg %p324
        %p1087 = pneg %p321
        %p1088 = pneg %p345
        %p1089 = pneg %p342
        %p1090 = pneg %p366
        %p1091 = pneg %p363
        %p1092 = pneg %p387
        %p1093 = pneg %p384
        %p1094 = pneg %p408
        %p1095 = pneg %p405
        %p1096 = pneg %p429
        %p1097 = pneg %p426
        %p1098 = pneg %p450
        %p1099 = pneg %p447
        %p1100 = pneg %p471
        %p1101 = pneg %p468
        %p1102 = pneg %p492
        %p1103 = pneg %p489
        %p1104 = pneg %p513
        %p1105 = pneg %p510
        %p1106 = pneg %p534
        %p1107 = pneg %p531
        %p1108 = pneg %p555
        %p1109 = pneg %p552
        %p1110 = pneg %p576
        %p1111 = pneg %p573
        %p1112 = pneg %p602
        %p1113 = pneg %p599
        %s1114 = sand.u32 %s589, 1
        %s1115 = scalar_lea.sflag [#allocation5], %s1114
        %s1116 = sand.u32 %s589, 1
        %s1117 = smul.addr %s1116, 4
        %s1118 = scalar_lea.vmem [#allocation41], %s1117
        %v1120 = vld [vmem:[%s936] sm:$0xf]
        %v1121 = vld [vmem:[%s945] sm:$0xf]
        %v1122 = vunpack.c.l.bf16 %v1120
        %v1123 = vld [vmem:[%s953] sm:$0x1]
        %v1124 = vld [vmem:[%s961] sm:$0x1]
        %v1125 = vlaneseq
        %v1126 = vshrl.u32 %v1125, 7
        %v1127 = vlaneseq
        %v1128 = vand.u32 %v1127, 127
        %vm1129 = vcmp.le.s32.totalorder %v1128, %v1126
        %v1130 = vsel %vm1129, 0.0, -1e+09
        %v1132 = vlaneseq
        %v1133 = vshrl.u32 %v1132, 7
        %v1134 = vsub.s32 0, %v1133
        %v1135 = vrot.slane %v1123, %v1134
        %v1137 = vadd.f32 %v1130, %v1135
        %v1138 = vld [vmem:[#allocation11] sm:$0xff]
        %v1139 = vld [vmem:[#allocation11 + $0x8] sm:$0xf]
        %v1140 = vld [vmem:[#allocation11 + $0xc] sm:$0xff]
        %v1141 = vld [vmem:[#allocation11 + $0x14] sm:$0xf]
        %v1142 = vld [vmem:[#allocation11 + $0x18] sm:$0xff]
        %v1143 = vld [vmem:[#allocation11 + $0x20] sm:$0xf]
        %v1144 = vld [vmem:[#allocation11 + $0x24] sm:$0xff]
        %v1145 = vld [vmem:[#allocation11 + $0x2c] sm:$0xf]
        %v1146 = vld [vmem:[#allocation11 + $0x30] sm:$0xff]
        %v1147 = vld [vmem:[#allocation11 + $0x38] sm:$0xf]
        %v1148 = vld [vmem:[#allocation11 + $0x3c] sm:$0xff]
        %v1149 = vld [vmem:[#allocation11 + $0x44] sm:$0xf]
        %v1150 = vld [vmem:[#allocation11 + $0x48] sm:$0xff]
        %v1151 = vld [vmem:[#allocation11 + $0x50] sm:$0xf]
        %v1152 = vld [vmem:[#allocation11 + $0x54] sm:$0xff]
        %v1153 = vld [vmem:[#allocation11 + $0x5c] sm:$0xf]
        %v1154 = vld [vmem:[#allocation11 + $0x60] sm:$0xff]
        %v1155 = vld [vmem:[#allocation11 + $0x68] sm:$0xf]
        %v1156 = vld [vmem:[#allocation11 + $0x6c] sm:$0xff]
        %v1157 = vld [vmem:[#allocation11 + $0x74] sm:$0xf]
        %v1158 = vld [vmem:[#allocation11 + $0x78] sm:$0xff]
        %v1159 = vld [vmem:[#allocation11 + $0x80] sm:$0xf]
        %v1160 = vld [vmem:[#allocation11 + $0x84] sm:$0xff]
        %v1161 = vld [vmem:[#allocation11 + $0x8c] sm:$0xf]
        %v1162 = vld [vmem:[#allocation11 + $0x90] sm:$0xff]
        %v1163 = vld [vmem:[#allocation11 + $0x98] sm:$0xf]
        %v1164 = vld [vmem:[#allocation11 + $0x9c] sm:$0xff]
        %v1165 = vld [vmem:[#allocation11 + $0xa4] sm:$0xf]
        %v1166 = vld [vmem:[#allocation11 + $0xa8] sm:$0xff]
        %v1167 = vld [vmem:[#allocation11 + $0xb0] sm:$0xf]
        %v1168 = vld [vmem:[#allocation11 + $0xb4] sm:$0xff]
        %v1169 = vld [vmem:[#allocation11 + $0xbc] sm:$0xf]
        %v1170 = vld [vmem:[#allocation12] sm:$0x7]
        %v1172 = vlaneseq
        %v1173 = vshrl.u32 %v1172, 7
        %v1174 = vsub.s32 0, %v1173
        %v1175 = vrot.slane %v1170, %v1174
        %v1176 = vlaneseq
        %v1177 = vshrl.u32 %v1176, 7
        %v1178 = vsub.s32 1, %v1177
        %v1179 = vrot.slane %v1170, %v1178
        %v1180 = vlaneseq
        %v1181 = vshrl.u32 %v1180, 7
        %v1182 = vsub.s32 2, %v1181
        %v1183 = vrot.slane %v1170, %v1182
        %v1219 = vunpack.c.l.b16 %v1138
        %v1220 = vunpack.c.h.b16 %v1138
        %v1221 = vunpack.c.l.b16 %v1139
        %v1222 = vunpack.c.l.b16 %v1140
        %v1223 = vunpack.c.h.b16 %v1140
        %v1224 = vunpack.c.l.b16 %v1141
        %v1225 = vunpack.c.l.b16 %v1142
        %v1226 = vunpack.c.h.b16 %v1142
        %v1227 = vunpack.c.l.b16 %v1143
        %v1228 = vunpack.c.l.b16 %v1144
        %v1229 = vunpack.c.h.b16 %v1144
        %v1230 = vunpack.c.l.b16 %v1145
        %v1231 = vunpack.c.l.b16 %v1146
        %v1232 = vunpack.c.h.b16 %v1146
        %v1233 = vunpack.c.l.b16 %v1147
        %v1234 = vunpack.c.l.b16 %v1148
        %v1235 = vunpack.c.h.b16 %v1148
        %v1236 = vunpack.c.l.b16 %v1149
        %v1237 = vunpack.c.l.b16 %v1150
        %v1238 = vunpack.c.h.b16 %v1150
        %v1239 = vunpack.c.l.b16 %v1151
        %v1240 = vunpack.c.l.b16 %v1152
        %v1241 = vunpack.c.h.b16 %v1152
        %v1242 = vunpack.c.l.b16 %v1153
        %v1243 = vunpack.c.l.b16 %v1154
        %v1244 = vunpack.c.h.b16 %v1154
        %v1245 = vunpack.c.l.b16 %v1155
        %v1246 = vunpack.c.l.b16 %v1156
        %v1247 = vunpack.c.h.b16 %v1156
        %v1248 = vunpack.c.l.b16 %v1157
        %v1249 = vunpack.c.l.b16 %v1158
        %v1250 = vunpack.c.h.b16 %v1158
        %v1251 = vunpack.c.l.b16 %v1159
        %v1252 = vunpack.c.l.b16 %v1160
        %v1253 = vunpack.c.h.b16 %v1160
        %v1254 = vunpack.c.l.b16 %v1161
        %v1255 = vunpack.c.l.b16 %v1162
        %v1256 = vunpack.c.h.b16 %v1162
        %v1257 = vunpack.c.l.b16 %v1163
        %v1258 = vunpack.c.l.b16 %v1164
        %v1259 = vunpack.c.h.b16 %v1164
        %v1260 = vunpack.c.l.b16 %v1165
        %v1261 = vunpack.c.l.b16 %v1166
        %v1262 = vunpack.c.h.b16 %v1166
        %v1263 = vunpack.c.l.b16 %v1167
        %v1264 = vunpack.c.l.b16 %v1168
        %v1265 = vunpack.c.h.b16 %v1168
        %v1266 = vunpack.c.l.b16 %v1169
        %v1267 = vpack.c.b16 %v1222, %v1219
        %v1268 = vpack.c.b16 %v1223, %v1220
        %v1269 = vpack.c.b16 %v1224, %v1221
        %v1270 = vpack.c.b16 %v1228, %v1225
        %v1271 = vpack.c.b16 %v1229, %v1226
        %v1272 = vpack.c.b16 %v1230, %v1227
        %v1273 = vpack.c.b16 %v1234, %v1231
        %v1274 = vpack.c.b16 %v1235, %v1232
        %v1275 = vpack.c.b16 %v1236, %v1233
        %v1276 = vpack.c.b16 %v1240, %v1237
        %v1277 = vpack.c.b16 %v1241, %v1238
        %v1278 = vpack.c.b16 %v1242, %v1239
        %v1279 = vpack.c.b16 %v1246, %v1243
        %v1280 = vpack.c.b16 %v1247, %v1244
        %v1281 = vpack.c.b16 %v1248, %v1245
        %v1282 = vpack.c.b16 %v1252, %v1249
        %v1283 = vpack.c.b16 %v1253, %v1250
        %v1284 = vpack.c.b16 %v1254, %v1251
        %v1285 = vpack.c.b16 %v1258, %v1255
        %v1286 = vpack.c.b16 %v1259, %v1256
        %v1287 = vpack.c.b16 %v1260, %v1257
        %v1288 = vpack.c.b16 %v1264, %v1261
        %v1289 = vpack.c.b16 %v1265, %v1262
        %v1290 = vpack.c.b16 %v1266, %v1263
        %1315 = vmatprep.subr.bf16.mxu0 %v1268
        %1316 = vmatpush1.bf16.msra.mxu0 %v1267
        %1317 = vmatprep.subr.bf16.mxu0 %v1271
        %1318 = vmatpush1.bf16.msra.mxu0 %v1270
        %1319 = vmatprep.subr.bf16.mxu0 %v1274
        %1320 = vmatpush1.bf16.msra.mxu0 %v1273
        %1321 = vmatprep.subr.bf16.mxu0 %v1277
        %1322 = vmatpush1.bf16.msra.mxu0 %v1276
        %1323 = vmatprep.subr.bf16.mxu0 %v1280
        %1324 = vmatpush1.bf16.msra.mxu0 %v1279
        %1325 = vmatprep.subr.bf16.mxu0 %v1283
        %1326 = vmatpush1.bf16.msra.mxu0 %v1282
        %1327 = vmatprep.subr.bf16.mxu0 %v1286
        %1328 = vmatpush1.bf16.msra.mxu0 %v1285
        %1329 = vmatprep.subr.bf16.mxu0 %v1289
        %1330 = vmatpush1.bf16.msra.mxu0 %v1288
        %1331 = vmatprep.subr.bf16.mxu0 0
        %1332 = vmatpush1.bf16.msra.mxu0 0
        %1333 = vmatprep.subr.bf16.mxu0 0
        %1334 = vmatpush1.bf16.msra.mxu0 0
        %1335 = vmatprep.subr.bf16.mxu0 0
        %1336 = vmatpush1.bf16.msra.mxu0 0
        %1337 = vmatprep.subr.bf16.mxu0 0
        %1338 = vmatpush1.bf16.msra.mxu0 0
        %1339 = vmatprep.subr.bf16.mxu0 0
        %1340 = vmatpush1.bf16.msra.mxu0 0
        %1341 = vmatprep.subr.bf16.mxu0 0
        %1342 = vmatpush1.bf16.msra.mxu0 0
        %1343 = vmatprep.subr.bf16.mxu0 0
        %1344 = vmatpush1.bf16.msra.mxu0 0
        %1345 = vmatprep.subr.bf16.mxu0 0
        %1346 = vmatpush1.bf16.msra.mxu0 0
        %1347 = vmatprep.mubr.bf16.mxu0 0
        %1348 = vmatmul.mubr.bf16.gmra.mrb[0].mxu0 %v1120
        %v1349 = vpop.f32.mrb[0].mxu0
        %v1350 = vadd.f32 %v1175, %v1349
        %v1351 = vpop.f32.mrb[0].mxu0
        %v1352 = vadd.f32 %v1179, %v1351
        %v1353 = vpop.f32.mrb[0].mxu0
        %v1354 = vpop.f32.mrb[0].mxu0
        %1355 = vdwg.mxu0
        %1356 = vmatprep.subr.bf16.mxu0 0
        %1357 = vmatpush1.bf16.msra.mxu0 %v1269
        %1358 = vmatprep.subr.bf16.mxu0 0
        %1359 = vmatpush1.bf16.msra.mxu0 %v1272
        %1360 = vmatprep.subr.bf16.mxu0 0
        %1361 = vmatpush1.bf16.msra.mxu0 %v1275
        %1362 = vmatprep.subr.bf16.mxu0 0
        %1363 = vmatpush1.bf16.msra.mxu0 %v1278
        %1364 = vmatprep.subr.bf16.mxu0 0
        %1365 = vmatpush1.bf16.msra.mxu0 %v1281
        %1366 = vmatprep.subr.bf16.mxu0 0
        %1367 = vmatpush1.bf16.msra.mxu0 %v1284
        %1368 = vmatprep.subr.bf16.mxu0 0
        %1369 = vmatpush1.bf16.msra.mxu0 %v1287
        %1370 = vmatprep.subr.bf16.mxu0 0
        %1371 = vmatpush1.bf16.msra.mxu0 %v1290
        %1372 = vmatprep.subr.bf16.mxu0 0
        %1373 = vmatpush1.bf16.msra.mxu0 0
        %1374 = vmatprep.subr.bf16.mxu0 0
        %1375 = vmatpush1.bf16.msra.mxu0 0
        %1376 = vmatprep.subr.bf16.mxu0 0
        %1377 = vmatpush1.bf16.msra.mxu0 0
        %1378 = vmatprep.subr.bf16.mxu0 0
        %1379 = vmatpush1.bf16.msra.mxu0 0
        %1380 = vmatprep.subr.bf16.mxu0 0
        %1381 = vmatpush1.bf16.msra.mxu0 0
        %1382 = vmatprep.subr.bf16.mxu0 0
        %1383 = vmatpush1.bf16.msra.mxu0 0
        %1384 = vmatprep.subr.bf16.mxu0 0
        %1385 = vmatpush1.bf16.msra.mxu0 0
        %1386 = vmatprep.subr.bf16.mxu0 0
        %1387 = vmatpush1.bf16.msra.mxu0 0
        %1388 = vmatprep.mubr.bf16.mxu0 0
        %1389 = vmatmul.mubr.bf16.gmra.mrb[0].mxu0 %v1120
        %v1390 = vpop.f32.mrb[0].mxu0
        %v1391 = vadd.f32 %v1183, %v1390
        %v1392 = vpop.f32.mrb[0].mxu0
        %v1393 = vpop.f32.mrb[0].mxu0
        %v1394 = vpop.f32.mrb[0].mxu0
        %1395 = vdwg.mxu0
        %v1396 = vld [vmem:[#allocation14] sm:$0xf]
        %v1397 = vld [vmem:[#allocation14 + $0x4] sm:$0xf]
        %v1398 = vld [vmem:[#allocation14 + $0x8] sm:$0xf]
        %v1399 = vld [vmem:[#allocation14 + $0xc] sm:$0xf]
        %v1400 = vld [vmem:[#allocation14 + $0x10] sm:$0xf]
        %v1401 = vld [vmem:[#allocation14 + $0x14] sm:$0xf]
        %v1402 = vld [vmem:[#allocation14 + $0x18] sm:$0xf]
        %v1403 = vld [vmem:[#allocation14 + $0x1c] sm:$0xf]
        %v1404 = vld [vmem:[#allocation14 + $0x20] sm:$0xf]
        %v1405 = vld [vmem:[#allocation14 + $0x24] sm:$0xf]
        %v1406 = vld [vmem:[#allocation14 + $0x28] sm:$0xf]
        %v1407 = vld [vmem:[#allocation14 + $0x2c] sm:$0xf]
        %v1408 = vld [vmem:[#allocation14 + $0x30] sm:$0xf]
        %v1409 = vld [vmem:[#allocation14 + $0x34] sm:$0xf]
        %v1410 = vld [vmem:[#allocation14 + $0x38] sm:$0xf]
        %v1411 = vld [vmem:[#allocation14 + $0x3c] sm:$0xf]
        %v1412 = vld [vmem:[#allocation15] sm:$0x1]
        %v1413 = vmul.f32 %v1350, 0.17677669
        %v1414 = vpack.c.bf16 %v1413, %v1413
        %v1415 = vpack.c.bf16 %v1352, %v1352
        %v1416 = vpack.c.bf16 %v1391, %v1391
        %vm1417 = vcmask 261120
        %v1419 = vsel %vm1417, %v1414, 0
        %v1422 = vsel %vm1417, %v1415, 0
        %1424 = vmatprep.subr.bf16.mxu0 0
        %1425 = vmatpush1.bf16.xpose.msra.mxu0 %v1422
        %1426 = vmatprep.subr.bf16.mxu0 0
        %1427 = vmatpush1.bf16.xpose.msra.mxu0 0
        %1428 = vmatprep.subr.bf16.mxu0 0
        %1429 = vmatpush1.bf16.xpose.msra.mxu0 0
        %1430 = vmatprep.subr.bf16.mxu0 0
        %1431 = vmatpush1.bf16.xpose.msra.mxu0 0
        %1432 = vmatprep.subr.bf16.mxu0 0
        %1433 = vmatpush1.bf16.xpose.msra.mxu0 0
        %1434 = vmatprep.subr.bf16.mxu0 0
        %1435 = vmatpush1.bf16.xpose.msra.mxu0 0
        %1436 = vmatprep.subr.bf16.mxu0 0
        %1437 = vmatpush1.bf16.xpose.msra.mxu0 0
        %1438 = vmatprep.subr.bf16.mxu0 0
        %1439 = vmatpush1.bf16.xpose.msra.mxu0 0
        %1440 = vmatprep.subr.bf16.mxu0 0
        %1441 = vmatpush1.bf16.xpose.msra.mxu0 0
        %1442 = vmatprep.subr.bf16.mxu0 0
        %1443 = vmatpush1.bf16.xpose.msra.mxu0 0
        %1444 = vmatprep.subr.bf16.mxu0 0
        %1445 = vmatpush1.bf16.xpose.msra.mxu0 0
        %1446 = vmatprep.subr.bf16.mxu0 0
        %1447 = vmatpush1.bf16.xpose.msra.mxu0 0
        %1448 = vmatprep.subr.bf16.mxu0 0
        %1449 = vmatpush1.bf16.xpose.msra.mxu0 0
        %1450 = vmatprep.subr.bf16.mxu0 0
        %1451 = vmatpush1.bf16.xpose.msra.mxu0 0
        %1452 = vmatprep.subr.bf16.mxu0 0
        %1453 = vmatpush1.bf16.xpose.msra.mxu0 0
        %1454 = vmatprep.subr.bf16.mxu0 0
        %1455 = vmatpush1.bf16.xpose.msra.mxu0 0
        %1456 = vmatprep.mubr.bf16.mxu0 0
        %1457 = vmatmul.mubr.bf16.gmra.mrb[0].mxu0 %v1419
        %v1458 = vpop.f32.mrb[0].mxu0
        %v1459 = vadd.f32 %v1137, %v1458
        %v1460 = vpop.f32.mrb[0].mxu0
        %v1461 = vpop.f32.mrb[0].mxu0
        %v1462 = vpop.f32.mrb[0].mxu0
        %1463 = vdwg.mxu0
        %vm1464 = vcmask 64512
        %v1465 = vsel %vm1464, %v1459, -inf
        %1466 = vmax.xlane.f32.xlu0 %v1465
        %v1467 = vpop.xlane.xlu0 %1466
        %v1468 = vsub.f32 %v1459, %v1467
        %v1469 = vmul.f32 %v1468, 1.442695
        %v1470 = vpow.pop %v1469
        %v1471 = vsel %vm1464, %v1470, 0.0
        %1472 = vadd.xlane.f32.xlu0 %v1471
        %v1473 = vpop.xlane.xlu0 %1472
        %v1474 = vrcp.pop %v1473
        %v1475 = vmul.f32 %v1470, %v1474
        %v1476 = vpack.c.bf16 %v1475, %v1475
        %v1478 = vsel %vm1464, %v1476, 0
        %vm1480 = vcmask 1043456
        %v1482 = vsel %vm1480, %v1416, 0
        %1484 = vmatprep.subr.bf16.mxu0 0
        %1485 = vmatpush1.bf16.msra.mxu0 %v1482
        %1486 = vmatprep.subr.bf16.mxu0 0
        %1487 = vmatpush1.bf16.msra.mxu0 0
        %1488 = vmatprep.subr.bf16.mxu0 0
        %1489 = vmatpush1.bf16.msra.mxu0 0
        %1490 = vmatprep.subr.bf16.mxu0 0
        %1491 = vmatpush1.bf16.msra.mxu0 0
        %1492 = vmatprep.subr.bf16.mxu0 0
        %1493 = vmatpush1.bf16.msra.mxu0 0
        %1494 = vmatprep.subr.bf16.mxu0 0
        %1495 = vmatpush1.bf16.msra.mxu0 0
        %1496 = vmatprep.subr.bf16.mxu0 0
        %1497 = vmatpush1.bf16.msra.mxu0 0
        %1498 = vmatprep.subr.bf16.mxu0 0
        %1499 = vmatpush1.bf16.msra.mxu0 0
        %1500 = vmatprep.subr.bf16.mxu0 0
        %1501 = vmatpush1.bf16.msra.mxu0 0
        %1502 = vmatprep.subr.bf16.mxu0 0
        %1503 = vmatpush1.bf16.msra.mxu0 0
        %1504 = vmatprep.subr.bf16.mxu0 0
        %1505 = vmatpush1.bf16.msra.mxu0 0
        %1506 = vmatprep.subr.bf16.mxu0 0
        %1507 = vmatpush1.bf16.msra.mxu0 0
        %1508 = vmatprep.subr.bf16.mxu0 0
        %1509 = vmatpush1.bf16.msra.mxu0 0
        %1510 = vmatprep.subr.bf16.mxu0 0
        %1511 = vmatpush1.bf16.msra.mxu0 0
        %1512 = vmatprep.subr.bf16.mxu0 0
        %1513 = vmatpush1.bf16.msra.mxu0 0
        %1514 = vmatprep.subr.bf16.mxu0 0
        %1515 = vmatpush1.bf16.msra.mxu0 0
        %1516 = vmatprep.mubr.bf16.mxu0 0
        %1517 = vmatmul.mubr.bf16.gmra.mrb[0].mxu0 %v1478
        %v1518 = vpop.f32.mrb[0].mxu0
        %v1519 = vadd.f32 0.0, %v1518
        %v1520 = vpop.f32.mrb[0].mxu0
        %v1521 = vpop.f32.mrb[0].mxu0
        %v1522 = vpop.f32.mrb[0].mxu0
        %1523 = vdwg.mxu0
        %1524 = vst.msk [vmem:[#allocation2] sm:$0xff] %vm1417, %v1519
        %1526 = vrot.lane.b32.xlu0 %v1414, 96
        %v1527 = vpop.permute.xlu0 %1526
        %1529 = vrot.lane.b32.xlu0 %v1415, 96
        %v1530 = vpop.permute.xlu0 %1529
        %v1532 = vsel %vm1417, %v1527, 0
        %v1535 = vsel %vm1417, %v1530, 0
        %1537 = vmatprep.subr.bf16.mxu0 0
        %1538 = vmatpush1.bf16.xpose.msra.mxu0 %v1535
        %1539 = vmatprep.subr.bf16.mxu0 0
        %1540 = vmatpush1.bf16.xpose.msra.mxu0 0
        %1541 = vmatprep.subr.bf16.mxu0 0
        %1542 = vmatpush1.bf16.xpose.msra.mxu0 0
        %1543 = vmatprep.subr.bf16.mxu0 0
        %1544 = vmatpush1.bf16.xpose.msra.mxu0 0
        %1545 = vmatprep.subr.bf16.mxu0 0
        %1546 = vmatpush1.bf16.xpose.msra.mxu0 0
        %1547 = vmatprep.subr.bf16.mxu0 0
        %1548 = vmatpush1.bf16.xpose.msra.mxu0 0
        %1549 = vmatprep.subr.bf16.mxu0 0
        %1550 = vmatpush1.bf16.xpose.msra.mxu0 0
        %1551 = vmatprep.subr.bf16.mxu0 0
        %1552 = vmatpush1.bf16.xpose.msra.mxu0 0
        %1553 = vmatprep.subr.bf16.mxu0 0
        %1554 = vmatpush1.bf16.xpose.msra.mxu0 0
        %1555 = vmatprep.subr.bf16.mxu0 0
        %1556 = vmatpush1.bf16.xpose.msra.mxu0 0
        %1557 = vmatprep.subr.bf16.mxu0 0
        %1558 = vmatpush1.bf16.xpose.msra.mxu0 0
        %1559 = vmatprep.subr.bf16.mxu0 0
        %1560 = vmatpush1.bf16.xpose.msra.mxu0 0
        %1561 = vmatprep.subr.bf16.mxu0 0
        %1562 = vmatpush1.bf16.xpose.msra.mxu0 0
        %1563 = vmatprep.subr.bf16.mxu0 0
        %1564 = vmatpush1.bf16.xpose.msra.mxu0 0
        %1565 = vmatprep.subr.bf16.mxu0 0
        %1566 = vmatpush1.bf16.xpose.msra.mxu0 0
        %1567 = vmatprep.subr.bf16.mxu0 0
        %1568 = vmatpush1.bf16.xpose.msra.mxu0 0
        %1569 = vmatprep.mubr.bf16.mxu0 0
        %1570 = vmatmul.mubr.bf16.gmra.mrb[0].mxu0 %v1532
        %v1571 = vpop.f32.mrb[0].mxu0
        %v1572 = vadd.f32 %v1137, %v1571
        %v1573 = vpop.f32.mrb[0].mxu0
        %v1574 = vpop.f32.mrb[0].mxu0
        %v1575 = vpop.f32.mrb[0].mxu0
        %1576 = vdwg.mxu0
        %v1577 = vsel %vm1464, %v1572, -inf
        %1578 = vmax.xlane.f32.xlu0 %v1577
        %v1579 = vpop.xlane.xlu0 %1578
        %v1580 = vsub.f32 %v1572, %v1579
        %v1581 = vmul.f32 %v1580, 1.442695
        %v1582 = vpow.pop %v1581
        %v1583 = vsel %vm1464, %v1582, 0.0
        %1584 = vadd.xlane.f32.xlu0 %v1583
        %v1585 = vpop.xlane.xlu0 %1584
        %v1586 = vrcp.pop %v1585
        %v1587 = vmul.f32 %v1582, %v1586
        %v1588 = vpack.c.bf16 %v1587, %v1587
        %1590 = vrot.lane.b32.xlu0 %v1416, 96
        %v1591 = vpop.permute.xlu0 %1590
        %v1593 = vsel %vm1464, %v1588, 0
        %v1596 = vsel %vm1480, %v1591, 0
        %1598 = vmatprep.subr.bf16.mxu0 0
        %1599 = vmatpush1.bf16.msra.mxu0 %v1596
        %1600 = vmatprep.subr.bf16.mxu0 0
        %1601 = vmatpush1.bf16.msra.mxu0 0
        %1602 = vmatprep.subr.bf16.mxu0 0
        %1603 = vmatpush1.bf16.msra.mxu0 0
        %1604 = vmatprep.subr.bf16.mxu0 0
        %1605 = vmatpush1.bf16.msra.mxu0 0
        %1606 = vmatprep.subr.bf16.mxu0 0
        %1607 = vmatpush1.bf16.msra.mxu0 0
        %1608 = vmatprep.subr.bf16.mxu0 0
        %1609 = vmatpush1.bf16.msra.mxu0 0
        %1610 = vmatprep.subr.bf16.mxu0 0
        %1611 = vmatpush1.bf16.msra.mxu0 0
        %1612 = vmatprep.subr.bf16.mxu0 0
        %1613 = vmatpush1.bf16.msra.mxu0 0
        %1614 = vmatprep.subr.bf16.mxu0 0
        %1615 = vmatpush1.bf16.msra.mxu0 0
        %1616 = vmatprep.subr.bf16.mxu0 0
        %1617 = vmatpush1.bf16.msra.mxu0 0
        %1618 = vmatprep.subr.bf16.mxu0 0
        %1619 = vmatpush1.bf16.msra.mxu0 0
        %1620 = vmatprep.subr.bf16.mxu0 0
        %1621 = vmatpush1.bf16.msra.mxu0 0
        %1622 = vmatprep.subr.bf16.mxu0 0
        %1623 = vmatpush1.bf16.msra.mxu0 0
        %1624 = vmatprep.subr.bf16.mxu0 0
        %1625 = vmatpush1.bf16.msra.mxu0 0
        %1626 = vmatprep.subr.bf16.mxu0 0
        %1627 = vmatpush1.bf16.msra.mxu0 0
        %1628 = vmatprep.subr.bf16.mxu0 0
        %1629 = vmatpush1.bf16.msra.mxu0 0
        %1630 = vmatprep.mubr.bf16.mxu0 0
        %1631 = vmatmul.mubr.bf16.gmra.mrb[0].mxu0 %v1593
        %v1632 = vpop.f32.mrb[0].mxu0
        %v1633 = vadd.f32 0.0, %v1632
        %v1634 = vpop.f32.mrb[0].mxu0
        %v1635 = vpop.f32.mrb[0].mxu0
        %v1636 = vpop.f32.mrb[0].mxu0
        %1637 = vdwg.mxu0
        %1639 = vrot.lane.b32.xlu0 %v1633, 32
        %v1640 = vpop.permute.xlu0 %1639
        %vm1642 = vcmask 523520
        %1643 = vst.msk [vmem:[#allocation2] sm:$0xff] %vm1642, %v1640
        %1644 = vrot.lane.b32.xlu0 %v1414, 64
        %v1645 = vpop.permute.xlu0 %1644
        %1646 = vrot.lane.b32.xlu0 %v1415, 64
        %v1647 = vpop.permute.xlu0 %1646
        %v1649 = vsel %vm1417, %v1645, 0
        %v1652 = vsel %vm1417, %v1647, 0
        %1654 = vmatprep.subr.bf16.mxu0 0
        %1655 = vmatpush1.bf16.xpose.msra.mxu0 %v1652
        %1656 = vmatprep.subr.bf16.mxu0 0
        %1657 = vmatpush1.bf16.xpose.msra.mxu0 0
        %1658 = vmatprep.subr.bf16.mxu0 0
        %1659 = vmatpush1.bf16.xpose.msra.mxu0 0
        %1660 = vmatprep.subr.bf16.mxu0 0
        %1661 = vmatpush1.bf16.xpose.msra.mxu0 0
        %1662 = vmatprep.subr.bf16.mxu0 0
        %1663 = vmatpush1.bf16.xpose.msra.mxu0 0
        %1664 = vmatprep.subr.bf16.mxu0 0
        %1665 = vmatpush1.bf16.xpose.msra.mxu0 0
        %1666 = vmatprep.subr.bf16.mxu0 0
        %1667 = vmatpush1.bf16.xpose.msra.mxu0 0
        %1668 = vmatprep.subr.bf16.mxu0 0
        %1669 = vmatpush1.bf16.xpose.msra.mxu0 0
        %1670 = vmatprep.subr.bf16.mxu0 0
        %1671 = vmatpush1.bf16.xpose.msra.mxu0 0
        %1672 = vmatprep.subr.bf16.mxu0 0
        %1673 = vmatpush1.bf16.xpose.msra.mxu0 0
        %1674 = vmatprep.subr.bf16.mxu0 0
        %1675 = vmatpush1.bf16.xpose.msra.mxu0 0
        %1676 = vmatprep.subr.bf16.mxu0 0
        %1677 = vmatpush1.bf16.xpose.msra.mxu0 0
        %1678 = vmatprep.subr.bf16.mxu0 0
        %1679 = vmatpush1.bf16.xpose.msra.mxu0 0
        %1680 = vmatprep.subr.bf16.mxu0 0
        %1681 = vmatpush1.bf16.xpose.msra.mxu0 0
        %1682 = vmatprep.subr.bf16.mxu0 0
        %1683 = vmatpush1.bf16.xpose.msra.mxu0 0
        %1684 = vmatprep.subr.bf16.mxu0 0
        %1685 = vmatpush1.bf16.xpose.msra.mxu0 0
        %1686 = vmatprep.mubr.bf16.mxu0 0
        %1687 = vmatmul.mubr.bf16.gmra.mrb[0].mxu0 %v1649
        %v1688 = vpop.f32.mrb[0].mxu0
        %v1689 = vadd.f32 %v1137, %v1688
        %v1690 = vpop.f32.mrb[0].mxu0
        %v1691 = vpop.f32.mrb[0].mxu0
        %v1692 = vpop.f32.mrb[0].mxu0
        %1693 = vdwg.mxu0
        %v1694 = vsel %vm1464, %v1689, -inf
        %1695 = vmax.xlane.f32.xlu0 %v1694
        %v1696 = vpop.xlane.xlu0 %1695
        %v1697 = vsub.f32 %v1689, %v1696
        %v1698 = vmul.f32 %v1697, 1.442695
        %v1699 = vpow.pop %v1698
        %v1700 = vsel %vm1464, %v1699, 0.0
        %1701 = vadd.xlane.f32.xlu0 %v1700
        %v1702 = vpop.xlane.xlu0 %1701
        %v1703 = vrcp.pop %v1702
        %v1704 = vmul.f32 %v1699, %v1703
        %v1705 = vpack.c.bf16 %v1704, %v1704
        %1706 = vrot.lane.b32.xlu0 %v1416, 64
        %v1707 = vpop.permute.xlu0 %1706
        %v1709 = vsel %vm1464, %v1705, 0
        %v1712 = vsel %vm1480, %v1707, 0
        %1714 = vmatprep.subr.bf16.mxu0 0
        %1715 = vmatpush1.bf16.msra.mxu0 %v1712
        %1716 = vmatprep.subr.bf16.mxu0 0
        %1717 = vmatpush1.bf16.msra.mxu0 0
        %1718 = vmatprep.subr.bf16.mxu0 0
        %1719 = vmatpush1.bf16.msra.mxu0 0
        %1720 = vmatprep.subr.bf16.mxu0 0
        %1721 = vmatpush1.bf16.msra.mxu0 0
        %1722 = vmatprep.subr.bf16.mxu0 0
        %1723 = vmatpush1.bf16.msra.mxu0 0
        %1724 = vmatprep.subr.bf16.mxu0 0
        %1725 = vmatpush1.bf16.msra.mxu0 0
        %1726 = vmatprep.subr.bf16.mxu0 0
        %1727 = vmatpush1.bf16.msra.mxu0 0
        %1728 = vmatprep.subr.bf16.mxu0 0
        %1729 = vmatpush1.bf16.msra.mxu0 0
        %1730 = vmatprep.subr.bf16.mxu0 0
        %1731 = vmatpush1.bf16.msra.mxu0 0
        %1732 = vmatprep.subr.bf16.mxu0 0
        %1733 = vmatpush1.bf16.msra.mxu0 0
        %1734 = vmatprep.subr.bf16.mxu0 0
        %1735 = vmatpush1.bf16.msra.mxu0 0
        %1736 = vmatprep.subr.bf16.mxu0 0
        %1737 = vmatpush1.bf16.msra.mxu0 0
        %1738 = vmatprep.subr.bf16.mxu0 0
        %1739 = vmatpush1.bf16.msra.mxu0 0
        %1740 = vmatprep.subr.bf16.mxu0 0
        %1741 = vmatpush1.bf16.msra.mxu0 0
        %1742 = vmatprep.subr.bf16.mxu0 0
        %1743 = vmatpush1.bf16.msra.mxu0 0
        %1744 = vmatprep.subr.bf16.mxu0 0
        %1745 = vmatpush1.bf16.msra.mxu0 0
        %1746 = vmatprep.mubr.bf16.mxu0 0
        %1747 = vmatmul.mubr.bf16.gmra.mrb[0].mxu0 %v1709
        %v1748 = vpop.f32.mrb[0].mxu0
        %v1749 = vadd.f32 0.0, %v1748
        %v1750 = vpop.f32.mrb[0].mxu0
        %v1751 = vpop.f32.mrb[0].mxu0
        %v1752 = vpop.f32.mrb[0].mxu0
        %1753 = vdwg.mxu0
        %1755 = vrot.lane.b32.xlu0 %v1749, 64
        %v1756 = vpop.permute.xlu0 %1755
        %vm1758 = vcmask 785920
        %1759 = vst.msk [vmem:[#allocation2] sm:$0xff] %vm1758, %v1756
        %1760 = vrot.lane.b32.xlu0 %v1414, 32
        %v1761 = vpop.permute.xlu0 %1760
        %1762 = vrot.lane.b32.xlu0 %v1415, 32
        %v1763 = vpop.permute.xlu0 %1762
        %v1765 = vsel %vm1417, %v1761, 0
        %v1768 = vsel %vm1417, %v1763, 0
        %1770 = vmatprep.subr.bf16.mxu0 0
        %1771 = vmatpush1.bf16.xpose.msra.mxu0 %v1768
        %1772 = vmatprep.subr.bf16.mxu0 0
        %1773 = vmatpush1.bf16.xpose.msra.mxu0 0
        %1774 = vmatprep.subr.bf16.mxu0 0
        %1775 = vmatpush1.bf16.xpose.msra.mxu0 0
        %1776 = vmatprep.subr.bf16.mxu0 0
        %1777 = vmatpush1.bf16.xpose.msra.mxu0 0
        %1778 = vmatprep.subr.bf16.mxu0 0
        %1779 = vmatpush1.bf16.xpose.msra.mxu0 0
        %1780 = vmatprep.subr.bf16.mxu0 0
        %1781 = vmatpush1.bf16.xpose.msra.mxu0 0
        %1782 = vmatprep.subr.bf16.mxu0 0
        %1783 = vmatpush1.bf16.xpose.msra.mxu0 0
        %1784 = vmatprep.subr.bf16.mxu0 0
        %1785 = vmatpush1.bf16.xpose.msra.mxu0 0
        %1786 = vmatprep.subr.bf16.mxu0 0
        %1787 = vmatpush1.bf16.xpose.msra.mxu0 0
        %1788 = vmatprep.subr.bf16.mxu0 0
        %1789 = vmatpush1.bf16.xpose.msra.mxu0 0
        %1790 = vmatprep.subr.bf16.mxu0 0
        %1791 = vmatpush1.bf16.xpose.msra.mxu0 0
        %1792 = vmatprep.subr.bf16.mxu0 0
        %1793 = vmatpush1.bf16.xpose.msra.mxu0 0
        %1794 = vmatprep.subr.bf16.mxu0 0
        %1795 = vmatpush1.bf16.xpose.msra.mxu0 0
        %1796 = vmatprep.subr.bf16.mxu0 0
        %1797 = vmatpush1.bf16.xpose.msra.mxu0 0
        %1798 = vmatprep.subr.bf16.mxu0 0
        %1799 = vmatpush1.bf16.xpose.msra.mxu0 0
        %1800 = vmatprep.subr.bf16.mxu0 0
        %1801 = vmatpush1.bf16.xpose.msra.mxu0 0
        %1802 = vmatprep.mubr.bf16.mxu0 0
        %1803 = vmatmul.mubr.bf16.gmra.mrb[0].mxu0 %v1765
        %v1804 = vpop.f32.mrb[0].mxu0
        %v1805 = vadd.f32 %v1137, %v1804
        %v1806 = vpop.f32.mrb[0].mxu0
        %v1807 = vpop.f32.mrb[0].mxu0
        %v1808 = vpop.f32.mrb[0].mxu0
        %1809 = vdwg.mxu0
        %v1810 = vsel %vm1464, %v1805, -inf
        %1811 = vmax.xlane.f32.xlu0 %v1810
        %v1812 = vpop.xlane.xlu0 %1811
        %v1813 = vsub.f32 %v1805, %v1812
        %v1814 = vmul.f32 %v1813, 1.442695
        %v1815 = vpow.pop %v1814
        %v1816 = vsel %vm1464, %v1815, 0.0
        %1817 = vadd.xlane.f32.xlu0 %v1816
        %v1818 = vpop.xlane.xlu0 %1817
        %v1819 = vrcp.pop %v1818
        %v1820 = vmul.f32 %v1815, %v1819
        %v1821 = vpack.c.bf16 %v1820, %v1820
        %1822 = vrot.lane.b32.xlu0 %v1416, 32
        %v1823 = vpop.permute.xlu0 %1822
        %v1825 = vsel %vm1464, %v1821, 0
        %v1828 = vsel %vm1480, %v1823, 0
        %1830 = vmatprep.subr.bf16.mxu0 0
        %1831 = vmatpush1.bf16.msra.mxu0 %v1828
        %1832 = vmatprep.subr.bf16.mxu0 0
        %1833 = vmatpush1.bf16.msra.mxu0 0
        %1834 = vmatprep.subr.bf16.mxu0 0
        %1835 = vmatpush1.bf16.msra.mxu0 0
        %1836 = vmatprep.subr.bf16.mxu0 0
        %1837 = vmatpush1.bf16.msra.mxu0 0
        %1838 = vmatprep.subr.bf16.mxu0 0
        %1839 = vmatpush1.bf16.msra.mxu0 0
        %1840 = vmatprep.subr.bf16.mxu0 0
        %1841 = vmatpush1.bf16.msra.mxu0 0
        %1842 = vmatprep.subr.bf16.mxu0 0
        %1843 = vmatpush1.bf16.msra.mxu0 0
        %1844 = vmatprep.subr.bf16.mxu0 0
        %1845 = vmatpush1.bf16.msra.mxu0 0
        %1846 = vmatprep.subr.bf16.mxu0 0
        %1847 = vmatpush1.bf16.msra.mxu0 0
        %1848 = vmatprep.subr.bf16.mxu0 0
        %1849 = vmatpush1.bf16.msra.mxu0 0
        %1850 = vmatprep.subr.bf16.mxu0 0
        %1851 = vmatpush1.bf16.msra.mxu0 0
        %1852 = vmatprep.subr.bf16.mxu0 0
        %1853 = vmatpush1.bf16.msra.mxu0 0
        %1854 = vmatprep.subr.bf16.mxu0 0
        %1855 = vmatpush1.bf16.msra.mxu0 0
        %1856 = vmatprep.subr.bf16.mxu0 0
        %1857 = vmatpush1.bf16.msra.mxu0 0
        %1858 = vmatprep.subr.bf16.mxu0 0
        %1859 = vmatpush1.bf16.msra.mxu0 0
        %1860 = vmatprep.subr.bf16.mxu0 0
        %1861 = vmatpush1.bf16.msra.mxu0 0
        %1862 = vmatprep.mubr.bf16.mxu0 0
        %1863 = vmatmul.mubr.bf16.gmra.mrb[0].mxu0 %v1825
        %v1864 = vpop.f32.mrb[0].mxu0
        %v1865 = vadd.f32 0.0, %v1864
        %v1866 = vpop.f32.mrb[0].mxu0
        %v1867 = vpop.f32.mrb[0].mxu0
        %v1868 = vpop.f32.mrb[0].mxu0
        %1869 = vdwg.mxu0
        %1871 = vrot.lane.b32.xlu0 %v1865, 96
        %v1872 = vpop.permute.xlu0 %1871
        %vm1874 = vcmask 1048320
        %1875 = vst.msk [vmem:[#allocation2] sm:$0xff] %vm1874, %v1872
        %v1876 = vld [vmem:[#allocation2] sm:$0xff]
        %v1877 = vpack.c.bf16 %v1876, %v1876
        %v1879 = vlaneseq
        %v1880 = vshrl.u32 %v1879, 7
        %v1881 = vsub.s32 0, %v1880
        %v1882 = vrot.slane %v1412, %v1881
        %v1900 = vunpack.c.l.b16 %v1396
        %v1901 = vunpack.c.l.b16 %v1397
        %v1902 = vunpack.c.l.b16 %v1398
        %v1903 = vunpack.c.l.b16 %v1399
        %v1904 = vunpack.c.l.b16 %v1400
        %v1905 = vunpack.c.l.b16 %v1401
        %v1906 = vunpack.c.l.b16 %v1402
        %v1907 = vunpack.c.l.b16 %v1403
        %v1908 = vunpack.c.l.b16 %v1404
        %v1909 = vunpack.c.l.b16 %v1405
        %v1910 = vunpack.c.l.b16 %v1406
        %v1911 = vunpack.c.l.b16 %v1407
        %v1912 = vunpack.c.l.b16 %v1408
        %v1913 = vunpack.c.l.b16 %v1409
        %v1914 = vunpack.c.l.b16 %v1410
        %v1915 = vunpack.c.l.b16 %v1411
        %v1916 = vpack.c.b16 %v1901, %v1900
        %v1917 = vpack.c.b16 %v1903, %v1902
        %v1918 = vpack.c.b16 %v1905, %v1904
        %v1919 = vpack.c.b16 %v1907, %v1906
        %v1920 = vpack.c.b16 %v1909, %v1908
        %v1921 = vpack.c.b16 %v1911, %v1910
        %v1922 = vpack.c.b16 %v1913, %v1912
        %v1923 = vpack.c.b16 %v1915, %v1914
        %1932 = vmatprep.subr.bf16.mxu0 0
        %1933 = vmatpush1.bf16.msra.mxu0 %v1916
        %1934 = vmatprep.subr.bf16.mxu0 0
        %1935 = vmatpush1.bf16.msra.mxu0 %v1917
        %1936 = vmatprep.subr.bf16.mxu0 0
        %1937 = vmatpush1.bf16.msra.mxu0 %v1918
        %1938 = vmatprep.subr.bf16.mxu0 0
        %1939 = vmatpush1.bf16.msra.mxu0 %v1919
        %1940 = vmatprep.subr.bf16.mxu0 0
        %1941 = vmatpush1.bf16.msra.mxu0 %v1920
        %1942 = vmatprep.subr.bf16.mxu0 0
        %1943 = vmatpush1.bf16.msra.mxu0 %v1921
        %1944 = vmatprep.subr.bf16.mxu0 0
        %1945 = vmatpush1.bf16.msra.mxu0 %v1922
        %1946 = vmatprep.subr.bf16.mxu0 0
        %1947 = vmatpush1.bf16.msra.mxu0 %v1923
        %1948 = vmatprep.subr.bf16.mxu0 0
        %1949 = vmatpush1.bf16.msra.mxu0 0
        %1950 = vmatprep.subr.bf16.mxu0 0
        %1951 = vmatpush1.bf16.msra.mxu0 0
        %1952 = vmatprep.subr.bf16.mxu0 0
        %1953 = vmatpush1.bf16.msra.mxu0 0
        %1954 = vmatprep.subr.bf16.mxu0 0
        %1955 = vmatpush1.bf16.msra.mxu0 0
        %1956 = vmatprep.subr.bf16.mxu0 0
        %1957 = vmatpush1.bf16.msra.mxu0 0
        %1958 = vmatprep.subr.bf16.mxu0 0
        %1959 = vmatpush1.bf16.msra.mxu0 0
        %1960 = vmatprep.subr.bf16.mxu0 0
        %1961 = vmatpush1.bf16.msra.mxu0 0
        %1962 = vmatprep.subr.bf16.mxu0 0
        %1963 = vmatpush1.bf16.msra.mxu0 0
        %1964 = vmatprep.mubr.bf16.mxu0 0
        %1965 = vmatmul.mubr.bf16.gmra.mrb[0].mxu0 %v1877
        %v1966 = vpop.f32.mrb[0].mxu0
        %v1967 = vadd.f32 %v1882, %v1966
        %v1968 = vpop.f32.mrb[0].mxu0
        %v1969 = vpop.f32.mrb[0].mxu0
        %v1970 = vpop.f32.mrb[0].mxu0
        %1971 = vdwg.mxu0
        %v1972 = vadd.f32 %v1122, %v1967
        %v1973 = vld [vmem:[#allocation17] sm:$0x1]
        %v1974 = vld [vmem:[#allocation18] sm:$0x1]
        %1975 = vadd.xlane.f32.xlu0 %v1972
        %v1976 = vpop.xlane.xlu0 %1975
        %v1977 = vrcp.pop 128.0
        %v1978 = vmul.f32 %v1976, %v1977
        %v1979 = vsub.f32 %v1972, %v1978
        %v1980 = vmul.f32 %v1979, %v1979
        %1981 = vadd.xlane.f32.xlu0 %v1980
        %v1982 = vpop.xlane.xlu0 %1981
        %v1983 = vmul.f32 %v1982, %v1977
        %v1984 = vadd.f32 %v1983, 1e-05
        %v1985 = vrsqrt.pop %v1984
        %v1986 = vmul.f32 %v1979, %v1985
        %v1988 = vlaneseq
        %v1989 = vshrl.u32 %v1988, 7
        %v1990 = vsub.s32 0, %v1989
        %v1991 = vrot.slane %v1973, %v1990
        %v1993 = vmul.f32 %v1986, %v1991
        %v1995 = vlaneseq
        %v1996 = vshrl.u32 %v1995, 7
        %v1997 = vsub.s32 0, %v1996
        %v1998 = vrot.slane %v1974, %v1997
        %v2000 = vadd.f32 %v1993, %v1998
        %v2001 = vpack.c.bf16 %v2000, %v2000
        %v2002 = vld [vmem:[#allocation20] sm:$0xf]
        %v2003 = vld [vmem:[#allocation20 + $0x4] sm:$0xf]
        %v2004 = vld [vmem:[#allocation20 + $0x8] sm:$0xf]
        %v2005 = vld [vmem:[#allocation20 + $0xc] sm:$0xf]
        %v2006 = vld [vmem:[#allocation20 + $0x10] sm:$0xf]
        %v2007 = vld [vmem:[#allocation20 + $0x14] sm:$0xf]
        %v2008 = vld [vmem:[#allocation20 + $0x18] sm:$0xf]
        %v2009 = vld [vmem:[#allocation20 + $0x1c] sm:$0xf]
        %v2010 = vld [vmem:[#allocation20 + $0x20] sm:$0xf]
        %v2011 = vld [vmem:[#allocation20 + $0x24] sm:$0xf]
        %v2012 = vld [vmem:[#allocation20 + $0x28] sm:$0xf]
        %v2013 = vld [vmem:[#allocation20 + $0x2c] sm:$0xf]
        %v2014 = vld [vmem:[#allocation20 + $0x30] sm:$0xf]
        %v2015 = vld [vmem:[#allocation20 + $0x34] sm:$0xf]
        %v2016 = vld [vmem:[#allocation20 + $0x38] sm:$0xf]
        %v2017 = vld [vmem:[#allocation20 + $0x3c] sm:$0xf]
        %v2018 = vld [vmem:[#allocation21] sm:$0x1]
        %v2020 = vlaneseq
        %v2021 = vshrl.u32 %v2020, 7
        %v2022 = vsub.s32 0, %v2021
        %v2023 = vrot.slane %v2018, %v2022
        %v2041 = vunpack.c.l.b16 %v2002
        %v2042 = vunpack.c.l.b16 %v2003
        %v2043 = vunpack.c.l.b16 %v2004
        %v2044 = vunpack.c.l.b16 %v2005
        %v2045 = vunpack.c.l.b16 %v2006
        %v2046 = vunpack.c.l.b16 %v2007
        %v2047 = vunpack.c.l.b16 %v2008
        %v2048 = vunpack.c.l.b16 %v2009
        %v2049 = vunpack.c.l.b16 %v2010
        %v2050 = vunpack.c.l.b16 %v2011
        %v2051 = vunpack.c.l.b16 %v2012
        %v2052 = vunpack.c.l.b16 %v2013
        %v2053 = vunpack.c.l.b16 %v2014
        %v2054 = vunpack.c.l.b16 %v2015
        %v2055 = vunpack.c.l.b16 %v2016
        %v2056 = vunpack.c.l.b16 %v2017
        %v2057 = vpack.c.b16 %v2042, %v2041
        %v2058 = vpack.c.b16 %v2044, %v2043
        %v2059 = vpack.c.b16 %v2046, %v2045
        %v2060 = vpack.c.b16 %v2048, %v2047
        %v2061 = vpack.c.b16 %v2050, %v2049
        %v2062 = vpack.c.b16 %v2052, %v2051
        %v2063 = vpack.c.b16 %v2054, %v2053
        %v2064 = vpack.c.b16 %v2056, %v2055
        %2073 = vmatprep.subr.bf16.mxu0 0
        %2074 = vmatpush1.bf16.msra.mxu0 %v2057
        %2075 = vmatprep.subr.bf16.mxu0 0
        %2076 = vmatpush1.bf16.msra.mxu0 %v2058
        %2077 = vmatprep.subr.bf16.mxu0 0
        %2078 = vmatpush1.bf16.msra.mxu0 %v2059
        %2079 = vmatprep.subr.bf16.mxu0 0
        %2080 = vmatpush1.bf16.msra.mxu0 %v2060
        %2081 = vmatprep.subr.bf16.mxu0 0
        %2082 = vmatpush1.bf16.msra.mxu0 %v2061
        %2083 = vmatprep.subr.bf16.mxu0 0
        %2084 = vmatpush1.bf16.msra.mxu0 %v2062
        %2085 = vmatprep.subr.bf16.mxu0 0
        %2086 = vmatpush1.bf16.msra.mxu0 %v2063
        %2087 = vmatprep.subr.bf16.mxu0 0
        %2088 = vmatpush1.bf16.msra.mxu0 %v2064
        %2089 = vmatprep.subr.bf16.mxu0 0
        %2090 = vmatpush1.bf16.msra.mxu0 0
        %2091 = vmatprep.subr.bf16.mxu0 0
        %2092 = vmatpush1.bf16.msra.mxu0 0
        %2093 = vmatprep.subr.bf16.mxu0 0
        %2094 = vmatpush1.bf16.msra.mxu0 0
        %2095 = vmatprep.subr.bf16.mxu0 0
        %2096 = vmatpush1.bf16.msra.mxu0 0
        %2097 = vmatprep.subr.bf16.mxu0 0
        %2098 = vmatpush1.bf16.msra.mxu0 0
        %2099 = vmatprep.subr.bf16.mxu0 0
        %2100 = vmatpush1.bf16.msra.mxu0 0
        %2101 = vmatprep.subr.bf16.mxu0 0
        %2102 = vmatpush1.bf16.msra.mxu0 0
        %2103 = vmatprep.subr.bf16.mxu0 0
        %2104 = vmatpush1.bf16.msra.mxu0 0
        %2105 = vmatprep.mubr.bf16.mxu0 0
        %2106 = vmatmul.mubr.bf16.gmra.mrb[0].mxu0 %v2001
        %v2107 = vpop.f32.mrb[0].mxu0
        %v2108 = vadd.f32 %v2023, %v2107
        %v2109 = vpop.f32.mrb[0].mxu0
        %v2110 = vpop.f32.mrb[0].mxu0
        %v2111 = vpop.f32.mrb[0].mxu0
        %2112 = vdwg.mxu0
        %v2113 = vld [vmem:[#allocation23] sm:$0xff]
        %v2114 = vld [vmem:[#allocation23 + $0x8] sm:$0xff]
        %v2115 = vld [vmem:[#allocation23 + $0x10] sm:$0xff]
        %v2116 = vld [vmem:[#allocation23 + $0x18] sm:$0xff]
        %v2117 = vld [vmem:[#allocation23 + $0x20] sm:$0xff]
        %v2118 = vld [vmem:[#allocation23 + $0x28] sm:$0xff]
        %v2119 = vld [vmem:[#allocation23 + $0x30] sm:$0xff]
        %v2120 = vld [vmem:[#allocation23 + $0x38] sm:$0xff]
        %v2121 = vld [vmem:[#allocation23 + $0x40] sm:$0xff]
        %v2122 = vld [vmem:[#allocation23 + $0x48] sm:$0xff]
        %v2123 = vld [vmem:[#allocation23 + $0x50] sm:$0xff]
        %v2124 = vld [vmem:[#allocation23 + $0x58] sm:$0xff]
        %v2125 = vld [vmem:[#allocation23 + $0x60] sm:$0xff]
        %v2126 = vld [vmem:[#allocation23 + $0x68] sm:$0xff]
        %v2127 = vld [vmem:[#allocation23 + $0x70] sm:$0xff]
        %v2128 = vld [vmem:[#allocation23 + $0x78] sm:$0xff]
        %v2129 = vld [vmem:[#allocation24] sm:$0x3]
        %v2131 = vlaneseq
        %v2132 = vshrl.u32 %v2131, 7
        %v2133 = vsub.s32 0, %v2132
        %v2134 = vrot.slane %v2129, %v2133
        %v2135 = vlaneseq
        %v2136 = vshrl.u32 %v2135, 7
        %v2137 = vsub.s32 1, %v2136
        %v2138 = vrot.slane %v2129, %v2137
        %v2157 = vunpack.c.l.b16 %v2113
        %v2158 = vunpack.c.h.b16 %v2113
        %v2159 = vunpack.c.l.b16 %v2114
        %v2160 = vunpack.c.h.b16 %v2114
        %v2161 = vunpack.c.l.b16 %v2115
        %v2162 = vunpack.c.h.b16 %v2115
        %v2163 = vunpack.c.l.b16 %v2116
        %v2164 = vunpack.c.h.b16 %v2116
        %v2165 = vunpack.c.l.b16 %v2117
        %v2166 = vunpack.c.h.b16 %v2117
        %v2167 = vunpack.c.l.b16 %v2118
        %v2168 = vunpack.c.h.b16 %v2118
        %v2169 = vunpack.c.l.b16 %v2119
        %v2170 = vunpack.c.h.b16 %v2119
        %v2171 = vunpack.c.l.b16 %v2120
        %v2172 = vunpack.c.h.b16 %v2120
        %v2173 = vunpack.c.l.b16 %v2121
        %v2174 = vunpack.c.h.b16 %v2121
        %v2175 = vunpack.c.l.b16 %v2122
        %v2176 = vunpack.c.h.b16 %v2122
        %v2177 = vunpack.c.l.b16 %v2123
        %v2178 = vunpack.c.h.b16 %v2123
        %v2179 = vunpack.c.l.b16 %v2124
        %v2180 = vunpack.c.h.b16 %v2124
        %v2181 = vunpack.c.l.b16 %v2125
        %v2182 = vunpack.c.h.b16 %v2125
        %v2183 = vunpack.c.l.b16 %v2126
        %v2184 = vunpack.c.h.b16 %v2126
        %v2185 = vunpack.c.l.b16 %v2127
        %v2186 = vunpack.c.h.b16 %v2127
        %v2187 = vunpack.c.l.b16 %v2128
        %v2188 = vunpack.c.h.b16 %v2128
        %v2189 = vpack.c.b16 %v2159, %v2157
        %v2190 = vpack.c.b16 %v2160, %v2158
        %v2191 = vpack.c.b16 %v2163, %v2161
        %v2192 = vpack.c.b16 %v2164, %v2162
        %v2193 = vpack.c.b16 %v2167, %v2165
        %v2194 = vpack.c.b16 %v2168, %v2166
        %v2195 = vpack.c.b16 %v2171, %v2169
        %v2196 = vpack.c.b16 %v2172, %v2170
        %v2197 = vpack.c.b16 %v2175, %v2173
        %v2198 = vpack.c.b16 %v2176, %v2174
        %v2199 = vpack.c.b16 %v2179, %v2177
        %v2200 = vpack.c.b16 %v2180, %v2178
        %v2201 = vpack.c.b16 %v2183, %v2181
        %v2202 = vpack.c.b16 %v2184, %v2182
        %v2203 = vpack.c.b16 %v2187, %v2185
        %v2204 = vpack.c.b16 %v2188, %v2186
        %2221 = vmatprep.subr.bf16.mxu0 %v2190
        %2222 = vmatpush1.bf16.msra.mxu0 %v2189
        %2223 = vmatprep.subr.bf16.mxu0 %v2192
        %2224 = vmatpush1.bf16.msra.mxu0 %v2191
        %2225 = vmatprep.subr.bf16.mxu0 %v2194
        %2226 = vmatpush1.bf16.msra.mxu0 %v2193
        %2227 = vmatprep.subr.bf16.mxu0 %v2196
        %2228 = vmatpush1.bf16.msra.mxu0 %v2195
        %2229 = vmatprep.subr.bf16.mxu0 %v2198
        %2230 = vmatpush1.bf16.msra.mxu0 %v2197
        %2231 = vmatprep.subr.bf16.mxu0 %v2200
        %2232 = vmatpush1.bf16.msra.mxu0 %v2199
        %2233 = vmatprep.subr.bf16.mxu0 %v2202
        %2234 = vmatpush1.bf16.msra.mxu0 %v2201
        %2235 = vmatprep.subr.bf16.mxu0 %v2204
        %2236 = vmatpush1.bf16.msra.mxu0 %v2203
        %2237 = vmatprep.subr.bf16.mxu0 0
        %2238 = vmatpush1.bf16.msra.mxu0 0
        %2239 = vmatprep.subr.bf16.mxu0 0
        %2240 = vmatpush1.bf16.msra.mxu0 0
        %2241 = vmatprep.subr.bf16.mxu0 0
        %2242 = vmatpush1.bf16.msra.mxu0 0
        %2243 = vmatprep.subr.bf16.mxu0 0
        %2244 = vmatpush1.bf16.msra.mxu0 0
        %2245 = vmatprep.subr.bf16.mxu0 0
        %2246 = vmatpush1.bf16.msra.mxu0 0
        %2247 = vmatprep.subr.bf16.mxu0 0
        %2248 = vmatpush1.bf16.msra.mxu0 0
        %2249 = vmatprep.subr.bf16.mxu0 0
        %2250 = vmatpush1.bf16.msra.mxu0 0
        %2251 = vmatprep.subr.bf16.mxu0 0
        %2252 = vmatpush1.bf16.msra.mxu0 0
        %2253 = vmatprep.mubr.bf16.mxu0 0
        %2254 = vmatmul.mubr.bf16.gmra.mrb[0].mxu0 %v1121
        %v2255 = vpop.f32.mrb[0].mxu0
        %v2256 = vadd.f32 %v2134, %v2255
        %v2257 = vpop.f32.mrb[0].mxu0
        %v2258 = vadd.f32 %v2138, %v2257
        %v2259 = vpop.f32.mrb[0].mxu0
        %v2260 = vpop.f32.mrb[0].mxu0
        %2261 = vdwg.mxu0
        %v2262 = vld [vmem:[#allocation26] sm:$0xf]
        %v2263 = vld [vmem:[#allocation26 + $0x4] sm:$0xf]
        %v2264 = vld [vmem:[#allocation26 + $0x8] sm:$0xf]
        %v2265 = vld [vmem:[#allocation26 + $0xc] sm:$0xf]
        %v2266 = vld [vmem:[#allocation26 + $0x10] sm:$0xf]
        %v2267 = vld [vmem:[#allocation26 + $0x14] sm:$0xf]
        %v2268 = vld [vmem:[#allocation26 + $0x18] sm:$0xf]
        %v2269 = vld [vmem:[#allocation26 + $0x1c] sm:$0xf]
        %v2270 = vld [vmem:[#allocation26 + $0x20] sm:$0xf]
        %v2271 = vld [vmem:[#allocation26 + $0x24] sm:$0xf]
        %v2272 = vld [vmem:[#allocation26 + $0x28] sm:$0xf]
        %v2273 = vld [vmem:[#allocation26 + $0x2c] sm:$0xf]
        %v2274 = vld [vmem:[#allocation26 + $0x30] sm:$0xf]
        %v2275 = vld [vmem:[#allocation26 + $0x34] sm:$0xf]
        %v2276 = vld [vmem:[#allocation26 + $0x38] sm:$0xf]
        %v2277 = vld [vmem:[#allocation26 + $0x3c] sm:$0xf]
        %v2278 = vld [vmem:[#allocation27] sm:$0x1]
        %v2279 = vmul.f32 %v2108, 0.17677669
        %v2280 = vpack.c.bf16 %v2279, %v2279
        %v2281 = vpack.c.bf16 %v2256, %v2256
        %v2282 = vpack.c.bf16 %v2258, %v2258
        %v2284 = vlaneseq
        %v2285 = vshrl.u32 %v2284, 7
        %v2286 = vsub.s32 0, %v2285
        %v2287 = vrot.slane %v1124, %v2286
        %v2290 = vsel %vm1417, %v2280, 0
        %v2293 = vsel %vm1417, %v2281, 0
        %2295 = vmatprep.subr.bf16.mxu0 0
        %2296 = vmatpush1.bf16.xpose.msra.mxu0 %v2293
        %2297 = vmatprep.subr.bf16.mxu0 0
        %2298 = vmatpush1.bf16.xpose.msra.mxu0 0
        %2299 = vmatprep.subr.bf16.mxu0 0
        %2300 = vmatpush1.bf16.xpose.msra.mxu0 0
        %2301 = vmatprep.subr.bf16.mxu0 0
        %2302 = vmatpush1.bf16.xpose.msra.mxu0 0
        %2303 = vmatprep.subr.bf16.mxu0 0
        %2304 = vmatpush1.bf16.xpose.msra.mxu0 0
        %2305 = vmatprep.subr.bf16.mxu0 0
        %2306 = vmatpush1.bf16.xpose.msra.mxu0 0
        %2307 = vmatprep.subr.bf16.mxu0 0
        %2308 = vmatpush1.bf16.xpose.msra.mxu0 0
        %2309 = vmatprep.subr.bf16.mxu0 0
        %2310 = vmatpush1.bf16.xpose.msra.mxu0 0
        %2311 = vmatprep.subr.bf16.mxu0 0
        %2312 = vmatpush1.bf16.xpose.msra.mxu0 0
        %2313 = vmatprep.subr.bf16.mxu0 0
        %2314 = vmatpush1.bf16.xpose.msra.mxu0 0
        %2315 = vmatprep.subr.bf16.mxu0 0
        %2316 = vmatpush1.bf16.xpose.msra.mxu0 0
        %2317 = vmatprep.subr.bf16.mxu0 0
        %2318 = vmatpush1.bf16.xpose.msra.mxu0 0
        %2319 = vmatprep.subr.bf16.mxu0 0
        %2320 = vmatpush1.bf16.xpose.msra.mxu0 0
        %2321 = vmatprep.subr.bf16.mxu0 0
        %2322 = vmatpush1.bf16.xpose.msra.mxu0 0
        %2323 = vmatprep.subr.bf16.mxu0 0
        %2324 = vmatpush1.bf16.xpose.msra.mxu0 0
        %2325 = vmatprep.subr.bf16.mxu0 0
        %2326 = vmatpush1.bf16.xpose.msra.mxu0 0
        %2327 = vmatprep.mubr.bf16.mxu0 0
        %2328 = vmatmul.mubr.bf16.gmra.mrb[0].mxu0 %v2290
        %v2329 = vpop.f32.mrb[0].mxu0
        %v2330 = vadd.f32 %v2287, %v2329
        %v2331 = vpop.f32.mrb[0].mxu0
        %v2332 = vpop.f32.mrb[0].mxu0
        %v2333 = vpop.f32.mrb[0].mxu0
        %2334 = vdwg.mxu0
        %v2335 = vsel %vm1464, %v2330, -inf
        %2336 = vmax.xlane.f32.xlu0 %v2335
        %v2337 = vpop.xlane.xlu0 %2336
        %v2338 = vsub.f32 %v2330, %v2337
        %v2339 = vmul.f32 %v2338, 1.442695
        %v2340 = vpow.pop %v2339
        %v2341 = vsel %vm1464, %v2340, 0.0
        %2342 = vadd.xlane.f32.xlu0 %v2341
        %v2343 = vpop.xlane.xlu0 %2342
        %v2344 = vrcp.pop %v2343
        %v2345 = vmul.f32 %v2340, %v2344
        %v2346 = vpack.c.bf16 %v2345, %v2345
        %v2348 = vsel %vm1464, %v2346, 0
        %v2351 = vsel %vm1480, %v2282, 0
        %2353 = vmatprep.subr.bf16.mxu0 0
        %2354 = vmatpush1.bf16.msra.mxu0 %v2351
        %2355 = vmatprep.subr.bf16.mxu0 0
        %2356 = vmatpush1.bf16.msra.mxu0 0
        %2357 = vmatprep.subr.bf16.mxu0 0
        %2358 = vmatpush1.bf16.msra.mxu0 0
        %2359 = vmatprep.subr.bf16.mxu0 0
        %2360 = vmatpush1.bf16.msra.mxu0 0
        %2361 = vmatprep.subr.bf16.mxu0 0
        %2362 = vmatpush1.bf16.msra.mxu0 0
        %2363 = vmatprep.subr.bf16.mxu0 0
        %2364 = vmatpush1.bf16.msra.mxu0 0
        %2365 = vmatprep.subr.bf16.mxu0 0
        %2366 = vmatpush1.bf16.msra.mxu0 0
        %2367 = vmatprep.subr.bf16.mxu0 0
        %2368 = vmatpush1.bf16.msra.mxu0 0
        %2369 = vmatprep.subr.bf16.mxu0 0
        %2370 = vmatpush1.bf16.msra.mxu0 0
        %2371 = vmatprep.subr.bf16.mxu0 0
        %2372 = vmatpush1.bf16.msra.mxu0 0
        %2373 = vmatprep.subr.bf16.mxu0 0
        %2374 = vmatpush1.bf16.msra.mxu0 0
        %2375 = vmatprep.subr.bf16.mxu0 0
        %2376 = vmatpush1.bf16.msra.mxu0 0
        %2377 = vmatprep.subr.bf16.mxu0 0
        %2378 = vmatpush1.bf16.msra.mxu0 0
        %2379 = vmatprep.subr.bf16.mxu0 0
        %2380 = vmatpush1.bf16.msra.mxu0 0
        %2381 = vmatprep.subr.bf16.mxu0 0
        %2382 = vmatpush1.bf16.msra.mxu0 0
        %2383 = vmatprep.subr.bf16.mxu0 0
        %2384 = vmatpush1.bf16.msra.mxu0 0
        %2385 = vmatprep.mubr.bf16.mxu0 0
        %2386 = vmatmul.mubr.bf16.gmra.mrb[0].mxu0 %v2348
        %v2387 = vpop.f32.mrb[0].mxu0
        %v2388 = vadd.f32 0.0, %v2387
        %v2389 = vpop.f32.mrb[0].mxu0
        %v2390 = vpop.f32.mrb[0].mxu0
        %v2391 = vpop.f32.mrb[0].mxu0
        %2392 = vdwg.mxu0
        %2393 = vst.msk [vmem:[#allocation2] sm:$0xff] %vm1417, %v2388
        %2395 = vrot.lane.b32.xlu0 %v2280, 96
        %v2396 = vpop.permute.xlu0 %2395
        %2398 = vrot.lane.b32.xlu0 %v2281, 96
        %v2399 = vpop.permute.xlu0 %2398
        %v2401 = vsel %vm1417, %v2396, 0
        %v2404 = vsel %vm1417, %v2399, 0
        %2406 = vmatprep.subr.bf16.mxu0 0
        %2407 = vmatpush1.bf16.xpose.msra.mxu0 %v2404
        %2408 = vmatprep.subr.bf16.mxu0 0
        %2409 = vmatpush1.bf16.xpose.msra.mxu0 0
        %2410 = vmatprep.subr.bf16.mxu0 0
        %2411 = vmatpush1.bf16.xpose.msra.mxu0 0
        %2412 = vmatprep.subr.bf16.mxu0 0
        %2413 = vmatpush1.bf16.xpose.msra.mxu0 0
        %2414 = vmatprep.subr.bf16.mxu0 0
        %2415 = vmatpush1.bf16.xpose.msra.mxu0 0
        %2416 = vmatprep.subr.bf16.mxu0 0
        %2417 = vmatpush1.bf16.xpose.msra.mxu0 0
        %2418 = vmatprep.subr.bf16.mxu0 0
        %2419 = vmatpush1.bf16.xpose.msra.mxu0 0
        %2420 = vmatprep.subr.bf16.mxu0 0
        %2421 = vmatpush1.bf16.xpose.msra.mxu0 0
        %2422 = vmatprep.subr.bf16.mxu0 0
        %2423 = vmatpush1.bf16.xpose.msra.mxu0 0
        %2424 = vmatprep.subr.bf16.mxu0 0
        %2425 = vmatpush1.bf16.xpose.msra.mxu0 0
        %2426 = vmatprep.subr.bf16.mxu0 0
        %2427 = vmatpush1.bf16.xpose.msra.mxu0 0
        %2428 = vmatprep.subr.bf16.mxu0 0
        %2429 = vmatpush1.bf16.xpose.msra.mxu0 0
        %2430 = vmatprep.subr.bf16.mxu0 0
        %2431 = vmatpush1.bf16.xpose.msra.mxu0 0
        %2432 = vmatprep.subr.bf16.mxu0 0
        %2433 = vmatpush1.bf16.xpose.msra.mxu0 0
        %2434 = vmatprep.subr.bf16.mxu0 0
        %2435 = vmatpush1.bf16.xpose.msra.mxu0 0
        %2436 = vmatprep.subr.bf16.mxu0 0
        %2437 = vmatpush1.bf16.xpose.msra.mxu0 0
        %2438 = vmatprep.mubr.bf16.mxu0 0
        %2439 = vmatmul.mubr.bf16.gmra.mrb[0].mxu0 %v2401
        %v2440 = vpop.f32.mrb[0].mxu0
        %v2441 = vadd.f32 %v2287, %v2440
        %v2442 = vpop.f32.mrb[0].mxu0
        %v2443 = vpop.f32.mrb[0].mxu0
        %v2444 = vpop.f32.mrb[0].mxu0
        %2445 = vdwg.mxu0
        %v2446 = vsel %vm1464, %v2441, -inf
        %2447 = vmax.xlane.f32.xlu0 %v2446
        %v2448 = vpop.xlane.xlu0 %2447
        %v2449 = vsub.f32 %v2441, %v2448
        %v2450 = vmul.f32 %v2449, 1.442695
        %v2451 = vpow.pop %v2450
        %v2452 = vsel %vm1464, %v2451, 0.0
        %2453 = vadd.xlane.f32.xlu0 %v2452
        %v2454 = vpop.xlane.xlu0 %2453
        %v2455 = vrcp.pop %v2454
        %v2456 = vmul.f32 %v2451, %v2455
        %v2457 = vpack.c.bf16 %v2456, %v2456
        %2459 = vrot.lane.b32.xlu0 %v2282, 96
        %v2460 = vpop.permute.xlu0 %2459
        %v2462 = vsel %vm1464, %v2457, 0
        %v2465 = vsel %vm1480, %v2460, 0
        %2467 = vmatprep.subr.bf16.mxu0 0
        %2468 = vmatpush1.bf16.msra.mxu0 %v2465
        %2469 = vmatprep.subr.bf16.mxu0 0
        %2470 = vmatpush1.bf16.msra.mxu0 0
        %2471 = vmatprep.subr.bf16.mxu0 0
        %2472 = vmatpush1.bf16.msra.mxu0 0
        %2473 = vmatprep.subr.bf16.mxu0 0
        %2474 = vmatpush1.bf16.msra.mxu0 0
        %2475 = vmatprep.subr.bf16.mxu0 0
        %2476 = vmatpush1.bf16.msra.mxu0 0
        %2477 = vmatprep.subr.bf16.mxu0 0
        %2478 = vmatpush1.bf16.msra.mxu0 0
        %2479 = vmatprep.subr.bf16.mxu0 0
        %2480 = vmatpush1.bf16.msra.mxu0 0
        %2481 = vmatprep.subr.bf16.mxu0 0
        %2482 = vmatpush1.bf16.msra.mxu0 0
        %2483 = vmatprep.subr.bf16.mxu0 0
        %2484 = vmatpush1.bf16.msra.mxu0 0
        %2485 = vmatprep.subr.bf16.mxu0 0
        %2486 = vmatpush1.bf16.msra.mxu0 0
        %2487 = vmatprep.subr.bf16.mxu0 0
        %2488 = vmatpush1.bf16.msra.mxu0 0
        %2489 = vmatprep.subr.bf16.mxu0 0
        %2490 = vmatpush1.bf16.msra.mxu0 0
        %2491 = vmatprep.subr.bf16.mxu0 0
        %2492 = vmatpush1.bf16.msra.mxu0 0
        %2493 = vmatprep.subr.bf16.mxu0 0
        %2494 = vmatpush1.bf16.msra.mxu0 0
        %2495 = vmatprep.subr.bf16.mxu0 0
        %2496 = vmatpush1.bf16.msra.mxu0 0
        %2497 = vmatprep.subr.bf16.mxu0 0
        %2498 = vmatpush1.bf16.msra.mxu0 0
        %2499 = vmatprep.mubr.bf16.mxu0 0
        %2500 = vmatmul.mubr.bf16.gmra.mrb[0].mxu0 %v2462
        %v2501 = vpop.f32.mrb[0].mxu0
        %v2502 = vadd.f32 0.0, %v2501
        %v2503 = vpop.f32.mrb[0].mxu0
        %v2504 = vpop.f32.mrb[0].mxu0
        %v2505 = vpop.f32.mrb[0].mxu0
        %2506 = vdwg.mxu0
        %2508 = vrot.lane.b32.xlu0 %v2502, 32
        %v2509 = vpop.permute.xlu0 %2508
        %2511 = vst.msk [vmem:[#allocation2] sm:$0xff] %vm1642, %v2509
        %2512 = vrot.lane.b32.xlu0 %v2280, 64
        %v2513 = vpop.permute.xlu0 %2512
        %2514 = vrot.lane.b32.xlu0 %v2281, 64
        %v2515 = vpop.permute.xlu0 %2514
        %v2517 = vsel %vm1417, %v2513, 0
        %v2520 = vsel %vm1417, %v2515, 0
        %2522 = vmatprep.subr.bf16.mxu0 0
        %2523 = vmatpush1.bf16.xpose.msra.mxu0 %v2520
        %2524 = vmatprep.subr.bf16.mxu0 0
        %2525 = vmatpush1.bf16.xpose.msra.mxu0 0
        %2526 = vmatprep.subr.bf16.mxu0 0
        %2527 = vmatpush1.bf16.xpose.msra.mxu0 0
        %2528 = vmatprep.subr.bf16.mxu0 0
        %2529 = vmatpush1.bf16.xpose.msra.mxu0 0
        %2530 = vmatprep.subr.bf16.mxu0 0
        %2531 = vmatpush1.bf16.xpose.msra.mxu0 0
        %2532 = vmatprep.subr.bf16.mxu0 0
        %2533 = vmatpush1.bf16.xpose.msra.mxu0 0
        %2534 = vmatprep.subr.bf16.mxu0 0
        %2535 = vmatpush1.bf16.xpose.msra.mxu0 0
        %2536 = vmatprep.subr.bf16.mxu0 0
        %2537 = vmatpush1.bf16.xpose.msra.mxu0 0
        %2538 = vmatprep.subr.bf16.mxu0 0
        %2539 = vmatpush1.bf16.xpose.msra.mxu0 0
        %2540 = vmatprep.subr.bf16.mxu0 0
        %2541 = vmatpush1.bf16.xpose.msra.mxu0 0
        %2542 = vmatprep.subr.bf16.mxu0 0
        %2543 = vmatpush1.bf16.xpose.msra.mxu0 0
        %2544 = vmatprep.subr.bf16.mxu0 0
        %2545 = vmatpush1.bf16.xpose.msra.mxu0 0
        %2546 = vmatprep.subr.bf16.mxu0 0
        %2547 = vmatpush1.bf16.xpose.msra.mxu0 0
        %2548 = vmatprep.subr.bf16.mxu0 0
        %2549 = vmatpush1.bf16.xpose.msra.mxu0 0
        %2550 = vmatprep.subr.bf16.mxu0 0
        %2551 = vmatpush1.bf16.xpose.msra.mxu0 0
        %2552 = vmatprep.subr.bf16.mxu0 0
        %2553 = vmatpush1.bf16.xpose.msra.mxu0 0
        %2554 = vmatprep.mubr.bf16.mxu0 0
        %2555 = vmatmul.mubr.bf16.gmra.mrb[0].mxu0 %v2517
        %v2556 = vpop.f32.mrb[0].mxu0
        %v2557 = vadd.f32 %v2287, %v2556
        %v2558 = vpop.f32.mrb[0].mxu0
        %v2559 = vpop.f32.mrb[0].mxu0
        %v2560 = vpop.f32.mrb[0].mxu0
        %2561 = vdwg.mxu0
        %v2562 = vsel %vm1464, %v2557, -inf
        %2563 = vmax.xlane.f32.xlu0 %v2562
        %v2564 = vpop.xlane.xlu0 %2563
        %v2565 = vsub.f32 %v2557, %v2564
        %v2566 = vmul.f32 %v2565, 1.442695
        %v2567 = vpow.pop %v2566
        %v2568 = vsel %vm1464, %v2567, 0.0
        %2569 = vadd.xlane.f32.xlu0 %v2568
        %v2570 = vpop.xlane.xlu0 %2569
        %v2571 = vrcp.pop %v2570
        %v2572 = vmul.f32 %v2567, %v2571
        %v2573 = vpack.c.bf16 %v2572, %v2572
        %2574 = vrot.lane.b32.xlu0 %v2282, 64
        %v2575 = vpop.permute.xlu0 %2574
        %v2577 = vsel %vm1464, %v2573, 0
        %v2580 = vsel %vm1480, %v2575, 0
        %2582 = vmatprep.subr.bf16.mxu0 0
        %2583 = vmatpush1.bf16.msra.mxu0 %v2580
        %2584 = vmatprep.subr.bf16.mxu0 0
        %2585 = vmatpush1.bf16.msra.mxu0 0
        %2586 = vmatprep.subr.bf16.mxu0 0
        %2587 = vmatpush1.bf16.msra.mxu0 0
        %2588 = vmatprep.subr.bf16.mxu0 0
        %2589 = vmatpush1.bf16.msra.mxu0 0
        %2590 = vmatprep.subr.bf16.mxu0 0
        %2591 = vmatpush1.bf16.msra.mxu0 0
        %2592 = vmatprep.subr.bf16.mxu0 0
        %2593 = vmatpush1.bf16.msra.mxu0 0
        %2594 = vmatprep.subr.bf16.mxu0 0
        %2595 = vmatpush1.bf16.msra.mxu0 0
        %2596 = vmatprep.subr.bf16.mxu0 0
        %2597 = vmatpush1.bf16.msra.mxu0 0
        %2598 = vmatprep.subr.bf16.mxu0 0
        %2599 = vmatpush1.bf16.msra.mxu0 0
        %2600 = vmatprep.subr.bf16.mxu0 0
        %2601 = vmatpush1.bf16.msra.mxu0 0
        %2602 = vmatprep.subr.bf16.mxu0 0
        %2603 = vmatpush1.bf16.msra.mxu0 0
        %2604 = vmatprep.subr.bf16.mxu0 0
        %2605 = vmatpush1.bf16.msra.mxu0 0
        %2606 = vmatprep.subr.bf16.mxu0 0
        %2607 = vmatpush1.bf16.msra.mxu0 0
        %2608 = vmatprep.subr.bf16.mxu0 0
        %2609 = vmatpush1.bf16.msra.mxu0 0
        %2610 = vmatprep.subr.bf16.mxu0 0
        %2611 = vmatpush1.bf16.msra.mxu0 0
        %2612 = vmatprep.subr.bf16.mxu0 0
        %2613 = vmatpush1.bf16.msra.mxu0 0
        %2614 = vmatprep.mubr.bf16.mxu0 0
        %2615 = vmatmul.mubr.bf16.gmra.mrb[0].mxu0 %v2577
        %v2616 = vpop.f32.mrb[0].mxu0
        %v2617 = vadd.f32 0.0, %v2616
        %v2618 = vpop.f32.mrb[0].mxu0
        %v2619 = vpop.f32.mrb[0].mxu0
        %v2620 = vpop.f32.mrb[0].mxu0
        %2621 = vdwg.mxu0
        %2623 = vrot.lane.b32.xlu0 %v2617, 64
        %v2624 = vpop.permute.xlu0 %2623
        %2626 = vst.msk [vmem:[#allocation2] sm:$0xff] %vm1758, %v2624
        %2627 = vrot.lane.b32.xlu0 %v2280, 32
        %v2628 = vpop.permute.xlu0 %2627
        %2629 = vrot.lane.b32.xlu0 %v2281, 32
        %v2630 = vpop.permute.xlu0 %2629
        %v2632 = vsel %vm1417, %v2628, 0
        %v2635 = vsel %vm1417, %v2630, 0
        %2637 = vmatprep.subr.bf16.mxu0 0
        %2638 = vmatpush1.bf16.xpose.msra.mxu0 %v2635
        %2639 = vmatprep.subr.bf16.mxu0 0
        %2640 = vmatpush1.bf16.xpose.msra.mxu0 0
        %2641 = vmatprep.subr.bf16.mxu0 0
        %2642 = vmatpush1.bf16.xpose.msra.mxu0 0
        %2643 = vmatprep.subr.bf16.mxu0 0
        %2644 = vmatpush1.bf16.xpose.msra.mxu0 0
        %2645 = vmatprep.subr.bf16.mxu0 0
        %2646 = vmatpush1.bf16.xpose.msra.mxu0 0
        %2647 = vmatprep.subr.bf16.mxu0 0
        %2648 = vmatpush1.bf16.xpose.msra.mxu0 0
        %2649 = vmatprep.subr.bf16.mxu0 0
        %2650 = vmatpush1.bf16.xpose.msra.mxu0 0
        %2651 = vmatprep.subr.bf16.mxu0 0
        %2652 = vmatpush1.bf16.xpose.msra.mxu0 0
        %2653 = vmatprep.subr.bf16.mxu0 0
        %2654 = vmatpush1.bf16.xpose.msra.mxu0 0
        %2655 = vmatprep.subr.bf16.mxu0 0
        %2656 = vmatpush1.bf16.xpose.msra.mxu0 0
        %2657 = vmatprep.subr.bf16.mxu0 0
        %2658 = vmatpush1.bf16.xpose.msra.mxu0 0
        %2659 = vmatprep.subr.bf16.mxu0 0
        %2660 = vmatpush1.bf16.xpose.msra.mxu0 0
        %2661 = vmatprep.subr.bf16.mxu0 0
        %2662 = vmatpush1.bf16.xpose.msra.mxu0 0
        %2663 = vmatprep.subr.bf16.mxu0 0
        %2664 = vmatpush1.bf16.xpose.msra.mxu0 0
        %2665 = vmatprep.subr.bf16.mxu0 0
        %2666 = vmatpush1.bf16.xpose.msra.mxu0 0
        %2667 = vmatprep.subr.bf16.mxu0 0
        %2668 = vmatpush1.bf16.xpose.msra.mxu0 0
        %2669 = vmatprep.mubr.bf16.mxu0 0
        %2670 = vmatmul.mubr.bf16.gmra.mrb[0].mxu0 %v2632
        %v2671 = vpop.f32.mrb[0].mxu0
        %v2672 = vadd.f32 %v2287, %v2671
        %v2673 = vpop.f32.mrb[0].mxu0
        %v2674 = vpop.f32.mrb[0].mxu0
        %v2675 = vpop.f32.mrb[0].mxu0
        %2676 = vdwg.mxu0
        %v2677 = vsel %vm1464, %v2672, -inf
        %2678 = vmax.xlane.f32.xlu0 %v2677
        %v2679 = vpop.xlane.xlu0 %2678
        %v2680 = vsub.f32 %v2672, %v2679
        %v2681 = vmul.f32 %v2680, 1.442695
        %v2682 = vpow.pop %v2681
        %v2683 = vsel %vm1464, %v2682, 0.0
        %2684 = vadd.xlane.f32.xlu0 %v2683
        %v2685 = vpop.xlane.xlu0 %2684
        %v2686 = vrcp.pop %v2685
        %v2687 = vmul.f32 %v2682, %v2686
        %v2688 = vpack.c.bf16 %v2687, %v2687
        %2689 = vrot.lane.b32.xlu0 %v2282, 32
        %v2690 = vpop.permute.xlu0 %2689
        %v2692 = vsel %vm1464, %v2688, 0
        %v2695 = vsel %vm1480, %v2690, 0
        %2697 = vmatprep.subr.bf16.mxu0 0
        %2698 = vmatpush1.bf16.msra.mxu0 %v2695
        %2699 = vmatprep.subr.bf16.mxu0 0
        %2700 = vmatpush1.bf16.msra.mxu0 0
        %2701 = vmatprep.subr.bf16.mxu0 0
        %2702 = vmatpush1.bf16.msra.mxu0 0
        %2703 = vmatprep.subr.bf16.mxu0 0
        %2704 = vmatpush1.bf16.msra.mxu0 0
        %2705 = vmatprep.subr.bf16.mxu0 0
        %2706 = vmatpush1.bf16.msra.mxu0 0
        %2707 = vmatprep.subr.bf16.mxu0 0
        %2708 = vmatpush1.bf16.msra.mxu0 0
        %2709 = vmatprep.subr.bf16.mxu0 0
        %2710 = vmatpush1.bf16.msra.mxu0 0
        %2711 = vmatprep.subr.bf16.mxu0 0
        %2712 = vmatpush1.bf16.msra.mxu0 0
        %2713 = vmatprep.subr.bf16.mxu0 0
        %2714 = vmatpush1.bf16.msra.mxu0 0
        %2715 = vmatprep.subr.bf16.mxu0 0
        %2716 = vmatpush1.bf16.msra.mxu0 0
        %2717 = vmatprep.subr.bf16.mxu0 0
        %2718 = vmatpush1.bf16.msra.mxu0 0
        %2719 = vmatprep.subr.bf16.mxu0 0
        %2720 = vmatpush1.bf16.msra.mxu0 0
        %2721 = vmatprep.subr.bf16.mxu0 0
        %2722 = vmatpush1.bf16.msra.mxu0 0
        %2723 = vmatprep.subr.bf16.mxu0 0
        %2724 = vmatpush1.bf16.msra.mxu0 0
        %2725 = vmatprep.subr.bf16.mxu0 0
        %2726 = vmatpush1.bf16.msra.mxu0 0
        %2727 = vmatprep.subr.bf16.mxu0 0
        %2728 = vmatpush1.bf16.msra.mxu0 0
        %2729 = vmatprep.mubr.bf16.mxu0 0
        %2730 = vmatmul.mubr.bf16.gmra.mrb[0].mxu0 %v2692
        %v2731 = vpop.f32.mrb[0].mxu0
        %v2732 = vadd.f32 0.0, %v2731
        %v2733 = vpop.f32.mrb[0].mxu0
        %v2734 = vpop.f32.mrb[0].mxu0
        %v2735 = vpop.f32.mrb[0].mxu0
        %2736 = vdwg.mxu0
        %2738 = vrot.lane.b32.xlu0 %v2732, 96
        %v2739 = vpop.permute.xlu0 %2738
        %2741 = vst.msk [vmem:[#allocation2] sm:$0xff] %vm1874, %v2739
        %v2742 = vld [vmem:[#allocation2] sm:$0xff]
        %v2743 = vpack.c.bf16 %v2742, %v2742
        %v2745 = vlaneseq
        %v2746 = vshrl.u32 %v2745, 7
        %v2747 = vsub.s32 0, %v2746
        %v2748 = vrot.slane %v2278, %v2747
        %v2766 = vunpack.c.l.b16 %v2262
        %v2767 = vunpack.c.l.b16 %v2263
        %v2768 = vunpack.c.l.b16 %v2264
        %v2769 = vunpack.c.l.b16 %v2265
        %v2770 = vunpack.c.l.b16 %v2266
        %v2771 = vunpack.c.l.b16 %v2267
        %v2772 = vunpack.c.l.b16 %v2268
        %v2773 = vunpack.c.l.b16 %v2269
        %v2774 = vunpack.c.l.b16 %v2270
        %v2775 = vunpack.c.l.b16 %v2271
        %v2776 = vunpack.c.l.b16 %v2272
        %v2777 = vunpack.c.l.b16 %v2273
        %v2778 = vunpack.c.l.b16 %v2274
        %v2779 = vunpack.c.l.b16 %v2275
        %v2780 = vunpack.c.l.b16 %v2276
        %v2781 = vunpack.c.l.b16 %v2277
        %v2782 = vpack.c.b16 %v2767, %v2766
        %v2783 = vpack.c.b16 %v2769, %v2768
        %v2784 = vpack.c.b16 %v2771, %v2770
        %v2785 = vpack.c.b16 %v2773, %v2772
        %v2786 = vpack.c.b16 %v2775, %v2774
        %v2787 = vpack.c.b16 %v2777, %v2776
        %v2788 = vpack.c.b16 %v2779, %v2778
        %v2789 = vpack.c.b16 %v2781, %v2780
        %2798 = vmatprep.subr.bf16.mxu0 0
        %2799 = vmatpush1.bf16.msra.mxu0 %v2782
        %2800 = vmatprep.subr.bf16.mxu0 0
        %2801 = vmatpush1.bf16.msra.mxu0 %v2783
        %2802 = vmatprep.subr.bf16.mxu0 0
        %2803 = vmatpush1.bf16.msra.mxu0 %v2784
        %2804 = vmatprep.subr.bf16.mxu0 0
        %2805 = vmatpush1.bf16.msra.mxu0 %v2785
        %2806 = vmatprep.subr.bf16.mxu0 0
        %2807 = vmatpush1.bf16.msra.mxu0 %v2786
        %2808 = vmatprep.subr.bf16.mxu0 0
        %2809 = vmatpush1.bf16.msra.mxu0 %v2787
        %2810 = vmatprep.subr.bf16.mxu0 0
        %2811 = vmatpush1.bf16.msra.mxu0 %v2788
        %2812 = vmatprep.subr.bf16.mxu0 0
        %2813 = vmatpush1.bf16.msra.mxu0 %v2789
        %2814 = vmatprep.subr.bf16.mxu0 0
        %2815 = vmatpush1.bf16.msra.mxu0 0
        %2816 = vmatprep.subr.bf16.mxu0 0
        %2817 = vmatpush1.bf16.msra.mxu0 0
        %2818 = vmatprep.subr.bf16.mxu0 0
        %2819 = vmatpush1.bf16.msra.mxu0 0
        %2820 = vmatprep.subr.bf16.mxu0 0
        %2821 = vmatpush1.bf16.msra.mxu0 0
        %2822 = vmatprep.subr.bf16.mxu0 0
        %2823 = vmatpush1.bf16.msra.mxu0 0
        %2824 = vmatprep.subr.bf16.mxu0 0
        %2825 = vmatpush1.bf16.msra.mxu0 0
        %2826 = vmatprep.subr.bf16.mxu0 0
        %2827 = vmatpush1.bf16.msra.mxu0 0
        %2828 = vmatprep.subr.bf16.mxu0 0
        %2829 = vmatpush1.bf16.msra.mxu0 0
        %2830 = vmatprep.mubr.bf16.mxu0 0
        %2831 = vmatmul.mubr.bf16.gmra.mrb[0].mxu0 %v2743
        %v2832 = vpop.f32.mrb[0].mxu0
        %v2833 = vadd.f32 %v2748, %v2832
        %v2834 = vpop.f32.mrb[0].mxu0
        %v2835 = vpop.f32.mrb[0].mxu0
        %v2836 = vpop.f32.mrb[0].mxu0
        %2837 = vdwg.mxu0
        %v2838 = vadd.f32 %v2000, %v2833
        %v2839 = vld [vmem:[#allocation29] sm:$0x1]
        %v2840 = vld [vmem:[#allocation30] sm:$0x1]
        %2841 = vadd.xlane.f32.xlu0 %v2838
        %v2842 = vpop.xlane.xlu0 %2841
        %v2843 = vmul.f32 %v2842, %v1977
        %v2844 = vsub.f32 %v2838, %v2843
        %v2845 = vmul.f32 %v2844, %v2844
        %2846 = vadd.xlane.f32.xlu0 %v2845
        %v2847 = vpop.xlane.xlu0 %2846
        %v2848 = vmul.f32 %v2847, %v1977
        %v2849 = vadd.f32 %v2848, 1e-05
        %v2850 = vrsqrt.pop %v2849
        %v2851 = vmul.f32 %v2844, %v2850
        %v2853 = vlaneseq
        %v2854 = vshrl.u32 %v2853, 7
        %v2855 = vsub.s32 0, %v2854
        %v2856 = vrot.slane %v2839, %v2855
        %v2858 = vmul.f32 %v2851, %v2856
        %v2860 = vlaneseq
        %v2861 = vshrl.u32 %v2860, 7
        %v2862 = vsub.s32 0, %v2861
        %v2863 = vrot.slane %v2840, %v2862
        %v2865 = vadd.f32 %v2858, %v2863
        %v2866 = vpack.c.bf16 %v2865, %v2865
        %v2867 = vld [vmem:[#allocation32] sm:$0xff]
        %v2868 = vld [vmem:[#allocation32 + $0x8] sm:$0xff]
        %v2869 = vld [vmem:[#allocation32 + $0x10] sm:$0xff]
        %v2870 = vld [vmem:[#allocation32 + $0x18] sm:$0xff]
        %v2871 = vld [vmem:[#allocation32 + $0x20] sm:$0xff]
        %v2872 = vld [vmem:[#allocation32 + $0x28] sm:$0xff]
        %v2873 = vld [vmem:[#allocation32 + $0x30] sm:$0xff]
        %v2874 = vld [vmem:[#allocation32 + $0x38] sm:$0xff]
        %v2875 = vld [vmem:[#allocation32 + $0x40] sm:$0xff]
        %v2876 = vld [vmem:[#allocation32 + $0x48] sm:$0xff]
        %v2877 = vld [vmem:[#allocation32 + $0x50] sm:$0xff]
        %v2878 = vld [vmem:[#allocation32 + $0x58] sm:$0xff]
        %v2879 = vld [vmem:[#allocation32 + $0x60] sm:$0xff]
        %v2880 = vld [vmem:[#allocation32 + $0x68] sm:$0xff]
        %v2881 = vld [vmem:[#allocation32 + $0x70] sm:$0xff]
        %v2882 = vld [vmem:[#allocation32 + $0x78] sm:$0xff]
        %v2883 = vld [vmem:[#allocation33] sm:$0x3]
        %v2885 = vlaneseq
        %v2886 = vshrl.u32 %v2885, 7
        %v2887 = vsub.s32 0, %v2886
        %v2888 = vrot.slane %v2883, %v2887
        %v2889 = vlaneseq
        %v2890 = vshrl.u32 %v2889, 7
        %v2891 = vsub.s32 1, %v2890
        %v2892 = vrot.slane %v2883, %v2891
        %v2911 = vunpack.c.l.b16 %v2867
        %v2912 = vunpack.c.h.b16 %v2867
        %v2913 = vunpack.c.l.b16 %v2868
        %v2914 = vunpack.c.h.b16 %v2868
        %v2915 = vunpack.c.l.b16 %v2869
        %v2916 = vunpack.c.h.b16 %v2869
        %v2917 = vunpack.c.l.b16 %v2870
        %v2918 = vunpack.c.h.b16 %v2870
        %v2919 = vunpack.c.l.b16 %v2871
        %v2920 = vunpack.c.h.b16 %v2871
        %v2921 = vunpack.c.l.b16 %v2872
        %v2922 = vunpack.c.h.b16 %v2872
        %v2923 = vunpack.c.l.b16 %v2873
        %v2924 = vunpack.c.h.b16 %v2873
        %v2925 = vunpack.c.l.b16 %v2874
        %v2926 = vunpack.c.h.b16 %v2874
        %v2927 = vunpack.c.l.b16 %v2875
        %v2928 = vunpack.c.h.b16 %v2875
        %v2929 = vunpack.c.l.b16 %v2876
        %v2930 = vunpack.c.h.b16 %v2876
        %v2931 = vunpack.c.l.b16 %v2877
        %v2932 = vunpack.c.h.b16 %v2877
        %v2933 = vunpack.c.l.b16 %v2878
        %v2934 = vunpack.c.h.b16 %v2878
        %v2935 = vunpack.c.l.b16 %v2879
        %v2936 = vunpack.c.h.b16 %v2879
        %v2937 = vunpack.c.l.b16 %v2880
        %v2938 = vunpack.c.h.b16 %v2880
        %v2939 = vunpack.c.l.b16 %v2881
        %v2940 = vunpack.c.h.b16 %v2881
        %v2941 = vunpack.c.l.b16 %v2882
        %v2942 = vunpack.c.h.b16 %v2882
        %v2943 = vpack.c.b16 %v2913, %v2911
        %v2944 = vpack.c.b16 %v2914, %v2912
        %v2945 = vpack.c.b16 %v2917, %v2915
        %v2946 = vpack.c.b16 %v2918, %v2916
        %v2947 = vpack.c.b16 %v2921, %v2919
        %v2948 = vpack.c.b16 %v2922, %v2920
        %v2949 = vpack.c.b16 %v2925, %v2923
        %v2950 = vpack.c.b16 %v2926, %v2924
        %v2951 = vpack.c.b16 %v2929, %v2927
        %v2952 = vpack.c.b16 %v2930, %v2928
        %v2953 = vpack.c.b16 %v2933, %v2931
        %v2954 = vpack.c.b16 %v2934, %v2932
        %v2955 = vpack.c.b16 %v2937, %v2935
        %v2956 = vpack.c.b16 %v2938, %v2936
        %v2957 = vpack.c.b16 %v2941, %v2939
        %v2958 = vpack.c.b16 %v2942, %v2940
        %2975 = vmatprep.subr.bf16.mxu0 %v2944
        %2976 = vmatpush1.bf16.msra.mxu0 %v2943
        %2977 = vmatprep.subr.bf16.mxu0 %v2946
        %2978 = vmatpush1.bf16.msra.mxu0 %v2945
        %2979 = vmatprep.subr.bf16.mxu0 %v2948
        %2980 = vmatpush1.bf16.msra.mxu0 %v2947
        %2981 = vmatprep.subr.bf16.mxu0 %v2950
        %2982 = vmatpush1.bf16.msra.mxu0 %v2949
        %2983 = vmatprep.subr.bf16.mxu0 %v2952
        %2984 = vmatpush1.bf16.msra.mxu0 %v2951
        %2985 = vmatprep.subr.bf16.mxu0 %v2954
        %2986 = vmatpush1.bf16.msra.mxu0 %v2953
        %2987 = vmatprep.subr.bf16.mxu0 %v2956
        %2988 = vmatpush1.bf16.msra.mxu0 %v2955
        %2989 = vmatprep.subr.bf16.mxu0 %v2958
        %2990 = vmatpush1.bf16.msra.mxu0 %v2957
        %2991 = vmatprep.subr.bf16.mxu0 0
        %2992 = vmatpush1.bf16.msra.mxu0 0
        %2993 = vmatprep.subr.bf16.mxu0 0
        %2994 = vmatpush1.bf16.msra.mxu0 0
        %2995 = vmatprep.subr.bf16.mxu0 0
        %2996 = vmatpush1.bf16.msra.mxu0 0
        %2997 = vmatprep.subr.bf16.mxu0 0
        %2998 = vmatpush1.bf16.msra.mxu0 0
        %2999 = vmatprep.subr.bf16.mxu0 0
        %3000 = vmatpush1.bf16.msra.mxu0 0
        %3001 = vmatprep.subr.bf16.mxu0 0
        %3002 = vmatpush1.bf16.msra.mxu0 0
        %3003 = vmatprep.subr.bf16.mxu0 0
        %3004 = vmatpush1.bf16.msra.mxu0 0
        %3005 = vmatprep.subr.bf16.mxu0 0
        %3006 = vmatpush1.bf16.msra.mxu0 0
        %3007 = vmatprep.mubr.bf16.mxu0 0
        %3008 = vmatmul.mubr.bf16.gmra.mrb[0].mxu0 %v2866
        %v3009 = vpop.f32.mrb[0].mxu0
        %v3010 = vadd.f32 %v2888, %v3009
        %v3011 = vpop.f32.mrb[0].mxu0
        %v3012 = vadd.f32 %v2892, %v3011
        %v3013 = vpop.f32.mrb[0].mxu0
        %v3014 = vpop.f32.mrb[0].mxu0
        %3015 = vdwg.mxu0
        %v3016 = vmax.f32 %v3010, 0.0
        %v3017 = vmax.f32 %v3012, 0.0
        %v3018 = vpack.c.bf16 %v3016, %v3016
        %v3019 = vpack.c.bf16 %v3017, %v3017
        %v3020 = vld [vmem:[#allocation35] sm:$0xf]
        %v3021 = vld [vmem:[#allocation35 + $0x4] sm:$0xf]
        %v3022 = vld [vmem:[#allocation35 + $0x8] sm:$0xf]
        %v3023 = vld [vmem:[#allocation35 + $0xc] sm:$0xf]
        %v3024 = vld [vmem:[#allocation35 + $0x10] sm:$0xf]
        %v3025 = vld [vmem:[#allocation35 + $0x14] sm:$0xf]
        %v3026 = vld [vmem:[#allocation35 + $0x18] sm:$0xf]
        %v3027 = vld [vmem:[#allocation35 + $0x1c] sm:$0xf]
        %v3028 = vld [vmem:[#allocation35 + $0x20] sm:$0xf]
        %v3029 = vld [vmem:[#allocation35 + $0x24] sm:$0xf]
        %v3030 = vld [vmem:[#allocation35 + $0x28] sm:$0xf]
        %v3031 = vld [vmem:[#allocation35 + $0x2c] sm:$0xf]
        %v3032 = vld [vmem:[#allocation35 + $0x30] sm:$0xf]
        %v3033 = vld [vmem:[#allocation35 + $0x34] sm:$0xf]
        %v3034 = vld [vmem:[#allocation35 + $0x38] sm:$0xf]
        %v3035 = vld [vmem:[#allocation35 + $0x3c] sm:$0xf]
        %v3036 = vld [vmem:[#allocation35 + $0x40] sm:$0xf]
        %v3037 = vld [vmem:[#allocation35 + $0x44] sm:$0xf]
        %v3038 = vld [vmem:[#allocation35 + $0x48] sm:$0xf]
        %v3039 = vld [vmem:[#allocation35 + $0x4c] sm:$0xf]
        %v3040 = vld [vmem:[#allocation35 + $0x50] sm:$0xf]
        %v3041 = vld [vmem:[#allocation35 + $0x54] sm:$0xf]
        %v3042 = vld [vmem:[#allocation35 + $0x58] sm:$0xf]
        %v3043 = vld [vmem:[#allocation35 + $0x5c] sm:$0xf]
        %v3044 = vld [vmem:[#allocation35 + $0x60] sm:$0xf]
        %v3045 = vld [vmem:[#allocation35 + $0x64] sm:$0xf]
        %v3046 = vld [vmem:[#allocation35 + $0x68] sm:$0xf]
        %v3047 = vld [vmem:[#allocation35 + $0x6c] sm:$0xf]
        %v3048 = vld [vmem:[#allocation35 + $0x70] sm:$0xf]
        %v3049 = vld [vmem:[#allocation35 + $0x74] sm:$0xf]
        %v3050 = vld [vmem:[#allocation35 + $0x78] sm:$0xf]
        %v3051 = vld [vmem:[#allocation35 + $0x7c] sm:$0xf]
        %v3052 = vld [vmem:[#allocation36] sm:$0x1]
        %v3054 = vlaneseq
        %v3055 = vshrl.u32 %v3054, 7
        %v3056 = vsub.s32 0, %v3055
        %v3057 = vrot.slane %v3052, %v3056
        %v3091 = vunpack.c.l.b16 %v3020
        %v3092 = vunpack.c.l.b16 %v3021
        %v3093 = vunpack.c.l.b16 %v3022
        %v3094 = vunpack.c.l.b16 %v3023
        %v3095 = vunpack.c.l.b16 %v3024
        %v3096 = vunpack.c.l.b16 %v3025
        %v3097 = vunpack.c.l.b16 %v3026
        %v3098 = vunpack.c.l.b16 %v3027
        %v3099 = vunpack.c.l.b16 %v3028
        %v3100 = vunpack.c.l.b16 %v3029
        %v3101 = vunpack.c.l.b16 %v3030
        %v3102 = vunpack.c.l.b16 %v3031
        %v3103 = vunpack.c.l.b16 %v3032
        %v3104 = vunpack.c.l.b16 %v3033
        %v3105 = vunpack.c.l.b16 %v3034
        %v3106 = vunpack.c.l.b16 %v3035
        %v3107 = vunpack.c.l.b16 %v3036
        %v3108 = vunpack.c.l.b16 %v3037
        %v3109 = vunpack.c.l.b16 %v3038
        %v3110 = vunpack.c.l.b16 %v3039
        %v3111 = vunpack.c.l.b16 %v3040
        %v3112 = vunpack.c.l.b16 %v3041
        %v3113 = vunpack.c.l.b16 %v3042
        %v3114 = vunpack.c.l.b16 %v3043
        %v3115 = vunpack.c.l.b16 %v3044
        %v3116 = vunpack.c.l.b16 %v3045
        %v3117 = vunpack.c.l.b16 %v3046
        %v3118 = vunpack.c.l.b16 %v3047
        %v3119 = vunpack.c.l.b16 %v3048
        %v3120 = vunpack.c.l.b16 %v3049
        %v3121 = vunpack.c.l.b16 %v3050
        %v3122 = vunpack.c.l.b16 %v3051
        %v3123 = vpack.c.b16 %v3092, %v3091
        %v3124 = vpack.c.b16 %v3094, %v3093
        %v3125 = vpack.c.b16 %v3096, %v3095
        %v3126 = vpack.c.b16 %v3098, %v3097
        %v3127 = vpack.c.b16 %v3100, %v3099
        %v3128 = vpack.c.b16 %v3102, %v3101
        %v3129 = vpack.c.b16 %v3104, %v3103
        %v3130 = vpack.c.b16 %v3106, %v3105
        %v3131 = vpack.c.b16 %v3108, %v3107
        %v3132 = vpack.c.b16 %v3110, %v3109
        %v3133 = vpack.c.b16 %v3112, %v3111
        %v3134 = vpack.c.b16 %v3114, %v3113
        %v3135 = vpack.c.b16 %v3116, %v3115
        %v3136 = vpack.c.b16 %v3118, %v3117
        %v3137 = vpack.c.b16 %v3120, %v3119
        %v3138 = vpack.c.b16 %v3122, %v3121
        %3155 = vmatprep.subr.bf16.mxu0 0
        %3156 = vmatpush1.bf16.msra.mxu0 %v3123
        %3157 = vmatprep.subr.bf16.mxu0 0
        %3158 = vmatpush1.bf16.msra.mxu0 %v3124
        %3159 = vmatprep.subr.bf16.mxu0 0
        %3160 = vmatpush1.bf16.msra.mxu0 %v3125
        %3161 = vmatprep.subr.bf16.mxu0 0
        %3162 = vmatpush1.bf16.msra.mxu0 %v3126
        %3163 = vmatprep.subr.bf16.mxu0 0
        %3164 = vmatpush1.bf16.msra.mxu0 %v3127
        %3165 = vmatprep.subr.bf16.mxu0 0
        %3166 = vmatpush1.bf16.msra.mxu0 %v3128
        %3167 = vmatprep.subr.bf16.mxu0 0
        %3168 = vmatpush1.bf16.msra.mxu0 %v3129
        %3169 = vmatprep.subr.bf16.mxu0 0
        %3170 = vmatpush1.bf16.msra.mxu0 %v3130
        %3171 = vmatprep.subr.bf16.mxu0 0
        %3172 = vmatpush1.bf16.msra.mxu0 %v3131
        %3173 = vmatprep.subr.bf16.mxu0 0
        %3174 = vmatpush1.bf16.msra.mxu0 %v3132
        %3175 = vmatprep.subr.bf16.mxu0 0
        %3176 = vmatpush1.bf16.msra.mxu0 %v3133
        %3177 = vmatprep.subr.bf16.mxu0 0
        %3178 = vmatpush1.bf16.msra.mxu0 %v3134
        %3179 = vmatprep.subr.bf16.mxu0 0
        %3180 = vmatpush1.bf16.msra.mxu0 %v3135
        %3181 = vmatprep.subr.bf16.mxu0 0
        %3182 = vmatpush1.bf16.msra.mxu0 %v3136
        %3183 = vmatprep.subr.bf16.mxu0 0
        %3184 = vmatpush1.bf16.msra.mxu0 %v3137
        %3185 = vmatprep.subr.bf16.mxu0 0
        %3186 = vmatpush1.bf16.msra.mxu0 %v3138
        %3187 = vmatprep.mubr.bf16.mxu0 %v3019
        %3188 = vmatmul.mubr.bf16.gmra.mrb[0].mxu0 %v3018
        %v3189 = vpop.f32.mrb[0].mxu0
        %v3190 = vadd.f32 %v3057, %v3189
        %v3191 = vpop.f32.mrb[0].mxu0
        %v3192 = vpop.f32.mrb[0].mxu0
        %v3193 = vpop.f32.mrb[0].mxu0
        %3194 = vdwg.mxu0
        %v3195 = vadd.f32 %v2865, %v3190
        %v3196 = vld [vmem:[#allocation38] sm:$0x1]
        %v3197 = vld [vmem:[#allocation39] sm:$0x1]
        %3198 = vadd.xlane.f32.xlu0 %v3195
        %v3199 = vpop.xlane.xlu0 %3198
        %v3200 = vmul.f32 %v3199, %v1977
        %v3201 = vsub.f32 %v3195, %v3200
        %v3202 = vmul.f32 %v3201, %v3201
        %3203 = vadd.xlane.f32.xlu0 %v3202
        %v3204 = vpop.xlane.xlu0 %3203
        %v3205 = vmul.f32 %v3204, %v1977
        %v3206 = vadd.f32 %v3205, 1e-05
        %v3207 = vrsqrt.pop %v3206
        %v3208 = vmul.f32 %v3201, %v3207
        %v3210 = vlaneseq
        %v3211 = vshrl.u32 %v3210, 7
        %v3212 = vsub.s32 0, %v3211
        %v3213 = vrot.slane %v3196, %v3212
        %v3215 = vmul.f32 %v3208, %v3213
        %v3217 = vlaneseq
        %v3218 = vshrl.u32 %v3217, 7
        %v3219 = vsub.s32 0, %v3218
        %v3220 = vrot.slane %v3197, %v3219
        %v3222 = vadd.f32 %v3215, %v3220
        %v3223 = vpack.c.bf16 %v3222, %v3222
        %3224 = vst [vmem:[%s1118] sm:$0xf] %v3223
        %s3225 = sand.u32 %s589, 1
        %s3226 = scalar_lea.sflag [#allocation5], %s3225
        %s3227 = sand.u32 %s589, 1
        %s3228 = smul.addr %s3227, 4
        %s3229 = scalar_lea.vmem [#allocation41], %s3228
        // Predicated region
        $region213: #{transformer_forward.7} parent=115 // pred_check
          %p3230 = pneg %p599
        $region214: #{transformer_forward.7} parent=115 // pred_check_branch
          %3232 = sbr.rel (%p3230) target = $region216
        $region215: #{transformer_forward.7} parent=115 // pred_region
          %s3234 = ssub.s32 64, 64
          %3235 = vsyncadd %s3226, %s3234
          %s3236 = smul.addr %s57, 64
          %s3237 = scalar_lea.hbm %s24, %s3236
          %s3239 = sshll.u32 %s3229, 4
          %s3240 = int_to_ptr.vmem [resolvable:$true] %s3239
          %3242 = dma.vmem_to_hbm [thread:$0]  %s3240, 64, %s3237, %s3226
        $region216: #{transformer_forward.7} parent=115 // pred_fallthru
          _
      $region116: #{transformer_forward.7} parent=5 // pred_fallthru
        _
      %p3243 = scmp.le.s32.totalorder 2, %s52
      // Predicated region
      $region217: #{transformer_forward.7} parent=5 // pred_check
        %p3244 = pneg %p3243
      $region218: #{transformer_forward.7} parent=5 // pred_check_branch
        %3246 = sbr.rel (%p3244) target = $region220
      $region219: #{transformer_forward.7} parent=5 // pred_region
        %s3247 = ssub.s32 %s52, 2
        // Predicated region
        $region221: #{transformer_forward.7} parent=219 // pred_check
          %p3248 = pneg %p605
        $region222: #{transformer_forward.7} parent=219 // pred_check_branch
          %3250 = sbr.rel (%p3248) target = $region224
        $region223: #{transformer_forward.7} parent=219 // pred_region
          %s3251 = sand.u32 %s590, 1
          %s3252 = scalar_lea.sflag [#allocation5], %s3251
          %s3253 = sand.u32 %s590, 1
          %s3254 = smul.addr %s3253, 4
          %s3255 = scalar_lea.vmem [#allocation41], %s3254
          %3256 = dma.done %s3252, 64
        $region224: #{transformer_forward.7} parent=219 // pred_fallthru
          _
      $region220: #{transformer_forward.7} parent=5 // pred_fallthru
        _
    $region6: #{transformer_forward.7} parent=1 // loop_footer
      %s56 = sadd.s32 1, %s52
    $region7: #{transformer_forward.7} parent=1 // loop_footer_branch
      %51 = sbr.rel target = $region3
    $region8: #{transformer_forward.7} parent=1 // loop_exit
      _
    %3257 = vsyncpa [#allocation4], 1
    %s3258 = scalar_lea.sflag [#allocation4], 1
    %3259 = vsyncpa %s3258, 1
    %3260 = vsyncpa [#allocation7], 1
    %s3261 = scalar_lea.sflag [#allocation7], 1
    %3262 = vsyncpa %s3261, 1
    %3263 = vsyncpa [#allocation10], 1
    %s3264 = scalar_lea.sflag [#allocation10], 1
    %3265 = vsyncpa %s3264, 1
    %3266 = vsyncpa [#allocation13], 1
    %3267 = vsyncpa [#allocation16], 1
    %3268 = vsyncpa [#allocation19], 1
    %3269 = vsyncpa [#allocation22], 1
    %3270 = vsyncpa [#allocation25], 1
    %3271 = vsyncpa [#allocation28], 1
    %3272 = vsyncpa [#allocation31], 1
    %3273 = vsyncpa [#allocation34], 1
    %3274 = vsyncpa [#allocation37], 1
    %3275 = vsyncpa [#allocation40], 1
    %3276 = vsyncpa [#allocation5], 1
    %s3277 = scalar_lea.sflag [#allocation5], 1
    %3278 = vsyncpa %s3277, 1

</llo_original>
